<compile_context>
chip_gen: v5e
topology: v5e:2x2
jax: 0.10.0
libtpu: 0.0.40
codegen_flags: <defaults>
</compile_context>

<pallas_src>
import jax
import jax.numpy as jnp
from jax.experimental import pallas as pl
from jax.experimental.pallas import tpu as pltpu


# ----------------------------- fused Pallas kernel -------------------------- #

def cnn_fused_kernel(p1_ref, w1_ref, b1_ref, w2_ref, b2_ref,
                     fc1w_ref, fc1b_ref, fc2w_ref, fc2b_ref,
                     fc3w_ref, fc3b_ref, o_ref, y1s_ref, lhs_ref, feat_ref):
    """Whole CNN forward pass in one kernel (all intermediates VMEM-resident).

    p1_ref  : (16*N, H4, W4, 9) f32  conv1 im2col taps; leading index is
              ((ry*2+rx)*4 + (gy*2+gx))*N + n, with (ry,rx) = parity class of the
              pool1-output pixel and (gy,gx) = position inside the 2x2 pool1 window.
    w1_ref  : (9, 32)  f32  conv1 weight (BN1 scale folded in)
    b1_ref  : (1, 32)  f32  folded conv1+BN1 bias
    w2_ref  : (288, 64) bf16 conv2 weight as matmul matrix, K order (dy, dx, cin),
              BN2 scale folded in
    b2_ref  : (1, 64)  f32  folded conv2+BN2 bias
    fc*_ref : fc weights (in, out) / biases (1, out); fc1 rows permuted to (ph, pw, c)
    o_ref   : (N, num_classes) f32
    y1s_ref : (4*N, H4+1, W4+1, 32) f32 scratch: parity-split, zero-padded pool1 output.
              Padded-y1 pixel (row 2i-p, col 2j-q) lives at [(p*2+q)*N + n, i, j, :].
    lhs_ref : (4*N*H4*W4, 288) f32 scratch: stacked conv2 im2col rows, row order
              (pool2 group, n, ph, pw).
    feat_ref: (N, H4*W4*64) f32 scratch: flattened features in (ph, pw, c) order.
    """
    n = o_ref.shape[0]
    h4 = p1_ref.shape[1]
    w4 = p1_ref.shape[2]
    m2 = n * h4 * w4                 # rows per pool2 group
    hw = h4 * w4
    c2 = w2_ref.shape[1]             # 64

    # ---------- stage 1: conv1 (VPU 9-tap stencil) + bn1 + relu + maxpool(2) ----------
    w1 = w1_ref[...]
    b1 = b1_ref[...]
    w1_rows = [w1[k:k + 1, :] for k in range(9)]
    y1s_ref[...] = jnp.zeros_like(y1s_ref)           # zeros double as conv2 "same" padding
    for ry in range(2):
        for rx in range(2):
            cls = ry * 2 + rx
            taps = p1_ref[cls * 4 * n:(cls + 1) * 4 * n, :, :, :]      # (4N, H4, W4, 9)
            acc = taps[..., 0:1] * w1_rows[0]
            for k in range(1, 9):
                acc = acc + taps[..., k:k + 1] * w1_rows[k]            # (4N, H4, W4, 32)
            pooled = acc[0:n]
            for g in range(1, 4):                                      # max over 2x2 window
                pooled = jnp.maximum(pooled, acc[g * n:(g + 1) * n])
            val = jnp.maximum(pooled + b1, 0.0)                        # bias+ReLU after max
            y1s_ref[cls * n:(cls + 1) * n, ry:ry + h4, rx:rx + w4, :] = val

    # ---------- stage 2: conv2 (one stacked MXU matmul) + bn2 + relu + maxpool(2) -----
    # Build the stacked im2col matrix in VMEM scratch with plain masked stores
    # (no in-kernel reshape/concatenate needed thanks to the parity-split layout).
    for gy in range(2):
        for gx in range(2):
            g = gy * 2 + gx
            for dy in range(3):
                for dx in range(3):
                    t = dy * 3 + dx
                    r0 = gy + dy - 1
                    c0 = gx + dx - 1
                    p, q = r0 % 2, c0 % 2
                    i0, j0 = (r0 + p) // 2, (c0 + q) // 2
                    cls = p * 2 + q
                    s = y1s_ref[cls * n:(cls + 1) * n, i0:i0 + h4, j0:j0 + w4, :]
                    for b in range(n):
                        for i in range(h4):
                            row0 = g * m2 + (b * h4 + i) * w4
                            lhs_ref[row0:row0 + w4, t * 32:(t + 1) * 32] = s[b, i]
    lhs = lhs_ref[...].astype(w2_ref.dtype)                            # (4*m2, 288) bf16
    y2 = jnp.dot(lhs, w2_ref[...], preferred_element_type=jnp.float32)  # (4*m2, 64) f32
    pooled2 = y2[0:m2]
    for g in range(1, 4):                                              # max over 2x2 window
        pooled2 = jnp.maximum(pooled2, y2[g * m2:(g + 1) * m2])
    y2p = jnp.maximum(pooled2 + b2_ref[...], 0.0)                      # (m2, 64)

    # ---------- flatten (NHWC order; fc1 weight rows pre-permuted to match) -----------
    for b in range(n):
        for s_idx in range(hw):
            feat_ref[b:b + 1, s_idx * c2:(s_idx + 1) * c2] = \
                y2p[b * hw + s_idx:b * hw + s_idx + 1, :]
    feat = feat_ref[...]                                               # (N, 512)

    # ---------- MLP: fc1 -> relu -> dropout(eval: identity) -> fc2 -> relu -> fc3 -----
    h1 = jnp.dot(feat.astype(fc1w_ref.dtype), fc1w_ref[...],
                 preferred_element_type=jnp.float32) + fc1b_ref[...]
    h1 = jnp.maximum(h1, 0.0)
    # TODO(synk): Dropout(0.3) is identity in eval mode; training-mode masking omitted.
    h2 = jnp.dot(h1.astype(fc2w_ref.dtype), fc2w_ref[...],
                 preferred_element_type=jnp.float32) + fc2b_ref[...]
    h2 = jnp.maximum(h2, 0.0)
    o_ref[...] = jnp.dot(h2, fc3w_ref[...],
                         preferred_element_type=jnp.float32) + fc3b_ref[...]


# ------------------------------ pallas wrapper ------------------------------ #

def _full_spec(a):
    nd = a.ndim
    return pl.BlockSpec(a.shape, lambda *_, nd=nd: (0,) * nd)


def cnn_fused(p1, params):
    n = p1.shape[0] // 16
    h4, w4, n_taps = p1.shape[1], p1.shape[2], p1.shape[3]
    c1 = params["conv1_w"].shape[1]                  # 32
    c2 = params["conv2_w"].shape[1]                  # 64
    num_classes = params["fc3_w"].shape[1]
    m2 = n * h4 * w4
    args = (p1,
            params["conv1_w"], params["conv1_b"],
            params["conv2_w"], params["conv2_b"],
            params["fc1_w"], params["fc1_b"],
            params["fc2_w"], params["fc2_b"],
            params["fc3_w"], params["fc3_b"])
    return pl.pallas_call(
        cnn_fused_kernel,
        grid=(1,),
        in_specs=[_full_spec(a) for a in args],
        out_specs=pl.BlockSpec((n, num_classes), lambda i: (0, 0)),
        out_shape=jax.ShapeDtypeStruct((n, num_classes), jnp.float32),
        scratch_shapes=[
            pltpu.VMEM((4 * n, h4 + 1, w4 + 1, c1), jnp.float32),  # parity-split pool1 out
            pltpu.VMEM((4 * m2, n_taps * c1), jnp.float32),        # stacked conv2 im2col
            pltpu.VMEM((n, h4 * w4 * c2), jnp.float32),            # flattened features
        ],
        compiler_params=pltpu.CompilerParams(
            dimension_semantics=("arbitrary",)),
    )(*args)


# ------------------------------- JAX glue (prep) ---------------------------- #

def build_conv1_taps(x_nchw):
    """conv1 im2col taps, organized by (pool1-output parity class, pool window pos).

    Returns (16*N, H4, W4, 9) with leading index ((ry*2+rx)*4 + gy*2+gx)*N + n and
    tap axis ordered (dy, dx) — matching conv1's (9, 32) weight matrix.
    """
    n, _, h, w = x_nchw.shape
    h4, w4 = h // 4, w // 4
    x2 = x_nchw[:, 0, :, :].astype(jnp.float32)                 # (N, H, W), Cin = 1
    xp = jnp.pad(x2, ((0, 0), (1, 1), (1, 1)))                  # (N, H+2, W+2)
    blocks = []
    for ry in range(2):
        for rx in range(2):
            for gy in range(2):
                for gx in range(2):
                    taps = []
                    for dy in range(3):
                        for dx in range(3):
                            r0 = 2 * ry + gy + dy
                            c0 = 2 * rx + gx + dx
                            taps.append(xp[:, r0:r0 + 4 * h4:4, c0:c0 + 4 * w4:4])
                    blocks.append(jnp.stack(taps, axis=-1))     # (N, H4, W4, 9)
    return jnp.concatenate(blocks, axis=0)                      # (16*N, H4, W4, 9)


def conv_weight_to_matrix(w_oihw):
    """PyTorch (Cout, Cin, 3, 3) -> (9*Cin, Cout), row order (dy, dx, cin)."""
    cout, cin = w_oihw.shape[0], w_oihw.shape[1]
    return jnp.transpose(w_oihw, (2, 3, 1, 0)).reshape(9 * cin, cout)


def fold_bn_into_weights(w_mat, conv_bias, gamma, beta, mean, var, eps=1e-5):
    """Fold eval-mode BatchNorm into the conv matmul weights + a bias row."""
    scale = gamma / jnp.sqrt(var + eps)
    w_folded = w_mat * scale[None, :]
    b_folded = beta + scale * (conv_bias - mean)
    return w_folded, b_folded.reshape(1, -1)


def init_params(key, num_classes=3):
    ks = jax.random.split(key, 18)
    p = {}

    # conv1: Conv2d(1, 32, 3, padding=1) + BatchNorm2d(32)
    w1 = jax.random.normal(ks[0], (32, 1, 3, 3), jnp.float32) / 3.0
    cb1 = 0.05 * jax.random.normal(ks[1], (32,), jnp.float32)
    g1 = 1.0 + 0.1 * jax.random.normal(ks[2], (32,), jnp.float32)
    be1 = 0.1 * jax.random.normal(ks[3], (32,), jnp.float32)
    rm1 = 0.1 * jax.random.normal(ks[4], (32,), jnp.float32)
    rv1 = 1.0 + 0.1 * jnp.abs(jax.random.normal(ks[5], (32,), jnp.float32))
    p["conv1_w"], p["conv1_b"] = fold_bn_into_weights(
        conv_weight_to_matrix(w1), cb1, g1, be1, rm1, rv1)

    # conv2: Conv2d(32, 64, 3, padding=1) + BatchNorm2d(64)
    w2 = jax.random.normal(ks[6], (64, 32, 3, 3), jnp.float32) / (3.0 * jnp.sqrt(32.0))
    cb2 = 0.05 * jax.random.normal(ks[7], (64,), jnp.float32)
    g2 = 1.0 + 0.1 * jax.random.normal(ks[8], (64,), jnp.float32)
    be2 = 0.1 * jax.random.normal(ks[9], (64,), jnp.float32)
    rm2 = 0.1 * jax.random.normal(ks[10], (64,), jnp.float32)
    rv2 = 1.0 + 0.1 * jnp.abs(jax.random.normal(ks[11], (64,), jnp.float32))
    w2f, p["conv2_b"] = fold_bn_into_weights(
        conv_weight_to_matrix(w2), cb2, g2, be2, rm2, rv2)
    p["conv2_w"] = w2f.astype(jnp.bfloat16)

    # fc layers stored (in, out).  fc1 is generated in PyTorch flatten order
    # (c*8 + ph*4 + pw) and its rows are permuted ONCE to the kernel's NHWC
    # flatten order ((ph*4 + pw)*64 + c) so no runtime transpose is needed.
    fc1_w = jax.random.normal(ks[12], (512, 256), jnp.float32) / jnp.sqrt(512.0)
    fc1_w_nhwc = fc1_w.reshape(64, 8, 256).transpose(1, 0, 2).reshape(512, 256)
    p["fc1_w"] = fc1_w_nhwc.astype(jnp.bfloat16)
    p["fc1_b"] = (0.05 * jax.random.normal(ks[13], (256,), jnp.float32)).reshape(1, -1)
    fc2_w = jax.random.normal(ks[14], (256, 64), jnp.float32) / jnp.sqrt(256.0)
    p["fc2_w"] = fc2_w.astype(jnp.bfloat16)
    p["fc2_b"] = (0.05 * jax.random.normal(ks[15], (64,), jnp.float32)).reshape(1, -1)
    p["fc3_w"] = jax.random.normal(ks[16], (64, num_classes), jnp.float32) / jnp.sqrt(64.0)
    p["fc3_b"] = (0.05 * jax.random.normal(ks[17], (num_classes,), jnp.float32)).reshape(1, -1)
    return p


def forward(x_nchw, params):
    n, _, h, w = x_nchw.shape
    assert h % 4 == 0 and w % 4 == 0, "two 2x2 max-pools require H, W divisible by 4"
    assert 64 * (h // 4) * (w // 4) == params["fc1_w"].shape[0], "flatten size must match fc1"
    p1 = build_conv1_taps(x_nchw)            # only XLA-side prep; everything else is fused
    return cnn_fused(p1, params)


if __name__ == "__main__":
    key = jax.random.PRNGKey(0)
    pkey, xkey = jax.random.split(key)
    params = init_params(pkey, num_classes=3)

    # input (N=2, C=1, H=8, W=16) -> after two 2x pools: 64 * 2 * 4 = 512 features (matches fc1)
    x = jax.random.normal(xkey, (2, 1, 8, 16), jnp.float32)

    out = jax.jit(lambda xx: forward(xx, params))(x)
    out = jax.block_until_ready(out)
    assert out.shape == (2, 3) and out.dtype == jnp.float32
    print("KERNEL_OK")
</pallas_src>

<mosaic_0001>
module attributes {stable_mosaic.version = 11 : i64} {
  func.func @cnn_fused_kernel(%arg0: i32, %arg1: memref<32x2x4x9xf32, #tpu.memory_space<vmem>>, %arg2: memref<9x32xf32, #tpu.memory_space<vmem>>, %arg3: memref<1x32xf32, #tpu.memory_space<vmem>>, %arg4: memref<288x64xbf16, #tpu.memory_space<vmem>>, %arg5: memref<1x64xf32, #tpu.memory_space<vmem>>, %arg6: memref<512x256xbf16, #tpu.memory_space<vmem>>, %arg7: memref<1x256xf32, #tpu.memory_space<vmem>>, %arg8: memref<256x64xbf16, #tpu.memory_space<vmem>>, %arg9: memref<1x64xf32, #tpu.memory_space<vmem>>, %arg10: memref<64x3xf32, #tpu.memory_space<vmem>>, %arg11: memref<1x3xf32, #tpu.memory_space<vmem>>, %arg12: memref<2x3xf32, #tpu.memory_space<vmem>>, %arg13: memref<8x3x5x32xf32, #tpu.memory_space<vmem>>, %arg14: memref<64x288xf32, #tpu.memory_space<vmem>>, %arg15: memref<2x512xf32, #tpu.memory_space<vmem>>) attributes {dimension_semantics = [#tpu.dimension_semantics<arbitrary>], iteration_bounds = array<i64: 1>, scalar_prefetch = 0 : i64, scratch_operands = 3 : i64, tpu.core_type = #tpu.core_type<tc>, window_params = [{pipeline_mode = #tpu.pipeline_mode<synchronous>, transform_indices = @transform_0, window_bounds = array<i64: 32, 2, 4, 9>}, {pipeline_mode = #tpu.pipeline_mode<synchronous>, transform_indices = @transform_1, window_bounds = array<i64: 9, 32>}, {pipeline_mode = #tpu.pipeline_mode<synchronous>, transform_indices = @transform_2, window_bounds = array<i64: 1, 32>}, {pipeline_mode = #tpu.pipeline_mode<synchronous>, transform_indices = @transform_3, window_bounds = array<i64: 288, 64>}, {pipeline_mode = #tpu.pipeline_mode<synchronous>, transform_indices = @transform_4, window_bounds = array<i64: 1, 64>}, {pipeline_mode = #tpu.pipeline_mode<synchronous>, transform_indices = @transform_5, window_bounds = array<i64: 512, 256>}, {pipeline_mode = #tpu.pipeline_mode<synchronous>, transform_indices = @transform_6, window_bounds = array<i64: 1, 256>}, {pipeline_mode = #tpu.pipeline_mode<synchronous>, transform_indices = @transform_7, window_bounds = array<i64: 256, 64>}, {pipeline_mode = #tpu.pipeline_mode<synchronous>, transform_indices = @transform_8, window_bounds = array<i64: 1, 64>}, {pipeline_mode = #tpu.pipeline_mode<synchronous>, transform_indices = @transform_9, window_bounds = array<i64: 64, 3>}, {pipeline_mode = #tpu.pipeline_mode<synchronous>, transform_indices = @transform_10, window_bounds = array<i64: 1, 3>}, {pipeline_mode = #tpu.pipeline_mode<synchronous>, transform_indices = @transform_11, window_bounds = array<i64: 2, 3>}]} {
    %c0 = arith.constant 0 : index
    %c0_0 = arith.constant 0 : index
    %0 = vector.load %arg2[%c0, %c0_0] : memref<9x32xf32, #tpu.memory_space<vmem>>, vector<9x32xf32>
    %c0_1 = arith.constant 0 : index
    %c0_2 = arith.constant 0 : index
    %1 = vector.load %arg3[%c0_1, %c0_2] : memref<1x32xf32, #tpu.memory_space<vmem>>, vector<1x32xf32>
    %2 = vector.extract_strided_slice %0 {offsets = [0, 0], sizes = [1, 32], strides = [1, 1]} : vector<9x32xf32> to vector<1x32xf32>
    %3 = vector.extract_strided_slice %0 {offsets = [1, 0], sizes = [1, 32], strides = [1, 1]} : vector<9x32xf32> to vector<1x32xf32>
    %4 = vector.extract_strided_slice %0 {offsets = [2, 0], sizes = [1, 32], strides = [1, 1]} : vector<9x32xf32> to vector<1x32xf32>
    %5 = vector.extract_strided_slice %0 {offsets = [3, 0], sizes = [1, 32], strides = [1, 1]} : vector<9x32xf32> to vector<1x32xf32>
    %6 = vector.extract_strided_slice %0 {offsets = [4, 0], sizes = [1, 32], strides = [1, 1]} : vector<9x32xf32> to vector<1x32xf32>
    %7 = vector.extract_strided_slice %0 {offsets = [5, 0], sizes = [1, 32], strides = [1, 1]} : vector<9x32xf32> to vector<1x32xf32>
    %8 = vector.extract_strided_slice %0 {offsets = [6, 0], sizes = [1, 32], strides = [1, 1]} : vector<9x32xf32> to vector<1x32xf32>
    %9 = vector.extract_strided_slice %0 {offsets = [7, 0], sizes = [1, 32], strides = [1, 1]} : vector<9x32xf32> to vector<1x32xf32>
    %10 = vector.extract_strided_slice %0 {offsets = [8, 0], sizes = [1, 32], strides = [1, 1]} : vector<9x32xf32> to vector<1x32xf32>
    %cst = arith.constant 0.000000e+00 : f32
    %11 = vector.broadcast %cst : f32 to vector<8x3x5x32xf32>
    %c0_3 = arith.constant 0 : index
    %c0_4 = arith.constant 0 : index
    %c0_5 = arith.constant 0 : index
    %c0_6 = arith.constant 0 : index
    %12 = vector.load %arg13[%c0_3, %c0_4, %c0_5, %c0_6] : memref<8x3x5x32xf32, #tpu.memory_space<vmem>>, vector<8x3x5x32xf32>
    tpu.vector_store %arg13[%c0_3, %c0_4, %c0_5, %c0_6], %11 {strides = array<i32>} : memref<8x3x5x32xf32, #tpu.memory_space<vmem>>, vector<8x3x5x32xf32>,
    %c0_7 = arith.constant 0 : index
    %c0_8 = arith.constant 0 : index
    %c0_9 = arith.constant 0 : index
    %c0_10 = arith.constant 0 : index
    %13 = vector.load %arg1[%c0_7, %c0_8, %c0_9, %c0_10] : memref<32x2x4x9xf32, #tpu.memory_space<vmem>>, vector<8x2x4x9xf32>
    %14 = vector.extract_strided_slice %13 {offsets = [0, 0, 0, 0], sizes = [8, 2, 4, 1], strides = [1, 1, 1, 1]} : vector<8x2x4x9xf32> to vector<8x2x4x1xf32>
    %15 = vector.shape_cast %2 : vector<1x32xf32> to vector<1x1x1x32xf32>
    %16 = vector.broadcast %14 : vector<8x2x4x1xf32> to vector<8x2x4x32xf32>
    %17 = vector.broadcast %15 : vector<1x1x1x32xf32> to vector<8x2x4x32xf32>
    %18 = arith.mulf %16, %17 : vector<8x2x4x32xf32>
    %19 = vector.extract_strided_slice %13 {offsets = [0, 0, 0, 1], sizes = [8, 2, 4, 1], strides = [1, 1, 1, 1]} : vector<8x2x4x9xf32> to vector<8x2x4x1xf32>
    %20 = vector.shape_cast %3 : vector<1x32xf32> to vector<1x1x1x32xf32>
    %21 = vector.broadcast %19 : vector<8x2x4x1xf32> to vector<8x2x4x32xf32>
    %22 = vector.broadcast %20 : vector<1x1x1x32xf32> to vector<8x2x4x32xf32>
    %23 = arith.mulf %21, %22 : vector<8x2x4x32xf32>
    %24 = arith.addf %18, %23 : vector<8x2x4x32xf32>
    %25 = vector.extract_strided_slice %13 {offsets = [0, 0, 0, 2], sizes = [8, 2, 4, 1], strides = [1, 1, 1, 1]} : vector<8x2x4x9xf32> to vector<8x2x4x1xf32>
    %26 = vector.shape_cast %4 : vector<1x32xf32> to vector<1x1x1x32xf32>
    %27 = vector.broadcast %25 : vector<8x2x4x1xf32> to vector<8x2x4x32xf32>
    %28 = vector.broadcast %26 : vector<1x1x1x32xf32> to vector<8x2x4x32xf32>
    %29 = arith.mulf %27, %28 : vector<8x2x4x32xf32>
    %30 = arith.addf %24, %29 : vector<8x2x4x32xf32>
    %31 = vector.extract_strided_slice %13 {offsets = [0, 0, 0, 3], sizes = [8, 2, 4, 1], strides = [1, 1, 1, 1]} : vector<8x2x4x9xf32> to vector<8x2x4x1xf32>
    %32 = vector.shape_cast %5 : vector<1x32xf32> to vector<1x1x1x32xf32>
    %33 = vector.broadcast %31 : vector<8x2x4x1xf32> to vector<8x2x4x32xf32>
    %34 = vector.broadcast %32 : vector<1x1x1x32xf32> to vector<8x2x4x32xf32>
    %35 = arith.mulf %33, %34 : vector<8x2x4x32xf32>
    %36 = arith.addf %30, %35 : vector<8x2x4x32xf32>
    %37 = vector.extract_strided_slice %13 {offsets = [0, 0, 0, 4], sizes = [8, 2, 4, 1], strides = [1, 1, 1, 1]} : vector<8x2x4x9xf32> to vector<8x2x4x1xf32>
    %38 = vector.shape_cast %6 : vector<1x32xf32> to vector<1x1x1x32xf32>
    %39 = vector.broadcast %37 : vector<8x2x4x1xf32> to vector<8x2x4x32xf32>
    %40 = vector.broadcast %38 : vector<1x1x1x32xf32> to vector<8x2x4x32xf32>
    %41 = arith.mulf %39, %40 : vector<8x2x4x32xf32>
    %42 = arith.addf %36, %41 : vector<8x2x4x32xf32>
    %43 = vector.extract_strided_slice %13 {offsets = [0, 0, 0, 5], sizes = [8, 2, 4, 1], strides = [1, 1, 1, 1]} : vector<8x2x4x9xf32> to vector<8x2x4x1xf32>
    %44 = vector.shape_cast %7 : vector<1x32xf32> to vector<1x1x1x32xf32>
    %45 = vector.broadcast %43 : vector<8x2x4x1xf32> to vector<8x2x4x32xf32>
    %46 = vector.broadcast %44 : vector<1x1x1x32xf32> to vector<8x2x4x32xf32>
    %47 = arith.mulf %45, %46 : vector<8x2x4x32xf32>
    %48 = arith.addf %42, %47 : vector<8x2x4x32xf32>
    %49 = vector.extract_strided_slice %13 {offsets = [0, 0, 0, 6], sizes = [8, 2, 4, 1], strides = [1, 1, 1, 1]} : vector<8x2x4x9xf32> to vector<8x2x4x1xf32>
    %50 = vector.shape_cast %8 : vector<1x32xf32> to vector<1x1x1x32xf32>
    %51 = vector.broadcast %49 : vector<8x2x4x1xf32> to vector<8x2x4x32xf32>
    %52 = vector.broadcast %50 : vector<1x1x1x32xf32> to vector<8x2x4x32xf32>
    %53 = arith.mulf %51, %52 : vector<8x2x4x32xf32>
    %54 = arith.addf %48, %53 : vector<8x2x4x32xf32>
    %55 = vector.extract_strided_slice %13 {offsets = [0, 0, 0, 7], sizes = [8, 2, 4, 1], strides = [1, 1, 1, 1]} : vector<8x2x4x9xf32> to vector<8x2x4x1xf32>
    %56 = vector.shape_cast %9 : vector<1x32xf32> to vector<1x1x1x32xf32>
    %57 = vector.broadcast %55 : vector<8x2x4x1xf32> to vector<8x2x4x32xf32>
    %58 = vector.broadcast %56 : vector<1x1x1x32xf32> to vector<8x2x4x32xf32>
    %59 = arith.mulf %57, %58 : vector<8x2x4x32xf32>
    %60 = arith.addf %54, %59 : vector<8x2x4x32xf32>
    %61 = vector.extract_strided_slice %13 {offsets = [0, 0, 0, 8], sizes = [8, 2, 4, 1], strides = [1, 1, 1, 1]} : vector<8x2x4x9xf32> to vector<8x2x4x1xf32>
    %62 = vector.shape_cast %10 : vector<1x32xf32> to vector<1x1x1x32xf32>
    %63 = vector.broadcast %61 : vector<8x2x4x1xf32> to vector<8x2x4x32xf32>
    %64 = vector.broadcast %62 : vector<1x1x1x32xf32> to vector<8x2x4x32xf32>
    %65 = arith.mulf %63, %64 : vector<8x2x4x32xf32>
    %66 = arith.addf %60, %65 : vector<8x2x4x32xf32>
    %67 = vector.extract_strided_slice %66 {offsets = [0, 0, 0, 0], sizes = [2, 2, 4, 32], strides = [1, 1, 1, 1]} : vector<8x2x4x32xf32> to vector<2x2x4x32xf32>
    %68 = vector.extract_strided_slice %66 {offsets = [2, 0, 0, 0], sizes = [2, 2, 4, 32], strides = [1, 1, 1, 1]} : vector<8x2x4x32xf32> to vector<2x2x4x32xf32>
    %69 = arith.maximumf %67, %68 : vector<2x2x4x32xf32>
    %70 = vector.extract_strided_slice %66 {offsets = [4, 0, 0, 0], sizes = [2, 2, 4, 32], strides = [1, 1, 1, 1]} : vector<8x2x4x32xf32> to vector<2x2x4x32xf32>
    %71 = arith.maximumf %69, %70 : vector<2x2x4x32xf32>
    %72 = vector.extract_strided_slice %66 {offsets = [6, 0, 0, 0], sizes = [2, 2, 4, 32], strides = [1, 1, 1, 1]} : vector<8x2x4x32xf32> to vector<2x2x4x32xf32>
    %73 = arith.maximumf %71, %72 : vector<2x2x4x32xf32>
    %74 = vector.shape_cast %1 : vector<1x32xf32> to vector<1x1x1x32xf32>
    %75 = vector.broadcast %74 : vector<1x1x1x32xf32> to vector<2x2x4x32xf32>
    %76 = arith.addf %73, %75 : vector<2x2x4x32xf32>
    %cst_11 = arith.constant 0.000000e+00 : f32
    %77 = vector.broadcast %cst_11 : f32 to vector<2x2x4x32xf32>
    %78 = arith.maximumf %76, %77 : vector<2x2x4x32xf32>
    %c0_12 = arith.constant 0 : index
    %c0_13 = arith.constant 0 : index
    %c0_14 = arith.constant 0 : index
    %c0_15 = arith.constant 0 : index
    %79 = vector.load %arg13[%c0_12, %c0_13, %c0_14, %c0_15] : memref<8x3x5x32xf32, #tpu.memory_space<vmem>>, vector<2x2x4x32xf32>
    tpu.vector_store %arg13[%c0_12, %c0_13, %c0_14, %c0_15], %78 {strides = array<i32>} : memref<8x3x5x32xf32, #tpu.memory_space<vmem>>, vector<2x2x4x32xf32>,
    %c8 = arith.constant 8 : index
    %c0_16 = arith.constant 0 : index
    %c0_17 = arith.constant 0 : index
    %c0_18 = arith.constant 0 : index
    %80 = vector.load %arg1[%c8, %c0_16, %c0_17, %c0_18] : memref<32x2x4x9xf32, #tpu.memory_space<vmem>>, vector<8x2x4x9xf32>
    %81 = vector.extract_strided_slice %80 {offsets = [0, 0, 0, 0], sizes = [8, 2, 4, 1], strides = [1, 1, 1, 1]} : vector<8x2x4x9xf32> to vector<8x2x4x1xf32>
    %82 = vector.shape_cast %2 : vector<1x32xf32> to vector<1x1x1x32xf32>
    %83 = vector.broadcast %81 : vector<8x2x4x1xf32> to vector<8x2x4x32xf32>
    %84 = vector.broadcast %82 : vector<1x1x1x32xf32> to vector<8x2x4x32xf32>
    %85 = arith.mulf %83, %84 : vector<8x2x4x32xf32>
    %86 = vector.extract_strided_slice %80 {offsets = [0, 0, 0, 1], sizes = [8, 2, 4, 1], strides = [1, 1, 1, 1]} : vector<8x2x4x9xf32> to vector<8x2x4x1xf32>
    %87 = vector.shape_cast %3 : vector<1x32xf32> to vector<1x1x1x32xf32>
    %88 = vector.broadcast %86 : vector<8x2x4x1xf32> to vector<8x2x4x32xf32>
    %89 = vector.broadcast %87 : vector<1x1x1x32xf32> to vector<8x2x4x32xf32>
    %90 = arith.mulf %88, %89 : vector<8x2x4x32xf32>
    %91 = arith.addf %85, %90 : vector<8x2x4x32xf32>
    %92 = vector.extract_strided_slice %80 {offsets = [0, 0, 0, 2], sizes = [8, 2, 4, 1], strides = [1, 1, 1, 1]} : vector<8x2x4x9xf32> to vector<8x2x4x1xf32>
    %93 = vector.shape_cast %4 : vector<1x32xf32> to vector<1x1x1x32xf32>
    %94 = vector.broadcast %92 : vector<8x2x4x1xf32> to vector<8x2x4x32xf32>
    %95 = vector.broadcast %93 : vector<1x1x1x32xf32> to vector<8x2x4x32xf32>
    %96 = arith.mulf %94, %95 : vector<8x2x4x32xf32>
    %97 = arith.addf %91, %96 : vector<8x2x4x32xf32>
    %98 = vector.extract_strided_slice %80 {offsets = [0, 0, 0, 3], sizes = [8, 2, 4, 1], strides = [1, 1, 1, 1]} : vector<8x2x4x9xf32> to vector<8x2x4x1xf32>
    %99 = vector.shape_cast %5 : vector<1x32xf32> to vector<1x1x1x32xf32>
    %100 = vector.broadcast %98 : vector<8x2x4x1xf32> to vector<8x2x4x32xf32>
    %101 = vector.broadcast %99 : vector<1x1x1x32xf32> to vector<8x2x4x32xf32>
    %102 = arith.mulf %100, %101 : vector<8x2x4x32xf32>
    %103 = arith.addf %97, %102 : vector<8x2x4x32xf32>
    %104 = vector.extract_strided_slice %80 {offsets = [0, 0, 0, 4], sizes = [8, 2, 4, 1], strides = [1, 1, 1, 1]} : vector<8x2x4x9xf32> to vector<8x2x4x1xf32>
    %105 = vector.shape_cast %6 : vector<1x32xf32> to vector<1x1x1x32xf32>
    %106 = vector.broadcast %104 : vector<8x2x4x1xf32> to vector<8x2x4x32xf32>
    %107 = vector.broadcast %105 : vector<1x1x1x32xf32> to vector<8x2x4x32xf32>
    %108 = arith.mulf %106, %107 : vector<8x2x4x32xf32>
    %109 = arith.addf %103, %108 : vector<8x2x4x32xf32>
    %110 = vector.extract_strided_slice %80 {offsets = [0, 0, 0, 5], sizes = [8, 2, 4, 1], strides = [1, 1, 1, 1]} : vector<8x2x4x9xf32> to vector<8x2x4x1xf32>
    %111 = vector.shape_cast %7 : vector<1x32xf32> to vector<1x1x1x32xf32>
    %112 = vector.broadcast %110 : vector<8x2x4x1xf32> to vector<8x2x4x32xf32>
    %113 = vector.broadcast %111 : vector<1x1x1x32xf32> to vector<8x2x4x32xf32>
    %114 = arith.mulf %112, %113 : vector<8x2x4x32xf32>
    %115 = arith.addf %109, %114 : vector<8x2x4x32xf32>
    %116 = vector.extract_strided_slice %80 {offsets = [0, 0, 0, 6], sizes = [8, 2, 4, 1], strides = [1, 1, 1, 1]} : vector<8x2x4x9xf32> to vector<8x2x4x1xf32>
    %117 = vector.shape_cast %8 : vector<1x32xf32> to vector<1x1x1x32xf32>
    %118 = vector.broadcast %116 : vector<8x2x4x1xf32> to vector<8x2x4x32xf32>
    %119 = vector.broadcast %117 : vector<1x1x1x32xf32> to vector<8x2x4x32xf32>
    %120 = arith.mulf %118, %119 : vector<8x2x4x32xf32>
    %121 = arith.addf %115, %120 : vector<8x2x4x32xf32>
    %122 = vector.extract_strided_slice %80 {offsets = [0, 0, 0, 7], sizes = [8, 2, 4, 1], strides = [1, 1, 1, 1]} : vector<8x2x4x9xf32> to vector<8x2x4x1xf32>
    %123 = vector.shape_cast %9 : vector<1x32xf32> to vector<1x1x1x32xf32>
    %124 = vector.broadcast %122 : vector<8x2x4x1xf32> to vector<8x2x4x32xf32>
    %125 = vector.broadcast %123 : vector<1x1x1x32xf32> to vector<8x2x4x32xf32>
    %126 = arith.mulf %124, %125 : vector<8x2x4x32xf32>
    %127 = arith.addf %121, %126 : vector<8x2x4x32xf32>
    %128 = vector.extract_strided_slice %80 {offsets = [0, 0, 0, 8], sizes = [8, 2, 4, 1], strides = [1, 1, 1, 1]} : vector<8x2x4x9xf32> to vector<8x2x4x1xf32>
    %129 = vector.shape_cast %10 : vector<1x32xf32> to vector<1x1x1x32xf32>
    %130 = vector.broadcast %128 : vector<8x2x4x1xf32> to vector<8x2x4x32xf32>
    %131 = vector.broadcast %129 : vector<1x1x1x32xf32> to vector<8x2x4x32xf32>
    %132 = arith.mulf %130, %131 : vector<8x2x4x32xf32>
    %133 = arith.addf %127, %132 : vector<8x2x4x32xf32>
    %134 = vector.extract_strided_slice %133 {offsets = [0, 0, 0, 0], sizes = [2, 2, 4, 32], strides = [1, 1, 1, 1]} : vector<8x2x4x32xf32> to vector<2x2x4x32xf32>
    %135 = vector.extract_strided_slice %133 {offsets = [2, 0, 0, 0], sizes = [2, 2, 4, 32], strides = [1, 1, 1, 1]} : vector<8x2x4x32xf32> to vector<2x2x4x32xf32>
    %136 = arith.maximumf %134, %135 : vector<2x2x4x32xf32>
    %137 = vector.extract_strided_slice %133 {offsets = [4, 0, 0, 0], sizes = [2, 2, 4, 32], strides = [1, 1, 1, 1]} : vector<8x2x4x32xf32> to vector<2x2x4x32xf32>
    %138 = arith.maximumf %136, %137 : vector<2x2x4x32xf32>
    %139 = vector.extract_strided_slice %133 {offsets = [6, 0, 0, 0], sizes = [2, 2, 4, 32], strides = [1, 1, 1, 1]} : vector<8x2x4x32xf32> to vector<2x2x4x32xf32>
    %140 = arith.maximumf %138, %139 : vector<2x2x4x32xf32>
    %141 = vector.shape_cast %1 : vector<1x32xf32> to vector<1x1x1x32xf32>
    %142 = vector.broadcast %141 : vector<1x1x1x32xf32> to vector<2x2x4x32xf32>
    %143 = arith.addf %140, %142 : vector<2x2x4x32xf32>
    %cst_19 = arith.constant 0.000000e+00 : f32
    %144 = vector.broadcast %cst_19 : f32 to vector<2x2x4x32xf32>
    %145 = arith.maximumf %143, %144 : vector<2x2x4x32xf32>
    %c2 = arith.constant 2 : index
    %c0_20 = arith.constant 0 : index
    %c1 = arith.constant 1 : index
    %c0_21 = arith.constant 0 : index
    %146 = vector.load %arg13[%c2, %c0_20, %c1, %c0_21] : memref<8x3x5x32xf32, #tpu.memory_space<vmem>>, vector<2x2x4x32xf32>
    tpu.vector_store %arg13[%c2, %c0_20, %c1, %c0_21], %145 {strides = array<i32>} : memref<8x3x5x32xf32, #tpu.memory_space<vmem>>, vector<2x2x4x32xf32>,
    %c16 = arith.constant 16 : index
    %c0_22 = arith.constant 0 : index
    %c0_23 = arith.constant 0 : index
    %c0_24 = arith.constant 0 : index
    %147 = vector.load %arg1[%c16, %c0_22, %c0_23, %c0_24] : memref<32x2x4x9xf32, #tpu.memory_space<vmem>>, vector<8x2x4x9xf32>
    %148 = vector.extract_strided_slice %147 {offsets = [0, 0, 0, 0], sizes = [8, 2, 4, 1], strides = [1, 1, 1, 1]} : vector<8x2x4x9xf32> to vector<8x2x4x1xf32>
    %149 = vector.shape_cast %2 : vector<1x32xf32> to vector<1x1x1x32xf32>
    %150 = vector.broadcast %148 : vector<8x2x4x1xf32> to vector<8x2x4x32xf32>
    %151 = vector.broadcast %149 : vector<1x1x1x32xf32> to vector<8x2x4x32xf32>
    %152 = arith.mulf %150, %151 : vector<8x2x4x32xf32>
    %153 = vector.extract_strided_slice %147 {offsets = [0, 0, 0, 1], sizes = [8, 2, 4, 1], strides = [1, 1, 1, 1]} : vector<8x2x4x9xf32> to vector<8x2x4x1xf32>
    %154 = vector.shape_cast %3 : vector<1x32xf32> to vector<1x1x1x32xf32>
    %155 = vector.broadcast %153 : vector<8x2x4x1xf32> to vector<8x2x4x32xf32>
    %156 = vector.broadcast %154 : vector<1x1x1x32xf32> to vector<8x2x4x32xf32>
    %157 = arith.mulf %155, %156 : vector<8x2x4x32xf32>
    %158 = arith.addf %152, %157 : vector<8x2x4x32xf32>
    %159 = vector.extract_strided_slice %147 {offsets = [0, 0, 0, 2], sizes = [8, 2, 4, 1], strides = [1, 1, 1, 1]} : vector<8x2x4x9xf32> to vector<8x2x4x1xf32>
    %160 = vector.shape_cast %4 : vector<1x32xf32> to vector<1x1x1x32xf32>
    %161 = vector.broadcast %159 : vector<8x2x4x1xf32> to vector<8x2x4x32xf32>
    %162 = vector.broadcast %160 : vector<1x1x1x32xf32> to vector<8x2x4x32xf32>
    %163 = arith.mulf %161, %162 : vector<8x2x4x32xf32>
    %164 = arith.addf %158, %163 : vector<8x2x4x32xf32>
    %165 = vector.extract_strided_slice %147 {offsets = [0, 0, 0, 3], sizes = [8, 2, 4, 1], strides = [1, 1, 1, 1]} : vector<8x2x4x9xf32> to vector<8x2x4x1xf32>
    %166 = vector.shape_cast %5 : vector<1x32xf32> to vector<1x1x1x32xf32>
    %167 = vector.broadcast %165 : vector<8x2x4x1xf32> to vector<8x2x4x32xf32>
    %168 = vector.broadcast %166 : vector<1x1x1x32xf32> to vector<8x2x4x32xf32>
    %169 = arith.mulf %167, %168 : vector<8x2x4x32xf32>
    %170 = arith.addf %164, %169 : vector<8x2x4x32xf32>
    %171 = vector.extract_strided_slice %147 {offsets = [0, 0, 0, 4], sizes = [8, 2, 4, 1], strides = [1, 1, 1, 1]} : vector<8x2x4x9xf32> to vector<8x2x4x1xf32>
    %172 = vector.shape_cast %6 : vector<1x32xf32> to vector<1x1x1x32xf32>
    %173 = vector.broadcast %171 : vector<8x2x4x1xf32> to vector<8x2x4x32xf32>
    %174 = vector.broadcast %172 : vector<1x1x1x32xf32> to vector<8x2x4x32xf32>
    %175 = arith.mulf %173, %174 : vector<8x2x4x32xf32>
    %176 = arith.addf %170, %175 : vector<8x2x4x32xf32>
    %177 = vector.extract_strided_slice %147 {offsets = [0, 0, 0, 5], sizes = [8, 2, 4, 1], strides = [1, 1, 1, 1]} : vector<8x2x4x9xf32> to vector<8x2x4x1xf32>
    %178 = vector.shape_cast %7 : vector<1x32xf32> to vector<1x1x1x32xf32>
    %179 = vector.broadcast %177 : vector<8x2x4x1xf32> to vector<8x2x4x32xf32>
    %180 = vector.broadcast %178 : vector<1x1x1x32xf32> to vector<8x2x4x32xf32>
    %181 = arith.mulf %179, %180 : vector<8x2x4x32xf32>
    %182 = arith.addf %176, %181 : vector<8x2x4x32xf32>
    %183 = vector.extract_strided_slice %147 {offsets = [0, 0, 0, 6], sizes = [8, 2, 4, 1], strides = [1, 1, 1, 1]} : vector<8x2x4x9xf32> to vector<8x2x4x1xf32>
    %184 = vector.shape_cast %8 : vector<1x32xf32> to vector<1x1x1x32xf32>
    %185 = vector.broadcast %183 : vector<8x2x4x1xf32> to vector<8x2x4x32xf32>
    %186 = vector.broadcast %184 : vector<1x1x1x32xf32> to vector<8x2x4x32xf32>
    %187 = arith.mulf %185, %186 : vector<8x2x4x32xf32>
    %188 = arith.addf %182, %187 : vector<8x2x4x32xf32>
    %189 = vector.extract_strided_slice %147 {offsets = [0, 0, 0, 7], sizes = [8, 2, 4, 1], strides = [1, 1, 1, 1]} : vector<8x2x4x9xf32> to vector<8x2x4x1xf32>
    %190 = vector.shape_cast %9 : vector<1x32xf32> to vector<1x1x1x32xf32>
    %191 = vector.broadcast %189 : vector<8x2x4x1xf32> to vector<8x2x4x32xf32>
    %192 = vector.broadcast %190 : vector<1x1x1x32xf32> to vector<8x2x4x32xf32>
    %193 = arith.mulf %191, %192 : vector<8x2x4x32xf32>
    %194 = arith.addf %188, %193 : vector<8x2x4x32xf32>
    %195 = vector.extract_strided_slice %147 {offsets = [0, 0, 0, 8], sizes = [8, 2, 4, 1], strides = [1, 1, 1, 1]} : vector<8x2x4x9xf32> to vector<8x2x4x1xf32>
    %196 = vector.shape_cast %10 : vector<1x32xf32> to vector<1x1x1x32xf32>
    %197 = vector.broadcast %195 : vector<8x2x4x1xf32> to vector<8x2x4x32xf32>
    %198 = vector.broadcast %196 : vector<1x1x1x32xf32> to vector<8x2x4x32xf32>
    %199 = arith.mulf %197, %198 : vector<8x2x4x32xf32>
    %200 = arith.addf %194, %199 : vector<8x2x4x32xf32>
    %201 = vector.extract_strided_slice %200 {offsets = [0, 0, 0, 0], sizes = [2, 2, 4, 32], strides = [1, 1, 1, 1]} : vector<8x2x4x32xf32> to vector<2x2x4x32xf32>
    %202 = vector.extract_strided_slice %200 {offsets = [2, 0, 0, 0], sizes = [2, 2, 4, 32], strides = [1, 1, 1, 1]} : vector<8x2x4x32xf32> to vector<2x2x4x32xf32>
    %203 = arith.maximumf %201, %202 : vector<2x2x4x32xf32>
    %204 = vector.extract_strided_slice %200 {offsets = [4, 0, 0, 0], sizes = [2, 2, 4, 32], strides = [1, 1, 1, 1]} : vector<8x2x4x32xf32> to vector<2x2x4x32xf32>
    %205 = arith.maximumf %203, %204 : vector<2x2x4x32xf32>
    %206 = vector.extract_strided_slice %200 {offsets = [6, 0, 0, 0], sizes = [2, 2, 4, 32], strides = [1, 1, 1, 1]} : vector<8x2x4x32xf32> to vector<2x2x4x32xf32>
    %207 = arith.maximumf %205, %206 : vector<2x2x4x32xf32>
    %208 = vector.shape_cast %1 : vector<1x32xf32> to vector<1x1x1x32xf32>
    %209 = vector.broadcast %208 : vector<1x1x1x32xf32> to vector<2x2x4x32xf32>
    %210 = arith.addf %207, %209 : vector<2x2x4x32xf32>
    %cst_25 = arith.constant 0.000000e+00 : f32
    %211 = vector.broadcast %cst_25 : f32 to vector<2x2x4x32xf32>
    %212 = arith.maximumf %210, %211 : vector<2x2x4x32xf32>
    %c4 = arith.constant 4 : index
    %c1_26 = arith.constant 1 : index
    %c0_27 = arith.constant 0 : index
    %c0_28 = arith.constant 0 : index
    %213 = vector.load %arg13[%c4, %c1_26, %c0_27, %c0_28] : memref<8x3x5x32xf32, #tpu.memory_space<vmem>>, vector<2x2x4x32xf32>
    tpu.vector_store %arg13[%c4, %c1_26, %c0_27, %c0_28], %212 {strides = array<i32>} : memref<8x3x5x32xf32, #tpu.memory_space<vmem>>, vector<2x2x4x32xf32>,
    %c24 = arith.constant 24 : index
    %c0_29 = arith.constant 0 : index
    %c0_30 = arith.constant 0 : index
    %c0_31 = arith.constant 0 : index
    %214 = vector.load %arg1[%c24, %c0_29, %c0_30, %c0_31] : memref<32x2x4x9xf32, #tpu.memory_space<vmem>>, vector<8x2x4x9xf32>
    %215 = vector.extract_strided_slice %214 {offsets = [0, 0, 0, 0], sizes = [8, 2, 4, 1], strides = [1, 1, 1, 1]} : vector<8x2x4x9xf32> to vector<8x2x4x1xf32>
    %216 = vector.shape_cast %2 : vector<1x32xf32> to vector<1x1x1x32xf32>
    %217 = vector.broadcast %215 : vector<8x2x4x1xf32> to vector<8x2x4x32xf32>
    %218 = vector.broadcast %216 : vector<1x1x1x32xf32> to vector<8x2x4x32xf32>
    %219 = arith.mulf %217, %218 : vector<8x2x4x32xf32>
    %220 = vector.extract_strided_slice %214 {offsets = [0, 0, 0, 1], sizes = [8, 2, 4, 1], strides = [1, 1, 1, 1]} : vector<8x2x4x9xf32> to vector<8x2x4x1xf32>
    %221 = vector.shape_cast %3 : vector<1x32xf32> to vector<1x1x1x32xf32>
    %222 = vector.broadcast %220 : vector<8x2x4x1xf32> to vector<8x2x4x32xf32>
    %223 = vector.broadcast %221 : vector<1x1x1x32xf32> to vector<8x2x4x32xf32>
    %224 = arith.mulf %222, %223 : vector<8x2x4x32xf32>
    %225 = arith.addf %219, %224 : vector<8x2x4x32xf32>
    %226 = vector.extract_strided_slice %214 {offsets = [0, 0, 0, 2], sizes = [8, 2, 4, 1], strides = [1, 1, 1, 1]} : vector<8x2x4x9xf32> to vector<8x2x4x1xf32>
    %227 = vector.shape_cast %4 : vector<1x32xf32> to vector<1x1x1x32xf32>
    %228 = vector.broadcast %226 : vector<8x2x4x1xf32> to vector<8x2x4x32xf32>
    %229 = vector.broadcast %227 : vector<1x1x1x32xf32> to vector<8x2x4x32xf32>
    %230 = arith.mulf %228, %229 : vector<8x2x4x32xf32>
    %231 = arith.addf %225, %230 : vector<8x2x4x32xf32>
    %232 = vector.extract_strided_slice %214 {offsets = [0, 0, 0, 3], sizes = [8, 2, 4, 1], strides = [1, 1, 1, 1]} : vector<8x2x4x9xf32> to vector<8x2x4x1xf32>
    %233 = vector.shape_cast %5 : vector<1x32xf32> to vector<1x1x1x32xf32>
    %234 = vector.broadcast %232 : vector<8x2x4x1xf32> to vector<8x2x4x32xf32>
    %235 = vector.broadcast %233 : vector<1x1x1x32xf32> to vector<8x2x4x32xf32>
    %236 = arith.mulf %234, %235 : vector<8x2x4x32xf32>
    %237 = arith.addf %231, %236 : vector<8x2x4x32xf32>
    %238 = vector.extract_strided_slice %214 {offsets = [0, 0, 0, 4], sizes = [8, 2, 4, 1], strides = [1, 1, 1, 1]} : vector<8x2x4x9xf32> to vector<8x2x4x1xf32>
    %239 = vector.shape_cast %6 : vector<1x32xf32> to vector<1x1x1x32xf32>
    %240 = vector.broadcast %238 : vector<8x2x4x1xf32> to vector<8x2x4x32xf32>
    %241 = vector.broadcast %239 : vector<1x1x1x32xf32> to vector<8x2x4x32xf32>
    %242 = arith.mulf %240, %241 : vector<8x2x4x32xf32>
    %243 = arith.addf %237, %242 : vector<8x2x4x32xf32>
    %244 = vector.extract_strided_slice %214 {offsets = [0, 0, 0, 5], sizes = [8, 2, 4, 1], strides = [1, 1, 1, 1]} : vector<8x2x4x9xf32> to vector<8x2x4x1xf32>
    %245 = vector.shape_cast %7 : vector<1x32xf32> to vector<1x1x1x32xf32>
    %246 = vector.broadcast %244 : vector<8x2x4x1xf32> to vector<8x2x4x32xf32>
    %247 = vector.broadcast %245 : vector<1x1x1x32xf32> to vector<8x2x4x32xf32>
    %248 = arith.mulf %246, %247 : vector<8x2x4x32xf32>
    %249 = arith.addf %243, %248 : vector<8x2x4x32xf32>
    %250 = vector.extract_strided_slice %214 {offsets = [0, 0, 0, 6], sizes = [8, 2, 4, 1], strides = [1, 1, 1, 1]} : vector<8x2x4x9xf32> to vector<8x2x4x1xf32>
    %251 = vector.shape_cast %8 : vector<1x32xf32> to vector<1x1x1x32xf32>
    %252 = vector.broadcast %250 : vector<8x2x4x1xf32> to vector<8x2x4x32xf32>
    %253 = vector.broadcast %251 : vector<1x1x1x32xf32> to vector<8x2x4x32xf32>
    %254 = arith.mulf %252, %253 : vector<8x2x4x32xf32>
    %255 = arith.addf %249, %254 : vector<8x2x4x32xf32>
    %256 = vector.extract_strided_slice %214 {offsets = [0, 0, 0, 7], sizes = [8, 2, 4, 1], strides = [1, 1, 1, 1]} : vector<8x2x4x9xf32> to vector<8x2x4x1xf32>
    %257 = vector.shape_cast %9 : vector<1x32xf32> to vector<1x1x1x32xf32>
    %258 = vector.broadcast %256 : vector<8x2x4x1xf32> to vector<8x2x4x32xf32>
    %259 = vector.broadcast %257 : vector<1x1x1x32xf32> to vector<8x2x4x32xf32>
    %260 = arith.mulf %258, %259 : vector<8x2x4x32xf32>
    %261 = arith.addf %255, %260 : vector<8x2x4x32xf32>
    %262 = vector.extract_strided_slice %214 {offsets = [0, 0, 0, 8], sizes = [8, 2, 4, 1], strides = [1, 1, 1, 1]} : vector<8x2x4x9xf32> to vector<8x2x4x1xf32>
    %263 = vector.shape_cast %10 : vector<1x32xf32> to vector<1x1x1x32xf32>
    %264 = vector.broadcast %262 : vector<8x2x4x1xf32> to vector<8x2x4x32xf32>
    %265 = vector.broadcast %263 : vector<1x1x1x32xf32> to vector<8x2x4x32xf32>
    %266 = arith.mulf %264, %265 : vector<8x2x4x32xf32>
    %267 = arith.addf %261, %266 : vector<8x2x4x32xf32>
    %268 = vector.extract_strided_slice %267 {offsets = [0, 0, 0, 0], sizes = [2, 2, 4, 32], strides = [1, 1, 1, 1]} : vector<8x2x4x32xf32> to vector<2x2x4x32xf32>
    %269 = vector.extract_strided_slice %267 {offsets = [2, 0, 0, 0], sizes = [2, 2, 4, 32], strides = [1, 1, 1, 1]} : vector<8x2x4x32xf32> to vector<2x2x4x32xf32>
    %270 = arith.maximumf %268, %269 : vector<2x2x4x32xf32>
    %271 = vector.extract_strided_slice %267 {offsets = [4, 0, 0, 0], sizes = [2, 2, 4, 32], strides = [1, 1, 1, 1]} : vector<8x2x4x32xf32> to vector<2x2x4x32xf32>
    %272 = arith.maximumf %270, %271 : vector<2x2x4x32xf32>
    %273 = vector.extract_strided_slice %267 {offsets = [6, 0, 0, 0], sizes = [2, 2, 4, 32], strides = [1, 1, 1, 1]} : vector<8x2x4x32xf32> to vector<2x2x4x32xf32>
    %274 = arith.maximumf %272, %273 : vector<2x2x4x32xf32>
    %275 = vector.shape_cast %1 : vector<1x32xf32> to vector<1x1x1x32xf32>
    %276 = vector.broadcast %275 : vector<1x1x1x32xf32> to vector<2x2x4x32xf32>
    %277 = arith.addf %274, %276 : vector<2x2x4x32xf32>
    %cst_32 = arith.constant 0.000000e+00 : f32
    %278 = vector.broadcast %cst_32 : f32 to vector<2x2x4x32xf32>
    %279 = arith.maximumf %277, %278 : vector<2x2x4x32xf32>
    %c6 = arith.constant 6 : index
    %c1_33 = arith.constant 1 : index
    %c1_34 = arith.constant 1 : index
    %c0_35 = arith.constant 0 : index
    %280 = vector.load %arg13[%c6, %c1_33, %c1_34, %c0_35] : memref<8x3x5x32xf32, #tpu.memory_space<vmem>>, vector<2x2x4x32xf32>
    tpu.vector_store %arg13[%c6, %c1_33, %c1_34, %c0_35], %279 {strides = array<i32>} : memref<8x3x5x32xf32, #tpu.memory_space<vmem>>, vector<2x2x4x32xf32>,
    %c6_36 = arith.constant 6 : index
    %c0_37 = arith.constant 0 : index
    %c0_38 = arith.constant 0 : index
    %c0_39 = arith.constant 0 : index
    %281 = vector.load %arg13[%c6_36, %c0_37, %c0_38, %c0_39] : memref<8x3x5x32xf32, #tpu.memory_space<vmem>>, vector<2x2x4x32xf32>
    %282 = vector.extract_strided_slice %281 {offsets = [0, 0, 0, 0], sizes = [1, 1, 4, 32], strides = [1, 1, 1, 1]} : vector<2x2x4x32xf32> to vector<1x1x4x32xf32>
    %283 = vector.shape_cast %282 : vector<1x1x4x32xf32> to vector<4x32xf32>
    %c0_40 = arith.constant 0 : index
    %c0_41 = arith.constant 0 : index
    %284 = vector.load %arg14[%c0_40, %c0_41] : memref<64x288xf32, #tpu.memory_space<vmem>>, vector<4x32xf32>
    tpu.vector_store %arg14[%c0_40, %c0_41], %283 {strides = array<i32>} : memref<64x288xf32, #tpu.memory_space<vmem>>, vector<4x32xf32>,
    %285 = vector.extract_strided_slice %281 {offsets = [0, 1, 0, 0], sizes = [1, 1, 4, 32], strides = [1, 1, 1, 1]} : vector<2x2x4x32xf32> to vector<1x1x4x32xf32>
    %286 = vector.shape_cast %285 : vector<1x1x4x32xf32> to vector<4x32xf32>
    %c4_42 = arith.constant 4 : index
    %c0_43 = arith.constant 0 : index
    %287 = vector.load %arg14[%c4_42, %c0_43] : memref<64x288xf32, #tpu.memory_space<vmem>>, vector<4x32xf32>
    tpu.vector_store %arg14[%c4_42, %c0_43], %286 {strides = array<i32>} : memref<64x288xf32, #tpu.memory_space<vmem>>, vector<4x32xf32>,
    %288 = vector.extract_strided_slice %281 {offsets = [1, 0, 0, 0], sizes = [1, 1, 4, 32], strides = [1, 1, 1, 1]} : vector<2x2x4x32xf32> to vector<1x1x4x32xf32>
    %289 = vector.shape_cast %288 : vector<1x1x4x32xf32> to vector<4x32xf32>
    %c8_44 = arith.constant 8 : index
    %c0_45 = arith.constant 0 : index
    %290 = vector.load %arg14[%c8_44, %c0_45] : memref<64x288xf32, #tpu.memory_space<vmem>>, vector<4x32xf32>
    tpu.vector_store %arg14[%c8_44, %c0_45], %289 {strides = array<i32>} : memref<64x288xf32, #tpu.memory_space<vmem>>, vector<4x32xf32>,
    %291 = vector.extract_strided_slice %281 {offsets = [1, 1, 0, 0], sizes = [1, 1, 4, 32], strides = [1, 1, 1, 1]} : vector<2x2x4x32xf32> to vector<1x1x4x32xf32>
    %292 = vector.shape_cast %291 : vector<1x1x4x32xf32> to vector<4x32xf32>
    %c12 = arith.constant 12 : index
    %c0_46 = arith.constant 0 : index
    %293 = vector.load %arg14[%c12, %c0_46] : memref<64x288xf32, #tpu.memory_space<vmem>>, vector<4x32xf32>
    tpu.vector_store %arg14[%c12, %c0_46], %292 {strides = array<i32>} : memref<64x288xf32, #tpu.memory_space<vmem>>, vector<4x32xf32>,
    %c4_47 = arith.constant 4 : index
    %c0_48 = arith.constant 0 : index
    %c0_49 = arith.constant 0 : index
    %c0_50 = arith.constant 0 : index
    %294 = vector.load %arg13[%c4_47, %c0_48, %c0_49, %c0_50] : memref<8x3x5x32xf32, #tpu.memory_space<vmem>>, vector<2x2x4x32xf32>
    %295 = vector.extract_strided_slice %294 {offsets = [0, 0, 0, 0], sizes = [1, 1, 4, 32], strides = [1, 1, 1, 1]} : vector<2x2x4x32xf32> to vector<1x1x4x32xf32>
    %296 = vector.shape_cast %295 : vector<1x1x4x32xf32> to vector<4x32xf32>
    %c0_51 = arith.constant 0 : index
    %c32 = arith.constant 32 : index
    %297 = vector.load %arg14[%c0_51, %c32] : memref<64x288xf32, #tpu.memory_space<vmem>>, vector<4x32xf32>
    tpu.vector_store %arg14[%c0_51, %c32], %296 {strides = array<i32>} : memref<64x288xf32, #tpu.memory_space<vmem>>, vector<4x32xf32>,
    %298 = vector.extract_strided_slice %294 {offsets = [0, 1, 0, 0], sizes = [1, 1, 4, 32], strides = [1, 1, 1, 1]} : vector<2x2x4x32xf32> to vector<1x1x4x32xf32>
    %299 = vector.shape_cast %298 : vector<1x1x4x32xf32> to vector<4x32xf32>
    %c4_52 = arith.constant 4 : index
    %c32_53 = arith.constant 32 : index
    %300 = vector.load %arg14[%c4_52, %c32_53] : memref<64x288xf32, #tpu.memory_space<vmem>>, vector<4x32xf32>
    tpu.vector_store %arg14[%c4_52, %c32_53], %299 {strides = array<i32>} : memref<64x288xf32, #tpu.memory_space<vmem>>, vector<4x32xf32>,
    %301 = vector.extract_strided_slice %294 {offsets = [1, 0, 0, 0], sizes = [1, 1, 4, 32], strides = [1, 1, 1, 1]} : vector<2x2x4x32xf32> to vector<1x1x4x32xf32>
    %302 = vector.shape_cast %301 : vector<1x1x4x32xf32> to vector<4x32xf32>
    %c8_54 = arith.constant 8 : index
    %c32_55 = arith.constant 32 : index
    %303 = vector.load %arg14[%c8_54, %c32_55] : memref<64x288xf32, #tpu.memory_space<vmem>>, vector<4x32xf32>
    tpu.vector_store %arg14[%c8_54, %c32_55], %302 {strides = array<i32>} : memref<64x288xf32, #tpu.memory_space<vmem>>, vector<4x32xf32>,
    %304 = vector.extract_strided_slice %294 {offsets = [1, 1, 0, 0], sizes = [1, 1, 4, 32], strides = [1, 1, 1, 1]} : vector<2x2x4x32xf32> to vector<1x1x4x32xf32>
    %305 = vector.shape_cast %304 : vector<1x1x4x32xf32> to vector<4x32xf32>
    %c12_56 = arith.constant 12 : index
    %c32_57 = arith.constant 32 : index
    %306 = vector.load %arg14[%c12_56, %c32_57] : memref<64x288xf32, #tpu.memory_space<vmem>>, vector<4x32xf32>
    tpu.vector_store %arg14[%c12_56, %c32_57], %305 {strides = array<i32>} : memref<64x288xf32, #tpu.memory_space<vmem>>, vector<4x32xf32>,
    %c6_58 = arith.constant 6 : index
    %c0_59 = arith.constant 0 : index
    %c1_60 = arith.constant 1 : index
    %c0_61 = arith.constant 0 : index
    %307 = vector.load %arg13[%c6_58, %c0_59, %c1_60, %c0_61] : memref<8x3x5x32xf32, #tpu.memory_space<vmem>>, vector<2x2x4x32xf32>
    %308 = vector.extract_strided_slice %307 {offsets = [0, 0, 0, 0], sizes = [1, 1, 4, 32], strides = [1, 1, 1, 1]} : vector<2x2x4x32xf32> to vector<1x1x4x32xf32>
    %309 = vector.shape_cast %308 : vector<1x1x4x32xf32> to vector<4x32xf32>
    %c0_62 = arith.constant 0 : index
    %c64 = arith.constant 64 : index
    %310 = vector.load %arg14[%c0_62, %c64] : memref<64x288xf32, #tpu.memory_space<vmem>>, vector<4x32xf32>
    tpu.vector_store %arg14[%c0_62, %c64], %309 {strides = array<i32>} : memref<64x288xf32, #tpu.memory_space<vmem>>, vector<4x32xf32>,
    %311 = vector.extract_strided_slice %307 {offsets = [0, 1, 0, 0], sizes = [1, 1, 4, 32], strides = [1, 1, 1, 1]} : vector<2x2x4x32xf32> to vector<1x1x4x32xf32>
    %312 = vector.shape_cast %311 : vector<1x1x4x32xf32> to vector<4x32xf32>
    %c4_63 = arith.constant 4 : index
    %c64_64 = arith.constant 64 : index
    %313 = vector.load %arg14[%c4_63, %c64_64] : memref<64x288xf32, #tpu.memory_space<vmem>>, vector<4x32xf32>
    tpu.vector_store %arg14[%c4_63, %c64_64], %312 {strides = array<i32>} : memref<64x288xf32, #tpu.memory_space<vmem>>, vector<4x32xf32>,
    %314 = vector.extract_strided_slice %307 {offsets = [1, 0, 0, 0], sizes = [1, 1, 4, 32], strides = [1, 1, 1, 1]} : vector<2x2x4x32xf32> to vector<1x1x4x32xf32>
    %315 = vector.shape_cast %314 : vector<1x1x4x32xf32> to vector<4x32xf32>
    %c8_65 = arith.constant 8 : index
    %c64_66 = arith.constant 64 : index
    %316 = vector.load %arg14[%c8_65, %c64_66] : memref<64x288xf32, #tpu.memory_space<vmem>>, vector<4x32xf32>
    tpu.vector_store %arg14[%c8_65, %c64_66], %315 {strides = array<i32>} : memref<64x288xf32, #tpu.memory_space<vmem>>, vector<4x32xf32>,
    %317 = vector.extract_strided_slice %307 {offsets = [1, 1, 0, 0], sizes = [1, 1, 4, 32], strides = [1, 1, 1, 1]} : vector<2x2x4x32xf32> to vector<1x1x4x32xf32>
    %318 = vector.shape_cast %317 : vector<1x1x4x32xf32> to vector<4x32xf32>
    %c12_67 = arith.constant 12 : index
    %c64_68 = arith.constant 64 : index
    %319 = vector.load %arg14[%c12_67, %c64_68] : memref<64x288xf32, #tpu.memory_space<vmem>>, vector<4x32xf32>
    tpu.vector_store %arg14[%c12_67, %c64_68], %318 {strides = array<i32>} : memref<64x288xf32, #tpu.memory_space<vmem>>, vector<4x32xf32>,
    %c2_69 = arith.constant 2 : index
    %c0_70 = arith.constant 0 : index
    %c0_71 = arith.constant 0 : index
    %c0_72 = arith.constant 0 : index
    %320 = vector.load %arg13[%c2_69, %c0_70, %c0_71, %c0_72] : memref<8x3x5x32xf32, #tpu.memory_space<vmem>>, vector<2x2x4x32xf32>
    %321 = vector.extract_strided_slice %320 {offsets = [0, 0, 0, 0], sizes = [1, 1, 4, 32], strides = [1, 1, 1, 1]} : vector<2x2x4x32xf32> to vector<1x1x4x32xf32>
    %322 = vector.shape_cast %321 : vector<1x1x4x32xf32> to vector<4x32xf32>
    %c0_73 = arith.constant 0 : index
    %c96 = arith.constant 96 : index
    %323 = vector.load %arg14[%c0_73, %c96] : memref<64x288xf32, #tpu.memory_space<vmem>>, vector<4x32xf32>
    tpu.vector_store %arg14[%c0_73, %c96], %322 {strides = array<i32>} : memref<64x288xf32, #tpu.memory_space<vmem>>, vector<4x32xf32>,
    %324 = vector.extract_strided_slice %320 {offsets = [0, 1, 0, 0], sizes = [1, 1, 4, 32], strides = [1, 1, 1, 1]} : vector<2x2x4x32xf32> to vector<1x1x4x32xf32>
    %325 = vector.shape_cast %324 : vector<1x1x4x32xf32> to vector<4x32xf32>
    %c4_74 = arith.constant 4 : index
    %c96_75 = arith.constant 96 : index
    %326 = vector.load %arg14[%c4_74, %c96_75] : memref<64x288xf32, #tpu.memory_space<vmem>>, vector<4x32xf32>
    tpu.vector_store %arg14[%c4_74, %c96_75], %325 {strides = array<i32>} : memref<64x288xf32, #tpu.memory_space<vmem>>, vector<4x32xf32>,
    %327 = vector.extract_strided_slice %320 {offsets = [1, 0, 0, 0], sizes = [1, 1, 4, 32], strides = [1, 1, 1, 1]} : vector<2x2x4x32xf32> to vector<1x1x4x32xf32>
    %328 = vector.shape_cast %327 : vector<1x1x4x32xf32> to vector<4x32xf32>
    %c8_76 = arith.constant 8 : index
    %c96_77 = arith.constant 96 : index
    %329 = vector.load %arg14[%c8_76, %c96_77] : memref<64x288xf32, #tpu.memory_space<vmem>>, vector<4x32xf32>
    tpu.vector_store %arg14[%c8_76, %c96_77], %328 {strides = array<i32>} : memref<64x288xf32, #tpu.memory_space<vmem>>, vector<4x32xf32>,
    %330 = vector.extract_strided_slice %320 {offsets = [1, 1, 0, 0], sizes = [1, 1, 4, 32], strides = [1, 1, 1, 1]} : vector<2x2x4x32xf32> to vector<1x1x4x32xf32>
    %331 = vector.shape_cast %330 : vector<1x1x4x32xf32> to vector<4x32xf32>
    %c12_78 = arith.constant 12 : index
    %c96_79 = arith.constant 96 : index
    %332 = vector.load %arg14[%c12_78, %c96_79] : memref<64x288xf32, #tpu.memory_space<vmem>>, vector<4x32xf32>
    tpu.vector_store %arg14[%c12_78, %c96_79], %331 {strides = array<i32>} : memref<64x288xf32, #tpu.memory_space<vmem>>, vector<4x32xf32>,
    %c0_80 = arith.constant 0 : index
    %c0_81 = arith.constant 0 : index
    %c0_82 = arith.constant 0 : index
    %c0_83 = arith.constant 0 : index
    %333 = vector.load %arg13[%c0_80, %c0_81, %c0_82, %c0_83] : memref<8x3x5x32xf32, #tpu.memory_space<vmem>>, vector<2x2x4x32xf32>
    %334 = vector.extract_strided_slice %333 {offsets = [0, 0, 0, 0], sizes = [1, 1, 4, 32], strides = [1, 1, 1, 1]} : vector<2x2x4x32xf32> to vector<1x1x4x32xf32>
    %335 = vector.shape_cast %334 : vector<1x1x4x32xf32> to vector<4x32xf32>
    %c0_84 = arith.constant 0 : index
    %c128 = arith.constant 128 : index
    %336 = vector.load %arg14[%c0_84, %c128] : memref<64x288xf32, #tpu.memory_space<vmem>>, vector<4x32xf32>
    tpu.vector_store %arg14[%c0_84, %c128], %335 {strides = array<i32>} : memref<64x288xf32, #tpu.memory_space<vmem>>, vector<4x32xf32>,
    %337 = vector.extract_strided_slice %333 {offsets = [0, 1, 0, 0], sizes = [1, 1, 4, 32], strides = [1, 1, 1, 1]} : vector<2x2x4x32xf32> to vector<1x1x4x32xf32>
    %338 = vector.shape_cast %337 : vector<1x1x4x32xf32> to vector<4x32xf32>
    %c4_85 = arith.constant 4 : index
    %c128_86 = arith.constant 128 : index
    %339 = vector.load %arg14[%c4_85, %c128_86] : memref<64x288xf32, #tpu.memory_space<vmem>>, vector<4x32xf32>
    tpu.vector_store %arg14[%c4_85, %c128_86], %338 {strides = array<i32>} : memref<64x288xf32, #tpu.memory_space<vmem>>, vector<4x32xf32>,
    %340 = vector.extract_strided_slice %333 {offsets = [1, 0, 0, 0], sizes = [1, 1, 4, 32], strides = [1, 1, 1, 1]} : vector<2x2x4x32xf32> to vector<1x1x4x32xf32>
    %341 = vector.shape_cast %340 : vector<1x1x4x32xf32> to vector<4x32xf32>
    %c8_87 = arith.constant 8 : index
    %c128_88 = arith.constant 128 : index
    %342 = vector.load %arg14[%c8_87, %c128_88] : memref<64x288xf32, #tpu.memory_space<vmem>>, vector<4x32xf32>
    tpu.vector_store %arg14[%c8_87, %c128_88], %341 {strides = array<i32>} : memref<64x288xf32, #tpu.memory_space<vmem>>, vector<4x32xf32>,
    %343 = vector.extract_strided_slice %333 {offsets = [1, 1, 0, 0], sizes = [1, 1, 4, 32], strides = [1, 1, 1, 1]} : vector<2x2x4x32xf32> to vector<1x1x4x32xf32>
    %344 = vector.shape_cast %343 : vector<1x1x4x32xf32> to vector<4x32xf32>
    %c12_89 = arith.constant 12 : index
    %c128_90 = arith.constant 128 : index
    %345 = vector.load %arg14[%c12_89, %c128_90] : memref<64x288xf32, #tpu.memory_space<vmem>>, vector<4x32xf32>
    tpu.vector_store %arg14[%c12_89, %c128_90], %344 {strides = array<i32>} : memref<64x288xf32, #tpu.memory_space<vmem>>, vector<4x32xf32>,
    %c2_91 = arith.constant 2 : index
    %c0_92 = arith.constant 0 : index
    %c1_93 = arith.constant 1 : index
    %c0_94 = arith.constant 0 : index
    %346 = vector.load %arg13[%c2_91, %c0_92, %c1_93, %c0_94] : memref<8x3x5x32xf32, #tpu.memory_space<vmem>>, vector<2x2x4x32xf32>
    %347 = vector.extract_strided_slice %346 {offsets = [0, 0, 0, 0], sizes = [1, 1, 4, 32], strides = [1, 1, 1, 1]} : vector<2x2x4x32xf32> to vector<1x1x4x32xf32>
    %348 = vector.shape_cast %347 : vector<1x1x4x32xf32> to vector<4x32xf32>
    %c0_95 = arith.constant 0 : index
    %c160 = arith.constant 160 : index
    %349 = vector.load %arg14[%c0_95, %c160] : memref<64x288xf32, #tpu.memory_space<vmem>>, vector<4x32xf32>
    tpu.vector_store %arg14[%c0_95, %c160], %348 {strides = array<i32>} : memref<64x288xf32, #tpu.memory_space<vmem>>, vector<4x32xf32>,
    %350 = vector.extract_strided_slice %346 {offsets = [0, 1, 0, 0], sizes = [1, 1, 4, 32], strides = [1, 1, 1, 1]} : vector<2x2x4x32xf32> to vector<1x1x4x32xf32>
    %351 = vector.shape_cast %350 : vector<1x1x4x32xf32> to vector<4x32xf32>
    %c4_96 = arith.constant 4 : index
    %c160_97 = arith.constant 160 : index
    %352 = vector.load %arg14[%c4_96, %c160_97] : memref<64x288xf32, #tpu.memory_space<vmem>>, vector<4x32xf32>
    tpu.vector_store %arg14[%c4_96, %c160_97], %351 {strides = array<i32>} : memref<64x288xf32, #tpu.memory_space<vmem>>, vector<4x32xf32>,
    %353 = vector.extract_strided_slice %346 {offsets = [1, 0, 0, 0], sizes = [1, 1, 4, 32], strides = [1, 1, 1, 1]} : vector<2x2x4x32xf32> to vector<1x1x4x32xf32>
    %354 = vector.shape_cast %353 : vector<1x1x4x32xf32> to vector<4x32xf32>
    %c8_98 = arith.constant 8 : index
    %c160_99 = arith.constant 160 : index
    %355 = vector.load %arg14[%c8_98, %c160_99] : memref<64x288xf32, #tpu.memory_space<vmem>>, vector<4x32xf32>
    tpu.vector_store %arg14[%c8_98, %c160_99], %354 {strides = array<i32>} : memref<64x288xf32, #tpu.memory_space<vmem>>, vector<4x32xf32>,
    %356 = vector.extract_strided_slice %346 {offsets = [1, 1, 0, 0], sizes = [1, 1, 4, 32], strides = [1, 1, 1, 1]} : vector<2x2x4x32xf32> to vector<1x1x4x32xf32>
    %357 = vector.shape_cast %356 : vector<1x1x4x32xf32> to vector<4x32xf32>
    %c12_100 = arith.constant 12 : index
    %c160_101 = arith.constant 160 : index
    %358 = vector.load %arg14[%c12_100, %c160_101] : memref<64x288xf32, #tpu.memory_space<vmem>>, vector<4x32xf32>
    tpu.vector_store %arg14[%c12_100, %c160_101], %357 {strides = array<i32>} : memref<64x288xf32, #tpu.memory_space<vmem>>, vector<4x32xf32>,
    %c6_102 = arith.constant 6 : index
    %c1_103 = arith.constant 1 : index
    %c0_104 = arith.constant 0 : index
    %c0_105 = arith.constant 0 : index
    %359 = vector.load %arg13[%c6_102, %c1_103, %c0_104, %c0_105] : memref<8x3x5x32xf32, #tpu.memory_space<vmem>>, vector<2x2x4x32xf32>
    %360 = vector.extract_strided_slice %359 {offsets = [0, 0, 0, 0], sizes = [1, 1, 4, 32], strides = [1, 1, 1, 1]} : vector<2x2x4x32xf32> to vector<1x1x4x32xf32>
    %361 = vector.shape_cast %360 : vector<1x1x4x32xf32> to vector<4x32xf32>
    %c0_106 = arith.constant 0 : index
    %c192 = arith.constant 192 : index
    %362 = vector.load %arg14[%c0_106, %c192] : memref<64x288xf32, #tpu.memory_space<vmem>>, vector<4x32xf32>
    tpu.vector_store %arg14[%c0_106, %c192], %361 {strides = array<i32>} : memref<64x288xf32, #tpu.memory_space<vmem>>, vector<4x32xf32>,
    %363 = vector.extract_strided_slice %359 {offsets = [0, 1, 0, 0], sizes = [1, 1, 4, 32], strides = [1, 1, 1, 1]} : vector<2x2x4x32xf32> to vector<1x1x4x32xf32>
    %364 = vector.shape_cast %363 : vector<1x1x4x32xf32> to vector<4x32xf32>
    %c4_107 = arith.constant 4 : index
    %c192_108 = arith.constant 192 : index
    %365 = vector.load %arg14[%c4_107, %c192_108] : memref<64x288xf32, #tpu.memory_space<vmem>>, vector<4x32xf32>
    tpu.vector_store %arg14[%c4_107, %c192_108], %364 {strides = array<i32>} : memref<64x288xf32, #tpu.memory_space<vmem>>, vector<4x32xf32>,
    %366 = vector.extract_strided_slice %359 {offsets = [1, 0, 0, 0], sizes = [1, 1, 4, 32], strides = [1, 1, 1, 1]} : vector<2x2x4x32xf32> to vector<1x1x4x32xf32>
    %367 = vector.shape_cast %366 : vector<1x1x4x32xf32> to vector<4x32xf32>
    %c8_109 = arith.constant 8 : index
    %c192_110 = arith.constant 192 : index
    %368 = vector.load %arg14[%c8_109, %c192_110] : memref<64x288xf32, #tpu.memory_space<vmem>>, vector<4x32xf32>
    tpu.vector_store %arg14[%c8_109, %c192_110], %367 {strides = array<i32>} : memref<64x288xf32, #tpu.memory_space<vmem>>, vector<4x32xf32>,
    %369 = vector.extract_strided_slice %359 {offsets = [1, 1, 0, 0], sizes = [1, 1, 4, 32], strides = [1, 1, 1, 1]} : vector<2x2x4x32xf32> to vector<1x1x4x32xf32>
    %370 = vector.shape_cast %369 : vector<1x1x4x32xf32> to vector<4x32xf32>
    %c12_111 = arith.constant 12 : index
    %c192_112 = arith.constant 192 : index
    %371 = vector.load %arg14[%c12_111, %c192_112] : memref<64x288xf32, #tpu.memory_space<vmem>>, vector<4x32xf32>
    tpu.vector_store %arg14[%c12_111, %c192_112], %370 {strides = array<i32>} : memref<64x288xf32, #tpu.memory_space<vmem>>, vector<4x32xf32>,
    %c4_113 = arith.constant 4 : index
    %c1_114 = arith.constant 1 : index
    %c0_115 = arith.constant 0 : index
    %c0_116 = arith.constant 0 : index
    %372 = vector.load %arg13[%c4_113, %c1_114, %c0_115, %c0_116] : memref<8x3x5x32xf32, #tpu.memory_space<vmem>>, vector<2x2x4x32xf32>
    %373 = vector.extract_strided_slice %372 {offsets = [0, 0, 0, 0], sizes = [1, 1, 4, 32], strides = [1, 1, 1, 1]} : vector<2x2x4x32xf32> to vector<1x1x4x32xf32>
    %374 = vector.shape_cast %373 : vector<1x1x4x32xf32> to vector<4x32xf32>
    %c0_117 = arith.constant 0 : index
    %c224 = arith.constant 224 : index
    %375 = vector.load %arg14[%c0_117, %c224] : memref<64x288xf32, #tpu.memory_space<vmem>>, vector<4x32xf32>
    tpu.vector_store %arg14[%c0_117, %c224], %374 {strides = array<i32>} : memref<64x288xf32, #tpu.memory_space<vmem>>, vector<4x32xf32>,
    %376 = vector.extract_strided_slice %372 {offsets = [0, 1, 0, 0], sizes = [1, 1, 4, 32], strides = [1, 1, 1, 1]} : vector<2x2x4x32xf32> to vector<1x1x4x32xf32>
    %377 = vector.shape_cast %376 : vector<1x1x4x32xf32> to vector<4x32xf32>
    %c4_118 = arith.constant 4 : index
    %c224_119 = arith.constant 224 : index
    %378 = vector.load %arg14[%c4_118, %c224_119] : memref<64x288xf32, #tpu.memory_space<vmem>>, vector<4x32xf32>
    tpu.vector_store %arg14[%c4_118, %c224_119], %377 {strides = array<i32>} : memref<64x288xf32, #tpu.memory_space<vmem>>, vector<4x32xf32>,
    %379 = vector.extract_strided_slice %372 {offsets = [1, 0, 0, 0], sizes = [1, 1, 4, 32], strides = [1, 1, 1, 1]} : vector<2x2x4x32xf32> to vector<1x1x4x32xf32>
    %380 = vector.shape_cast %379 : vector<1x1x4x32xf32> to vector<4x32xf32>
    %c8_120 = arith.constant 8 : index
    %c224_121 = arith.constant 224 : index
    %381 = vector.load %arg14[%c8_120, %c224_121] : memref<64x288xf32, #tpu.memory_space<vmem>>, vector<4x32xf32>
    tpu.vector_store %arg14[%c8_120, %c224_121], %380 {strides = array<i32>} : memref<64x288xf32, #tpu.memory_space<vmem>>, vector<4x32xf32>,
    %382 = vector.extract_strided_slice %372 {offsets = [1, 1, 0, 0], sizes = [1, 1, 4, 32], strides = [1, 1, 1, 1]} : vector<2x2x4x32xf32> to vector<1x1x4x32xf32>
    %383 = vector.shape_cast %382 : vector<1x1x4x32xf32> to vector<4x32xf32>
    %c12_122 = arith.constant 12 : index
    %c224_123 = arith.constant 224 : index
    %384 = vector.load %arg14[%c12_122, %c224_123] : memref<64x288xf32, #tpu.memory_space<vmem>>, vector<4x32xf32>
    tpu.vector_store %arg14[%c12_122, %c224_123], %383 {strides = array<i32>} : memref<64x288xf32, #tpu.memory_space<vmem>>, vector<4x32xf32>,
    %c6_124 = arith.constant 6 : index
    %c1_125 = arith.constant 1 : index
    %c1_126 = arith.constant 1 : index
    %c0_127 = arith.constant 0 : index
    %385 = vector.load %arg13[%c6_124, %c1_125, %c1_126, %c0_127] : memref<8x3x5x32xf32, #tpu.memory_space<vmem>>, vector<2x2x4x32xf32>
    %386 = vector.extract_strided_slice %385 {offsets = [0, 0, 0, 0], sizes = [1, 1, 4, 32], strides = [1, 1, 1, 1]} : vector<2x2x4x32xf32> to vector<1x1x4x32xf32>
    %387 = vector.shape_cast %386 : vector<1x1x4x32xf32> to vector<4x32xf32>
    %c0_128 = arith.constant 0 : index
    %c256 = arith.constant 256 : index
    %388 = vector.load %arg14[%c0_128, %c256] : memref<64x288xf32, #tpu.memory_space<vmem>>, vector<4x32xf32>
    tpu.vector_store %arg14[%c0_128, %c256], %387 {strides = array<i32>} : memref<64x288xf32, #tpu.memory_space<vmem>>, vector<4x32xf32>,
    %389 = vector.extract_strided_slice %385 {offsets = [0, 1, 0, 0], sizes = [1, 1, 4, 32], strides = [1, 1, 1, 1]} : vector<2x2x4x32xf32> to vector<1x1x4x32xf32>
    %390 = vector.shape_cast %389 : vector<1x1x4x32xf32> to vector<4x32xf32>
    %c4_129 = arith.constant 4 : index
    %c256_130 = arith.constant 256 : index
    %391 = vector.load %arg14[%c4_129, %c256_130] : memref<64x288xf32, #tpu.memory_space<vmem>>, vector<4x32xf32>
    tpu.vector_store %arg14[%c4_129, %c256_130], %390 {strides = array<i32>} : memref<64x288xf32, #tpu.memory_space<vmem>>, vector<4x32xf32>,
    %392 = vector.extract_strided_slice %385 {offsets = [1, 0, 0, 0], sizes = [1, 1, 4, 32], strides = [1, 1, 1, 1]} : vector<2x2x4x32xf32> to vector<1x1x4x32xf32>
    %393 = vector.shape_cast %392 : vector<1x1x4x32xf32> to vector<4x32xf32>
    %c8_131 = arith.constant 8 : index
    %c256_132 = arith.constant 256 : index
    %394 = vector.load %arg14[%c8_131, %c256_132] : memref<64x288xf32, #tpu.memory_space<vmem>>, vector<4x32xf32>
    tpu.vector_store %arg14[%c8_131, %c256_132], %393 {strides = array<i32>} : memref<64x288xf32, #tpu.memory_space<vmem>>, vector<4x32xf32>,
    %395 = vector.extract_strided_slice %385 {offsets = [1, 1, 0, 0], sizes = [1, 1, 4, 32], strides = [1, 1, 1, 1]} : vector<2x2x4x32xf32> to vector<1x1x4x32xf32>
    %396 = vector.shape_cast %395 : vector<1x1x4x32xf32> to vector<4x32xf32>
    %c12_133 = arith.constant 12 : index
    %c256_134 = arith.constant 256 : index
    %397 = vector.load %arg14[%c12_133, %c256_134] : memref<64x288xf32, #tpu.memory_space<vmem>>, vector<4x32xf32>
    tpu.vector_store %arg14[%c12_133, %c256_134], %396 {strides = array<i32>} : memref<64x288xf32, #tpu.memory_space<vmem>>, vector<4x32xf32>,
    %c4_135 = arith.constant 4 : index
    %c0_136 = arith.constant 0 : index
    %c0_137 = arith.constant 0 : index
    %c0_138 = arith.constant 0 : index
    %398 = vector.load %arg13[%c4_135, %c0_136, %c0_137, %c0_138] : memref<8x3x5x32xf32, #tpu.memory_space<vmem>>, vector<2x2x4x32xf32>
    %399 = vector.extract_strided_slice %398 {offsets = [0, 0, 0, 0], sizes = [1, 1, 4, 32], strides = [1, 1, 1, 1]} : vector<2x2x4x32xf32> to vector<1x1x4x32xf32>
    %400 = vector.shape_cast %399 : vector<1x1x4x32xf32> to vector<4x32xf32>
    %c16_139 = arith.constant 16 : index
    %c0_140 = arith.constant 0 : index
    %401 = vector.load %arg14[%c16_139, %c0_140] : memref<64x288xf32, #tpu.memory_space<vmem>>, vector<4x32xf32>
    tpu.vector_store %arg14[%c16_139, %c0_140], %400 {strides = array<i32>} : memref<64x288xf32, #tpu.memory_space<vmem>>, vector<4x32xf32>,
    %402 = vector.extract_strided_slice %398 {offsets = [0, 1, 0, 0], sizes = [1, 1, 4, 32], strides = [1, 1, 1, 1]} : vector<2x2x4x32xf32> to vector<1x1x4x32xf32>
    %403 = vector.shape_cast %402 : vector<1x1x4x32xf32> to vector<4x32xf32>
    %c20 = arith.constant 20 : index
    %c0_141 = arith.constant 0 : index
    %404 = vector.load %arg14[%c20, %c0_141] : memref<64x288xf32, #tpu.memory_space<vmem>>, vector<4x32xf32>
    tpu.vector_store %arg14[%c20, %c0_141], %403 {strides = array<i32>} : memref<64x288xf32, #tpu.memory_space<vmem>>, vector<4x32xf32>,
    %405 = vector.extract_strided_slice %398 {offsets = [1, 0, 0, 0], sizes = [1, 1, 4, 32], strides = [1, 1, 1, 1]} : vector<2x2x4x32xf32> to vector<1x1x4x32xf32>
    %406 = vector.shape_cast %405 : vector<1x1x4x32xf32> to vector<4x32xf32>
    %c24_142 = arith.constant 24 : index
    %c0_143 = arith.constant 0 : index
    %407 = vector.load %arg14[%c24_142, %c0_143] : memref<64x288xf32, #tpu.memory_space<vmem>>, vector<4x32xf32>
    tpu.vector_store %arg14[%c24_142, %c0_143], %406 {strides = array<i32>} : memref<64x288xf32, #tpu.memory_space<vmem>>, vector<4x32xf32>,
    %408 = vector.extract_strided_slice %398 {offsets = [1, 1, 0, 0], sizes = [1, 1, 4, 32], strides = [1, 1, 1, 1]} : vector<2x2x4x32xf32> to vector<1x1x4x32xf32>
    %409 = vector.shape_cast %408 : vector<1x1x4x32xf32> to vector<4x32xf32>
    %c28 = arith.constant 28 : index
    %c0_144 = arith.constant 0 : index
    %410 = vector.load %arg14[%c28, %c0_144] : memref<64x288xf32, #tpu.memory_space<vmem>>, vector<4x32xf32>
    tpu.vector_store %arg14[%c28, %c0_144], %409 {strides = array<i32>} : memref<64x288xf32, #tpu.memory_space<vmem>>, vector<4x32xf32>,
    %c6_145 = arith.constant 6 : index
    %c0_146 = arith.constant 0 : index
    %c1_147 = arith.constant 1 : index
    %c0_148 = arith.constant 0 : index
    %411 = vector.load %arg13[%c6_145, %c0_146, %c1_147, %c0_148] : memref<8x3x5x32xf32, #tpu.memory_space<vmem>>, vector<2x2x4x32xf32>
    %412 = vector.extract_strided_slice %411 {offsets = [0, 0, 0, 0], sizes = [1, 1, 4, 32], strides = [1, 1, 1, 1]} : vector<2x2x4x32xf32> to vector<1x1x4x32xf32>
    %413 = vector.shape_cast %412 : vector<1x1x4x32xf32> to vector<4x32xf32>
    %c16_149 = arith.constant 16 : index
    %c32_150 = arith.constant 32 : index
    %414 = vector.load %arg14[%c16_149, %c32_150] : memref<64x288xf32, #tpu.memory_space<vmem>>, vector<4x32xf32>
    tpu.vector_store %arg14[%c16_149, %c32_150], %413 {strides = array<i32>} : memref<64x288xf32, #tpu.memory_space<vmem>>, vector<4x32xf32>,
    %415 = vector.extract_strided_slice %411 {offsets = [0, 1, 0, 0], sizes = [1, 1, 4, 32], strides = [1, 1, 1, 1]} : vector<2x2x4x32xf32> to vector<1x1x4x32xf32>
    %416 = vector.shape_cast %415 : vector<1x1x4x32xf32> to vector<4x32xf32>
    %c20_151 = arith.constant 20 : index
    %c32_152 = arith.constant 32 : index
    %417 = vector.load %arg14[%c20_151, %c32_152] : memref<64x288xf32, #tpu.memory_space<vmem>>, vector<4x32xf32>
    tpu.vector_store %arg14[%c20_151, %c32_152], %416 {strides = array<i32>} : memref<64x288xf32, #tpu.memory_space<vmem>>, vector<4x32xf32>,
    %418 = vector.extract_strided_slice %411 {offsets = [1, 0, 0, 0], sizes = [1, 1, 4, 32], strides = [1, 1, 1, 1]} : vector<2x2x4x32xf32> to vector<1x1x4x32xf32>
    %419 = vector.shape_cast %418 : vector<1x1x4x32xf32> to vector<4x32xf32>
    %c24_153 = arith.constant 24 : index
    %c32_154 = arith.constant 32 : index
    %420 = vector.load %arg14[%c24_153, %c32_154] : memref<64x288xf32, #tpu.memory_space<vmem>>, vector<4x32xf32>
    tpu.vector_store %arg14[%c24_153, %c32_154], %419 {strides = array<i32>} : memref<64x288xf32, #tpu.memory_space<vmem>>, vector<4x32xf32>,
    %421 = vector.extract_strided_slice %411 {offsets = [1, 1, 0, 0], sizes = [1, 1, 4, 32], strides = [1, 1, 1, 1]} : vector<2x2x4x32xf32> to vector<1x1x4x32xf32>
    %422 = vector.shape_cast %421 : vector<1x1x4x32xf32> to vector<4x32xf32>
    %c28_155 = arith.constant 28 : index
    %c32_156 = arith.constant 32 : index
    %423 = vector.load %arg14[%c28_155, %c32_156] : memref<64x288xf32, #tpu.memory_space<vmem>>, vector<4x32xf32>
    tpu.vector_store %arg14[%c28_155, %c32_156], %422 {strides = array<i32>} : memref<64x288xf32, #tpu.memory_space<vmem>>, vector<4x32xf32>,
    %c4_157 = arith.constant 4 : index
    %c0_158 = arith.constant 0 : index
    %c1_159 = arith.constant 1 : index
    %c0_160 = arith.constant 0 : index
    %424 = vector.load %arg13[%c4_157, %c0_158, %c1_159, %c0_160] : memref<8x3x5x32xf32, #tpu.memory_space<vmem>>, vector<2x2x4x32xf32>
    %425 = vector.extract_strided_slice %424 {offsets = [0, 0, 0, 0], sizes = [1, 1, 4, 32], strides = [1, 1, 1, 1]} : vector<2x2x4x32xf32> to vector<1x1x4x32xf32>
    %426 = vector.shape_cast %425 : vector<1x1x4x32xf32> to vector<4x32xf32>
    %c16_161 = arith.constant 16 : index
    %c64_162 = arith.constant 64 : index
    %427 = vector.load %arg14[%c16_161, %c64_162] : memref<64x288xf32, #tpu.memory_space<vmem>>, vector<4x32xf32>
    tpu.vector_store %arg14[%c16_161, %c64_162], %426 {strides = array<i32>} : memref<64x288xf32, #tpu.memory_space<vmem>>, vector<4x32xf32>,
    %428 = vector.extract_strided_slice %424 {offsets = [0, 1, 0, 0], sizes = [1, 1, 4, 32], strides = [1, 1, 1, 1]} : vector<2x2x4x32xf32> to vector<1x1x4x32xf32>
    %429 = vector.shape_cast %428 : vector<1x1x4x32xf32> to vector<4x32xf32>
    %c20_163 = arith.constant 20 : index
    %c64_164 = arith.constant 64 : index
    %430 = vector.load %arg14[%c20_163, %c64_164] : memref<64x288xf32, #tpu.memory_space<vmem>>, vector<4x32xf32>
    tpu.vector_store %arg14[%c20_163, %c64_164], %429 {strides = array<i32>} : memref<64x288xf32, #tpu.memory_space<vmem>>, vector<4x32xf32>,
    %431 = vector.extract_strided_slice %424 {offsets = [1, 0, 0, 0], sizes = [1, 1, 4, 32], strides = [1, 1, 1, 1]} : vector<2x2x4x32xf32> to vector<1x1x4x32xf32>
    %432 = vector.shape_cast %431 : vector<1x1x4x32xf32> to vector<4x32xf32>
    %c24_165 = arith.constant 24 : index
    %c64_166 = arith.constant 64 : index
    %433 = vector.load %arg14[%c24_165, %c64_166] : memref<64x288xf32, #tpu.memory_space<vmem>>, vector<4x32xf32>
    tpu.vector_store %arg14[%c24_165, %c64_166], %432 {strides = array<i32>} : memref<64x288xf32, #tpu.memory_space<vmem>>, vector<4x32xf32>,
    %434 = vector.extract_strided_slice %424 {offsets = [1, 1, 0, 0], sizes = [1, 1, 4, 32], strides = [1, 1, 1, 1]} : vector<2x2x4x32xf32> to vector<1x1x4x32xf32>
    %435 = vector.shape_cast %434 : vector<1x1x4x32xf32> to vector<4x32xf32>
    %c28_167 = arith.constant 28 : index
    %c64_168 = arith.constant 64 : index
    %436 = vector.load %arg14[%c28_167, %c64_168] : memref<64x288xf32, #tpu.memory_space<vmem>>, vector<4x32xf32>
    tpu.vector_store %arg14[%c28_167, %c64_168], %435 {strides = array<i32>} : memref<64x288xf32, #tpu.memory_space<vmem>>, vector<4x32xf32>,
    %c0_169 = arith.constant 0 : index
    %c0_170 = arith.constant 0 : index
    %c0_171 = arith.constant 0 : index
    %c0_172 = arith.constant 0 : index
    %437 = vector.load %arg13[%c0_169, %c0_170, %c0_171, %c0_172] : memref<8x3x5x32xf32, #tpu.memory_space<vmem>>, vector<2x2x4x32xf32>
    %438 = vector.extract_strided_slice %437 {offsets = [0, 0, 0, 0], sizes = [1, 1, 4, 32], strides = [1, 1, 1, 1]} : vector<2x2x4x32xf32> to vector<1x1x4x32xf32>
    %439 = vector.shape_cast %438 : vector<1x1x4x32xf32> to vector<4x32xf32>
    %c16_173 = arith.constant 16 : index
    %c96_174 = arith.constant 96 : index
    %440 = vector.load %arg14[%c16_173, %c96_174] : memref<64x288xf32, #tpu.memory_space<vmem>>, vector<4x32xf32>
    tpu.vector_store %arg14[%c16_173, %c96_174], %439 {strides = array<i32>} : memref<64x288xf32, #tpu.memory_space<vmem>>, vector<4x32xf32>,
    %441 = vector.extract_strided_slice %437 {offsets = [0, 1, 0, 0], sizes = [1, 1, 4, 32], strides = [1, 1, 1, 1]} : vector<2x2x4x32xf32> to vector<1x1x4x32xf32>
    %442 = vector.shape_cast %441 : vector<1x1x4x32xf32> to vector<4x32xf32>
    %c20_175 = arith.constant 20 : index
    %c96_176 = arith.constant 96 : index
    %443 = vector.load %arg14[%c20_175, %c96_176] : memref<64x288xf32, #tpu.memory_space<vmem>>, vector<4x32xf32>
    tpu.vector_store %arg14[%c20_175, %c96_176], %442 {strides = array<i32>} : memref<64x288xf32, #tpu.memory_space<vmem>>, vector<4x32xf32>,
    %444 = vector.extract_strided_slice %437 {offsets = [1, 0, 0, 0], sizes = [1, 1, 4, 32], strides = [1, 1, 1, 1]} : vector<2x2x4x32xf32> to vector<1x1x4x32xf32>
    %445 = vector.shape_cast %444 : vector<1x1x4x32xf32> to vector<4x32xf32>
    %c24_177 = arith.constant 24 : index
    %c96_178 = arith.constant 96 : index
    %446 = vector.load %arg14[%c24_177, %c96_178] : memref<64x288xf32, #tpu.memory_space<vmem>>, vector<4x32xf32>
    tpu.vector_store %arg14[%c24_177, %c96_178], %445 {strides = array<i32>} : memref<64x288xf32, #tpu.memory_space<vmem>>, vector<4x32xf32>,
    %447 = vector.extract_strided_slice %437 {offsets = [1, 1, 0, 0], sizes = [1, 1, 4, 32], strides = [1, 1, 1, 1]} : vector<2x2x4x32xf32> to vector<1x1x4x32xf32>
    %448 = vector.shape_cast %447 : vector<1x1x4x32xf32> to vector<4x32xf32>
    %c28_179 = arith.constant 28 : index
    %c96_180 = arith.constant 96 : index
    %449 = vector.load %arg14[%c28_179, %c96_180] : memref<64x288xf32, #tpu.memory_space<vmem>>, vector<4x32xf32>
    tpu.vector_store %arg14[%c28_179, %c96_180], %448 {strides = array<i32>} : memref<64x288xf32, #tpu.memory_space<vmem>>, vector<4x32xf32>,
    %c2_181 = arith.constant 2 : index
    %c0_182 = arith.constant 0 : index
    %c1_183 = arith.constant 1 : index
    %c0_184 = arith.constant 0 : index
    %450 = vector.load %arg13[%c2_181, %c0_182, %c1_183, %c0_184] : memref<8x3x5x32xf32, #tpu.memory_space<vmem>>, vector<2x2x4x32xf32>
    %451 = vector.extract_strided_slice %450 {offsets = [0, 0, 0, 0], sizes = [1, 1, 4, 32], strides = [1, 1, 1, 1]} : vector<2x2x4x32xf32> to vector<1x1x4x32xf32>
    %452 = vector.shape_cast %451 : vector<1x1x4x32xf32> to vector<4x32xf32>
    %c16_185 = arith.constant 16 : index
    %c128_186 = arith.constant 128 : index
    %453 = vector.load %arg14[%c16_185, %c128_186] : memref<64x288xf32, #tpu.memory_space<vmem>>, vector<4x32xf32>
    tpu.vector_store %arg14[%c16_185, %c128_186], %452 {strides = array<i32>} : memref<64x288xf32, #tpu.memory_space<vmem>>, vector<4x32xf32>,
    %454 = vector.extract_strided_slice %450 {offsets = [0, 1, 0, 0], sizes = [1, 1, 4, 32], strides = [1, 1, 1, 1]} : vector<2x2x4x32xf32> to vector<1x1x4x32xf32>
    %455 = vector.shape_cast %454 : vector<1x1x4x32xf32> to vector<4x32xf32>
    %c20_187 = arith.constant 20 : index
    %c128_188 = arith.constant 128 : index
    %456 = vector.load %arg14[%c20_187, %c128_188] : memref<64x288xf32, #tpu.memory_space<vmem>>, vector<4x32xf32>
    tpu.vector_store %arg14[%c20_187, %c128_188], %455 {strides = array<i32>} : memref<64x288xf32, #tpu.memory_space<vmem>>, vector<4x32xf32>,
    %457 = vector.extract_strided_slice %450 {offsets = [1, 0, 0, 0], sizes = [1, 1, 4, 32], strides = [1, 1, 1, 1]} : vector<2x2x4x32xf32> to vector<1x1x4x32xf32>
    %458 = vector.shape_cast %457 : vector<1x1x4x32xf32> to vector<4x32xf32>
    %c24_189 = arith.constant 24 : index
    %c128_190 = arith.constant 128 : index
    %459 = vector.load %arg14[%c24_189, %c128_190] : memref<64x288xf32, #tpu.memory_space<vmem>>, vector<4x32xf32>
    tpu.vector_store %arg14[%c24_189, %c128_190], %458 {strides = array<i32>} : memref<64x288xf32, #tpu.memory_space<vmem>>, vector<4x32xf32>,
    %460 = vector.extract_strided_slice %450 {offsets = [1, 1, 0, 0], sizes = [1, 1, 4, 32], strides = [1, 1, 1, 1]} : vector<2x2x4x32xf32> to vector<1x1x4x32xf32>
    %461 = vector.shape_cast %460 : vector<1x1x4x32xf32> to vector<4x32xf32>
    %c28_191 = arith.constant 28 : index
    %c128_192 = arith.constant 128 : index
    %462 = vector.load %arg14[%c28_191, %c128_192] : memref<64x288xf32, #tpu.memory_space<vmem>>, vector<4x32xf32>
    tpu.vector_store %arg14[%c28_191, %c128_192], %461 {strides = array<i32>} : memref<64x288xf32, #tpu.memory_space<vmem>>, vector<4x32xf32>,
    %c0_193 = arith.constant 0 : index
    %c0_194 = arith.constant 0 : index
    %c1_195 = arith.constant 1 : index
    %c0_196 = arith.constant 0 : index
    %463 = vector.load %arg13[%c0_193, %c0_194, %c1_195, %c0_196] : memref<8x3x5x32xf32, #tpu.memory_space<vmem>>, vector<2x2x4x32xf32>
    %464 = vector.extract_strided_slice %463 {offsets = [0, 0, 0, 0], sizes = [1, 1, 4, 32], strides = [1, 1, 1, 1]} : vector<2x2x4x32xf32> to vector<1x1x4x32xf32>
    %465 = vector.shape_cast %464 : vector<1x1x4x32xf32> to vector<4x32xf32>
    %c16_197 = arith.constant 16 : index
    %c160_198 = arith.constant 160 : index
    %466 = vector.load %arg14[%c16_197, %c160_198] : memref<64x288xf32, #tpu.memory_space<vmem>>, vector<4x32xf32>
    tpu.vector_store %arg14[%c16_197, %c160_198], %465 {strides = array<i32>} : memref<64x288xf32, #tpu.memory_space<vmem>>, vector<4x32xf32>,
    %467 = vector.extract_strided_slice %463 {offsets = [0, 1, 0, 0], sizes = [1, 1, 4, 32], strides = [1, 1, 1, 1]} : vector<2x2x4x32xf32> to vector<1x1x4x32xf32>
    %468 = vector.shape_cast %467 : vector<1x1x4x32xf32> to vector<4x32xf32>
    %c20_199 = arith.constant 20 : index
    %c160_200 = arith.constant 160 : index
    %469 = vector.load %arg14[%c20_199, %c160_200] : memref<64x288xf32, #tpu.memory_space<vmem>>, vector<4x32xf32>
    tpu.vector_store %arg14[%c20_199, %c160_200], %468 {strides = array<i32>} : memref<64x288xf32, #tpu.memory_space<vmem>>, vector<4x32xf32>,
    %470 = vector.extract_strided_slice %463 {offsets = [1, 0, 0, 0], sizes = [1, 1, 4, 32], strides = [1, 1, 1, 1]} : vector<2x2x4x32xf32> to vector<1x1x4x32xf32>
    %471 = vector.shape_cast %470 : vector<1x1x4x32xf32> to vector<4x32xf32>
    %c24_201 = arith.constant 24 : index
    %c160_202 = arith.constant 160 : index
    %472 = vector.load %arg14[%c24_201, %c160_202] : memref<64x288xf32, #tpu.memory_space<vmem>>, vector<4x32xf32>
    tpu.vector_store %arg14[%c24_201, %c160_202], %471 {strides = array<i32>} : memref<64x288xf32, #tpu.memory_space<vmem>>, vector<4x32xf32>,
    %473 = vector.extract_strided_slice %463 {offsets = [1, 1, 0, 0], sizes = [1, 1, 4, 32], strides = [1, 1, 1, 1]} : vector<2x2x4x32xf32> to vector<1x1x4x32xf32>
    %474 = vector.shape_cast %473 : vector<1x1x4x32xf32> to vector<4x32xf32>
    %c28_203 = arith.constant 28 : index
    %c160_204 = arith.constant 160 : index
    %475 = vector.load %arg14[%c28_203, %c160_204] : memref<64x288xf32, #tpu.memory_space<vmem>>, vector<4x32xf32>
    tpu.vector_store %arg14[%c28_203, %c160_204], %474 {strides = array<i32>} : memref<64x288xf32, #tpu.memory_space<vmem>>, vector<4x32xf32>,
    %c4_205 = arith.constant 4 : index
    %c1_206 = arith.constant 1 : index
    %c0_207 = arith.constant 0 : index
    %c0_208 = arith.constant 0 : index
    %476 = vector.load %arg13[%c4_205, %c1_206, %c0_207, %c0_208] : memref<8x3x5x32xf32, #tpu.memory_space<vmem>>, vector<2x2x4x32xf32>
    %477 = vector.extract_strided_slice %476 {offsets = [0, 0, 0, 0], sizes = [1, 1, 4, 32], strides = [1, 1, 1, 1]} : vector<2x2x4x32xf32> to vector<1x1x4x32xf32>
    %478 = vector.shape_cast %477 : vector<1x1x4x32xf32> to vector<4x32xf32>
    %c16_209 = arith.constant 16 : index
    %c192_210 = arith.constant 192 : index
    %479 = vector.load %arg14[%c16_209, %c192_210] : memref<64x288xf32, #tpu.memory_space<vmem>>, vector<4x32xf32>
    tpu.vector_store %arg14[%c16_209, %c192_210], %478 {strides = array<i32>} : memref<64x288xf32, #tpu.memory_space<vmem>>, vector<4x32xf32>,
    %480 = vector.extract_strided_slice %476 {offsets = [0, 1, 0, 0], sizes = [1, 1, 4, 32], strides = [1, 1, 1, 1]} : vector<2x2x4x32xf32> to vector<1x1x4x32xf32>
    %481 = vector.shape_cast %480 : vector<1x1x4x32xf32> to vector<4x32xf32>
    %c20_211 = arith.constant 20 : index
    %c192_212 = arith.constant 192 : index
    %482 = vector.load %arg14[%c20_211, %c192_212] : memref<64x288xf32, #tpu.memory_space<vmem>>, vector<4x32xf32>
    tpu.vector_store %arg14[%c20_211, %c192_212], %481 {strides = array<i32>} : memref<64x288xf32, #tpu.memory_space<vmem>>, vector<4x32xf32>,
    %483 = vector.extract_strided_slice %476 {offsets = [1, 0, 0, 0], sizes = [1, 1, 4, 32], strides = [1, 1, 1, 1]} : vector<2x2x4x32xf32> to vector<1x1x4x32xf32>
    %484 = vector.shape_cast %483 : vector<1x1x4x32xf32> to vector<4x32xf32>
    %c24_213 = arith.constant 24 : index
    %c192_214 = arith.constant 192 : index
    %485 = vector.load %arg14[%c24_213, %c192_214] : memref<64x288xf32, #tpu.memory_space<vmem>>, vector<4x32xf32>
    tpu.vector_store %arg14[%c24_213, %c192_214], %484 {strides = array<i32>} : memref<64x288xf32, #tpu.memory_space<vmem>>, vector<4x32xf32>,
    %486 = vector.extract_strided_slice %476 {offsets = [1, 1, 0, 0], sizes = [1, 1, 4, 32], strides = [1, 1, 1, 1]} : vector<2x2x4x32xf32> to vector<1x1x4x32xf32>
    %487 = vector.shape_cast %486 : vector<1x1x4x32xf32> to vector<4x32xf32>
    %c28_215 = arith.constant 28 : index
    %c192_216 = arith.constant 192 : index
    %488 = vector.load %arg14[%c28_215, %c192_216] : memref<64x288xf32, #tpu.memory_space<vmem>>, vector<4x32xf32>
    tpu.vector_store %arg14[%c28_215, %c192_216], %487 {strides = array<i32>} : memref<64x288xf32, #tpu.memory_space<vmem>>, vector<4x32xf32>,
    %c6_217 = arith.constant 6 : index
    %c1_218 = arith.constant 1 : index
    %c1_219 = arith.constant 1 : index
    %c0_220 = arith.constant 0 : index
    %489 = vector.load %arg13[%c6_217, %c1_218, %c1_219, %c0_220] : memref<8x3x5x32xf32, #tpu.memory_space<vmem>>, vector<2x2x4x32xf32>
    %490 = vector.extract_strided_slice %489 {offsets = [0, 0, 0, 0], sizes = [1, 1, 4, 32], strides = [1, 1, 1, 1]} : vector<2x2x4x32xf32> to vector<1x1x4x32xf32>
    %491 = vector.shape_cast %490 : vector<1x1x4x32xf32> to vector<4x32xf32>
    %c16_221 = arith.constant 16 : index
    %c224_222 = arith.constant 224 : index
    %492 = vector.load %arg14[%c16_221, %c224_222] : memref<64x288xf32, #tpu.memory_space<vmem>>, vector<4x32xf32>
    tpu.vector_store %arg14[%c16_221, %c224_222], %491 {strides = array<i32>} : memref<64x288xf32, #tpu.memory_space<vmem>>, vector<4x32xf32>,
    %493 = vector.extract_strided_slice %489 {offsets = [0, 1, 0, 0], sizes = [1, 1, 4, 32], strides = [1, 1, 1, 1]} : vector<2x2x4x32xf32> to vector<1x1x4x32xf32>
    %494 = vector.shape_cast %493 : vector<1x1x4x32xf32> to vector<4x32xf32>
    %c20_223 = arith.constant 20 : index
    %c224_224 = arith.constant 224 : index
    %495 = vector.load %arg14[%c20_223, %c224_224] : memref<64x288xf32, #tpu.memory_space<vmem>>, vector<4x32xf32>
    tpu.vector_store %arg14[%c20_223, %c224_224], %494 {strides = array<i32>} : memref<64x288xf32, #tpu.memory_space<vmem>>, vector<4x32xf32>,
    %496 = vector.extract_strided_slice %489 {offsets = [1, 0, 0, 0], sizes = [1, 1, 4, 32], strides = [1, 1, 1, 1]} : vector<2x2x4x32xf32> to vector<1x1x4x32xf32>
    %497 = vector.shape_cast %496 : vector<1x1x4x32xf32> to vector<4x32xf32>
    %c24_225 = arith.constant 24 : index
    %c224_226 = arith.constant 224 : index
    %498 = vector.load %arg14[%c24_225, %c224_226] : memref<64x288xf32, #tpu.memory_space<vmem>>, vector<4x32xf32>
    tpu.vector_store %arg14[%c24_225, %c224_226], %497 {strides = array<i32>} : memref<64x288xf32, #tpu.memory_space<vmem>>, vector<4x32xf32>,
    %499 = vector.extract_strided_slice %489 {offsets = [1, 1, 0, 0], sizes = [1, 1, 4, 32], strides = [1, 1, 1, 1]} : vector<2x2x4x32xf32> to vector<1x1x4x32xf32>
    %500 = vector.shape_cast %499 : vector<1x1x4x32xf32> to vector<4x32xf32>
    %c28_227 = arith.constant 28 : index
    %c224_228 = arith.constant 224 : index
    %501 = vector.load %arg14[%c28_227, %c224_228] : memref<64x288xf32, #tpu.memory_space<vmem>>, vector<4x32xf32>
    tpu.vector_store %arg14[%c28_227, %c224_228], %500 {strides = array<i32>} : memref<64x288xf32, #tpu.memory_space<vmem>>, vector<4x32xf32>,
    %c4_229 = arith.constant 4 : index
    %c1_230 = arith.constant 1 : index
    %c1_231 = arith.constant 1 : index
    %c0_232 = arith.constant 0 : index
    %502 = vector.load %arg13[%c4_229, %c1_230, %c1_231, %c0_232] : memref<8x3x5x32xf32, #tpu.memory_space<vmem>>, vector<2x2x4x32xf32>
    %503 = vector.extract_strided_slice %502 {offsets = [0, 0, 0, 0], sizes = [1, 1, 4, 32], strides = [1, 1, 1, 1]} : vector<2x2x4x32xf32> to vector<1x1x4x32xf32>
    %504 = vector.shape_cast %503 : vector<1x1x4x32xf32> to vector<4x32xf32>
    %c16_233 = arith.constant 16 : index
    %c256_234 = arith.constant 256 : index
    %505 = vector.load %arg14[%c16_233, %c256_234] : memref<64x288xf32, #tpu.memory_space<vmem>>, vector<4x32xf32>
    tpu.vector_store %arg14[%c16_233, %c256_234], %504 {strides = array<i32>} : memref<64x288xf32, #tpu.memory_space<vmem>>, vector<4x32xf32>,
    %506 = vector.extract_strided_slice %502 {offsets = [0, 1, 0, 0], sizes = [1, 1, 4, 32], strides = [1, 1, 1, 1]} : vector<2x2x4x32xf32> to vector<1x1x4x32xf32>
    %507 = vector.shape_cast %506 : vector<1x1x4x32xf32> to vector<4x32xf32>
    %c20_235 = arith.constant 20 : index
    %c256_236 = arith.constant 256 : index
    %508 = vector.load %arg14[%c20_235, %c256_236] : memref<64x288xf32, #tpu.memory_space<vmem>>, vector<4x32xf32>
    tpu.vector_store %arg14[%c20_235, %c256_236], %507 {strides = array<i32>} : memref<64x288xf32, #tpu.memory_space<vmem>>, vector<4x32xf32>,
    %509 = vector.extract_strided_slice %502 {offsets = [1, 0, 0, 0], sizes = [1, 1, 4, 32], strides = [1, 1, 1, 1]} : vector<2x2x4x32xf32> to vector<1x1x4x32xf32>
    %510 = vector.shape_cast %509 : vector<1x1x4x32xf32> to vector<4x32xf32>
    %c24_237 = arith.constant 24 : index
    %c256_238 = arith.constant 256 : index
    %511 = vector.load %arg14[%c24_237, %c256_238] : memref<64x288xf32, #tpu.memory_space<vmem>>, vector<4x32xf32>
    tpu.vector_store %arg14[%c24_237, %c256_238], %510 {strides = array<i32>} : memref<64x288xf32, #tpu.memory_space<vmem>>, vector<4x32xf32>,
    %512 = vector.extract_strided_slice %502 {offsets = [1, 1, 0, 0], sizes = [1, 1, 4, 32], strides = [1, 1, 1, 1]} : vector<2x2x4x32xf32> to vector<1x1x4x32xf32>
    %513 = vector.shape_cast %512 : vector<1x1x4x32xf32> to vector<4x32xf32>
    %c28_239 = arith.constant 28 : index
    %c256_240 = arith.constant 256 : index
    %514 = vector.load %arg14[%c28_239, %c256_240] : memref<64x288xf32, #tpu.memory_space<vmem>>, vector<4x32xf32>
    tpu.vector_store %arg14[%c28_239, %c256_240], %513 {strides = array<i32>} : memref<64x288xf32, #tpu.memory_space<vmem>>, vector<4x32xf32>,
    %c2_241 = arith.constant 2 : index
    %c0_242 = arith.constant 0 : index
    %c0_243 = arith.constant 0 : index
    %c0_244 = arith.constant 0 : index
    %515 = vector.load %arg13[%c2_241, %c0_242, %c0_243, %c0_244] : memref<8x3x5x32xf32, #tpu.memory_space<vmem>>, vector<2x2x4x32xf32>
    %516 = vector.extract_strided_slice %515 {offsets = [0, 0, 0, 0], sizes = [1, 1, 4, 32], strides = [1, 1, 1, 1]} : vector<2x2x4x32xf32> to vector<1x1x4x32xf32>
    %517 = vector.shape_cast %516 : vector<1x1x4x32xf32> to vector<4x32xf32>
    %c32_245 = arith.constant 32 : index
    %c0_246 = arith.constant 0 : index
    %518 = vector.load %arg14[%c32_245, %c0_246] : memref<64x288xf32, #tpu.memory_space<vmem>>, vector<4x32xf32>
    tpu.vector_store %arg14[%c32_245, %c0_246], %517 {strides = array<i32>} : memref<64x288xf32, #tpu.memory_space<vmem>>, vector<4x32xf32>,
    %519 = vector.extract_strided_slice %515 {offsets = [0, 1, 0, 0], sizes = [1, 1, 4, 32], strides = [1, 1, 1, 1]} : vector<2x2x4x32xf32> to vector<1x1x4x32xf32>
    %520 = vector.shape_cast %519 : vector<1x1x4x32xf32> to vector<4x32xf32>
    %c36 = arith.constant 36 : index
    %c0_247 = arith.constant 0 : index
    %521 = vector.load %arg14[%c36, %c0_247] : memref<64x288xf32, #tpu.memory_space<vmem>>, vector<4x32xf32>
    tpu.vector_store %arg14[%c36, %c0_247], %520 {strides = array<i32>} : memref<64x288xf32, #tpu.memory_space<vmem>>, vector<4x32xf32>,
    %522 = vector.extract_strided_slice %515 {offsets = [1, 0, 0, 0], sizes = [1, 1, 4, 32], strides = [1, 1, 1, 1]} : vector<2x2x4x32xf32> to vector<1x1x4x32xf32>
    %523 = vector.shape_cast %522 : vector<1x1x4x32xf32> to vector<4x32xf32>
    %c40 = arith.constant 40 : index
    %c0_248 = arith.constant 0 : index
    %524 = vector.load %arg14[%c40, %c0_248] : memref<64x288xf32, #tpu.memory_space<vmem>>, vector<4x32xf32>
    tpu.vector_store %arg14[%c40, %c0_248], %523 {strides = array<i32>} : memref<64x288xf32, #tpu.memory_space<vmem>>, vector<4x32xf32>,
    %525 = vector.extract_strided_slice %515 {offsets = [1, 1, 0, 0], sizes = [1, 1, 4, 32], strides = [1, 1, 1, 1]} : vector<2x2x4x32xf32> to vector<1x1x4x32xf32>
    %526 = vector.shape_cast %525 : vector<1x1x4x32xf32> to vector<4x32xf32>
    %c44 = arith.constant 44 : index
    %c0_249 = arith.constant 0 : index
    %527 = vector.load %arg14[%c44, %c0_249] : memref<64x288xf32, #tpu.memory_space<vmem>>, vector<4x32xf32>
    tpu.vector_store %arg14[%c44, %c0_249], %526 {strides = array<i32>} : memref<64x288xf32, #tpu.memory_space<vmem>>, vector<4x32xf32>,
    %c0_250 = arith.constant 0 : index
    %c0_251 = arith.constant 0 : index
    %c0_252 = arith.constant 0 : index
    %c0_253 = arith.constant 0 : index
    %528 = vector.load %arg13[%c0_250, %c0_251, %c0_252, %c0_253] : memref<8x3x5x32xf32, #tpu.memory_space<vmem>>, vector<2x2x4x32xf32>
    %529 = vector.extract_strided_slice %528 {offsets = [0, 0, 0, 0], sizes = [1, 1, 4, 32], strides = [1, 1, 1, 1]} : vector<2x2x4x32xf32> to vector<1x1x4x32xf32>
    %530 = vector.shape_cast %529 : vector<1x1x4x32xf32> to vector<4x32xf32>
    %c32_254 = arith.constant 32 : index
    %c32_255 = arith.constant 32 : index
    %531 = vector.load %arg14[%c32_254, %c32_255] : memref<64x288xf32, #tpu.memory_space<vmem>>, vector<4x32xf32>
    tpu.vector_store %arg14[%c32_254, %c32_255], %530 {strides = array<i32>} : memref<64x288xf32, #tpu.memory_space<vmem>>, vector<4x32xf32>,
    %532 = vector.extract_strided_slice %528 {offsets = [0, 1, 0, 0], sizes = [1, 1, 4, 32], strides = [1, 1, 1, 1]} : vector<2x2x4x32xf32> to vector<1x1x4x32xf32>
    %533 = vector.shape_cast %532 : vector<1x1x4x32xf32> to vector<4x32xf32>
    %c36_256 = arith.constant 36 : index
    %c32_257 = arith.constant 32 : index
    %534 = vector.load %arg14[%c36_256, %c32_257] : memref<64x288xf32, #tpu.memory_space<vmem>>, vector<4x32xf32>
    tpu.vector_store %arg14[%c36_256, %c32_257], %533 {strides = array<i32>} : memref<64x288xf32, #tpu.memory_space<vmem>>, vector<4x32xf32>,
    %535 = vector.extract_strided_slice %528 {offsets = [1, 0, 0, 0], sizes = [1, 1, 4, 32], strides = [1, 1, 1, 1]} : vector<2x2x4x32xf32> to vector<1x1x4x32xf32>
    %536 = vector.shape_cast %535 : vector<1x1x4x32xf32> to vector<4x32xf32>
    %c40_258 = arith.constant 40 : index
    %c32_259 = arith.constant 32 : index
    %537 = vector.load %arg14[%c40_258, %c32_259] : memref<64x288xf32, #tpu.memory_space<vmem>>, vector<4x32xf32>
    tpu.vector_store %arg14[%c40_258, %c32_259], %536 {strides = array<i32>} : memref<64x288xf32, #tpu.memory_space<vmem>>, vector<4x32xf32>,
    %538 = vector.extract_strided_slice %528 {offsets = [1, 1, 0, 0], sizes = [1, 1, 4, 32], strides = [1, 1, 1, 1]} : vector<2x2x4x32xf32> to vector<1x1x4x32xf32>
    %539 = vector.shape_cast %538 : vector<1x1x4x32xf32> to vector<4x32xf32>
    %c44_260 = arith.constant 44 : index
    %c32_261 = arith.constant 32 : index
    %540 = vector.load %arg14[%c44_260, %c32_261] : memref<64x288xf32, #tpu.memory_space<vmem>>, vector<4x32xf32>
    tpu.vector_store %arg14[%c44_260, %c32_261], %539 {strides = array<i32>} : memref<64x288xf32, #tpu.memory_space<vmem>>, vector<4x32xf32>,
    %c2_262 = arith.constant 2 : index
    %c0_263 = arith.constant 0 : index
    %c1_264 = arith.constant 1 : index
    %c0_265 = arith.constant 0 : index
    %541 = vector.load %arg13[%c2_262, %c0_263, %c1_264, %c0_265] : memref<8x3x5x32xf32, #tpu.memory_space<vmem>>, vector<2x2x4x32xf32>
    %542 = vector.extract_strided_slice %541 {offsets = [0, 0, 0, 0], sizes = [1, 1, 4, 32], strides = [1, 1, 1, 1]} : vector<2x2x4x32xf32> to vector<1x1x4x32xf32>
    %543 = vector.shape_cast %542 : vector<1x1x4x32xf32> to vector<4x32xf32>
    %c32_266 = arith.constant 32 : index
    %c64_267 = arith.constant 64 : index
    %544 = vector.load %arg14[%c32_266, %c64_267] : memref<64x288xf32, #tpu.memory_space<vmem>>, vector<4x32xf32>
    tpu.vector_store %arg14[%c32_266, %c64_267], %543 {strides = array<i32>} : memref<64x288xf32, #tpu.memory_space<vmem>>, vector<4x32xf32>,
    %545 = vector.extract_strided_slice %541 {offsets = [0, 1, 0, 0], sizes = [1, 1, 4, 32], strides = [1, 1, 1, 1]} : vector<2x2x4x32xf32> to vector<1x1x4x32xf32>
    %546 = vector.shape_cast %545 : vector<1x1x4x32xf32> to vector<4x32xf32>
    %c36_268 = arith.constant 36 : index
    %c64_269 = arith.constant 64 : index
    %547 = vector.load %arg14[%c36_268, %c64_269] : memref<64x288xf32, #tpu.memory_space<vmem>>, vector<4x32xf32>
    tpu.vector_store %arg14[%c36_268, %c64_269], %546 {strides = array<i32>} : memref<64x288xf32, #tpu.memory_space<vmem>>, vector<4x32xf32>,
    %548 = vector.extract_strided_slice %541 {offsets = [1, 0, 0, 0], sizes = [1, 1, 4, 32], strides = [1, 1, 1, 1]} : vector<2x2x4x32xf32> to vector<1x1x4x32xf32>
    %549 = vector.shape_cast %548 : vector<1x1x4x32xf32> to vector<4x32xf32>
    %c40_270 = arith.constant 40 : index
    %c64_271 = arith.constant 64 : index
    %550 = vector.load %arg14[%c40_270, %c64_271] : memref<64x288xf32, #tpu.memory_space<vmem>>, vector<4x32xf32>
    tpu.vector_store %arg14[%c40_270, %c64_271], %549 {strides = array<i32>} : memref<64x288xf32, #tpu.memory_space<vmem>>, vector<4x32xf32>,
    %551 = vector.extract_strided_slice %541 {offsets = [1, 1, 0, 0], sizes = [1, 1, 4, 32], strides = [1, 1, 1, 1]} : vector<2x2x4x32xf32> to vector<1x1x4x32xf32>
    %552 = vector.shape_cast %551 : vector<1x1x4x32xf32> to vector<4x32xf32>
    %c44_272 = arith.constant 44 : index
    %c64_273 = arith.constant 64 : index
    %553 = vector.load %arg14[%c44_272, %c64_273] : memref<64x288xf32, #tpu.memory_space<vmem>>, vector<4x32xf32>
    tpu.vector_store %arg14[%c44_272, %c64_273], %552 {strides = array<i32>} : memref<64x288xf32, #tpu.memory_space<vmem>>, vector<4x32xf32>,
    %c6_274 = arith.constant 6 : index
    %c1_275 = arith.constant 1 : index
    %c0_276 = arith.constant 0 : index
    %c0_277 = arith.constant 0 : index
    %554 = vector.load %arg13[%c6_274, %c1_275, %c0_276, %c0_277] : memref<8x3x5x32xf32, #tpu.memory_space<vmem>>, vector<2x2x4x32xf32>
    %555 = vector.extract_strided_slice %554 {offsets = [0, 0, 0, 0], sizes = [1, 1, 4, 32], strides = [1, 1, 1, 1]} : vector<2x2x4x32xf32> to vector<1x1x4x32xf32>
    %556 = vector.shape_cast %555 : vector<1x1x4x32xf32> to vector<4x32xf32>
    %c32_278 = arith.constant 32 : index
    %c96_279 = arith.constant 96 : index
    %557 = vector.load %arg14[%c32_278, %c96_279] : memref<64x288xf32, #tpu.memory_space<vmem>>, vector<4x32xf32>
    tpu.vector_store %arg14[%c32_278, %c96_279], %556 {strides = array<i32>} : memref<64x288xf32, #tpu.memory_space<vmem>>, vector<4x32xf32>,
    %558 = vector.extract_strided_slice %554 {offsets = [0, 1, 0, 0], sizes = [1, 1, 4, 32], strides = [1, 1, 1, 1]} : vector<2x2x4x32xf32> to vector<1x1x4x32xf32>
    %559 = vector.shape_cast %558 : vector<1x1x4x32xf32> to vector<4x32xf32>
    %c36_280 = arith.constant 36 : index
    %c96_281 = arith.constant 96 : index
    %560 = vector.load %arg14[%c36_280, %c96_281] : memref<64x288xf32, #tpu.memory_space<vmem>>, vector<4x32xf32>
    tpu.vector_store %arg14[%c36_280, %c96_281], %559 {strides = array<i32>} : memref<64x288xf32, #tpu.memory_space<vmem>>, vector<4x32xf32>,
    %561 = vector.extract_strided_slice %554 {offsets = [1, 0, 0, 0], sizes = [1, 1, 4, 32], strides = [1, 1, 1, 1]} : vector<2x2x4x32xf32> to vector<1x1x4x32xf32>
    %562 = vector.shape_cast %561 : vector<1x1x4x32xf32> to vector<4x32xf32>
    %c40_282 = arith.constant 40 : index
    %c96_283 = arith.constant 96 : index
    %563 = vector.load %arg14[%c40_282, %c96_283] : memref<64x288xf32, #tpu.memory_space<vmem>>, vector<4x32xf32>
    tpu.vector_store %arg14[%c40_282, %c96_283], %562 {strides = array<i32>} : memref<64x288xf32, #tpu.memory_space<vmem>>, vector<4x32xf32>,
    %564 = vector.extract_strided_slice %554 {offsets = [1, 1, 0, 0], sizes = [1, 1, 4, 32], strides = [1, 1, 1, 1]} : vector<2x2x4x32xf32> to vector<1x1x4x32xf32>
    %565 = vector.shape_cast %564 : vector<1x1x4x32xf32> to vector<4x32xf32>
    %c44_284 = arith.constant 44 : index
    %c96_285 = arith.constant 96 : index
    %566 = vector.load %arg14[%c44_284, %c96_285] : memref<64x288xf32, #tpu.memory_space<vmem>>, vector<4x32xf32>
    tpu.vector_store %arg14[%c44_284, %c96_285], %565 {strides = array<i32>} : memref<64x288xf32, #tpu.memory_space<vmem>>, vector<4x32xf32>,
    %c4_286 = arith.constant 4 : index
    %c1_287 = arith.constant 1 : index
    %c0_288 = arith.constant 0 : index
    %c0_289 = arith.constant 0 : index
    %567 = vector.load %arg13[%c4_286, %c1_287, %c0_288, %c0_289] : memref<8x3x5x32xf32, #tpu.memory_space<vmem>>, vector<2x2x4x32xf32>
    %568 = vector.extract_strided_slice %567 {offsets = [0, 0, 0, 0], sizes = [1, 1, 4, 32], strides = [1, 1, 1, 1]} : vector<2x2x4x32xf32> to vector<1x1x4x32xf32>
    %569 = vector.shape_cast %568 : vector<1x1x4x32xf32> to vector<4x32xf32>
    %c32_290 = arith.constant 32 : index
    %c128_291 = arith.constant 128 : index
    %570 = vector.load %arg14[%c32_290, %c128_291] : memref<64x288xf32, #tpu.memory_space<vmem>>, vector<4x32xf32>
    tpu.vector_store %arg14[%c32_290, %c128_291], %569 {strides = array<i32>} : memref<64x288xf32, #tpu.memory_space<vmem>>, vector<4x32xf32>,
    %571 = vector.extract_strided_slice %567 {offsets = [0, 1, 0, 0], sizes = [1, 1, 4, 32], strides = [1, 1, 1, 1]} : vector<2x2x4x32xf32> to vector<1x1x4x32xf32>
    %572 = vector.shape_cast %571 : vector<1x1x4x32xf32> to vector<4x32xf32>
    %c36_292 = arith.constant 36 : index
    %c128_293 = arith.constant 128 : index
    %573 = vector.load %arg14[%c36_292, %c128_293] : memref<64x288xf32, #tpu.memory_space<vmem>>, vector<4x32xf32>
    tpu.vector_store %arg14[%c36_292, %c128_293], %572 {strides = array<i32>} : memref<64x288xf32, #tpu.memory_space<vmem>>, vector<4x32xf32>,
    %574 = vector.extract_strided_slice %567 {offsets = [1, 0, 0, 0], sizes = [1, 1, 4, 32], strides = [1, 1, 1, 1]} : vector<2x2x4x32xf32> to vector<1x1x4x32xf32>
    %575 = vector.shape_cast %574 : vector<1x1x4x32xf32> to vector<4x32xf32>
    %c40_294 = arith.constant 40 : index
    %c128_295 = arith.constant 128 : index
    %576 = vector.load %arg14[%c40_294, %c128_295] : memref<64x288xf32, #tpu.memory_space<vmem>>, vector<4x32xf32>
    tpu.vector_store %arg14[%c40_294, %c128_295], %575 {strides = array<i32>} : memref<64x288xf32, #tpu.memory_space<vmem>>, vector<4x32xf32>,
    %577 = vector.extract_strided_slice %567 {offsets = [1, 1, 0, 0], sizes = [1, 1, 4, 32], strides = [1, 1, 1, 1]} : vector<2x2x4x32xf32> to vector<1x1x4x32xf32>
    %578 = vector.shape_cast %577 : vector<1x1x4x32xf32> to vector<4x32xf32>
    %c44_296 = arith.constant 44 : index
    %c128_297 = arith.constant 128 : index
    %579 = vector.load %arg14[%c44_296, %c128_297] : memref<64x288xf32, #tpu.memory_space<vmem>>, vector<4x32xf32>
    tpu.vector_store %arg14[%c44_296, %c128_297], %578 {strides = array<i32>} : memref<64x288xf32, #tpu.memory_space<vmem>>, vector<4x32xf32>,
    %c6_298 = arith.constant 6 : index
    %c1_299 = arith.constant 1 : index
    %c1_300 = arith.constant 1 : index
    %c0_301 = arith.constant 0 : index
    %580 = vector.load %arg13[%c6_298, %c1_299, %c1_300, %c0_301] : memref<8x3x5x32xf32, #tpu.memory_space<vmem>>, vector<2x2x4x32xf32>
    %581 = vector.extract_strided_slice %580 {offsets = [0, 0, 0, 0], sizes = [1, 1, 4, 32], strides = [1, 1, 1, 1]} : vector<2x2x4x32xf32> to vector<1x1x4x32xf32>
    %582 = vector.shape_cast %581 : vector<1x1x4x32xf32> to vector<4x32xf32>
    %c32_302 = arith.constant 32 : index
    %c160_303 = arith.constant 160 : index
    %583 = vector.load %arg14[%c32_302, %c160_303] : memref<64x288xf32, #tpu.memory_space<vmem>>, vector<4x32xf32>
    tpu.vector_store %arg14[%c32_302, %c160_303], %582 {strides = array<i32>} : memref<64x288xf32, #tpu.memory_space<vmem>>, vector<4x32xf32>,
    %584 = vector.extract_strided_slice %580 {offsets = [0, 1, 0, 0], sizes = [1, 1, 4, 32], strides = [1, 1, 1, 1]} : vector<2x2x4x32xf32> to vector<1x1x4x32xf32>
    %585 = vector.shape_cast %584 : vector<1x1x4x32xf32> to vector<4x32xf32>
    %c36_304 = arith.constant 36 : index
    %c160_305 = arith.constant 160 : index
    %586 = vector.load %arg14[%c36_304, %c160_305] : memref<64x288xf32, #tpu.memory_space<vmem>>, vector<4x32xf32>
    tpu.vector_store %arg14[%c36_304, %c160_305], %585 {strides = array<i32>} : memref<64x288xf32, #tpu.memory_space<vmem>>, vector<4x32xf32>,
    %587 = vector.extract_strided_slice %580 {offsets = [1, 0, 0, 0], sizes = [1, 1, 4, 32], strides = [1, 1, 1, 1]} : vector<2x2x4x32xf32> to vector<1x1x4x32xf32>
    %588 = vector.shape_cast %587 : vector<1x1x4x32xf32> to vector<4x32xf32>
    %c40_306 = arith.constant 40 : index
    %c160_307 = arith.constant 160 : index
    %589 = vector.load %arg14[%c40_306, %c160_307] : memref<64x288xf32, #tpu.memory_space<vmem>>, vector<4x32xf32>
    tpu.vector_store %arg14[%c40_306, %c160_307], %588 {strides = array<i32>} : memref<64x288xf32, #tpu.memory_space<vmem>>, vector<4x32xf32>,
    %590 = vector.extract_strided_slice %580 {offsets = [1, 1, 0, 0], sizes = [1, 1, 4, 32], strides = [1, 1, 1, 1]} : vector<2x2x4x32xf32> to vector<1x1x4x32xf32>
    %591 = vector.shape_cast %590 : vector<1x1x4x32xf32> to vector<4x32xf32>
    %c44_308 = arith.constant 44 : index
    %c160_309 = arith.constant 160 : index
    %592 = vector.load %arg14[%c44_308, %c160_309] : memref<64x288xf32, #tpu.memory_space<vmem>>, vector<4x32xf32>
    tpu.vector_store %arg14[%c44_308, %c160_309], %591 {strides = array<i32>} : memref<64x288xf32, #tpu.memory_space<vmem>>, vector<4x32xf32>,
    %c2_310 = arith.constant 2 : index
    %c1_311 = arith.constant 1 : index
    %c0_312 = arith.constant 0 : index
    %c0_313 = arith.constant 0 : index
    %593 = vector.load %arg13[%c2_310, %c1_311, %c0_312, %c0_313] : memref<8x3x5x32xf32, #tpu.memory_space<vmem>>, vector<2x2x4x32xf32>
    %594 = vector.extract_strided_slice %593 {offsets = [0, 0, 0, 0], sizes = [1, 1, 4, 32], strides = [1, 1, 1, 1]} : vector<2x2x4x32xf32> to vector<1x1x4x32xf32>
    %595 = vector.shape_cast %594 : vector<1x1x4x32xf32> to vector<4x32xf32>
    %c32_314 = arith.constant 32 : index
    %c192_315 = arith.constant 192 : index
    %596 = vector.load %arg14[%c32_314, %c192_315] : memref<64x288xf32, #tpu.memory_space<vmem>>, vector<4x32xf32>
    tpu.vector_store %arg14[%c32_314, %c192_315], %595 {strides = array<i32>} : memref<64x288xf32, #tpu.memory_space<vmem>>, vector<4x32xf32>,
    %597 = vector.extract_strided_slice %593 {offsets = [0, 1, 0, 0], sizes = [1, 1, 4, 32], strides = [1, 1, 1, 1]} : vector<2x2x4x32xf32> to vector<1x1x4x32xf32>
    %598 = vector.shape_cast %597 : vector<1x1x4x32xf32> to vector<4x32xf32>
    %c36_316 = arith.constant 36 : index
    %c192_317 = arith.constant 192 : index
    %599 = vector.load %arg14[%c36_316, %c192_317] : memref<64x288xf32, #tpu.memory_space<vmem>>, vector<4x32xf32>
    tpu.vector_store %arg14[%c36_316, %c192_317], %598 {strides = array<i32>} : memref<64x288xf32, #tpu.memory_space<vmem>>, vector<4x32xf32>,
    %600 = vector.extract_strided_slice %593 {offsets = [1, 0, 0, 0], sizes = [1, 1, 4, 32], strides = [1, 1, 1, 1]} : vector<2x2x4x32xf32> to vector<1x1x4x32xf32>
    %601 = vector.shape_cast %600 : vector<1x1x4x32xf32> to vector<4x32xf32>
    %c40_318 = arith.constant 40 : index
    %c192_319 = arith.constant 192 : index
    %602 = vector.load %arg14[%c40_318, %c192_319] : memref<64x288xf32, #tpu.memory_space<vmem>>, vector<4x32xf32>
    tpu.vector_store %arg14[%c40_318, %c192_319], %601 {strides = array<i32>} : memref<64x288xf32, #tpu.memory_space<vmem>>, vector<4x32xf32>,
    %603 = vector.extract_strided_slice %593 {offsets = [1, 1, 0, 0], sizes = [1, 1, 4, 32], strides = [1, 1, 1, 1]} : vector<2x2x4x32xf32> to vector<1x1x4x32xf32>
    %604 = vector.shape_cast %603 : vector<1x1x4x32xf32> to vector<4x32xf32>
    %c44_320 = arith.constant 44 : index
    %c192_321 = arith.constant 192 : index
    %605 = vector.load %arg14[%c44_320, %c192_321] : memref<64x288xf32, #tpu.memory_space<vmem>>, vector<4x32xf32>
    tpu.vector_store %arg14[%c44_320, %c192_321], %604 {strides = array<i32>} : memref<64x288xf32, #tpu.memory_space<vmem>>, vector<4x32xf32>,
    %c0_322 = arith.constant 0 : index
    %c1_323 = arith.constant 1 : index
    %c0_324 = arith.constant 0 : index
    %c0_325 = arith.constant 0 : index
    %606 = vector.load %arg13[%c0_322, %c1_323, %c0_324, %c0_325] : memref<8x3x5x32xf32, #tpu.memory_space<vmem>>, vector<2x2x4x32xf32>
    %607 = vector.extract_strided_slice %606 {offsets = [0, 0, 0, 0], sizes = [1, 1, 4, 32], strides = [1, 1, 1, 1]} : vector<2x2x4x32xf32> to vector<1x1x4x32xf32>
    %608 = vector.shape_cast %607 : vector<1x1x4x32xf32> to vector<4x32xf32>
    %c32_326 = arith.constant 32 : index
    %c224_327 = arith.constant 224 : index
    %609 = vector.load %arg14[%c32_326, %c224_327] : memref<64x288xf32, #tpu.memory_space<vmem>>, vector<4x32xf32>
    tpu.vector_store %arg14[%c32_326, %c224_327], %608 {strides = array<i32>} : memref<64x288xf32, #tpu.memory_space<vmem>>, vector<4x32xf32>,
    %610 = vector.extract_strided_slice %606 {offsets = [0, 1, 0, 0], sizes = [1, 1, 4, 32], strides = [1, 1, 1, 1]} : vector<2x2x4x32xf32> to vector<1x1x4x32xf32>
    %611 = vector.shape_cast %610 : vector<1x1x4x32xf32> to vector<4x32xf32>
    %c36_328 = arith.constant 36 : index
    %c224_329 = arith.constant 224 : index
    %612 = vector.load %arg14[%c36_328, %c224_329] : memref<64x288xf32, #tpu.memory_space<vmem>>, vector<4x32xf32>
    tpu.vector_store %arg14[%c36_328, %c224_329], %611 {strides = array<i32>} : memref<64x288xf32, #tpu.memory_space<vmem>>, vector<4x32xf32>,
    %613 = vector.extract_strided_slice %606 {offsets = [1, 0, 0, 0], sizes = [1, 1, 4, 32], strides = [1, 1, 1, 1]} : vector<2x2x4x32xf32> to vector<1x1x4x32xf32>
    %614 = vector.shape_cast %613 : vector<1x1x4x32xf32> to vector<4x32xf32>
    %c40_330 = arith.constant 40 : index
    %c224_331 = arith.constant 224 : index
    %615 = vector.load %arg14[%c40_330, %c224_331] : memref<64x288xf32, #tpu.memory_space<vmem>>, vector<4x32xf32>
    tpu.vector_store %arg14[%c40_330, %c224_331], %614 {strides = array<i32>} : memref<64x288xf32, #tpu.memory_space<vmem>>, vector<4x32xf32>,
    %616 = vector.extract_strided_slice %606 {offsets = [1, 1, 0, 0], sizes = [1, 1, 4, 32], strides = [1, 1, 1, 1]} : vector<2x2x4x32xf32> to vector<1x1x4x32xf32>
    %617 = vector.shape_cast %616 : vector<1x1x4x32xf32> to vector<4x32xf32>
    %c44_332 = arith.constant 44 : index
    %c224_333 = arith.constant 224 : index
    %618 = vector.load %arg14[%c44_332, %c224_333] : memref<64x288xf32, #tpu.memory_space<vmem>>, vector<4x32xf32>
    tpu.vector_store %arg14[%c44_332, %c224_333], %617 {strides = array<i32>} : memref<64x288xf32, #tpu.memory_space<vmem>>, vector<4x32xf32>,
    %c2_334 = arith.constant 2 : index
    %c1_335 = arith.constant 1 : index
    %c1_336 = arith.constant 1 : index
    %c0_337 = arith.constant 0 : index
    %619 = vector.load %arg13[%c2_334, %c1_335, %c1_336, %c0_337] : memref<8x3x5x32xf32, #tpu.memory_space<vmem>>, vector<2x2x4x32xf32>
    %620 = vector.extract_strided_slice %619 {offsets = [0, 0, 0, 0], sizes = [1, 1, 4, 32], strides = [1, 1, 1, 1]} : vector<2x2x4x32xf32> to vector<1x1x4x32xf32>
    %621 = vector.shape_cast %620 : vector<1x1x4x32xf32> to vector<4x32xf32>
    %c32_338 = arith.constant 32 : index
    %c256_339 = arith.constant 256 : index
    %622 = vector.load %arg14[%c32_338, %c256_339] : memref<64x288xf32, #tpu.memory_space<vmem>>, vector<4x32xf32>
    tpu.vector_store %arg14[%c32_338, %c256_339], %621 {strides = array<i32>} : memref<64x288xf32, #tpu.memory_space<vmem>>, vector<4x32xf32>,
    %623 = vector.extract_strided_slice %619 {offsets = [0, 1, 0, 0], sizes = [1, 1, 4, 32], strides = [1, 1, 1, 1]} : vector<2x2x4x32xf32> to vector<1x1x4x32xf32>
    %624 = vector.shape_cast %623 : vector<1x1x4x32xf32> to vector<4x32xf32>
    %c36_340 = arith.constant 36 : index
    %c256_341 = arith.constant 256 : index
    %625 = vector.load %arg14[%c36_340, %c256_341] : memref<64x288xf32, #tpu.memory_space<vmem>>, vector<4x32xf32>
    tpu.vector_store %arg14[%c36_340, %c256_341], %624 {strides = array<i32>} : memref<64x288xf32, #tpu.memory_space<vmem>>, vector<4x32xf32>,
    %626 = vector.extract_strided_slice %619 {offsets = [1, 0, 0, 0], sizes = [1, 1, 4, 32], strides = [1, 1, 1, 1]} : vector<2x2x4x32xf32> to vector<1x1x4x32xf32>
    %627 = vector.shape_cast %626 : vector<1x1x4x32xf32> to vector<4x32xf32>
    %c40_342 = arith.constant 40 : index
    %c256_343 = arith.constant 256 : index
    %628 = vector.load %arg14[%c40_342, %c256_343] : memref<64x288xf32, #tpu.memory_space<vmem>>, vector<4x32xf32>
    tpu.vector_store %arg14[%c40_342, %c256_343], %627 {strides = array<i32>} : memref<64x288xf32, #tpu.memory_space<vmem>>, vector<4x32xf32>,
    %629 = vector.extract_strided_slice %619 {offsets = [1, 1, 0, 0], sizes = [1, 1, 4, 32], strides = [1, 1, 1, 1]} : vector<2x2x4x32xf32> to vector<1x1x4x32xf32>
    %630 = vector.shape_cast %629 : vector<1x1x4x32xf32> to vector<4x32xf32>
    %c44_344 = arith.constant 44 : index
    %c256_345 = arith.constant 256 : index
    %631 = vector.load %arg14[%c44_344, %c256_345] : memref<64x288xf32, #tpu.memory_space<vmem>>, vector<4x32xf32>
    tpu.vector_store %arg14[%c44_344, %c256_345], %630 {strides = array<i32>} : memref<64x288xf32, #tpu.memory_space<vmem>>, vector<4x32xf32>,
    %c0_346 = arith.constant 0 : index
    %c0_347 = arith.constant 0 : index
    %c0_348 = arith.constant 0 : index
    %c0_349 = arith.constant 0 : index
    %632 = vector.load %arg13[%c0_346, %c0_347, %c0_348, %c0_349] : memref<8x3x5x32xf32, #tpu.memory_space<vmem>>, vector<2x2x4x32xf32>
    %633 = vector.extract_strided_slice %632 {offsets = [0, 0, 0, 0], sizes = [1, 1, 4, 32], strides = [1, 1, 1, 1]} : vector<2x2x4x32xf32> to vector<1x1x4x32xf32>
    %634 = vector.shape_cast %633 : vector<1x1x4x32xf32> to vector<4x32xf32>
    %c48 = arith.constant 48 : index
    %c0_350 = arith.constant 0 : index
    %635 = vector.load %arg14[%c48, %c0_350] : memref<64x288xf32, #tpu.memory_space<vmem>>, vector<4x32xf32>
    tpu.vector_store %arg14[%c48, %c0_350], %634 {strides = array<i32>} : memref<64x288xf32, #tpu.memory_space<vmem>>, vector<4x32xf32>,
    %636 = vector.extract_strided_slice %632 {offsets = [0, 1, 0, 0], sizes = [1, 1, 4, 32], strides = [1, 1, 1, 1]} : vector<2x2x4x32xf32> to vector<1x1x4x32xf32>
    %637 = vector.shape_cast %636 : vector<1x1x4x32xf32> to vector<4x32xf32>
    %c52 = arith.constant 52 : index
    %c0_351 = arith.constant 0 : index
    %638 = vector.load %arg14[%c52, %c0_351] : memref<64x288xf32, #tpu.memory_space<vmem>>, vector<4x32xf32>
    tpu.vector_store %arg14[%c52, %c0_351], %637 {strides = array<i32>} : memref<64x288xf32, #tpu.memory_space<vmem>>, vector<4x32xf32>,
    %639 = vector.extract_strided_slice %632 {offsets = [1, 0, 0, 0], sizes = [1, 1, 4, 32], strides = [1, 1, 1, 1]} : vector<2x2x4x32xf32> to vector<1x1x4x32xf32>
    %640 = vector.shape_cast %639 : vector<1x1x4x32xf32> to vector<4x32xf32>
    %c56 = arith.constant 56 : index
    %c0_352 = arith.constant 0 : index
    %641 = vector.load %arg14[%c56, %c0_352] : memref<64x288xf32, #tpu.memory_space<vmem>>, vector<4x32xf32>
    tpu.vector_store %arg14[%c56, %c0_352], %640 {strides = array<i32>} : memref<64x288xf32, #tpu.memory_space<vmem>>, vector<4x32xf32>,
    %642 = vector.extract_strided_slice %632 {offsets = [1, 1, 0, 0], sizes = [1, 1, 4, 32], strides = [1, 1, 1, 1]} : vector<2x2x4x32xf32> to vector<1x1x4x32xf32>
    %643 = vector.shape_cast %642 : vector<1x1x4x32xf32> to vector<4x32xf32>
    %c60 = arith.constant 60 : index
    %c0_353 = arith.constant 0 : index
    %644 = vector.load %arg14[%c60, %c0_353] : memref<64x288xf32, #tpu.memory_space<vmem>>, vector<4x32xf32>
    tpu.vector_store %arg14[%c60, %c0_353], %643 {strides = array<i32>} : memref<64x288xf32, #tpu.memory_space<vmem>>, vector<4x32xf32>,
    %c2_354 = arith.constant 2 : index
    %c0_355 = arith.constant 0 : index
    %c1_356 = arith.constant 1 : index
    %c0_357 = arith.constant 0 : index
    %645 = vector.load %arg13[%c2_354, %c0_355, %c1_356, %c0_357] : memref<8x3x5x32xf32, #tpu.memory_space<vmem>>, vector<2x2x4x32xf32>
    %646 = vector.extract_strided_slice %645 {offsets = [0, 0, 0, 0], sizes = [1, 1, 4, 32], strides = [1, 1, 1, 1]} : vector<2x2x4x32xf32> to vector<1x1x4x32xf32>
    %647 = vector.shape_cast %646 : vector<1x1x4x32xf32> to vector<4x32xf32>
    %c48_358 = arith.constant 48 : index
    %c32_359 = arith.constant 32 : index
    %648 = vector.load %arg14[%c48_358, %c32_359] : memref<64x288xf32, #tpu.memory_space<vmem>>, vector<4x32xf32>
    tpu.vector_store %arg14[%c48_358, %c32_359], %647 {strides = array<i32>} : memref<64x288xf32, #tpu.memory_space<vmem>>, vector<4x32xf32>,
    %649 = vector.extract_strided_slice %645 {offsets = [0, 1, 0, 0], sizes = [1, 1, 4, 32], strides = [1, 1, 1, 1]} : vector<2x2x4x32xf32> to vector<1x1x4x32xf32>
    %650 = vector.shape_cast %649 : vector<1x1x4x32xf32> to vector<4x32xf32>
    %c52_360 = arith.constant 52 : index
    %c32_361 = arith.constant 32 : index
    %651 = vector.load %arg14[%c52_360, %c32_361] : memref<64x288xf32, #tpu.memory_space<vmem>>, vector<4x32xf32>
    tpu.vector_store %arg14[%c52_360, %c32_361], %650 {strides = array<i32>} : memref<64x288xf32, #tpu.memory_space<vmem>>, vector<4x32xf32>,
    %652 = vector.extract_strided_slice %645 {offsets = [1, 0, 0, 0], sizes = [1, 1, 4, 32], strides = [1, 1, 1, 1]} : vector<2x2x4x32xf32> to vector<1x1x4x32xf32>
    %653 = vector.shape_cast %652 : vector<1x1x4x32xf32> to vector<4x32xf32>
    %c56_362 = arith.constant 56 : index
    %c32_363 = arith.constant 32 : index
    %654 = vector.load %arg14[%c56_362, %c32_363] : memref<64x288xf32, #tpu.memory_space<vmem>>, vector<4x32xf32>
    tpu.vector_store %arg14[%c56_362, %c32_363], %653 {strides = array<i32>} : memref<64x288xf32, #tpu.memory_space<vmem>>, vector<4x32xf32>,
    %655 = vector.extract_strided_slice %645 {offsets = [1, 1, 0, 0], sizes = [1, 1, 4, 32], strides = [1, 1, 1, 1]} : vector<2x2x4x32xf32> to vector<1x1x4x32xf32>
    %656 = vector.shape_cast %655 : vector<1x1x4x32xf32> to vector<4x32xf32>
    %c60_364 = arith.constant 60 : index
    %c32_365 = arith.constant 32 : index
    %657 = vector.load %arg14[%c60_364, %c32_365] : memref<64x288xf32, #tpu.memory_space<vmem>>, vector<4x32xf32>
    tpu.vector_store %arg14[%c60_364, %c32_365], %656 {strides = array<i32>} : memref<64x288xf32, #tpu.memory_space<vmem>>, vector<4x32xf32>,
    %c0_366 = arith.constant 0 : index
    %c0_367 = arith.constant 0 : index
    %c1_368 = arith.constant 1 : index
    %c0_369 = arith.constant 0 : index
    %658 = vector.load %arg13[%c0_366, %c0_367, %c1_368, %c0_369] : memref<8x3x5x32xf32, #tpu.memory_space<vmem>>, vector<2x2x4x32xf32>
    %659 = vector.extract_strided_slice %658 {offsets = [0, 0, 0, 0], sizes = [1, 1, 4, 32], strides = [1, 1, 1, 1]} : vector<2x2x4x32xf32> to vector<1x1x4x32xf32>
    %660 = vector.shape_cast %659 : vector<1x1x4x32xf32> to vector<4x32xf32>
    %c48_370 = arith.constant 48 : index
    %c64_371 = arith.constant 64 : index
    %661 = vector.load %arg14[%c48_370, %c64_371] : memref<64x288xf32, #tpu.memory_space<vmem>>, vector<4x32xf32>
    tpu.vector_store %arg14[%c48_370, %c64_371], %660 {strides = array<i32>} : memref<64x288xf32, #tpu.memory_space<vmem>>, vector<4x32xf32>,
    %662 = vector.extract_strided_slice %658 {offsets = [0, 1, 0, 0], sizes = [1, 1, 4, 32], strides = [1, 1, 1, 1]} : vector<2x2x4x32xf32> to vector<1x1x4x32xf32>
    %663 = vector.shape_cast %662 : vector<1x1x4x32xf32> to vector<4x32xf32>
    %c52_372 = arith.constant 52 : index
    %c64_373 = arith.constant 64 : index
    %664 = vector.load %arg14[%c52_372, %c64_373] : memref<64x288xf32, #tpu.memory_space<vmem>>, vector<4x32xf32>
    tpu.vector_store %arg14[%c52_372, %c64_373], %663 {strides = array<i32>} : memref<64x288xf32, #tpu.memory_space<vmem>>, vector<4x32xf32>,
    %665 = vector.extract_strided_slice %658 {offsets = [1, 0, 0, 0], sizes = [1, 1, 4, 32], strides = [1, 1, 1, 1]} : vector<2x2x4x32xf32> to vector<1x1x4x32xf32>
    %666 = vector.shape_cast %665 : vector<1x1x4x32xf32> to vector<4x32xf32>
    %c56_374 = arith.constant 56 : index
    %c64_375 = arith.constant 64 : index
    %667 = vector.load %arg14[%c56_374, %c64_375] : memref<64x288xf32, #tpu.memory_space<vmem>>, vector<4x32xf32>
    tpu.vector_store %arg14[%c56_374, %c64_375], %666 {strides = array<i32>} : memref<64x288xf32, #tpu.memory_space<vmem>>, vector<4x32xf32>,
    %668 = vector.extract_strided_slice %658 {offsets = [1, 1, 0, 0], sizes = [1, 1, 4, 32], strides = [1, 1, 1, 1]} : vector<2x2x4x32xf32> to vector<1x1x4x32xf32>
    %669 = vector.shape_cast %668 : vector<1x1x4x32xf32> to vector<4x32xf32>
    %c60_376 = arith.constant 60 : index
    %c64_377 = arith.constant 64 : index
    %670 = vector.load %arg14[%c60_376, %c64_377] : memref<64x288xf32, #tpu.memory_space<vmem>>, vector<4x32xf32>
    tpu.vector_store %arg14[%c60_376, %c64_377], %669 {strides = array<i32>} : memref<64x288xf32, #tpu.memory_space<vmem>>, vector<4x32xf32>,
    %c4_378 = arith.constant 4 : index
    %c1_379 = arith.constant 1 : index
    %c0_380 = arith.constant 0 : index
    %c0_381 = arith.constant 0 : index
    %671 = vector.load %arg13[%c4_378, %c1_379, %c0_380, %c0_381] : memref<8x3x5x32xf32, #tpu.memory_space<vmem>>, vector<2x2x4x32xf32>
    %672 = vector.extract_strided_slice %671 {offsets = [0, 0, 0, 0], sizes = [1, 1, 4, 32], strides = [1, 1, 1, 1]} : vector<2x2x4x32xf32> to vector<1x1x4x32xf32>
    %673 = vector.shape_cast %672 : vector<1x1x4x32xf32> to vector<4x32xf32>
    %c48_382 = arith.constant 48 : index
    %c96_383 = arith.constant 96 : index
    %674 = vector.load %arg14[%c48_382, %c96_383] : memref<64x288xf32, #tpu.memory_space<vmem>>, vector<4x32xf32>
    tpu.vector_store %arg14[%c48_382, %c96_383], %673 {strides = array<i32>} : memref<64x288xf32, #tpu.memory_space<vmem>>, vector<4x32xf32>,
    %675 = vector.extract_strided_slice %671 {offsets = [0, 1, 0, 0], sizes = [1, 1, 4, 32], strides = [1, 1, 1, 1]} : vector<2x2x4x32xf32> to vector<1x1x4x32xf32>
    %676 = vector.shape_cast %675 : vector<1x1x4x32xf32> to vector<4x32xf32>
    %c52_384 = arith.constant 52 : index
    %c96_385 = arith.constant 96 : index
    %677 = vector.load %arg14[%c52_384, %c96_385] : memref<64x288xf32, #tpu.memory_space<vmem>>, vector<4x32xf32>
    tpu.vector_store %arg14[%c52_384, %c96_385], %676 {strides = array<i32>} : memref<64x288xf32, #tpu.memory_space<vmem>>, vector<4x32xf32>,
    %678 = vector.extract_strided_slice %671 {offsets = [1, 0, 0, 0], sizes = [1, 1, 4, 32], strides = [1, 1, 1, 1]} : vector<2x2x4x32xf32> to vector<1x1x4x32xf32>
    %679 = vector.shape_cast %678 : vector<1x1x4x32xf32> to vector<4x32xf32>
    %c56_386 = arith.constant 56 : index
    %c96_387 = arith.constant 96 : index
    %680 = vector.load %arg14[%c56_386, %c96_387] : memref<64x288xf32, #tpu.memory_space<vmem>>, vector<4x32xf32>
    tpu.vector_store %arg14[%c56_386, %c96_387], %679 {strides = array<i32>} : memref<64x288xf32, #tpu.memory_space<vmem>>, vector<4x32xf32>,
    %681 = vector.extract_strided_slice %671 {offsets = [1, 1, 0, 0], sizes = [1, 1, 4, 32], strides = [1, 1, 1, 1]} : vector<2x2x4x32xf32> to vector<1x1x4x32xf32>
    %682 = vector.shape_cast %681 : vector<1x1x4x32xf32> to vector<4x32xf32>
    %c60_388 = arith.constant 60 : index
    %c96_389 = arith.constant 96 : index
    %683 = vector.load %arg14[%c60_388, %c96_389] : memref<64x288xf32, #tpu.memory_space<vmem>>, vector<4x32xf32>
    tpu.vector_store %arg14[%c60_388, %c96_389], %682 {strides = array<i32>} : memref<64x288xf32, #tpu.memory_space<vmem>>, vector<4x32xf32>,
    %c6_390 = arith.constant 6 : index
    %c1_391 = arith.constant 1 : index
    %c1_392 = arith.constant 1 : index
    %c0_393 = arith.constant 0 : index
    %684 = vector.load %arg13[%c6_390, %c1_391, %c1_392, %c0_393] : memref<8x3x5x32xf32, #tpu.memory_space<vmem>>, vector<2x2x4x32xf32>
    %685 = vector.extract_strided_slice %684 {offsets = [0, 0, 0, 0], sizes = [1, 1, 4, 32], strides = [1, 1, 1, 1]} : vector<2x2x4x32xf32> to vector<1x1x4x32xf32>
    %686 = vector.shape_cast %685 : vector<1x1x4x32xf32> to vector<4x32xf32>
    %c48_394 = arith.constant 48 : index
    %c128_395 = arith.constant 128 : index
    %687 = vector.load %arg14[%c48_394, %c128_395] : memref<64x288xf32, #tpu.memory_space<vmem>>, vector<4x32xf32>
    tpu.vector_store %arg14[%c48_394, %c128_395], %686 {strides = array<i32>} : memref<64x288xf32, #tpu.memory_space<vmem>>, vector<4x32xf32>,
    %688 = vector.extract_strided_slice %684 {offsets = [0, 1, 0, 0], sizes = [1, 1, 4, 32], strides = [1, 1, 1, 1]} : vector<2x2x4x32xf32> to vector<1x1x4x32xf32>
    %689 = vector.shape_cast %688 : vector<1x1x4x32xf32> to vector<4x32xf32>
    %c52_396 = arith.constant 52 : index
    %c128_397 = arith.constant 128 : index
    %690 = vector.load %arg14[%c52_396, %c128_397] : memref<64x288xf32, #tpu.memory_space<vmem>>, vector<4x32xf32>
    tpu.vector_store %arg14[%c52_396, %c128_397], %689 {strides = array<i32>} : memref<64x288xf32, #tpu.memory_space<vmem>>, vector<4x32xf32>,
    %691 = vector.extract_strided_slice %684 {offsets = [1, 0, 0, 0], sizes = [1, 1, 4, 32], strides = [1, 1, 1, 1]} : vector<2x2x4x32xf32> to vector<1x1x4x32xf32>
    %692 = vector.shape_cast %691 : vector<1x1x4x32xf32> to vector<4x32xf32>
    %c56_398 = arith.constant 56 : index
    %c128_399 = arith.constant 128 : index
    %693 = vector.load %arg14[%c56_398, %c128_399] : memref<64x288xf32, #tpu.memory_space<vmem>>, vector<4x32xf32>
    tpu.vector_store %arg14[%c56_398, %c128_399], %692 {strides = array<i32>} : memref<64x288xf32, #tpu.memory_space<vmem>>, vector<4x32xf32>,
    %694 = vector.extract_strided_slice %684 {offsets = [1, 1, 0, 0], sizes = [1, 1, 4, 32], strides = [1, 1, 1, 1]} : vector<2x2x4x32xf32> to vector<1x1x4x32xf32>
    %695 = vector.shape_cast %694 : vector<1x1x4x32xf32> to vector<4x32xf32>
    %c60_400 = arith.constant 60 : index
    %c128_401 = arith.constant 128 : index
    %696 = vector.load %arg14[%c60_400, %c128_401] : memref<64x288xf32, #tpu.memory_space<vmem>>, vector<4x32xf32>
    tpu.vector_store %arg14[%c60_400, %c128_401], %695 {strides = array<i32>} : memref<64x288xf32, #tpu.memory_space<vmem>>, vector<4x32xf32>,
    %c4_402 = arith.constant 4 : index
    %c1_403 = arith.constant 1 : index
    %c1_404 = arith.constant 1 : index
    %c0_405 = arith.constant 0 : index
    %697 = vector.load %arg13[%c4_402, %c1_403, %c1_404, %c0_405] : memref<8x3x5x32xf32, #tpu.memory_space<vmem>>, vector<2x2x4x32xf32>
    %698 = vector.extract_strided_slice %697 {offsets = [0, 0, 0, 0], sizes = [1, 1, 4, 32], strides = [1, 1, 1, 1]} : vector<2x2x4x32xf32> to vector<1x1x4x32xf32>
    %699 = vector.shape_cast %698 : vector<1x1x4x32xf32> to vector<4x32xf32>
    %c48_406 = arith.constant 48 : index
    %c160_407 = arith.constant 160 : index
    %700 = vector.load %arg14[%c48_406, %c160_407] : memref<64x288xf32, #tpu.memory_space<vmem>>, vector<4x32xf32>
    tpu.vector_store %arg14[%c48_406, %c160_407], %699 {strides = array<i32>} : memref<64x288xf32, #tpu.memory_space<vmem>>, vector<4x32xf32>,
    %701 = vector.extract_strided_slice %697 {offsets = [0, 1, 0, 0], sizes = [1, 1, 4, 32], strides = [1, 1, 1, 1]} : vector<2x2x4x32xf32> to vector<1x1x4x32xf32>
    %702 = vector.shape_cast %701 : vector<1x1x4x32xf32> to vector<4x32xf32>
    %c52_408 = arith.constant 52 : index
    %c160_409 = arith.constant 160 : index
    %703 = vector.load %arg14[%c52_408, %c160_409] : memref<64x288xf32, #tpu.memory_space<vmem>>, vector<4x32xf32>
    tpu.vector_store %arg14[%c52_408, %c160_409], %702 {strides = array<i32>} : memref<64x288xf32, #tpu.memory_space<vmem>>, vector<4x32xf32>,
    %704 = vector.extract_strided_slice %697 {offsets = [1, 0, 0, 0], sizes = [1, 1, 4, 32], strides = [1, 1, 1, 1]} : vector<2x2x4x32xf32> to vector<1x1x4x32xf32>
    %705 = vector.shape_cast %704 : vector<1x1x4x32xf32> to vector<4x32xf32>
    %c56_410 = arith.constant 56 : index
    %c160_411 = arith.constant 160 : index
    %706 = vector.load %arg14[%c56_410, %c160_411] : memref<64x288xf32, #tpu.memory_space<vmem>>, vector<4x32xf32>
    tpu.vector_store %arg14[%c56_410, %c160_411], %705 {strides = array<i32>} : memref<64x288xf32, #tpu.memory_space<vmem>>, vector<4x32xf32>,
    %707 = vector.extract_strided_slice %697 {offsets = [1, 1, 0, 0], sizes = [1, 1, 4, 32], strides = [1, 1, 1, 1]} : vector<2x2x4x32xf32> to vector<1x1x4x32xf32>
    %708 = vector.shape_cast %707 : vector<1x1x4x32xf32> to vector<4x32xf32>
    %c60_412 = arith.constant 60 : index
    %c160_413 = arith.constant 160 : index
    %709 = vector.load %arg14[%c60_412, %c160_413] : memref<64x288xf32, #tpu.memory_space<vmem>>, vector<4x32xf32>
    tpu.vector_store %arg14[%c60_412, %c160_413], %708 {strides = array<i32>} : memref<64x288xf32, #tpu.memory_space<vmem>>, vector<4x32xf32>,
    %c0_414 = arith.constant 0 : index
    %c1_415 = arith.constant 1 : index
    %c0_416 = arith.constant 0 : index
    %c0_417 = arith.constant 0 : index
    %710 = vector.load %arg13[%c0_414, %c1_415, %c0_416, %c0_417] : memref<8x3x5x32xf32, #tpu.memory_space<vmem>>, vector<2x2x4x32xf32>
    %711 = vector.extract_strided_slice %710 {offsets = [0, 0, 0, 0], sizes = [1, 1, 4, 32], strides = [1, 1, 1, 1]} : vector<2x2x4x32xf32> to vector<1x1x4x32xf32>
    %712 = vector.shape_cast %711 : vector<1x1x4x32xf32> to vector<4x32xf32>
    %c48_418 = arith.constant 48 : index
    %c192_419 = arith.constant 192 : index
    %713 = vector.load %arg14[%c48_418, %c192_419] : memref<64x288xf32, #tpu.memory_space<vmem>>, vector<4x32xf32>
    tpu.vector_store %arg14[%c48_418, %c192_419], %712 {strides = array<i32>} : memref<64x288xf32, #tpu.memory_space<vmem>>, vector<4x32xf32>,
    %714 = vector.extract_strided_slice %710 {offsets = [0, 1, 0, 0], sizes = [1, 1, 4, 32], strides = [1, 1, 1, 1]} : vector<2x2x4x32xf32> to vector<1x1x4x32xf32>
    %715 = vector.shape_cast %714 : vector<1x1x4x32xf32> to vector<4x32xf32>
    %c52_420 = arith.constant 52 : index
    %c192_421 = arith.constant 192 : index
    %716 = vector.load %arg14[%c52_420, %c192_421] : memref<64x288xf32, #tpu.memory_space<vmem>>, vector<4x32xf32>
    tpu.vector_store %arg14[%c52_420, %c192_421], %715 {strides = array<i32>} : memref<64x288xf32, #tpu.memory_space<vmem>>, vector<4x32xf32>,
    %717 = vector.extract_strided_slice %710 {offsets = [1, 0, 0, 0], sizes = [1, 1, 4, 32], strides = [1, 1, 1, 1]} : vector<2x2x4x32xf32> to vector<1x1x4x32xf32>
    %718 = vector.shape_cast %717 : vector<1x1x4x32xf32> to vector<4x32xf32>
    %c56_422 = arith.constant 56 : index
    %c192_423 = arith.constant 192 : index
    %719 = vector.load %arg14[%c56_422, %c192_423] : memref<64x288xf32, #tpu.memory_space<vmem>>, vector<4x32xf32>
    tpu.vector_store %arg14[%c56_422, %c192_423], %718 {strides = array<i32>} : memref<64x288xf32, #tpu.memory_space<vmem>>, vector<4x32xf32>,
    %720 = vector.extract_strided_slice %710 {offsets = [1, 1, 0, 0], sizes = [1, 1, 4, 32], strides = [1, 1, 1, 1]} : vector<2x2x4x32xf32> to vector<1x1x4x32xf32>
    %721 = vector.shape_cast %720 : vector<1x1x4x32xf32> to vector<4x32xf32>
    %c60_424 = arith.constant 60 : index
    %c192_425 = arith.constant 192 : index
    %722 = vector.load %arg14[%c60_424, %c192_425] : memref<64x288xf32, #tpu.memory_space<vmem>>, vector<4x32xf32>
    tpu.vector_store %arg14[%c60_424, %c192_425], %721 {strides = array<i32>} : memref<64x288xf32, #tpu.memory_space<vmem>>, vector<4x32xf32>,
    %c2_426 = arith.constant 2 : index
    %c1_427 = arith.constant 1 : index
    %c1_428 = arith.constant 1 : index
    %c0_429 = arith.constant 0 : index
    %723 = vector.load %arg13[%c2_426, %c1_427, %c1_428, %c0_429] : memref<8x3x5x32xf32, #tpu.memory_space<vmem>>, vector<2x2x4x32xf32>
    %724 = vector.extract_strided_slice %723 {offsets = [0, 0, 0, 0], sizes = [1, 1, 4, 32], strides = [1, 1, 1, 1]} : vector<2x2x4x32xf32> to vector<1x1x4x32xf32>
    %725 = vector.shape_cast %724 : vector<1x1x4x32xf32> to vector<4x32xf32>
    %c48_430 = arith.constant 48 : index
    %c224_431 = arith.constant 224 : index
    %726 = vector.load %arg14[%c48_430, %c224_431] : memref<64x288xf32, #tpu.memory_space<vmem>>, vector<4x32xf32>
    tpu.vector_store %arg14[%c48_430, %c224_431], %725 {strides = array<i32>} : memref<64x288xf32, #tpu.memory_space<vmem>>, vector<4x32xf32>,
    %727 = vector.extract_strided_slice %723 {offsets = [0, 1, 0, 0], sizes = [1, 1, 4, 32], strides = [1, 1, 1, 1]} : vector<2x2x4x32xf32> to vector<1x1x4x32xf32>
    %728 = vector.shape_cast %727 : vector<1x1x4x32xf32> to vector<4x32xf32>
    %c52_432 = arith.constant 52 : index
    %c224_433 = arith.constant 224 : index
    %729 = vector.load %arg14[%c52_432, %c224_433] : memref<64x288xf32, #tpu.memory_space<vmem>>, vector<4x32xf32>
    tpu.vector_store %arg14[%c52_432, %c224_433], %728 {strides = array<i32>} : memref<64x288xf32, #tpu.memory_space<vmem>>, vector<4x32xf32>,
    %730 = vector.extract_strided_slice %723 {offsets = [1, 0, 0, 0], sizes = [1, 1, 4, 32], strides = [1, 1, 1, 1]} : vector<2x2x4x32xf32> to vector<1x1x4x32xf32>
    %731 = vector.shape_cast %730 : vector<1x1x4x32xf32> to vector<4x32xf32>
    %c56_434 = arith.constant 56 : index
    %c224_435 = arith.constant 224 : index
    %732 = vector.load %arg14[%c56_434, %c224_435] : memref<64x288xf32, #tpu.memory_space<vmem>>, vector<4x32xf32>
    tpu.vector_store %arg14[%c56_434, %c224_435], %731 {strides = array<i32>} : memref<64x288xf32, #tpu.memory_space<vmem>>, vector<4x32xf32>,
    %733 = vector.extract_strided_slice %723 {offsets = [1, 1, 0, 0], sizes = [1, 1, 4, 32], strides = [1, 1, 1, 1]} : vector<2x2x4x32xf32> to vector<1x1x4x32xf32>
    %734 = vector.shape_cast %733 : vector<1x1x4x32xf32> to vector<4x32xf32>
    %c60_436 = arith.constant 60 : index
    %c224_437 = arith.constant 224 : index
    %735 = vector.load %arg14[%c60_436, %c224_437] : memref<64x288xf32, #tpu.memory_space<vmem>>, vector<4x32xf32>
    tpu.vector_store %arg14[%c60_436, %c224_437], %734 {strides = array<i32>} : memref<64x288xf32, #tpu.memory_space<vmem>>, vector<4x32xf32>,
    %c0_438 = arith.constant 0 : index
    %c1_439 = arith.constant 1 : index
    %c1_440 = arith.constant 1 : index
    %c0_441 = arith.constant 0 : index
    %736 = vector.load %arg13[%c0_438, %c1_439, %c1_440, %c0_441] : memref<8x3x5x32xf32, #tpu.memory_space<vmem>>, vector<2x2x4x32xf32>
    %737 = vector.extract_strided_slice %736 {offsets = [0, 0, 0, 0], sizes = [1, 1, 4, 32], strides = [1, 1, 1, 1]} : vector<2x2x4x32xf32> to vector<1x1x4x32xf32>
    %738 = vector.shape_cast %737 : vector<1x1x4x32xf32> to vector<4x32xf32>
    %c48_442 = arith.constant 48 : index
    %c256_443 = arith.constant 256 : index
    %739 = vector.load %arg14[%c48_442, %c256_443] : memref<64x288xf32, #tpu.memory_space<vmem>>, vector<4x32xf32>
    tpu.vector_store %arg14[%c48_442, %c256_443], %738 {strides = array<i32>} : memref<64x288xf32, #tpu.memory_space<vmem>>, vector<4x32xf32>,
    %740 = vector.extract_strided_slice %736 {offsets = [0, 1, 0, 0], sizes = [1, 1, 4, 32], strides = [1, 1, 1, 1]} : vector<2x2x4x32xf32> to vector<1x1x4x32xf32>
    %741 = vector.shape_cast %740 : vector<1x1x4x32xf32> to vector<4x32xf32>
    %c52_444 = arith.constant 52 : index
    %c256_445 = arith.constant 256 : index
    %742 = vector.load %arg14[%c52_444, %c256_445] : memref<64x288xf32, #tpu.memory_space<vmem>>, vector<4x32xf32>
    tpu.vector_store %arg14[%c52_444, %c256_445], %741 {strides = array<i32>} : memref<64x288xf32, #tpu.memory_space<vmem>>, vector<4x32xf32>,
    %743 = vector.extract_strided_slice %736 {offsets = [1, 0, 0, 0], sizes = [1, 1, 4, 32], strides = [1, 1, 1, 1]} : vector<2x2x4x32xf32> to vector<1x1x4x32xf32>
    %744 = vector.shape_cast %743 : vector<1x1x4x32xf32> to vector<4x32xf32>
    %c56_446 = arith.constant 56 : index
    %c256_447 = arith.constant 256 : index
    %745 = vector.load %arg14[%c56_446, %c256_447] : memref<64x288xf32, #tpu.memory_space<vmem>>, vector<4x32xf32>
    tpu.vector_store %arg14[%c56_446, %c256_447], %744 {strides = array<i32>} : memref<64x288xf32, #tpu.memory_space<vmem>>, vector<4x32xf32>,
    %746 = vector.extract_strided_slice %736 {offsets = [1, 1, 0, 0], sizes = [1, 1, 4, 32], strides = [1, 1, 1, 1]} : vector<2x2x4x32xf32> to vector<1x1x4x32xf32>
    %747 = vector.shape_cast %746 : vector<1x1x4x32xf32> to vector<4x32xf32>
    %c60_448 = arith.constant 60 : index
    %c256_449 = arith.constant 256 : index
    %748 = vector.load %arg14[%c60_448, %c256_449] : memref<64x288xf32, #tpu.memory_space<vmem>>, vector<4x32xf32>
    tpu.vector_store %arg14[%c60_448, %c256_449], %747 {strides = array<i32>} : memref<64x288xf32, #tpu.memory_space<vmem>>, vector<4x32xf32>,
    %c0_450 = arith.constant 0 : index
    %c0_451 = arith.constant 0 : index
    %749 = vector.load %arg14[%c0_450, %c0_451] : memref<64x288xf32, #tpu.memory_space<vmem>>, vector<64x288xf32>
    %750 = arith.truncf %749 : vector<64x288xf32> to vector<64x288xbf16>
    %c0_452 = arith.constant 0 : index
    %c0_453 = arith.constant 0 : index
    %751 = vector.load %arg4[%c0_452, %c0_453] : memref<288x64xbf16, #tpu.memory_space<vmem>>, vector<288x64xbf16>
    %cst_454 = arith.constant dense<0.000000e+00> : vector<64x64xf32>
    %752 = tpu.matmul %750, %751, %cst_454 {dimension_numbers = #tpu.dot_dimension_numbers<[1], [0], [0], [1], [0, 0, 1, 1], [], []>} : vector<64x288xbf16>, vector<288x64xbf16>, vector<64x64xf32> -> vector<64x64xf32>
    %753 = vector.extract_strided_slice %752 {offsets = [0, 0], sizes = [16, 64], strides = [1, 1]} : vector<64x64xf32> to vector<16x64xf32>
    %754 = vector.extract_strided_slice %752 {offsets = [16, 0], sizes = [16, 64], strides = [1, 1]} : vector<64x64xf32> to vector<16x64xf32>
    %755 = arith.maximumf %753, %754 : vector<16x64xf32>
    %756 = vector.extract_strided_slice %752 {offsets = [32, 0], sizes = [16, 64], strides = [1, 1]} : vector<64x64xf32> to vector<16x64xf32>
    %757 = arith.maximumf %755, %756 : vector<16x64xf32>
    %758 = vector.extract_strided_slice %752 {offsets = [48, 0], sizes = [16, 64], strides = [1, 1]} : vector<64x64xf32> to vector<16x64xf32>
    %759 = arith.maximumf %757, %758 : vector<16x64xf32>
    %c0_455 = arith.constant 0 : index
    %c0_456 = arith.constant 0 : index
    %760 = vector.load %arg5[%c0_455, %c0_456] : memref<1x64xf32, #tpu.memory_space<vmem>>, vector<1x64xf32>
    %761 = vector.broadcast %760 : vector<1x64xf32> to vector<16x64xf32>
    %762 = arith.addf %759, %761 : vector<16x64xf32>
    %cst_457 = arith.constant 0.000000e+00 : f32
    %763 = vector.broadcast %cst_457 : f32 to vector<16x64xf32>
    %764 = arith.maximumf %762, %763 : vector<16x64xf32>
    %765 = vector.extract_strided_slice %764 {offsets = [0, 0], sizes = [1, 64], strides = [1, 1]} : vector<16x64xf32> to vector<1x64xf32>
    %c0_458 = arith.constant 0 : index
    %c0_459 = arith.constant 0 : index
    %766 = vector.load %arg15[%c0_458, %c0_459] : memref<2x512xf32, #tpu.memory_space<vmem>>, vector<1x64xf32>
    tpu.vector_store %arg15[%c0_458, %c0_459], %765 {strides = array<i32>} : memref<2x512xf32, #tpu.memory_space<vmem>>, vector<1x64xf32>,
    %767 = vector.extract_strided_slice %764 {offsets = [1, 0], sizes = [1, 64], strides = [1, 1]} : vector<16x64xf32> to vector<1x64xf32>
    %c0_460 = arith.constant 0 : index
    %c64_461 = arith.constant 64 : index
    %768 = vector.load %arg15[%c0_460, %c64_461] : memref<2x512xf32, #tpu.memory_space<vmem>>, vector<1x64xf32>
    tpu.vector_store %arg15[%c0_460, %c64_461], %767 {strides = array<i32>} : memref<2x512xf32, #tpu.memory_space<vmem>>, vector<1x64xf32>,
    %769 = vector.extract_strided_slice %764 {offsets = [2, 0], sizes = [1, 64], strides = [1, 1]} : vector<16x64xf32> to vector<1x64xf32>
    %c0_462 = arith.constant 0 : index
    %c128_463 = arith.constant 128 : index
    %770 = vector.load %arg15[%c0_462, %c128_463] : memref<2x512xf32, #tpu.memory_space<vmem>>, vector<1x64xf32>
    tpu.vector_store %arg15[%c0_462, %c128_463], %769 {strides = array<i32>} : memref<2x512xf32, #tpu.memory_space<vmem>>, vector<1x64xf32>,
    %771 = vector.extract_strided_slice %764 {offsets = [3, 0], sizes = [1, 64], strides = [1, 1]} : vector<16x64xf32> to vector<1x64xf32>
    %c0_464 = arith.constant 0 : index
    %c192_465 = arith.constant 192 : index
    %772 = vector.load %arg15[%c0_464, %c192_465] : memref<2x512xf32, #tpu.memory_space<vmem>>, vector<1x64xf32>
    tpu.vector_store %arg15[%c0_464, %c192_465], %771 {strides = array<i32>} : memref<2x512xf32, #tpu.memory_space<vmem>>, vector<1x64xf32>,
    %773 = vector.extract_strided_slice %764 {offsets = [4, 0], sizes = [1, 64], strides = [1, 1]} : vector<16x64xf32> to vector<1x64xf32>
    %c0_466 = arith.constant 0 : index
    %c256_467 = arith.constant 256 : index
    %774 = vector.load %arg15[%c0_466, %c256_467] : memref<2x512xf32, #tpu.memory_space<vmem>>, vector<1x64xf32>
    tpu.vector_store %arg15[%c0_466, %c256_467], %773 {strides = array<i32>} : memref<2x512xf32, #tpu.memory_space<vmem>>, vector<1x64xf32>,
    %775 = vector.extract_strided_slice %764 {offsets = [5, 0], sizes = [1, 64], strides = [1, 1]} : vector<16x64xf32> to vector<1x64xf32>
    %c0_468 = arith.constant 0 : index
    %c320 = arith.constant 320 : index
    %776 = vector.load %arg15[%c0_468, %c320] : memref<2x512xf32, #tpu.memory_space<vmem>>, vector<1x64xf32>
    tpu.vector_store %arg15[%c0_468, %c320], %775 {strides = array<i32>} : memref<2x512xf32, #tpu.memory_space<vmem>>, vector<1x64xf32>,
    %777 = vector.extract_strided_slice %764 {offsets = [6, 0], sizes = [1, 64], strides = [1, 1]} : vector<16x64xf32> to vector<1x64xf32>
    %c0_469 = arith.constant 0 : index
    %c384 = arith.constant 384 : index
    %778 = vector.load %arg15[%c0_469, %c384] : memref<2x512xf32, #tpu.memory_space<vmem>>, vector<1x64xf32>
    tpu.vector_store %arg15[%c0_469, %c384], %777 {strides = array<i32>} : memref<2x512xf32, #tpu.memory_space<vmem>>, vector<1x64xf32>,
    %779 = vector.extract_strided_slice %764 {offsets = [7, 0], sizes = [1, 64], strides = [1, 1]} : vector<16x64xf32> to vector<1x64xf32>
    %c0_470 = arith.constant 0 : index
    %c448 = arith.constant 448 : index
    %780 = vector.load %arg15[%c0_470, %c448] : memref<2x512xf32, #tpu.memory_space<vmem>>, vector<1x64xf32>
    tpu.vector_store %arg15[%c0_470, %c448], %779 {strides = array<i32>} : memref<2x512xf32, #tpu.memory_space<vmem>>, vector<1x64xf32>,
    %781 = vector.extract_strided_slice %764 {offsets = [8, 0], sizes = [1, 64], strides = [1, 1]} : vector<16x64xf32> to vector<1x64xf32>
    %c1_471 = arith.constant 1 : index
    %c0_472 = arith.constant 0 : index
    %782 = vector.load %arg15[%c1_471, %c0_472] : memref<2x512xf32, #tpu.memory_space<vmem>>, vector<1x64xf32>
    tpu.vector_store %arg15[%c1_471, %c0_472], %781 {strides = array<i32>} : memref<2x512xf32, #tpu.memory_space<vmem>>, vector<1x64xf32>,
    %783 = vector.extract_strided_slice %764 {offsets = [9, 0], sizes = [1, 64], strides = [1, 1]} : vector<16x64xf32> to vector<1x64xf32>
    %c1_473 = arith.constant 1 : index
    %c64_474 = arith.constant 64 : index
    %784 = vector.load %arg15[%c1_473, %c64_474] : memref<2x512xf32, #tpu.memory_space<vmem>>, vector<1x64xf32>
    tpu.vector_store %arg15[%c1_473, %c64_474], %783 {strides = array<i32>} : memref<2x512xf32, #tpu.memory_space<vmem>>, vector<1x64xf32>,
    %785 = vector.extract_strided_slice %764 {offsets = [10, 0], sizes = [1, 64], strides = [1, 1]} : vector<16x64xf32> to vector<1x64xf32>
    %c1_475 = arith.constant 1 : index
    %c128_476 = arith.constant 128 : index
    %786 = vector.load %arg15[%c1_475, %c128_476] : memref<2x512xf32, #tpu.memory_space<vmem>>, vector<1x64xf32>
    tpu.vector_store %arg15[%c1_475, %c128_476], %785 {strides = array<i32>} : memref<2x512xf32, #tpu.memory_space<vmem>>, vector<1x64xf32>,
    %787 = vector.extract_strided_slice %764 {offsets = [11, 0], sizes = [1, 64], strides = [1, 1]} : vector<16x64xf32> to vector<1x64xf32>
    %c1_477 = arith.constant 1 : index
    %c192_478 = arith.constant 192 : index
    %788 = vector.load %arg15[%c1_477, %c192_478] : memref<2x512xf32, #tpu.memory_space<vmem>>, vector<1x64xf32>
    tpu.vector_store %arg15[%c1_477, %c192_478], %787 {strides = array<i32>} : memref<2x512xf32, #tpu.memory_space<vmem>>, vector<1x64xf32>,
    %789 = vector.extract_strided_slice %764 {offsets = [12, 0], sizes = [1, 64], strides = [1, 1]} : vector<16x64xf32> to vector<1x64xf32>
    %c1_479 = arith.constant 1 : index
    %c256_480 = arith.constant 256 : index
    %790 = vector.load %arg15[%c1_479, %c256_480] : memref<2x512xf32, #tpu.memory_space<vmem>>, vector<1x64xf32>
    tpu.vector_store %arg15[%c1_479, %c256_480], %789 {strides = array<i32>} : memref<2x512xf32, #tpu.memory_space<vmem>>, vector<1x64xf32>,
    %791 = vector.extract_strided_slice %764 {offsets = [13, 0], sizes = [1, 64], strides = [1, 1]} : vector<16x64xf32> to vector<1x64xf32>
    %c1_481 = arith.constant 1 : index
    %c320_482 = arith.constant 320 : index
    %792 = vector.load %arg15[%c1_481, %c320_482] : memref<2x512xf32, #tpu.memory_space<vmem>>, vector<1x64xf32>
    tpu.vector_store %arg15[%c1_481, %c320_482], %791 {strides = array<i32>} : memref<2x512xf32, #tpu.memory_space<vmem>>, vector<1x64xf32>,
    %793 = vector.extract_strided_slice %764 {offsets = [14, 0], sizes = [1, 64], strides = [1, 1]} : vector<16x64xf32> to vector<1x64xf32>
    %c1_483 = arith.constant 1 : index
    %c384_484 = arith.constant 384 : index
    %794 = vector.load %arg15[%c1_483, %c384_484] : memref<2x512xf32, #tpu.memory_space<vmem>>, vector<1x64xf32>
    tpu.vector_store %arg15[%c1_483, %c384_484], %793 {strides = array<i32>} : memref<2x512xf32, #tpu.memory_space<vmem>>, vector<1x64xf32>,
    %795 = vector.extract_strided_slice %764 {offsets = [15, 0], sizes = [1, 64], strides = [1, 1]} : vector<16x64xf32> to vector<1x64xf32>
    %c1_485 = arith.constant 1 : index
    %c448_486 = arith.constant 448 : index
    %796 = vector.load %arg15[%c1_485, %c448_486] : memref<2x512xf32, #tpu.memory_space<vmem>>, vector<1x64xf32>
    tpu.vector_store %arg15[%c1_485, %c448_486], %795 {strides = array<i32>} : memref<2x512xf32, #tpu.memory_space<vmem>>, vector<1x64xf32>,
    %c0_487 = arith.constant 0 : index
    %c0_488 = arith.constant 0 : index
    %797 = vector.load %arg15[%c0_487, %c0_488] : memref<2x512xf32, #tpu.memory_space<vmem>>, vector<2x512xf32>
    %798 = arith.truncf %797 : vector<2x512xf32> to vector<2x512xbf16>
    %c0_489 = arith.constant 0 : index
    %c0_490 = arith.constant 0 : index
    %799 = vector.load %arg6[%c0_489, %c0_490] : memref<512x256xbf16, #tpu.memory_space<vmem>>, vector<512x256xbf16>
    %cst_491 = arith.constant dense<0.000000e+00> : vector<2x256xf32>
    %800 = tpu.matmul %798, %799, %cst_491 {dimension_numbers = #tpu.dot_dimension_numbers<[1], [0], [0], [1], [0, 0, 1, 1], [], []>} : vector<2x512xbf16>, vector<512x256xbf16>, vector<2x256xf32> -> vector<2x256xf32>
    %c0_492 = arith.constant 0 : index
    %c0_493 = arith.constant 0 : index
    %801 = vector.load %arg7[%c0_492, %c0_493] : memref<1x256xf32, #tpu.memory_space<vmem>>, vector<1x256xf32>
    %802 = vector.broadcast %801 : vector<1x256xf32> to vector<2x256xf32>
    %803 = arith.addf %800, %802 : vector<2x256xf32>
    %cst_494 = arith.constant 0.000000e+00 : f32
    %804 = vector.broadcast %cst_494 : f32 to vector<2x256xf32>
    %805 = arith.maximumf %803, %804 : vector<2x256xf32>
    %806 = arith.truncf %805 : vector<2x256xf32> to vector<2x256xbf16>
    %c0_495 = arith.constant 0 : index
    %c0_496 = arith.constant 0 : index
    %807 = vector.load %arg8[%c0_495, %c0_496] : memref<256x64xbf16, #tpu.memory_space<vmem>>, vector<256x64xbf16>
    %cst_497 = arith.constant dense<0.000000e+00> : vector<2x64xf32>
    %808 = tpu.matmul %806, %807, %cst_497 {dimension_numbers = #tpu.dot_dimension_numbers<[1], [0], [0], [1], [0, 0, 1, 1], [], []>} : vector<2x256xbf16>, vector<256x64xbf16>, vector<2x64xf32> -> vector<2x64xf32>
    %c0_498 = arith.constant 0 : index
    %c0_499 = arith.constant 0 : index
    %809 = vector.load %arg9[%c0_498, %c0_499] : memref<1x64xf32, #tpu.memory_space<vmem>>, vector<1x64xf32>
    %810 = vector.broadcast %809 : vector<1x64xf32> to vector<2x64xf32>
    %811 = arith.addf %808, %810 : vector<2x64xf32>
    %cst_500 = arith.constant 0.000000e+00 : f32
    %812 = vector.broadcast %cst_500 : f32 to vector<2x64xf32>
    %813 = arith.maximumf %811, %812 : vector<2x64xf32>
    %c0_501 = arith.constant 0 : index
    %c0_502 = arith.constant 0 : index
    %814 = vector.load %arg10[%c0_501, %c0_502] : memref<64x3xf32, #tpu.memory_space<vmem>>, vector<64x3xf32>
    %cst_503 = arith.constant dense<0.000000e+00> : vector<2x3xf32>
    %815 = tpu.matmul %813, %814, %cst_503 {dimension_numbers = #tpu.dot_dimension_numbers<[1], [0], [0], [1], [0, 0, 1, 1], [], []>} : vector<2x64xf32>, vector<64x3xf32>, vector<2x3xf32> -> vector<2x3xf32>
    %c0_504 = arith.constant 0 : index
    %c0_505 = arith.constant 0 : index
    %816 = vector.load %arg11[%c0_504, %c0_505] : memref<1x3xf32, #tpu.memory_space<vmem>>, vector<1x3xf32>
    %817 = vector.broadcast %816 : vector<1x3xf32> to vector<2x3xf32>
    %818 = arith.addf %815, %817 : vector<2x3xf32>
    %c0_506 = arith.constant 0 : index
    %c0_507 = arith.constant 0 : index
    %819 = vector.load %arg12[%c0_506, %c0_507] : memref<2x3xf32, #tpu.memory_space<vmem>>, vector<2x3xf32>
    tpu.vector_store %arg12[%c0_506, %c0_507], %818 {strides = array<i32>} : memref<2x3xf32, #tpu.memory_space<vmem>>, vector<2x3xf32>,
    return
  }
  func.func @transform_0(%arg0: i32) -> (i32, i32, i32, i32) {
    %c0_i32 = arith.constant 0 : i32
    %c0_i32_0 = arith.constant 0 : i32
    %c0_i32_1 = arith.constant 0 : i32
    %c0_i32_2 = arith.constant 0 : i32
    %c0_i32_3 = arith.constant 0 : i32
    return %c0_i32, %c0_i32_0, %c0_i32_1, %c0_i32_2 : i32, i32, i32, i32
  }
  func.func @transform_1(%arg0: i32) -> (i32, i32) {
    %c0_i32 = arith.constant 0 : i32
    %c0_i32_0 = arith.constant 0 : i32
    %c0_i32_1 = arith.constant 0 : i32
    return %c0_i32, %c0_i32_0 : i32, i32
  }
  func.func @transform_2(%arg0: i32) -> (i32, i32) {
    %c0_i32 = arith.constant 0 : i32
    %c0_i32_0 = arith.constant 0 : i32
    %c0_i32_1 = arith.constant 0 : i32
    return %c0_i32, %c0_i32_0 : i32, i32
  }
  func.func @transform_3(%arg0: i32) -> (i32, i32) {
    %c0_i32 = arith.constant 0 : i32
    %c0_i32_0 = arith.constant 0 : i32
    %c0_i32_1 = arith.constant 0 : i32
    return %c0_i32, %c0_i32_0 : i32, i32
  }
  func.func @transform_4(%arg0: i32) -> (i32, i32) {
    %c0_i32 = arith.constant 0 : i32
    %c0_i32_0 = arith.constant 0 : i32
    %c0_i32_1 = arith.constant 0 : i32
    return %c0_i32, %c0_i32_0 : i32, i32
  }
  func.func @transform_5(%arg0: i32) -> (i32, i32) {
    %c0_i32 = arith.constant 0 : i32
    %c0_i32_0 = arith.constant 0 : i32
    %c0_i32_1 = arith.constant 0 : i32
    return %c0_i32, %c0_i32_0 : i32, i32
  }
  func.func @transform_6(%arg0: i32) -> (i32, i32) {
    %c0_i32 = arith.constant 0 : i32
    %c0_i32_0 = arith.constant 0 : i32
    %c0_i32_1 = arith.constant 0 : i32
    return %c0_i32, %c0_i32_0 : i32, i32
  }
  func.func @transform_7(%arg0: i32) -> (i32, i32) {
    %c0_i32 = arith.constant 0 : i32
    %c0_i32_0 = arith.constant 0 : i32
    %c0_i32_1 = arith.constant 0 : i32
    return %c0_i32, %c0_i32_0 : i32, i32
  }
  func.func @transform_8(%arg0: i32) -> (i32, i32) {
    %c0_i32 = arith.constant 0 : i32
    %c0_i32_0 = arith.constant 0 : i32
    %c0_i32_1 = arith.constant 0 : i32
    return %c0_i32, %c0_i32_0 : i32, i32
  }
  func.func @transform_9(%arg0: i32) -> (i32, i32) {
    %c0_i32 = arith.constant 0 : i32
    %c0_i32_0 = arith.constant 0 : i32
    %c0_i32_1 = arith.constant 0 : i32
    return %c0_i32, %c0_i32_0 : i32, i32
  }
  func.func @transform_10(%arg0: i32) -> (i32, i32) {
    %c0_i32 = arith.constant 0 : i32
    %c0_i32_0 = arith.constant 0 : i32
    %c0_i32_1 = arith.constant 0 : i32
    return %c0_i32, %c0_i32_0 : i32, i32
  }
  func.func @transform_11(%arg0: i32) -> (i32, i32) {
    %c0_i32 = arith.constant 0 : i32
    %c0_i32_0 = arith.constant 0 : i32
    %c0_i32_1 = arith.constant 0 : i32
    return %c0_i32, %c0_i32_0 : i32, i32
  }
}

</mosaic_0001>

<llo_original>
// kernel: _lambda_.1
$region0: #{_lambda_.1}
  #allocation0 [shape = 'u32[]', space=smem, size = 0x4, offset = 0x4, fixed_abs, tag = 'smem constant byte address 0x4 - core index']
  #allocation1 [shape = 'u32[72,128]{1,0:T(1,128)}', space=vmem, size = 0x9000, scoped, tag = 'internal scratch']
  #allocation2 [shape = 'f32[8,3,5,32]{3,2,1,0:T(8,128)}', space=vmem, size = 0x18000, scoped, tag = 'scratch operand']
  #allocation3 [shape = 'f32[64,288]{1,0:T(8,128)}', space=vmem, size = 0x18000, scoped, tag = 'scratch operand']
  #allocation4 [shape = 'f32[2,512]{1,0:T(2,128)}', space=vmem, size = 0x1000, scoped, tag = 'scratch operand']
  %s0 = inlined_call_operand.vmem [shape: f32[32,2,4,9], index: 0, kind: input, shape index: {}]
  %s1 = inlined_call_operand.vmem [shape: f32[9,32], index: 1, kind: input, shape index: {}]
  %s2 = inlined_call_operand.vmem [shape: f32[1,32], index: 2, kind: input, shape index: {}]
  %s3 = inlined_call_operand.vmem [shape: bf16[288,64], index: 3, kind: input, shape index: {}]
  %s4 = inlined_call_operand.vmem [shape: f32[1,64], index: 4, kind: input, shape index: {}]
  %s5 = inlined_call_operand.vmem [shape: bf16[512,256], index: 5, kind: input, shape index: {}]
  %s6 = inlined_call_operand.vmem [shape: f32[1,256], index: 6, kind: input, shape index: {}]
  %s7 = inlined_call_operand.vmem [shape: bf16[256,64], index: 7, kind: input, shape index: {}]
  %s8 = inlined_call_operand.vmem [shape: f32[1,64], index: 8, kind: input, shape index: {}]
  %s9 = inlined_call_operand.vmem [shape: f32[64,3], index: 9, kind: input, shape index: {}]
  %s10 = inlined_call_operand.vmem [shape: f32[1,3], index: 10, kind: input, shape index: {}]
  %s11 = inlined_call_operand.hbm [shape: f32[2,3], index: 11, kind: output, shape index: {}]
  %s12 = sld [smem:[#allocation0]]
  $region54: #{_lambda_.1} parent=0
    _
  %s14 = ssub.s32 1, %s12
  %s15 = scalar_select 0, %s14, %s12
  $region1: #{_lambda_.1} parent=0
    #allocation5 [shape = 'u8[1024]{0}', space=vmem, size = 0x400, scoped, tag = 'output window, operand 0, single buffered']
    #allocation6 [shape = 's32[1]{0}', space=sflag, size = 0x4, scoped, tag = 'scoped memory for _lambda_.1']
    %16 = vsyncpa [#allocation6], 0
    // Predicated region
    $region2: #{_lambda_.1} parent=1 // pred_check
      _
    $region3: #{_lambda_.1} parent=1 // pred_check_branch
      %18 = sbr.rel (0) target = $region5
    $region4: #{_lambda_.1} parent=1 // pred_region
      _
    $region5: #{_lambda_.1} parent=1 // pred_fallthru
      _
    // Predicated region
    $region6: #{_lambda_.1} parent=1 // pred_check
      _
    $region7: #{_lambda_.1} parent=1 // pred_check_branch
      %20 = sbr.rel (0) target = $region9
    $region8: #{_lambda_.1} parent=1 // pred_region
      _
    $region9: #{_lambda_.1} parent=1 // pred_fallthru
      _
    // Predicated region
    $region10: #{_lambda_.1} parent=1 // pred_check
      _
    $region11: #{_lambda_.1} parent=1 // pred_check_branch
      %22 = sbr.rel (0) target = $region13
    $region12: #{_lambda_.1} parent=1 // pred_region
      _
    $region13: #{_lambda_.1} parent=1 // pred_fallthru
      _
    // Predicated region
    $region14: #{_lambda_.1} parent=1 // pred_check
      _
    $region15: #{_lambda_.1} parent=1 // pred_check_branch
      %24 = sbr.rel (0) target = $region17
    $region16: #{_lambda_.1} parent=1 // pred_region
      _
    $region17: #{_lambda_.1} parent=1 // pred_fallthru
      _
    // Predicated region
    $region18: #{_lambda_.1} parent=1 // pred_check
      _
    $region19: #{_lambda_.1} parent=1 // pred_check_branch
      %26 = sbr.rel (0) target = $region21
    $region20: #{_lambda_.1} parent=1 // pred_region
      _
    $region21: #{_lambda_.1} parent=1 // pred_fallthru
      _
    // Predicated region
    $region22: #{_lambda_.1} parent=1 // pred_check
      _
    $region23: #{_lambda_.1} parent=1 // pred_check_branch
      %28 = sbr.rel (0) target = $region25
    $region24: #{_lambda_.1} parent=1 // pred_region
      _
    $region25: #{_lambda_.1} parent=1 // pred_fallthru
      _
    // Predicated region
    $region26: #{_lambda_.1} parent=1 // pred_check
      _
    $region27: #{_lambda_.1} parent=1 // pred_check_branch
      %30 = sbr.rel (0) target = $region29
    $region28: #{_lambda_.1} parent=1 // pred_region
      _
    $region29: #{_lambda_.1} parent=1 // pred_fallthru
      _
    // Predicated region
    $region30: #{_lambda_.1} parent=1 // pred_check
      _
    $region31: #{_lambda_.1} parent=1 // pred_check_branch
      %32 = sbr.rel (0) target = $region33
    $region32: #{_lambda_.1} parent=1 // pred_region
      _
    $region33: #{_lambda_.1} parent=1 // pred_fallthru
      _
    // Predicated region
    $region34: #{_lambda_.1} parent=1 // pred_check
      _
    $region35: #{_lambda_.1} parent=1 // pred_check_branch
      %34 = sbr.rel (0) target = $region37
    $region36: #{_lambda_.1} parent=1 // pred_region
      _
    $region37: #{_lambda_.1} parent=1 // pred_fallthru
      _
    // Predicated region
    $region38: #{_lambda_.1} parent=1 // pred_check
      _
    $region39: #{_lambda_.1} parent=1 // pred_check_branch
      %36 = sbr.rel (0) target = $region41
    $region40: #{_lambda_.1} parent=1 // pred_region
      _
    $region41: #{_lambda_.1} parent=1 // pred_fallthru
      _
    // Predicated region
    $region42: #{_lambda_.1} parent=1 // pred_check
      _
    $region43: #{_lambda_.1} parent=1 // pred_check_branch
      %38 = sbr.rel (0) target = $region45
    $region44: #{_lambda_.1} parent=1 // pred_region
      _
    $region45: #{_lambda_.1} parent=1 // pred_fallthru
      _
    %v40 = vld [vmem:[%s1] sm:$0xff]
    %v41 = vld [vmem:[%s1 + $0x8] sm:$0x1]
    %v42 = vld [vmem:[%s2] sm:$0x1]
    %vm43 = vcmask 258048
    %44 = vst.msk [vmem:[#allocation2] sm:$0x1f] %vm43, 0.0
    %45 = vst.msk [vmem:[#allocation2 + $0x8] sm:$0x1f] %vm43, 0.0
    %46 = vst.msk [vmem:[#allocation2 + $0x10] sm:$0x1f] %vm43, 0.0
    %47 = vst.msk [vmem:[#allocation2 + $0x18] sm:$0x1f] %vm43, 0.0
    %48 = vst.msk [vmem:[#allocation2 + $0x20] sm:$0x1f] %vm43, 0.0
    %49 = vst.msk [vmem:[#allocation2 + $0x28] sm:$0x1f] %vm43, 0.0
    %50 = vst.msk [vmem:[#allocation2 + $0x30] sm:$0x1f] %vm43, 0.0
    %51 = vst.msk [vmem:[#allocation2 + $0x38] sm:$0x1f] %vm43, 0.0
    %52 = vst.msk [vmem:[#allocation2 + $0x40] sm:$0x1f] %vm43, 0.0
    %53 = vst.msk [vmem:[#allocation2 + $0x48] sm:$0x1f] %vm43, 0.0
    %54 = vst.msk [vmem:[#allocation2 + $0x50] sm:$0x1f] %vm43, 0.0
    %55 = vst.msk [vmem:[#allocation2 + $0x58] sm:$0x1f] %vm43, 0.0
    %56 = vst.msk [vmem:[#allocation2 + $0x60] sm:$0x1f] %vm43, 0.0
    %57 = vst.msk [vmem:[#allocation2 + $0x68] sm:$0x1f] %vm43, 0.0
    %58 = vst.msk [vmem:[#allocation2 + $0x70] sm:$0x1f] %vm43, 0.0
    %59 = vst.msk [vmem:[#allocation2 + $0x78] sm:$0x1f] %vm43, 0.0
    %60 = vst.msk [vmem:[#allocation2 + $0x80] sm:$0x1f] %vm43, 0.0
    %61 = vst.msk [vmem:[#allocation2 + $0x88] sm:$0x1f] %vm43, 0.0
    %62 = vst.msk [vmem:[#allocation2 + $0x90] sm:$0x1f] %vm43, 0.0
    %63 = vst.msk [vmem:[#allocation2 + $0x98] sm:$0x1f] %vm43, 0.0
    %64 = vst.msk [vmem:[#allocation2 + $0xa0] sm:$0x1f] %vm43, 0.0
    %65 = vst.msk [vmem:[#allocation2 + $0xa8] sm:$0x1f] %vm43, 0.0
    %66 = vst.msk [vmem:[#allocation2 + $0xb0] sm:$0x1f] %vm43, 0.0
    %67 = vst.msk [vmem:[#allocation2 + $0xb8] sm:$0x1f] %vm43, 0.0
    %v68 = vld [vmem:[%s0] sm:$0xf]
    %v69 = vld [vmem:[%s0 + $0x4] sm:$0xf]
    %v70 = vld [vmem:[%s0 + $0x8] sm:$0xf]
    %v71 = vld [vmem:[%s0 + $0xc] sm:$0xf]
    %v72 = vld [vmem:[%s0 + $0x10] sm:$0xf]
    %v73 = vld [vmem:[%s0 + $0x14] sm:$0xf]
    %v74 = vld [vmem:[%s0 + $0x18] sm:$0xf]
    %v75 = vld [vmem:[%s0 + $0x1c] sm:$0xf]
    %v76 = vld [vmem:[%s0 + $0x20] sm:$0xf]
    %v77 = vld [vmem:[%s0 + $0x24] sm:$0xf]
    %v78 = vld [vmem:[%s0 + $0x28] sm:$0xf]
    %v79 = vld [vmem:[%s0 + $0x2c] sm:$0xf]
    %v80 = vld [vmem:[%s0 + $0x30] sm:$0xf]
    %v81 = vld [vmem:[%s0 + $0x34] sm:$0xf]
    %v82 = vld [vmem:[%s0 + $0x38] sm:$0xf]
    %v83 = vld [vmem:[%s0 + $0x3c] sm:$0xf]
    %85 = vset.pattern.permute.xlu0 0
    %86 = vperm.xlu0 %85, %v68
    %v87 = vpop.permute.xlu0 %86
    %90 = vset.pattern.permute.xlu0 0
    %91 = vperm.xlu0 %90, %v69
    %v92 = vpop.permute.xlu0 %91
    %95 = vset.pattern.permute.xlu0 0
    %96 = vperm.xlu0 %95, %v70
    %v97 = vpop.permute.xlu0 %96
    %100 = vset.pattern.permute.xlu0 0
    %101 = vperm.xlu0 %100, %v71
    %v102 = vpop.permute.xlu0 %101
    %105 = vset.pattern.permute.xlu0 0
    %106 = vperm.xlu0 %105, %v72
    %v107 = vpop.permute.xlu0 %106
    %110 = vset.pattern.permute.xlu0 0
    %111 = vperm.xlu0 %110, %v73
    %v112 = vpop.permute.xlu0 %111
    %115 = vset.pattern.permute.xlu0 0
    %116 = vperm.xlu0 %115, %v74
    %v117 = vpop.permute.xlu0 %116
    %120 = vset.pattern.permute.xlu0 0
    %121 = vperm.xlu0 %120, %v75
    %v122 = vpop.permute.xlu0 %121
    %125 = vset.pattern.permute.xlu0 0
    %126 = vperm.xlu0 %125, %v76
    %v127 = vpop.permute.xlu0 %126
    %130 = vset.pattern.permute.xlu0 0
    %131 = vperm.xlu0 %130, %v77
    %v132 = vpop.permute.xlu0 %131
    %135 = vset.pattern.permute.xlu0 0
    %136 = vperm.xlu0 %135, %v78
    %v137 = vpop.permute.xlu0 %136
    %140 = vset.pattern.permute.xlu0 0
    %141 = vperm.xlu0 %140, %v79
    %v142 = vpop.permute.xlu0 %141
    %145 = vset.pattern.permute.xlu0 0
    %146 = vperm.xlu0 %145, %v80
    %v147 = vpop.permute.xlu0 %146
    %150 = vset.pattern.permute.xlu0 0
    %151 = vperm.xlu0 %150, %v81
    %v152 = vpop.permute.xlu0 %151
    %155 = vset.pattern.permute.xlu0 0
    %156 = vperm.xlu0 %155, %v82
    %v157 = vpop.permute.xlu0 %156
    %160 = vset.pattern.permute.xlu0 0
    %161 = vperm.xlu0 %160, %v83
    %v162 = vpop.permute.xlu0 %161
    %v164 = vperm.slane %v40, 0
    %v165 = vmul.f32 %v87, %v164
    %v166 = vmul.f32 %v92, %v164
    %v167 = vmul.f32 %v97, %v164
    %v168 = vmul.f32 %v102, %v164
    %v169 = vmul.f32 %v107, %v164
    %v170 = vmul.f32 %v112, %v164
    %v171 = vmul.f32 %v117, %v164
    %v172 = vmul.f32 %v122, %v164
    %v173 = vmul.f32 %v127, %v164
    %v174 = vmul.f32 %v132, %v164
    %v175 = vmul.f32 %v137, %v164
    %v176 = vmul.f32 %v142, %v164
    %v177 = vmul.f32 %v147, %v164
    %v178 = vmul.f32 %v152, %v164
    %v179 = vmul.f32 %v157, %v164
    %v180 = vmul.f32 %v162, %v164
    %181 = vset.pattern.permute.xlu0 1
    %182 = vperm.xlu0 %181, %v68
    %v183 = vpop.permute.xlu0 %182
    %185 = vset.pattern.permute.xlu0 1
    %186 = vperm.xlu0 %185, %v69
    %v187 = vpop.permute.xlu0 %186
    %189 = vset.pattern.permute.xlu0 1
    %190 = vperm.xlu0 %189, %v70
    %v191 = vpop.permute.xlu0 %190
    %193 = vset.pattern.permute.xlu0 1
    %194 = vperm.xlu0 %193, %v71
    %v195 = vpop.permute.xlu0 %194
    %197 = vset.pattern.permute.xlu0 1
    %198 = vperm.xlu0 %197, %v72
    %v199 = vpop.permute.xlu0 %198
    %201 = vset.pattern.permute.xlu0 1
    %202 = vperm.xlu0 %201, %v73
    %v203 = vpop.permute.xlu0 %202
    %205 = vset.pattern.permute.xlu0 1
    %206 = vperm.xlu0 %205, %v74
    %v207 = vpop.permute.xlu0 %206
    %209 = vset.pattern.permute.xlu0 1
    %210 = vperm.xlu0 %209, %v75
    %v211 = vpop.permute.xlu0 %210
    %213 = vset.pattern.permute.xlu0 1
    %214 = vperm.xlu0 %213, %v76
    %v215 = vpop.permute.xlu0 %214
    %217 = vset.pattern.permute.xlu0 1
    %218 = vperm.xlu0 %217, %v77
    %v219 = vpop.permute.xlu0 %218
    %221 = vset.pattern.permute.xlu0 1
    %222 = vperm.xlu0 %221, %v78
    %v223 = vpop.permute.xlu0 %222
    %225 = vset.pattern.permute.xlu0 1
    %226 = vperm.xlu0 %225, %v79
    %v227 = vpop.permute.xlu0 %226
    %229 = vset.pattern.permute.xlu0 1
    %230 = vperm.xlu0 %229, %v80
    %v231 = vpop.permute.xlu0 %230
    %233 = vset.pattern.permute.xlu0 1
    %234 = vperm.xlu0 %233, %v81
    %v235 = vpop.permute.xlu0 %234
    %237 = vset.pattern.permute.xlu0 1
    %238 = vperm.xlu0 %237, %v82
    %v239 = vpop.permute.xlu0 %238
    %241 = vset.pattern.permute.xlu0 1
    %242 = vperm.xlu0 %241, %v83
    %v243 = vpop.permute.xlu0 %242
    %v245 = vperm.slane %v40, 1
    %v246 = vmul.f32 %v183, %v245
    %v247 = vmul.f32 %v187, %v245
    %v248 = vmul.f32 %v191, %v245
    %v249 = vmul.f32 %v195, %v245
    %v250 = vmul.f32 %v199, %v245
    %v251 = vmul.f32 %v203, %v245
    %v252 = vmul.f32 %v207, %v245
    %v253 = vmul.f32 %v211, %v245
    %v254 = vmul.f32 %v215, %v245
    %v255 = vmul.f32 %v219, %v245
    %v256 = vmul.f32 %v223, %v245
    %v257 = vmul.f32 %v227, %v245
    %v258 = vmul.f32 %v231, %v245
    %v259 = vmul.f32 %v235, %v245
    %v260 = vmul.f32 %v239, %v245
    %v261 = vmul.f32 %v243, %v245
    %v262 = vadd.f32 %v165, %v246
    %v263 = vadd.f32 %v166, %v247
    %v264 = vadd.f32 %v167, %v248
    %v265 = vadd.f32 %v168, %v249
    %v266 = vadd.f32 %v169, %v250
    %v267 = vadd.f32 %v170, %v251
    %v268 = vadd.f32 %v171, %v252
    %v269 = vadd.f32 %v172, %v253
    %v270 = vadd.f32 %v173, %v254
    %v271 = vadd.f32 %v174, %v255
    %v272 = vadd.f32 %v175, %v256
    %v273 = vadd.f32 %v176, %v257
    %v274 = vadd.f32 %v177, %v258
    %v275 = vadd.f32 %v178, %v259
    %v276 = vadd.f32 %v179, %v260
    %v277 = vadd.f32 %v180, %v261
    %278 = vset.pattern.permute.xlu0 2
    %279 = vperm.xlu0 %278, %v68
    %v280 = vpop.permute.xlu0 %279
    %282 = vset.pattern.permute.xlu0 2
    %283 = vperm.xlu0 %282, %v69
    %v284 = vpop.permute.xlu0 %283
    %286 = vset.pattern.permute.xlu0 2
    %287 = vperm.xlu0 %286, %v70
    %v288 = vpop.permute.xlu0 %287
    %290 = vset.pattern.permute.xlu0 2
    %291 = vperm.xlu0 %290, %v71
    %v292 = vpop.permute.xlu0 %291
    %294 = vset.pattern.permute.xlu0 2
    %295 = vperm.xlu0 %294, %v72
    %v296 = vpop.permute.xlu0 %295
    %298 = vset.pattern.permute.xlu0 2
    %299 = vperm.xlu0 %298, %v73
    %v300 = vpop.permute.xlu0 %299
    %302 = vset.pattern.permute.xlu0 2
    %303 = vperm.xlu0 %302, %v74
    %v304 = vpop.permute.xlu0 %303
    %306 = vset.pattern.permute.xlu0 2
    %307 = vperm.xlu0 %306, %v75
    %v308 = vpop.permute.xlu0 %307
    %310 = vset.pattern.permute.xlu0 2
    %311 = vperm.xlu0 %310, %v76
    %v312 = vpop.permute.xlu0 %311
    %314 = vset.pattern.permute.xlu0 2
    %315 = vperm.xlu0 %314, %v77
    %v316 = vpop.permute.xlu0 %315
    %318 = vset.pattern.permute.xlu0 2
    %319 = vperm.xlu0 %318, %v78
    %v320 = vpop.permute.xlu0 %319
    %322 = vset.pattern.permute.xlu0 2
    %323 = vperm.xlu0 %322, %v79
    %v324 = vpop.permute.xlu0 %323
    %326 = vset.pattern.permute.xlu0 2
    %327 = vperm.xlu0 %326, %v80
    %v328 = vpop.permute.xlu0 %327
    %330 = vset.pattern.permute.xlu0 2
    %331 = vperm.xlu0 %330, %v81
    %v332 = vpop.permute.xlu0 %331
    %334 = vset.pattern.permute.xlu0 2
    %335 = vperm.xlu0 %334, %v82
    %v336 = vpop.permute.xlu0 %335
    %338 = vset.pattern.permute.xlu0 2
    %339 = vperm.xlu0 %338, %v83
    %v340 = vpop.permute.xlu0 %339
    %v342 = vperm.slane %v40, 2
    %v343 = vmul.f32 %v280, %v342
    %v344 = vmul.f32 %v284, %v342
    %v345 = vmul.f32 %v288, %v342
    %v346 = vmul.f32 %v292, %v342
    %v347 = vmul.f32 %v296, %v342
    %v348 = vmul.f32 %v300, %v342
    %v349 = vmul.f32 %v304, %v342
    %v350 = vmul.f32 %v308, %v342
    %v351 = vmul.f32 %v312, %v342
    %v352 = vmul.f32 %v316, %v342
    %v353 = vmul.f32 %v320, %v342
    %v354 = vmul.f32 %v324, %v342
    %v355 = vmul.f32 %v328, %v342
    %v356 = vmul.f32 %v332, %v342
    %v357 = vmul.f32 %v336, %v342
    %v358 = vmul.f32 %v340, %v342
    %v359 = vadd.f32 %v262, %v343
    %v360 = vadd.f32 %v263, %v344
    %v361 = vadd.f32 %v264, %v345
    %v362 = vadd.f32 %v265, %v346
    %v363 = vadd.f32 %v266, %v347
    %v364 = vadd.f32 %v267, %v348
    %v365 = vadd.f32 %v268, %v349
    %v366 = vadd.f32 %v269, %v350
    %v367 = vadd.f32 %v270, %v351
    %v368 = vadd.f32 %v271, %v352
    %v369 = vadd.f32 %v272, %v353
    %v370 = vadd.f32 %v273, %v354
    %v371 = vadd.f32 %v274, %v355
    %v372 = vadd.f32 %v275, %v356
    %v373 = vadd.f32 %v276, %v357
    %v374 = vadd.f32 %v277, %v358
    %375 = vset.pattern.permute.xlu0 3
    %376 = vperm.xlu0 %375, %v68
    %v377 = vpop.permute.xlu0 %376
    %379 = vset.pattern.permute.xlu0 3
    %380 = vperm.xlu0 %379, %v69
    %v381 = vpop.permute.xlu0 %380
    %383 = vset.pattern.permute.xlu0 3
    %384 = vperm.xlu0 %383, %v70
    %v385 = vpop.permute.xlu0 %384
    %387 = vset.pattern.permute.xlu0 3
    %388 = vperm.xlu0 %387, %v71
    %v389 = vpop.permute.xlu0 %388
    %391 = vset.pattern.permute.xlu0 3
    %392 = vperm.xlu0 %391, %v72
    %v393 = vpop.permute.xlu0 %392
    %395 = vset.pattern.permute.xlu0 3
    %396 = vperm.xlu0 %395, %v73
    %v397 = vpop.permute.xlu0 %396
    %399 = vset.pattern.permute.xlu0 3
    %400 = vperm.xlu0 %399, %v74
    %v401 = vpop.permute.xlu0 %400
    %403 = vset.pattern.permute.xlu0 3
    %404 = vperm.xlu0 %403, %v75
    %v405 = vpop.permute.xlu0 %404
    %407 = vset.pattern.permute.xlu0 3
    %408 = vperm.xlu0 %407, %v76
    %v409 = vpop.permute.xlu0 %408
    %411 = vset.pattern.permute.xlu0 3
    %412 = vperm.xlu0 %411, %v77
    %v413 = vpop.permute.xlu0 %412
    %415 = vset.pattern.permute.xlu0 3
    %416 = vperm.xlu0 %415, %v78
    %v417 = vpop.permute.xlu0 %416
    %419 = vset.pattern.permute.xlu0 3
    %420 = vperm.xlu0 %419, %v79
    %v421 = vpop.permute.xlu0 %420
    %423 = vset.pattern.permute.xlu0 3
    %424 = vperm.xlu0 %423, %v80
    %v425 = vpop.permute.xlu0 %424
    %427 = vset.pattern.permute.xlu0 3
    %428 = vperm.xlu0 %427, %v81
    %v429 = vpop.permute.xlu0 %428
    %431 = vset.pattern.permute.xlu0 3
    %432 = vperm.xlu0 %431, %v82
    %v433 = vpop.permute.xlu0 %432
    %435 = vset.pattern.permute.xlu0 3
    %436 = vperm.xlu0 %435, %v83
    %v437 = vpop.permute.xlu0 %436
    %v439 = vperm.slane %v40, 3
    %v440 = vmul.f32 %v377, %v439
    %v441 = vmul.f32 %v381, %v439
    %v442 = vmul.f32 %v385, %v439
    %v443 = vmul.f32 %v389, %v439
    %v444 = vmul.f32 %v393, %v439
    %v445 = vmul.f32 %v397, %v439
    %v446 = vmul.f32 %v401, %v439
    %v447 = vmul.f32 %v405, %v439
    %v448 = vmul.f32 %v409, %v439
    %v449 = vmul.f32 %v413, %v439
    %v450 = vmul.f32 %v417, %v439
    %v451 = vmul.f32 %v421, %v439
    %v452 = vmul.f32 %v425, %v439
    %v453 = vmul.f32 %v429, %v439
    %v454 = vmul.f32 %v433, %v439
    %v455 = vmul.f32 %v437, %v439
    %v456 = vadd.f32 %v359, %v440
    %v457 = vadd.f32 %v360, %v441
    %v458 = vadd.f32 %v361, %v442
    %v459 = vadd.f32 %v362, %v443
    %v460 = vadd.f32 %v363, %v444
    %v461 = vadd.f32 %v364, %v445
    %v462 = vadd.f32 %v365, %v446
    %v463 = vadd.f32 %v366, %v447
    %v464 = vadd.f32 %v367, %v448
    %v465 = vadd.f32 %v368, %v449
    %v466 = vadd.f32 %v369, %v450
    %v467 = vadd.f32 %v370, %v451
    %v468 = vadd.f32 %v371, %v452
    %v469 = vadd.f32 %v372, %v453
    %v470 = vadd.f32 %v373, %v454
    %v471 = vadd.f32 %v374, %v455
    %472 = vset.pattern.permute.xlu0 4
    %473 = vperm.xlu0 %472, %v68
    %v474 = vpop.permute.xlu0 %473
    %476 = vset.pattern.permute.xlu0 4
    %477 = vperm.xlu0 %476, %v69
    %v478 = vpop.permute.xlu0 %477
    %480 = vset.pattern.permute.xlu0 4
    %481 = vperm.xlu0 %480, %v70
    %v482 = vpop.permute.xlu0 %481
    %484 = vset.pattern.permute.xlu0 4
    %485 = vperm.xlu0 %484, %v71
    %v486 = vpop.permute.xlu0 %485
    %488 = vset.pattern.permute.xlu0 4
    %489 = vperm.xlu0 %488, %v72
    %v490 = vpop.permute.xlu0 %489
    %492 = vset.pattern.permute.xlu0 4
    %493 = vperm.xlu0 %492, %v73
    %v494 = vpop.permute.xlu0 %493
    %496 = vset.pattern.permute.xlu0 4
    %497 = vperm.xlu0 %496, %v74
    %v498 = vpop.permute.xlu0 %497
    %500 = vset.pattern.permute.xlu0 4
    %501 = vperm.xlu0 %500, %v75
    %v502 = vpop.permute.xlu0 %501
    %504 = vset.pattern.permute.xlu0 4
    %505 = vperm.xlu0 %504, %v76
    %v506 = vpop.permute.xlu0 %505
    %508 = vset.pattern.permute.xlu0 4
    %509 = vperm.xlu0 %508, %v77
    %v510 = vpop.permute.xlu0 %509
    %512 = vset.pattern.permute.xlu0 4
    %513 = vperm.xlu0 %512, %v78
    %v514 = vpop.permute.xlu0 %513
    %516 = vset.pattern.permute.xlu0 4
    %517 = vperm.xlu0 %516, %v79
    %v518 = vpop.permute.xlu0 %517
    %520 = vset.pattern.permute.xlu0 4
    %521 = vperm.xlu0 %520, %v80
    %v522 = vpop.permute.xlu0 %521
    %524 = vset.pattern.permute.xlu0 4
    %525 = vperm.xlu0 %524, %v81
    %v526 = vpop.permute.xlu0 %525
    %528 = vset.pattern.permute.xlu0 4
    %529 = vperm.xlu0 %528, %v82
    %v530 = vpop.permute.xlu0 %529
    %532 = vset.pattern.permute.xlu0 4
    %533 = vperm.xlu0 %532, %v83
    %v534 = vpop.permute.xlu0 %533
    %v536 = vperm.slane %v40, 4
    %v537 = vmul.f32 %v474, %v536
    %v538 = vmul.f32 %v478, %v536
    %v539 = vmul.f32 %v482, %v536
    %v540 = vmul.f32 %v486, %v536
    %v541 = vmul.f32 %v490, %v536
    %v542 = vmul.f32 %v494, %v536
    %v543 = vmul.f32 %v498, %v536
    %v544 = vmul.f32 %v502, %v536
    %v545 = vmul.f32 %v506, %v536
    %v546 = vmul.f32 %v510, %v536
    %v547 = vmul.f32 %v514, %v536
    %v548 = vmul.f32 %v518, %v536
    %v549 = vmul.f32 %v522, %v536
    %v550 = vmul.f32 %v526, %v536
    %v551 = vmul.f32 %v530, %v536
    %v552 = vmul.f32 %v534, %v536
    %v553 = vadd.f32 %v456, %v537
    %v554 = vadd.f32 %v457, %v538
    %v555 = vadd.f32 %v458, %v539
    %v556 = vadd.f32 %v459, %v540
    %v557 = vadd.f32 %v460, %v541
    %v558 = vadd.f32 %v461, %v542
    %v559 = vadd.f32 %v462, %v543
    %v560 = vadd.f32 %v463, %v544
    %v561 = vadd.f32 %v464, %v545
    %v562 = vadd.f32 %v465, %v546
    %v563 = vadd.f32 %v466, %v547
    %v564 = vadd.f32 %v467, %v548
    %v565 = vadd.f32 %v468, %v549
    %v566 = vadd.f32 %v469, %v550
    %v567 = vadd.f32 %v470, %v551
    %v568 = vadd.f32 %v471, %v552
    %569 = vset.pattern.permute.xlu0 5
    %570 = vperm.xlu0 %569, %v68
    %v571 = vpop.permute.xlu0 %570
    %573 = vset.pattern.permute.xlu0 5
    %574 = vperm.xlu0 %573, %v69
    %v575 = vpop.permute.xlu0 %574
    %577 = vset.pattern.permute.xlu0 5
    %578 = vperm.xlu0 %577, %v70
    %v579 = vpop.permute.xlu0 %578
    %581 = vset.pattern.permute.xlu0 5
    %582 = vperm.xlu0 %581, %v71
    %v583 = vpop.permute.xlu0 %582
    %585 = vset.pattern.permute.xlu0 5
    %586 = vperm.xlu0 %585, %v72
    %v587 = vpop.permute.xlu0 %586
    %589 = vset.pattern.permute.xlu0 5
    %590 = vperm.xlu0 %589, %v73
    %v591 = vpop.permute.xlu0 %590
    %593 = vset.pattern.permute.xlu0 5
    %594 = vperm.xlu0 %593, %v74
    %v595 = vpop.permute.xlu0 %594
    %597 = vset.pattern.permute.xlu0 5
    %598 = vperm.xlu0 %597, %v75
    %v599 = vpop.permute.xlu0 %598
    %601 = vset.pattern.permute.xlu0 5
    %602 = vperm.xlu0 %601, %v76
    %v603 = vpop.permute.xlu0 %602
    %605 = vset.pattern.permute.xlu0 5
    %606 = vperm.xlu0 %605, %v77
    %v607 = vpop.permute.xlu0 %606
    %609 = vset.pattern.permute.xlu0 5
    %610 = vperm.xlu0 %609, %v78
    %v611 = vpop.permute.xlu0 %610
    %613 = vset.pattern.permute.xlu0 5
    %614 = vperm.xlu0 %613, %v79
    %v615 = vpop.permute.xlu0 %614
    %617 = vset.pattern.permute.xlu0 5
    %618 = vperm.xlu0 %617, %v80
    %v619 = vpop.permute.xlu0 %618
    %621 = vset.pattern.permute.xlu0 5
    %622 = vperm.xlu0 %621, %v81
    %v623 = vpop.permute.xlu0 %622
    %625 = vset.pattern.permute.xlu0 5
    %626 = vperm.xlu0 %625, %v82
    %v627 = vpop.permute.xlu0 %626
    %629 = vset.pattern.permute.xlu0 5
    %630 = vperm.xlu0 %629, %v83
    %v631 = vpop.permute.xlu0 %630
    %v633 = vperm.slane %v40, 5
    %v634 = vmul.f32 %v571, %v633
    %v635 = vmul.f32 %v575, %v633
    %v636 = vmul.f32 %v579, %v633
    %v637 = vmul.f32 %v583, %v633
    %v638 = vmul.f32 %v587, %v633
    %v639 = vmul.f32 %v591, %v633
    %v640 = vmul.f32 %v595, %v633
    %v641 = vmul.f32 %v599, %v633
    %v642 = vmul.f32 %v603, %v633
    %v643 = vmul.f32 %v607, %v633
    %v644 = vmul.f32 %v611, %v633
    %v645 = vmul.f32 %v615, %v633
    %v646 = vmul.f32 %v619, %v633
    %v647 = vmul.f32 %v623, %v633
    %v648 = vmul.f32 %v627, %v633
    %v649 = vmul.f32 %v631, %v633
    %v650 = vadd.f32 %v553, %v634
    %v651 = vadd.f32 %v554, %v635
    %v652 = vadd.f32 %v555, %v636
    %v653 = vadd.f32 %v556, %v637
    %v654 = vadd.f32 %v557, %v638
    %v655 = vadd.f32 %v558, %v639
    %v656 = vadd.f32 %v559, %v640
    %v657 = vadd.f32 %v560, %v641
    %v658 = vadd.f32 %v561, %v642
    %v659 = vadd.f32 %v562, %v643
    %v660 = vadd.f32 %v563, %v644
    %v661 = vadd.f32 %v564, %v645
    %v662 = vadd.f32 %v565, %v646
    %v663 = vadd.f32 %v566, %v647
    %v664 = vadd.f32 %v567, %v648
    %v665 = vadd.f32 %v568, %v649
    %666 = vset.pattern.permute.xlu0 6
    %667 = vperm.xlu0 %666, %v68
    %v668 = vpop.permute.xlu0 %667
    %670 = vset.pattern.permute.xlu0 6
    %671 = vperm.xlu0 %670, %v69
    %v672 = vpop.permute.xlu0 %671
    %674 = vset.pattern.permute.xlu0 6
    %675 = vperm.xlu0 %674, %v70
    %v676 = vpop.permute.xlu0 %675
    %678 = vset.pattern.permute.xlu0 6
    %679 = vperm.xlu0 %678, %v71
    %v680 = vpop.permute.xlu0 %679
    %682 = vset.pattern.permute.xlu0 6
    %683 = vperm.xlu0 %682, %v72
    %v684 = vpop.permute.xlu0 %683
    %686 = vset.pattern.permute.xlu0 6
    %687 = vperm.xlu0 %686, %v73
    %v688 = vpop.permute.xlu0 %687
    %690 = vset.pattern.permute.xlu0 6
    %691 = vperm.xlu0 %690, %v74
    %v692 = vpop.permute.xlu0 %691
    %694 = vset.pattern.permute.xlu0 6
    %695 = vperm.xlu0 %694, %v75
    %v696 = vpop.permute.xlu0 %695
    %698 = vset.pattern.permute.xlu0 6
    %699 = vperm.xlu0 %698, %v76
    %v700 = vpop.permute.xlu0 %699
    %702 = vset.pattern.permute.xlu0 6
    %703 = vperm.xlu0 %702, %v77
    %v704 = vpop.permute.xlu0 %703
    %706 = vset.pattern.permute.xlu0 6
    %707 = vperm.xlu0 %706, %v78
    %v708 = vpop.permute.xlu0 %707
    %710 = vset.pattern.permute.xlu0 6
    %711 = vperm.xlu0 %710, %v79
    %v712 = vpop.permute.xlu0 %711
    %714 = vset.pattern.permute.xlu0 6
    %715 = vperm.xlu0 %714, %v80
    %v716 = vpop.permute.xlu0 %715
    %718 = vset.pattern.permute.xlu0 6
    %719 = vperm.xlu0 %718, %v81
    %v720 = vpop.permute.xlu0 %719
    %722 = vset.pattern.permute.xlu0 6
    %723 = vperm.xlu0 %722, %v82
    %v724 = vpop.permute.xlu0 %723
    %726 = vset.pattern.permute.xlu0 6
    %727 = vperm.xlu0 %726, %v83
    %v728 = vpop.permute.xlu0 %727
    %v730 = vperm.slane %v40, 6
    %v731 = vmul.f32 %v668, %v730
    %v732 = vmul.f32 %v672, %v730
    %v733 = vmul.f32 %v676, %v730
    %v734 = vmul.f32 %v680, %v730
    %v735 = vmul.f32 %v684, %v730
    %v736 = vmul.f32 %v688, %v730
    %v737 = vmul.f32 %v692, %v730
    %v738 = vmul.f32 %v696, %v730
    %v739 = vmul.f32 %v700, %v730
    %v740 = vmul.f32 %v704, %v730
    %v741 = vmul.f32 %v708, %v730
    %v742 = vmul.f32 %v712, %v730
    %v743 = vmul.f32 %v716, %v730
    %v744 = vmul.f32 %v720, %v730
    %v745 = vmul.f32 %v724, %v730
    %v746 = vmul.f32 %v728, %v730
    %v747 = vadd.f32 %v650, %v731
    %v748 = vadd.f32 %v651, %v732
    %v749 = vadd.f32 %v652, %v733
    %v750 = vadd.f32 %v653, %v734
    %v751 = vadd.f32 %v654, %v735
    %v752 = vadd.f32 %v655, %v736
    %v753 = vadd.f32 %v656, %v737
    %v754 = vadd.f32 %v657, %v738
    %v755 = vadd.f32 %v658, %v739
    %v756 = vadd.f32 %v659, %v740
    %v757 = vadd.f32 %v660, %v741
    %v758 = vadd.f32 %v661, %v742
    %v759 = vadd.f32 %v662, %v743
    %v760 = vadd.f32 %v663, %v744
    %v761 = vadd.f32 %v664, %v745
    %v762 = vadd.f32 %v665, %v746
    %763 = vset.pattern.permute.xlu0 7
    %764 = vperm.xlu0 %763, %v68
    %v765 = vpop.permute.xlu0 %764
    %767 = vset.pattern.permute.xlu0 7
    %768 = vperm.xlu0 %767, %v69
    %v769 = vpop.permute.xlu0 %768
    %771 = vset.pattern.permute.xlu0 7
    %772 = vperm.xlu0 %771, %v70
    %v773 = vpop.permute.xlu0 %772
    %775 = vset.pattern.permute.xlu0 7
    %776 = vperm.xlu0 %775, %v71
    %v777 = vpop.permute.xlu0 %776
    %779 = vset.pattern.permute.xlu0 7
    %780 = vperm.xlu0 %779, %v72
    %v781 = vpop.permute.xlu0 %780
    %783 = vset.pattern.permute.xlu0 7
    %784 = vperm.xlu0 %783, %v73
    %v785 = vpop.permute.xlu0 %784
    %787 = vset.pattern.permute.xlu0 7
    %788 = vperm.xlu0 %787, %v74
    %v789 = vpop.permute.xlu0 %788
    %791 = vset.pattern.permute.xlu0 7
    %792 = vperm.xlu0 %791, %v75
    %v793 = vpop.permute.xlu0 %792
    %795 = vset.pattern.permute.xlu0 7
    %796 = vperm.xlu0 %795, %v76
    %v797 = vpop.permute.xlu0 %796
    %799 = vset.pattern.permute.xlu0 7
    %800 = vperm.xlu0 %799, %v77
    %v801 = vpop.permute.xlu0 %800
    %803 = vset.pattern.permute.xlu0 7
    %804 = vperm.xlu0 %803, %v78
    %v805 = vpop.permute.xlu0 %804
    %807 = vset.pattern.permute.xlu0 7
    %808 = vperm.xlu0 %807, %v79
    %v809 = vpop.permute.xlu0 %808
    %811 = vset.pattern.permute.xlu0 7
    %812 = vperm.xlu0 %811, %v80
    %v813 = vpop.permute.xlu0 %812
    %815 = vset.pattern.permute.xlu0 7
    %816 = vperm.xlu0 %815, %v81
    %v817 = vpop.permute.xlu0 %816
    %819 = vset.pattern.permute.xlu0 7
    %820 = vperm.xlu0 %819, %v82
    %v821 = vpop.permute.xlu0 %820
    %823 = vset.pattern.permute.xlu0 7
    %824 = vperm.xlu0 %823, %v83
    %v825 = vpop.permute.xlu0 %824
    %v827 = vperm.slane %v40, 7
    %v828 = vmul.f32 %v765, %v827
    %v829 = vmul.f32 %v769, %v827
    %v830 = vmul.f32 %v773, %v827
    %v831 = vmul.f32 %v777, %v827
    %v832 = vmul.f32 %v781, %v827
    %v833 = vmul.f32 %v785, %v827
    %v834 = vmul.f32 %v789, %v827
    %v835 = vmul.f32 %v793, %v827
    %v836 = vmul.f32 %v797, %v827
    %v837 = vmul.f32 %v801, %v827
    %v838 = vmul.f32 %v805, %v827
    %v839 = vmul.f32 %v809, %v827
    %v840 = vmul.f32 %v813, %v827
    %v841 = vmul.f32 %v817, %v827
    %v842 = vmul.f32 %v821, %v827
    %v843 = vmul.f32 %v825, %v827
    %v844 = vadd.f32 %v747, %v828
    %v845 = vadd.f32 %v748, %v829
    %v846 = vadd.f32 %v749, %v830
    %v847 = vadd.f32 %v750, %v831
    %v848 = vadd.f32 %v751, %v832
    %v849 = vadd.f32 %v752, %v833
    %v850 = vadd.f32 %v753, %v834
    %v851 = vadd.f32 %v754, %v835
    %v852 = vadd.f32 %v755, %v836
    %v853 = vadd.f32 %v756, %v837
    %v854 = vadd.f32 %v757, %v838
    %v855 = vadd.f32 %v758, %v839
    %v856 = vadd.f32 %v759, %v840
    %v857 = vadd.f32 %v760, %v841
    %v858 = vadd.f32 %v761, %v842
    %v859 = vadd.f32 %v762, %v843
    %860 = vset.pattern.permute.xlu0 8
    %861 = vperm.xlu0 %860, %v68
    %v862 = vpop.permute.xlu0 %861
    %864 = vset.pattern.permute.xlu0 8
    %865 = vperm.xlu0 %864, %v69
    %v866 = vpop.permute.xlu0 %865
    %868 = vset.pattern.permute.xlu0 8
    %869 = vperm.xlu0 %868, %v70
    %v870 = vpop.permute.xlu0 %869
    %872 = vset.pattern.permute.xlu0 8
    %873 = vperm.xlu0 %872, %v71
    %v874 = vpop.permute.xlu0 %873
    %876 = vset.pattern.permute.xlu0 8
    %877 = vperm.xlu0 %876, %v72
    %v878 = vpop.permute.xlu0 %877
    %880 = vset.pattern.permute.xlu0 8
    %881 = vperm.xlu0 %880, %v73
    %v882 = vpop.permute.xlu0 %881
    %884 = vset.pattern.permute.xlu0 8
    %885 = vperm.xlu0 %884, %v74
    %v886 = vpop.permute.xlu0 %885
    %888 = vset.pattern.permute.xlu0 8
    %889 = vperm.xlu0 %888, %v75
    %v890 = vpop.permute.xlu0 %889
    %892 = vset.pattern.permute.xlu0 8
    %893 = vperm.xlu0 %892, %v76
    %v894 = vpop.permute.xlu0 %893
    %896 = vset.pattern.permute.xlu0 8
    %897 = vperm.xlu0 %896, %v77
    %v898 = vpop.permute.xlu0 %897
    %900 = vset.pattern.permute.xlu0 8
    %901 = vperm.xlu0 %900, %v78
    %v902 = vpop.permute.xlu0 %901
    %904 = vset.pattern.permute.xlu0 8
    %905 = vperm.xlu0 %904, %v79
    %v906 = vpop.permute.xlu0 %905
    %908 = vset.pattern.permute.xlu0 8
    %909 = vperm.xlu0 %908, %v80
    %v910 = vpop.permute.xlu0 %909
    %912 = vset.pattern.permute.xlu0 8
    %913 = vperm.xlu0 %912, %v81
    %v914 = vpop.permute.xlu0 %913
    %916 = vset.pattern.permute.xlu0 8
    %917 = vperm.xlu0 %916, %v82
    %v918 = vpop.permute.xlu0 %917
    %920 = vset.pattern.permute.xlu0 8
    %921 = vperm.xlu0 %920, %v83
    %v922 = vpop.permute.xlu0 %921
    %v924 = vperm.slane %v41, 0
    %v925 = vmul.f32 %v862, %v924
    %v926 = vmul.f32 %v866, %v924
    %v927 = vmul.f32 %v870, %v924
    %v928 = vmul.f32 %v874, %v924
    %v929 = vmul.f32 %v878, %v924
    %v930 = vmul.f32 %v882, %v924
    %v931 = vmul.f32 %v886, %v924
    %v932 = vmul.f32 %v890, %v924
    %v933 = vmul.f32 %v894, %v924
    %v934 = vmul.f32 %v898, %v924
    %v935 = vmul.f32 %v902, %v924
    %v936 = vmul.f32 %v906, %v924
    %v937 = vmul.f32 %v910, %v924
    %v938 = vmul.f32 %v914, %v924
    %v939 = vmul.f32 %v918, %v924
    %v940 = vmul.f32 %v922, %v924
    %v941 = vadd.f32 %v844, %v925
    %v942 = vadd.f32 %v845, %v926
    %v943 = vadd.f32 %v846, %v927
    %v944 = vadd.f32 %v847, %v928
    %v945 = vadd.f32 %v848, %v929
    %v946 = vadd.f32 %v849, %v930
    %v947 = vadd.f32 %v850, %v931
    %v948 = vadd.f32 %v851, %v932
    %v949 = vadd.f32 %v852, %v933
    %v950 = vadd.f32 %v853, %v934
    %v951 = vadd.f32 %v854, %v935
    %v952 = vadd.f32 %v855, %v936
    %v953 = vadd.f32 %v856, %v937
    %v954 = vadd.f32 %v857, %v938
    %v955 = vadd.f32 %v858, %v939
    %v956 = vadd.f32 %v859, %v940
    %v957 = vmax.f32 %v941, %v945
    %v958 = vmax.f32 %v942, %v946
    %v959 = vmax.f32 %v943, %v947
    %v960 = vmax.f32 %v944, %v948
    %v961 = vmax.f32 %v957, %v949
    %v962 = vmax.f32 %v958, %v950
    %v963 = vmax.f32 %v959, %v951
    %v964 = vmax.f32 %v960, %v952
    %v965 = vmax.f32 %v961, %v953
    %v966 = vmax.f32 %v962, %v954
    %v967 = vmax.f32 %v963, %v955
    %v968 = vmax.f32 %v964, %v956
    %v970 = vperm.slane %v42, 0
    %v972 = vadd.f32 %v965, %v970
    %v973 = vadd.f32 %v966, %v970
    %v974 = vadd.f32 %v967, %v970
    %v975 = vadd.f32 %v968, %v970
    %v976 = vmax.f32 %v972, 0.0
    %v977 = vmax.f32 %v973, 0.0
    %v978 = vmax.f32 %v974, 0.0
    %v979 = vmax.f32 %v975, 0.0
    %vm980 = vcmask 257024
    %981 = vst.msk [vmem:[#allocation2] sm:$0xf] %vm980, %v976
    %982 = vst.msk [vmem:[#allocation2 + $0x8] sm:$0xf] %vm980, %v977
    %983 = vst.msk [vmem:[#allocation2 + $0x18] sm:$0xf] %vm980, %v978
    %984 = vst.msk [vmem:[#allocation2 + $0x20] sm:$0xf] %vm980, %v979
    %s985 = scalar_lea.vmem %s0, 64
    %v986 = vld [vmem:[%s985] sm:$0xf]
    %v987 = vld [vmem:[%s985 + $0x4] sm:$0xf]
    %v988 = vld [vmem:[%s985 + $0x8] sm:$0xf]
    %v989 = vld [vmem:[%s985 + $0xc] sm:$0xf]
    %v990 = vld [vmem:[%s985 + $0x10] sm:$0xf]
    %v991 = vld [vmem:[%s985 + $0x14] sm:$0xf]
    %v992 = vld [vmem:[%s985 + $0x18] sm:$0xf]
    %v993 = vld [vmem:[%s985 + $0x1c] sm:$0xf]
    %v994 = vld [vmem:[%s985 + $0x20] sm:$0xf]
    %v995 = vld [vmem:[%s985 + $0x24] sm:$0xf]
    %v996 = vld [vmem:[%s985 + $0x28] sm:$0xf]
    %v997 = vld [vmem:[%s985 + $0x2c] sm:$0xf]
    %v998 = vld [vmem:[%s985 + $0x30] sm:$0xf]
    %v999 = vld [vmem:[%s985 + $0x34] sm:$0xf]
    %v1000 = vld [vmem:[%s985 + $0x38] sm:$0xf]
    %v1001 = vld [vmem:[%s985 + $0x3c] sm:$0xf]
    %1003 = vset.pattern.permute.xlu0 0
    %1004 = vperm.xlu0 %1003, %v986
    %v1005 = vpop.permute.xlu0 %1004
    %1008 = vset.pattern.permute.xlu0 0
    %1009 = vperm.xlu0 %1008, %v987
    %v1010 = vpop.permute.xlu0 %1009
    %1013 = vset.pattern.permute.xlu0 0
    %1014 = vperm.xlu0 %1013, %v988
    %v1015 = vpop.permute.xlu0 %1014
    %1018 = vset.pattern.permute.xlu0 0
    %1019 = vperm.xlu0 %1018, %v989
    %v1020 = vpop.permute.xlu0 %1019
    %1023 = vset.pattern.permute.xlu0 0
    %1024 = vperm.xlu0 %1023, %v990
    %v1025 = vpop.permute.xlu0 %1024
    %1028 = vset.pattern.permute.xlu0 0
    %1029 = vperm.xlu0 %1028, %v991
    %v1030 = vpop.permute.xlu0 %1029
    %1033 = vset.pattern.permute.xlu0 0
    %1034 = vperm.xlu0 %1033, %v992
    %v1035 = vpop.permute.xlu0 %1034
    %1038 = vset.pattern.permute.xlu0 0
    %1039 = vperm.xlu0 %1038, %v993
    %v1040 = vpop.permute.xlu0 %1039
    %1043 = vset.pattern.permute.xlu0 0
    %1044 = vperm.xlu0 %1043, %v994
    %v1045 = vpop.permute.xlu0 %1044
    %1048 = vset.pattern.permute.xlu0 0
    %1049 = vperm.xlu0 %1048, %v995
    %v1050 = vpop.permute.xlu0 %1049
    %1053 = vset.pattern.permute.xlu0 0
    %1054 = vperm.xlu0 %1053, %v996
    %v1055 = vpop.permute.xlu0 %1054
    %1058 = vset.pattern.permute.xlu0 0
    %1059 = vperm.xlu0 %1058, %v997
    %v1060 = vpop.permute.xlu0 %1059
    %1063 = vset.pattern.permute.xlu0 0
    %1064 = vperm.xlu0 %1063, %v998
    %v1065 = vpop.permute.xlu0 %1064
    %1068 = vset.pattern.permute.xlu0 0
    %1069 = vperm.xlu0 %1068, %v999
    %v1070 = vpop.permute.xlu0 %1069
    %1073 = vset.pattern.permute.xlu0 0
    %1074 = vperm.xlu0 %1073, %v1000
    %v1075 = vpop.permute.xlu0 %1074
    %1078 = vset.pattern.permute.xlu0 0
    %1079 = vperm.xlu0 %1078, %v1001
    %v1080 = vpop.permute.xlu0 %1079
    %v1082 = vmul.f32 %v1005, %v164
    %v1083 = vmul.f32 %v1010, %v164
    %v1084 = vmul.f32 %v1015, %v164
    %v1085 = vmul.f32 %v1020, %v164
    %v1086 = vmul.f32 %v1025, %v164
    %v1087 = vmul.f32 %v1030, %v164
    %v1088 = vmul.f32 %v1035, %v164
    %v1089 = vmul.f32 %v1040, %v164
    %v1090 = vmul.f32 %v1045, %v164
    %v1091 = vmul.f32 %v1050, %v164
    %v1092 = vmul.f32 %v1055, %v164
    %v1093 = vmul.f32 %v1060, %v164
    %v1094 = vmul.f32 %v1065, %v164
    %v1095 = vmul.f32 %v1070, %v164
    %v1096 = vmul.f32 %v1075, %v164
    %v1097 = vmul.f32 %v1080, %v164
    %1098 = vset.pattern.permute.xlu0 1
    %1099 = vperm.xlu0 %1098, %v986
    %v1100 = vpop.permute.xlu0 %1099
    %1102 = vset.pattern.permute.xlu0 1
    %1103 = vperm.xlu0 %1102, %v987
    %v1104 = vpop.permute.xlu0 %1103
    %1106 = vset.pattern.permute.xlu0 1
    %1107 = vperm.xlu0 %1106, %v988
    %v1108 = vpop.permute.xlu0 %1107
    %1110 = vset.pattern.permute.xlu0 1
    %1111 = vperm.xlu0 %1110, %v989
    %v1112 = vpop.permute.xlu0 %1111
    %1114 = vset.pattern.permute.xlu0 1
    %1115 = vperm.xlu0 %1114, %v990
    %v1116 = vpop.permute.xlu0 %1115
    %1118 = vset.pattern.permute.xlu0 1
    %1119 = vperm.xlu0 %1118, %v991
    %v1120 = vpop.permute.xlu0 %1119
    %1122 = vset.pattern.permute.xlu0 1
    %1123 = vperm.xlu0 %1122, %v992
    %v1124 = vpop.permute.xlu0 %1123
    %1126 = vset.pattern.permute.xlu0 1
    %1127 = vperm.xlu0 %1126, %v993
    %v1128 = vpop.permute.xlu0 %1127
    %1130 = vset.pattern.permute.xlu0 1
    %1131 = vperm.xlu0 %1130, %v994
    %v1132 = vpop.permute.xlu0 %1131
    %1134 = vset.pattern.permute.xlu0 1
    %1135 = vperm.xlu0 %1134, %v995
    %v1136 = vpop.permute.xlu0 %1135
    %1138 = vset.pattern.permute.xlu0 1
    %1139 = vperm.xlu0 %1138, %v996
    %v1140 = vpop.permute.xlu0 %1139
    %1142 = vset.pattern.permute.xlu0 1
    %1143 = vperm.xlu0 %1142, %v997
    %v1144 = vpop.permute.xlu0 %1143
    %1146 = vset.pattern.permute.xlu0 1
    %1147 = vperm.xlu0 %1146, %v998
    %v1148 = vpop.permute.xlu0 %1147
    %1150 = vset.pattern.permute.xlu0 1
    %1151 = vperm.xlu0 %1150, %v999
    %v1152 = vpop.permute.xlu0 %1151
    %1154 = vset.pattern.permute.xlu0 1
    %1155 = vperm.xlu0 %1154, %v1000
    %v1156 = vpop.permute.xlu0 %1155
    %1158 = vset.pattern.permute.xlu0 1
    %1159 = vperm.xlu0 %1158, %v1001
    %v1160 = vpop.permute.xlu0 %1159
    %v1162 = vmul.f32 %v1100, %v245
    %v1163 = vmul.f32 %v1104, %v245
    %v1164 = vmul.f32 %v1108, %v245
    %v1165 = vmul.f32 %v1112, %v245
    %v1166 = vmul.f32 %v1116, %v245
    %v1167 = vmul.f32 %v1120, %v245
    %v1168 = vmul.f32 %v1124, %v245
    %v1169 = vmul.f32 %v1128, %v245
    %v1170 = vmul.f32 %v1132, %v245
    %v1171 = vmul.f32 %v1136, %v245
    %v1172 = vmul.f32 %v1140, %v245
    %v1173 = vmul.f32 %v1144, %v245
    %v1174 = vmul.f32 %v1148, %v245
    %v1175 = vmul.f32 %v1152, %v245
    %v1176 = vmul.f32 %v1156, %v245
    %v1177 = vmul.f32 %v1160, %v245
    %v1178 = vadd.f32 %v1082, %v1162
    %v1179 = vadd.f32 %v1083, %v1163
    %v1180 = vadd.f32 %v1084, %v1164
    %v1181 = vadd.f32 %v1085, %v1165
    %v1182 = vadd.f32 %v1086, %v1166
    %v1183 = vadd.f32 %v1087, %v1167
    %v1184 = vadd.f32 %v1088, %v1168
    %v1185 = vadd.f32 %v1089, %v1169
    %v1186 = vadd.f32 %v1090, %v1170
    %v1187 = vadd.f32 %v1091, %v1171
    %v1188 = vadd.f32 %v1092, %v1172
    %v1189 = vadd.f32 %v1093, %v1173
    %v1190 = vadd.f32 %v1094, %v1174
    %v1191 = vadd.f32 %v1095, %v1175
    %v1192 = vadd.f32 %v1096, %v1176
    %v1193 = vadd.f32 %v1097, %v1177
    %1194 = vset.pattern.permute.xlu0 2
    %1195 = vperm.xlu0 %1194, %v986
    %v1196 = vpop.permute.xlu0 %1195
    %1198 = vset.pattern.permute.xlu0 2
    %1199 = vperm.xlu0 %1198, %v987
    %v1200 = vpop.permute.xlu0 %1199
    %1202 = vset.pattern.permute.xlu0 2
    %1203 = vperm.xlu0 %1202, %v988
    %v1204 = vpop.permute.xlu0 %1203
    %1206 = vset.pattern.permute.xlu0 2
    %1207 = vperm.xlu0 %1206, %v989
    %v1208 = vpop.permute.xlu0 %1207
    %1210 = vset.pattern.permute.xlu0 2
    %1211 = vperm.xlu0 %1210, %v990
    %v1212 = vpop.permute.xlu0 %1211
    %1214 = vset.pattern.permute.xlu0 2
    %1215 = vperm.xlu0 %1214, %v991
    %v1216 = vpop.permute.xlu0 %1215
    %1218 = vset.pattern.permute.xlu0 2
    %1219 = vperm.xlu0 %1218, %v992
    %v1220 = vpop.permute.xlu0 %1219
    %1222 = vset.pattern.permute.xlu0 2
    %1223 = vperm.xlu0 %1222, %v993
    %v1224 = vpop.permute.xlu0 %1223
    %1226 = vset.pattern.permute.xlu0 2
    %1227 = vperm.xlu0 %1226, %v994
    %v1228 = vpop.permute.xlu0 %1227
    %1230 = vset.pattern.permute.xlu0 2
    %1231 = vperm.xlu0 %1230, %v995
    %v1232 = vpop.permute.xlu0 %1231
    %1234 = vset.pattern.permute.xlu0 2
    %1235 = vperm.xlu0 %1234, %v996
    %v1236 = vpop.permute.xlu0 %1235
    %1238 = vset.pattern.permute.xlu0 2
    %1239 = vperm.xlu0 %1238, %v997
    %v1240 = vpop.permute.xlu0 %1239
    %1242 = vset.pattern.permute.xlu0 2
    %1243 = vperm.xlu0 %1242, %v998
    %v1244 = vpop.permute.xlu0 %1243
    %1246 = vset.pattern.permute.xlu0 2
    %1247 = vperm.xlu0 %1246, %v999
    %v1248 = vpop.permute.xlu0 %1247
    %1250 = vset.pattern.permute.xlu0 2
    %1251 = vperm.xlu0 %1250, %v1000
    %v1252 = vpop.permute.xlu0 %1251
    %1254 = vset.pattern.permute.xlu0 2
    %1255 = vperm.xlu0 %1254, %v1001
    %v1256 = vpop.permute.xlu0 %1255
    %v1258 = vmul.f32 %v1196, %v342
    %v1259 = vmul.f32 %v1200, %v342
    %v1260 = vmul.f32 %v1204, %v342
    %v1261 = vmul.f32 %v1208, %v342
    %v1262 = vmul.f32 %v1212, %v342
    %v1263 = vmul.f32 %v1216, %v342
    %v1264 = vmul.f32 %v1220, %v342
    %v1265 = vmul.f32 %v1224, %v342
    %v1266 = vmul.f32 %v1228, %v342
    %v1267 = vmul.f32 %v1232, %v342
    %v1268 = vmul.f32 %v1236, %v342
    %v1269 = vmul.f32 %v1240, %v342
    %v1270 = vmul.f32 %v1244, %v342
    %v1271 = vmul.f32 %v1248, %v342
    %v1272 = vmul.f32 %v1252, %v342
    %v1273 = vmul.f32 %v1256, %v342
    %v1274 = vadd.f32 %v1178, %v1258
    %v1275 = vadd.f32 %v1179, %v1259
    %v1276 = vadd.f32 %v1180, %v1260
    %v1277 = vadd.f32 %v1181, %v1261
    %v1278 = vadd.f32 %v1182, %v1262
    %v1279 = vadd.f32 %v1183, %v1263
    %v1280 = vadd.f32 %v1184, %v1264
    %v1281 = vadd.f32 %v1185, %v1265
    %v1282 = vadd.f32 %v1186, %v1266
    %v1283 = vadd.f32 %v1187, %v1267
    %v1284 = vadd.f32 %v1188, %v1268
    %v1285 = vadd.f32 %v1189, %v1269
    %v1286 = vadd.f32 %v1190, %v1270
    %v1287 = vadd.f32 %v1191, %v1271
    %v1288 = vadd.f32 %v1192, %v1272
    %v1289 = vadd.f32 %v1193, %v1273
    %1290 = vset.pattern.permute.xlu0 3
    %1291 = vperm.xlu0 %1290, %v986
    %v1292 = vpop.permute.xlu0 %1291
    %1294 = vset.pattern.permute.xlu0 3
    %1295 = vperm.xlu0 %1294, %v987
    %v1296 = vpop.permute.xlu0 %1295
    %1298 = vset.pattern.permute.xlu0 3
    %1299 = vperm.xlu0 %1298, %v988
    %v1300 = vpop.permute.xlu0 %1299
    %1302 = vset.pattern.permute.xlu0 3
    %1303 = vperm.xlu0 %1302, %v989
    %v1304 = vpop.permute.xlu0 %1303
    %1306 = vset.pattern.permute.xlu0 3
    %1307 = vperm.xlu0 %1306, %v990
    %v1308 = vpop.permute.xlu0 %1307
    %1310 = vset.pattern.permute.xlu0 3
    %1311 = vperm.xlu0 %1310, %v991
    %v1312 = vpop.permute.xlu0 %1311
    %1314 = vset.pattern.permute.xlu0 3
    %1315 = vperm.xlu0 %1314, %v992
    %v1316 = vpop.permute.xlu0 %1315
    %1318 = vset.pattern.permute.xlu0 3
    %1319 = vperm.xlu0 %1318, %v993
    %v1320 = vpop.permute.xlu0 %1319
    %1322 = vset.pattern.permute.xlu0 3
    %1323 = vperm.xlu0 %1322, %v994
    %v1324 = vpop.permute.xlu0 %1323
    %1326 = vset.pattern.permute.xlu0 3
    %1327 = vperm.xlu0 %1326, %v995
    %v1328 = vpop.permute.xlu0 %1327
    %1330 = vset.pattern.permute.xlu0 3
    %1331 = vperm.xlu0 %1330, %v996
    %v1332 = vpop.permute.xlu0 %1331
    %1334 = vset.pattern.permute.xlu0 3
    %1335 = vperm.xlu0 %1334, %v997
    %v1336 = vpop.permute.xlu0 %1335
    %1338 = vset.pattern.permute.xlu0 3
    %1339 = vperm.xlu0 %1338, %v998
    %v1340 = vpop.permute.xlu0 %1339
    %1342 = vset.pattern.permute.xlu0 3
    %1343 = vperm.xlu0 %1342, %v999
    %v1344 = vpop.permute.xlu0 %1343
    %1346 = vset.pattern.permute.xlu0 3
    %1347 = vperm.xlu0 %1346, %v1000
    %v1348 = vpop.permute.xlu0 %1347
    %1350 = vset.pattern.permute.xlu0 3
    %1351 = vperm.xlu0 %1350, %v1001
    %v1352 = vpop.permute.xlu0 %1351
    %v1354 = vmul.f32 %v1292, %v439
    %v1355 = vmul.f32 %v1296, %v439
    %v1356 = vmul.f32 %v1300, %v439
    %v1357 = vmul.f32 %v1304, %v439
    %v1358 = vmul.f32 %v1308, %v439
    %v1359 = vmul.f32 %v1312, %v439
    %v1360 = vmul.f32 %v1316, %v439
    %v1361 = vmul.f32 %v1320, %v439
    %v1362 = vmul.f32 %v1324, %v439
    %v1363 = vmul.f32 %v1328, %v439
    %v1364 = vmul.f32 %v1332, %v439
    %v1365 = vmul.f32 %v1336, %v439
    %v1366 = vmul.f32 %v1340, %v439
    %v1367 = vmul.f32 %v1344, %v439
    %v1368 = vmul.f32 %v1348, %v439
    %v1369 = vmul.f32 %v1352, %v439
    %v1370 = vadd.f32 %v1274, %v1354
    %v1371 = vadd.f32 %v1275, %v1355
    %v1372 = vadd.f32 %v1276, %v1356
    %v1373 = vadd.f32 %v1277, %v1357
    %v1374 = vadd.f32 %v1278, %v1358
    %v1375 = vadd.f32 %v1279, %v1359
    %v1376 = vadd.f32 %v1280, %v1360
    %v1377 = vadd.f32 %v1281, %v1361
    %v1378 = vadd.f32 %v1282, %v1362
    %v1379 = vadd.f32 %v1283, %v1363
    %v1380 = vadd.f32 %v1284, %v1364
    %v1381 = vadd.f32 %v1285, %v1365
    %v1382 = vadd.f32 %v1286, %v1366
    %v1383 = vadd.f32 %v1287, %v1367
    %v1384 = vadd.f32 %v1288, %v1368
    %v1385 = vadd.f32 %v1289, %v1369
    %1386 = vset.pattern.permute.xlu0 4
    %1387 = vperm.xlu0 %1386, %v986
    %v1388 = vpop.permute.xlu0 %1387
    %1390 = vset.pattern.permute.xlu0 4
    %1391 = vperm.xlu0 %1390, %v987
    %v1392 = vpop.permute.xlu0 %1391
    %1394 = vset.pattern.permute.xlu0 4
    %1395 = vperm.xlu0 %1394, %v988
    %v1396 = vpop.permute.xlu0 %1395
    %1398 = vset.pattern.permute.xlu0 4
    %1399 = vperm.xlu0 %1398, %v989
    %v1400 = vpop.permute.xlu0 %1399
    %1402 = vset.pattern.permute.xlu0 4
    %1403 = vperm.xlu0 %1402, %v990
    %v1404 = vpop.permute.xlu0 %1403
    %1406 = vset.pattern.permute.xlu0 4
    %1407 = vperm.xlu0 %1406, %v991
    %v1408 = vpop.permute.xlu0 %1407
    %1410 = vset.pattern.permute.xlu0 4
    %1411 = vperm.xlu0 %1410, %v992
    %v1412 = vpop.permute.xlu0 %1411
    %1414 = vset.pattern.permute.xlu0 4
    %1415 = vperm.xlu0 %1414, %v993
    %v1416 = vpop.permute.xlu0 %1415
    %1418 = vset.pattern.permute.xlu0 4
    %1419 = vperm.xlu0 %1418, %v994
    %v1420 = vpop.permute.xlu0 %1419
    %1422 = vset.pattern.permute.xlu0 4
    %1423 = vperm.xlu0 %1422, %v995
    %v1424 = vpop.permute.xlu0 %1423
    %1426 = vset.pattern.permute.xlu0 4
    %1427 = vperm.xlu0 %1426, %v996
    %v1428 = vpop.permute.xlu0 %1427
    %1430 = vset.pattern.permute.xlu0 4
    %1431 = vperm.xlu0 %1430, %v997
    %v1432 = vpop.permute.xlu0 %1431
    %1434 = vset.pattern.permute.xlu0 4
    %1435 = vperm.xlu0 %1434, %v998
    %v1436 = vpop.permute.xlu0 %1435
    %1438 = vset.pattern.permute.xlu0 4
    %1439 = vperm.xlu0 %1438, %v999
    %v1440 = vpop.permute.xlu0 %1439
    %1442 = vset.pattern.permute.xlu0 4
    %1443 = vperm.xlu0 %1442, %v1000
    %v1444 = vpop.permute.xlu0 %1443
    %1446 = vset.pattern.permute.xlu0 4
    %1447 = vperm.xlu0 %1446, %v1001
    %v1448 = vpop.permute.xlu0 %1447
    %v1450 = vmul.f32 %v1388, %v536
    %v1451 = vmul.f32 %v1392, %v536
    %v1452 = vmul.f32 %v1396, %v536
    %v1453 = vmul.f32 %v1400, %v536
    %v1454 = vmul.f32 %v1404, %v536
    %v1455 = vmul.f32 %v1408, %v536
    %v1456 = vmul.f32 %v1412, %v536
    %v1457 = vmul.f32 %v1416, %v536
    %v1458 = vmul.f32 %v1420, %v536
    %v1459 = vmul.f32 %v1424, %v536
    %v1460 = vmul.f32 %v1428, %v536
    %v1461 = vmul.f32 %v1432, %v536
    %v1462 = vmul.f32 %v1436, %v536
    %v1463 = vmul.f32 %v1440, %v536
    %v1464 = vmul.f32 %v1444, %v536
    %v1465 = vmul.f32 %v1448, %v536
    %v1466 = vadd.f32 %v1370, %v1450
    %v1467 = vadd.f32 %v1371, %v1451
    %v1468 = vadd.f32 %v1372, %v1452
    %v1469 = vadd.f32 %v1373, %v1453
    %v1470 = vadd.f32 %v1374, %v1454
    %v1471 = vadd.f32 %v1375, %v1455
    %v1472 = vadd.f32 %v1376, %v1456
    %v1473 = vadd.f32 %v1377, %v1457
    %v1474 = vadd.f32 %v1378, %v1458
    %v1475 = vadd.f32 %v1379, %v1459
    %v1476 = vadd.f32 %v1380, %v1460
    %v1477 = vadd.f32 %v1381, %v1461
    %v1478 = vadd.f32 %v1382, %v1462
    %v1479 = vadd.f32 %v1383, %v1463
    %v1480 = vadd.f32 %v1384, %v1464
    %v1481 = vadd.f32 %v1385, %v1465
    %1482 = vset.pattern.permute.xlu0 5
    %1483 = vperm.xlu0 %1482, %v986
    %v1484 = vpop.permute.xlu0 %1483
    %1486 = vset.pattern.permute.xlu0 5
    %1487 = vperm.xlu0 %1486, %v987
    %v1488 = vpop.permute.xlu0 %1487
    %1490 = vset.pattern.permute.xlu0 5
    %1491 = vperm.xlu0 %1490, %v988
    %v1492 = vpop.permute.xlu0 %1491
    %1494 = vset.pattern.permute.xlu0 5
    %1495 = vperm.xlu0 %1494, %v989
    %v1496 = vpop.permute.xlu0 %1495
    %1498 = vset.pattern.permute.xlu0 5
    %1499 = vperm.xlu0 %1498, %v990
    %v1500 = vpop.permute.xlu0 %1499
    %1502 = vset.pattern.permute.xlu0 5
    %1503 = vperm.xlu0 %1502, %v991
    %v1504 = vpop.permute.xlu0 %1503
    %1506 = vset.pattern.permute.xlu0 5
    %1507 = vperm.xlu0 %1506, %v992
    %v1508 = vpop.permute.xlu0 %1507
    %1510 = vset.pattern.permute.xlu0 5
    %1511 = vperm.xlu0 %1510, %v993
    %v1512 = vpop.permute.xlu0 %1511
    %1514 = vset.pattern.permute.xlu0 5
    %1515 = vperm.xlu0 %1514, %v994
    %v1516 = vpop.permute.xlu0 %1515
    %1518 = vset.pattern.permute.xlu0 5
    %1519 = vperm.xlu0 %1518, %v995
    %v1520 = vpop.permute.xlu0 %1519
    %1522 = vset.pattern.permute.xlu0 5
    %1523 = vperm.xlu0 %1522, %v996
    %v1524 = vpop.permute.xlu0 %1523
    %1526 = vset.pattern.permute.xlu0 5
    %1527 = vperm.xlu0 %1526, %v997
    %v1528 = vpop.permute.xlu0 %1527
    %1530 = vset.pattern.permute.xlu0 5
    %1531 = vperm.xlu0 %1530, %v998
    %v1532 = vpop.permute.xlu0 %1531
    %1534 = vset.pattern.permute.xlu0 5
    %1535 = vperm.xlu0 %1534, %v999
    %v1536 = vpop.permute.xlu0 %1535
    %1538 = vset.pattern.permute.xlu0 5
    %1539 = vperm.xlu0 %1538, %v1000
    %v1540 = vpop.permute.xlu0 %1539
    %1542 = vset.pattern.permute.xlu0 5
    %1543 = vperm.xlu0 %1542, %v1001
    %v1544 = vpop.permute.xlu0 %1543
    %v1546 = vmul.f32 %v1484, %v633
    %v1547 = vmul.f32 %v1488, %v633
    %v1548 = vmul.f32 %v1492, %v633
    %v1549 = vmul.f32 %v1496, %v633
    %v1550 = vmul.f32 %v1500, %v633
    %v1551 = vmul.f32 %v1504, %v633
    %v1552 = vmul.f32 %v1508, %v633
    %v1553 = vmul.f32 %v1512, %v633
    %v1554 = vmul.f32 %v1516, %v633
    %v1555 = vmul.f32 %v1520, %v633
    %v1556 = vmul.f32 %v1524, %v633
    %v1557 = vmul.f32 %v1528, %v633
    %v1558 = vmul.f32 %v1532, %v633
    %v1559 = vmul.f32 %v1536, %v633
    %v1560 = vmul.f32 %v1540, %v633
    %v1561 = vmul.f32 %v1544, %v633
    %v1562 = vadd.f32 %v1466, %v1546
    %v1563 = vadd.f32 %v1467, %v1547
    %v1564 = vadd.f32 %v1468, %v1548
    %v1565 = vadd.f32 %v1469, %v1549
    %v1566 = vadd.f32 %v1470, %v1550
    %v1567 = vadd.f32 %v1471, %v1551
    %v1568 = vadd.f32 %v1472, %v1552
    %v1569 = vadd.f32 %v1473, %v1553
    %v1570 = vadd.f32 %v1474, %v1554
    %v1571 = vadd.f32 %v1475, %v1555
    %v1572 = vadd.f32 %v1476, %v1556
    %v1573 = vadd.f32 %v1477, %v1557
    %v1574 = vadd.f32 %v1478, %v1558
    %v1575 = vadd.f32 %v1479, %v1559
    %v1576 = vadd.f32 %v1480, %v1560
    %v1577 = vadd.f32 %v1481, %v1561
    %1578 = vset.pattern.permute.xlu0 6
    %1579 = vperm.xlu0 %1578, %v986
    %v1580 = vpop.permute.xlu0 %1579
    %1582 = vset.pattern.permute.xlu0 6
    %1583 = vperm.xlu0 %1582, %v987
    %v1584 = vpop.permute.xlu0 %1583
    %1586 = vset.pattern.permute.xlu0 6
    %1587 = vperm.xlu0 %1586, %v988
    %v1588 = vpop.permute.xlu0 %1587
    %1590 = vset.pattern.permute.xlu0 6
    %1591 = vperm.xlu0 %1590, %v989
    %v1592 = vpop.permute.xlu0 %1591
    %1594 = vset.pattern.permute.xlu0 6
    %1595 = vperm.xlu0 %1594, %v990
    %v1596 = vpop.permute.xlu0 %1595
    %1598 = vset.pattern.permute.xlu0 6
    %1599 = vperm.xlu0 %1598, %v991
    %v1600 = vpop.permute.xlu0 %1599
    %1602 = vset.pattern.permute.xlu0 6
    %1603 = vperm.xlu0 %1602, %v992
    %v1604 = vpop.permute.xlu0 %1603
    %1606 = vset.pattern.permute.xlu0 6
    %1607 = vperm.xlu0 %1606, %v993
    %v1608 = vpop.permute.xlu0 %1607
    %1610 = vset.pattern.permute.xlu0 6
    %1611 = vperm.xlu0 %1610, %v994
    %v1612 = vpop.permute.xlu0 %1611
    %1614 = vset.pattern.permute.xlu0 6
    %1615 = vperm.xlu0 %1614, %v995
    %v1616 = vpop.permute.xlu0 %1615
    %1618 = vset.pattern.permute.xlu0 6
    %1619 = vperm.xlu0 %1618, %v996
    %v1620 = vpop.permute.xlu0 %1619
    %1622 = vset.pattern.permute.xlu0 6
    %1623 = vperm.xlu0 %1622, %v997
    %v1624 = vpop.permute.xlu0 %1623
    %1626 = vset.pattern.permute.xlu0 6
    %1627 = vperm.xlu0 %1626, %v998
    %v1628 = vpop.permute.xlu0 %1627
    %1630 = vset.pattern.permute.xlu0 6
    %1631 = vperm.xlu0 %1630, %v999
    %v1632 = vpop.permute.xlu0 %1631
    %1634 = vset.pattern.permute.xlu0 6
    %1635 = vperm.xlu0 %1634, %v1000
    %v1636 = vpop.permute.xlu0 %1635
    %1638 = vset.pattern.permute.xlu0 6
    %1639 = vperm.xlu0 %1638, %v1001
    %v1640 = vpop.permute.xlu0 %1639
    %v1642 = vmul.f32 %v1580, %v730
    %v1643 = vmul.f32 %v1584, %v730
    %v1644 = vmul.f32 %v1588, %v730
    %v1645 = vmul.f32 %v1592, %v730
    %v1646 = vmul.f32 %v1596, %v730
    %v1647 = vmul.f32 %v1600, %v730
    %v1648 = vmul.f32 %v1604, %v730
    %v1649 = vmul.f32 %v1608, %v730
    %v1650 = vmul.f32 %v1612, %v730
    %v1651 = vmul.f32 %v1616, %v730
    %v1652 = vmul.f32 %v1620, %v730
    %v1653 = vmul.f32 %v1624, %v730
    %v1654 = vmul.f32 %v1628, %v730
    %v1655 = vmul.f32 %v1632, %v730
    %v1656 = vmul.f32 %v1636, %v730
    %v1657 = vmul.f32 %v1640, %v730
    %v1658 = vadd.f32 %v1562, %v1642
    %v1659 = vadd.f32 %v1563, %v1643
    %v1660 = vadd.f32 %v1564, %v1644
    %v1661 = vadd.f32 %v1565, %v1645
    %v1662 = vadd.f32 %v1566, %v1646
    %v1663 = vadd.f32 %v1567, %v1647
    %v1664 = vadd.f32 %v1568, %v1648
    %v1665 = vadd.f32 %v1569, %v1649
    %v1666 = vadd.f32 %v1570, %v1650
    %v1667 = vadd.f32 %v1571, %v1651
    %v1668 = vadd.f32 %v1572, %v1652
    %v1669 = vadd.f32 %v1573, %v1653
    %v1670 = vadd.f32 %v1574, %v1654
    %v1671 = vadd.f32 %v1575, %v1655
    %v1672 = vadd.f32 %v1576, %v1656
    %v1673 = vadd.f32 %v1577, %v1657
    %1674 = vset.pattern.permute.xlu0 7
    %1675 = vperm.xlu0 %1674, %v986
    %v1676 = vpop.permute.xlu0 %1675
    %1678 = vset.pattern.permute.xlu0 7
    %1679 = vperm.xlu0 %1678, %v987
    %v1680 = vpop.permute.xlu0 %1679
    %1682 = vset.pattern.permute.xlu0 7
    %1683 = vperm.xlu0 %1682, %v988
    %v1684 = vpop.permute.xlu0 %1683
    %1686 = vset.pattern.permute.xlu0 7
    %1687 = vperm.xlu0 %1686, %v989
    %v1688 = vpop.permute.xlu0 %1687
    %1690 = vset.pattern.permute.xlu0 7
    %1691 = vperm.xlu0 %1690, %v990
    %v1692 = vpop.permute.xlu0 %1691
    %1694 = vset.pattern.permute.xlu0 7
    %1695 = vperm.xlu0 %1694, %v991
    %v1696 = vpop.permute.xlu0 %1695
    %1698 = vset.pattern.permute.xlu0 7
    %1699 = vperm.xlu0 %1698, %v992
    %v1700 = vpop.permute.xlu0 %1699
    %1702 = vset.pattern.permute.xlu0 7
    %1703 = vperm.xlu0 %1702, %v993
    %v1704 = vpop.permute.xlu0 %1703
    %1706 = vset.pattern.permute.xlu0 7
    %1707 = vperm.xlu0 %1706, %v994
    %v1708 = vpop.permute.xlu0 %1707
    %1710 = vset.pattern.permute.xlu0 7
    %1711 = vperm.xlu0 %1710, %v995
    %v1712 = vpop.permute.xlu0 %1711
    %1714 = vset.pattern.permute.xlu0 7
    %1715 = vperm.xlu0 %1714, %v996
    %v1716 = vpop.permute.xlu0 %1715
    %1718 = vset.pattern.permute.xlu0 7
    %1719 = vperm.xlu0 %1718, %v997
    %v1720 = vpop.permute.xlu0 %1719
    %1722 = vset.pattern.permute.xlu0 7
    %1723 = vperm.xlu0 %1722, %v998
    %v1724 = vpop.permute.xlu0 %1723
    %1726 = vset.pattern.permute.xlu0 7
    %1727 = vperm.xlu0 %1726, %v999
    %v1728 = vpop.permute.xlu0 %1727
    %1730 = vset.pattern.permute.xlu0 7
    %1731 = vperm.xlu0 %1730, %v1000
    %v1732 = vpop.permute.xlu0 %1731
    %1734 = vset.pattern.permute.xlu0 7
    %1735 = vperm.xlu0 %1734, %v1001
    %v1736 = vpop.permute.xlu0 %1735
    %v1738 = vmul.f32 %v1676, %v827
    %v1739 = vmul.f32 %v1680, %v827
    %v1740 = vmul.f32 %v1684, %v827
    %v1741 = vmul.f32 %v1688, %v827
    %v1742 = vmul.f32 %v1692, %v827
    %v1743 = vmul.f32 %v1696, %v827
    %v1744 = vmul.f32 %v1700, %v827
    %v1745 = vmul.f32 %v1704, %v827
    %v1746 = vmul.f32 %v1708, %v827
    %v1747 = vmul.f32 %v1712, %v827
    %v1748 = vmul.f32 %v1716, %v827
    %v1749 = vmul.f32 %v1720, %v827
    %v1750 = vmul.f32 %v1724, %v827
    %v1751 = vmul.f32 %v1728, %v827
    %v1752 = vmul.f32 %v1732, %v827
    %v1753 = vmul.f32 %v1736, %v827
    %v1754 = vadd.f32 %v1658, %v1738
    %v1755 = vadd.f32 %v1659, %v1739
    %v1756 = vadd.f32 %v1660, %v1740
    %v1757 = vadd.f32 %v1661, %v1741
    %v1758 = vadd.f32 %v1662, %v1742
    %v1759 = vadd.f32 %v1663, %v1743
    %v1760 = vadd.f32 %v1664, %v1744
    %v1761 = vadd.f32 %v1665, %v1745
    %v1762 = vadd.f32 %v1666, %v1746
    %v1763 = vadd.f32 %v1667, %v1747
    %v1764 = vadd.f32 %v1668, %v1748
    %v1765 = vadd.f32 %v1669, %v1749
    %v1766 = vadd.f32 %v1670, %v1750
    %v1767 = vadd.f32 %v1671, %v1751
    %v1768 = vadd.f32 %v1672, %v1752
    %v1769 = vadd.f32 %v1673, %v1753
    %1770 = vset.pattern.permute.xlu0 8
    %1771 = vperm.xlu0 %1770, %v986
    %v1772 = vpop.permute.xlu0 %1771
    %1774 = vset.pattern.permute.xlu0 8
    %1775 = vperm.xlu0 %1774, %v987
    %v1776 = vpop.permute.xlu0 %1775
    %1778 = vset.pattern.permute.xlu0 8
    %1779 = vperm.xlu0 %1778, %v988
    %v1780 = vpop.permute.xlu0 %1779
    %1782 = vset.pattern.permute.xlu0 8
    %1783 = vperm.xlu0 %1782, %v989
    %v1784 = vpop.permute.xlu0 %1783
    %1786 = vset.pattern.permute.xlu0 8
    %1787 = vperm.xlu0 %1786, %v990
    %v1788 = vpop.permute.xlu0 %1787
    %1790 = vset.pattern.permute.xlu0 8
    %1791 = vperm.xlu0 %1790, %v991
    %v1792 = vpop.permute.xlu0 %1791
    %1794 = vset.pattern.permute.xlu0 8
    %1795 = vperm.xlu0 %1794, %v992
    %v1796 = vpop.permute.xlu0 %1795
    %1798 = vset.pattern.permute.xlu0 8
    %1799 = vperm.xlu0 %1798, %v993
    %v1800 = vpop.permute.xlu0 %1799
    %1802 = vset.pattern.permute.xlu0 8
    %1803 = vperm.xlu0 %1802, %v994
    %v1804 = vpop.permute.xlu0 %1803
    %1806 = vset.pattern.permute.xlu0 8
    %1807 = vperm.xlu0 %1806, %v995
    %v1808 = vpop.permute.xlu0 %1807
    %1810 = vset.pattern.permute.xlu0 8
    %1811 = vperm.xlu0 %1810, %v996
    %v1812 = vpop.permute.xlu0 %1811
    %1814 = vset.pattern.permute.xlu0 8
    %1815 = vperm.xlu0 %1814, %v997
    %v1816 = vpop.permute.xlu0 %1815
    %1818 = vset.pattern.permute.xlu0 8
    %1819 = vperm.xlu0 %1818, %v998
    %v1820 = vpop.permute.xlu0 %1819
    %1822 = vset.pattern.permute.xlu0 8
    %1823 = vperm.xlu0 %1822, %v999
    %v1824 = vpop.permute.xlu0 %1823
    %1826 = vset.pattern.permute.xlu0 8
    %1827 = vperm.xlu0 %1826, %v1000
    %v1828 = vpop.permute.xlu0 %1827
    %1830 = vset.pattern.permute.xlu0 8
    %1831 = vperm.xlu0 %1830, %v1001
    %v1832 = vpop.permute.xlu0 %1831
    %v1834 = vmul.f32 %v1772, %v924
    %v1835 = vmul.f32 %v1776, %v924
    %v1836 = vmul.f32 %v1780, %v924
    %v1837 = vmul.f32 %v1784, %v924
    %v1838 = vmul.f32 %v1788, %v924
    %v1839 = vmul.f32 %v1792, %v924
    %v1840 = vmul.f32 %v1796, %v924
    %v1841 = vmul.f32 %v1800, %v924
    %v1842 = vmul.f32 %v1804, %v924
    %v1843 = vmul.f32 %v1808, %v924
    %v1844 = vmul.f32 %v1812, %v924
    %v1845 = vmul.f32 %v1816, %v924
    %v1846 = vmul.f32 %v1820, %v924
    %v1847 = vmul.f32 %v1824, %v924
    %v1848 = vmul.f32 %v1828, %v924
    %v1849 = vmul.f32 %v1832, %v924
    %v1850 = vadd.f32 %v1754, %v1834
    %v1851 = vadd.f32 %v1755, %v1835
    %v1852 = vadd.f32 %v1756, %v1836
    %v1853 = vadd.f32 %v1757, %v1837
    %v1854 = vadd.f32 %v1758, %v1838
    %v1855 = vadd.f32 %v1759, %v1839
    %v1856 = vadd.f32 %v1760, %v1840
    %v1857 = vadd.f32 %v1761, %v1841
    %v1858 = vadd.f32 %v1762, %v1842
    %v1859 = vadd.f32 %v1763, %v1843
    %v1860 = vadd.f32 %v1764, %v1844
    %v1861 = vadd.f32 %v1765, %v1845
    %v1862 = vadd.f32 %v1766, %v1846
    %v1863 = vadd.f32 %v1767, %v1847
    %v1864 = vadd.f32 %v1768, %v1848
    %v1865 = vadd.f32 %v1769, %v1849
    %v1866 = vmax.f32 %v1850, %v1854
    %v1867 = vmax.f32 %v1851, %v1855
    %v1868 = vmax.f32 %v1852, %v1856
    %v1869 = vmax.f32 %v1853, %v1857
    %v1870 = vmax.f32 %v1866, %v1858
    %v1871 = vmax.f32 %v1867, %v1859
    %v1872 = vmax.f32 %v1868, %v1860
    %v1873 = vmax.f32 %v1869, %v1861
    %v1874 = vmax.f32 %v1870, %v1862
    %v1875 = vmax.f32 %v1871, %v1863
    %v1876 = vmax.f32 %v1872, %v1864
    %v1877 = vmax.f32 %v1873, %v1865
    %v1878 = vadd.f32 %v1874, %v970
    %v1879 = vadd.f32 %v1875, %v970
    %v1880 = vadd.f32 %v1876, %v970
    %v1881 = vadd.f32 %v1877, %v970
    %v1882 = vmax.f32 %v1878, 0.0
    %v1883 = vmax.f32 %v1879, 0.0
    %v1884 = vmax.f32 %v1880, 0.0
    %v1885 = vmax.f32 %v1881, 0.0
    %s1886 = scalar_lea.vmem [#allocation2], 48
    %1887 = vst.msk [vmem:[%s1886 + $0x1] sm:$0xf] %vm980, %v1882
    %1888 = vst.msk [vmem:[%s1886 + $0x9] sm:$0xf] %vm980, %v1883
    %1889 = vst.msk [vmem:[%s1886 + $0x19] sm:$0xf] %vm980, %v1884
    %1890 = vst.msk [vmem:[%s1886 + $0x21] sm:$0xf] %vm980, %v1885
    %s1891 = scalar_lea.vmem %s0, 128
    %v1892 = vld [vmem:[%s1891] sm:$0xf]
    %v1893 = vld [vmem:[%s1891 + $0x4] sm:$0xf]
    %v1894 = vld [vmem:[%s1891 + $0x8] sm:$0xf]
    %v1895 = vld [vmem:[%s1891 + $0xc] sm:$0xf]
    %v1896 = vld [vmem:[%s1891 + $0x10] sm:$0xf]
    %v1897 = vld [vmem:[%s1891 + $0x14] sm:$0xf]
    %v1898 = vld [vmem:[%s1891 + $0x18] sm:$0xf]
    %v1899 = vld [vmem:[%s1891 + $0x1c] sm:$0xf]
    %v1900 = vld [vmem:[%s1891 + $0x20] sm:$0xf]
    %v1901 = vld [vmem:[%s1891 + $0x24] sm:$0xf]
    %v1902 = vld [vmem:[%s1891 + $0x28] sm:$0xf]
    %v1903 = vld [vmem:[%s1891 + $0x2c] sm:$0xf]
    %v1904 = vld [vmem:[%s1891 + $0x30] sm:$0xf]
    %v1905 = vld [vmem:[%s1891 + $0x34] sm:$0xf]
    %v1906 = vld [vmem:[%s1891 + $0x38] sm:$0xf]
    %v1907 = vld [vmem:[%s1891 + $0x3c] sm:$0xf]
    %1909 = vset.pattern.permute.xlu0 0
    %1910 = vperm.xlu0 %1909, %v1892
    %v1911 = vpop.permute.xlu0 %1910
    %1914 = vset.pattern.permute.xlu0 0
    %1915 = vperm.xlu0 %1914, %v1893
    %v1916 = vpop.permute.xlu0 %1915
    %1919 = vset.pattern.permute.xlu0 0
    %1920 = vperm.xlu0 %1919, %v1894
    %v1921 = vpop.permute.xlu0 %1920
    %1924 = vset.pattern.permute.xlu0 0
    %1925 = vperm.xlu0 %1924, %v1895
    %v1926 = vpop.permute.xlu0 %1925
    %1929 = vset.pattern.permute.xlu0 0
    %1930 = vperm.xlu0 %1929, %v1896
    %v1931 = vpop.permute.xlu0 %1930
    %1934 = vset.pattern.permute.xlu0 0
    %1935 = vperm.xlu0 %1934, %v1897
    %v1936 = vpop.permute.xlu0 %1935
    %1939 = vset.pattern.permute.xlu0 0
    %1940 = vperm.xlu0 %1939, %v1898
    %v1941 = vpop.permute.xlu0 %1940
    %1944 = vset.pattern.permute.xlu0 0
    %1945 = vperm.xlu0 %1944, %v1899
    %v1946 = vpop.permute.xlu0 %1945
    %1949 = vset.pattern.permute.xlu0 0
    %1950 = vperm.xlu0 %1949, %v1900
    %v1951 = vpop.permute.xlu0 %1950
    %1954 = vset.pattern.permute.xlu0 0
    %1955 = vperm.xlu0 %1954, %v1901
    %v1956 = vpop.permute.xlu0 %1955
    %1959 = vset.pattern.permute.xlu0 0
    %1960 = vperm.xlu0 %1959, %v1902
    %v1961 = vpop.permute.xlu0 %1960
    %1964 = vset.pattern.permute.xlu0 0
    %1965 = vperm.xlu0 %1964, %v1903
    %v1966 = vpop.permute.xlu0 %1965
    %1969 = vset.pattern.permute.xlu0 0
    %1970 = vperm.xlu0 %1969, %v1904
    %v1971 = vpop.permute.xlu0 %1970
    %1974 = vset.pattern.permute.xlu0 0
    %1975 = vperm.xlu0 %1974, %v1905
    %v1976 = vpop.permute.xlu0 %1975
    %1979 = vset.pattern.permute.xlu0 0
    %1980 = vperm.xlu0 %1979, %v1906
    %v1981 = vpop.permute.xlu0 %1980
    %1984 = vset.pattern.permute.xlu0 0
    %1985 = vperm.xlu0 %1984, %v1907
    %v1986 = vpop.permute.xlu0 %1985
    %v1988 = vmul.f32 %v1911, %v164
    %v1989 = vmul.f32 %v1916, %v164
    %v1990 = vmul.f32 %v1921, %v164
    %v1991 = vmul.f32 %v1926, %v164
    %v1992 = vmul.f32 %v1931, %v164
    %v1993 = vmul.f32 %v1936, %v164
    %v1994 = vmul.f32 %v1941, %v164
    %v1995 = vmul.f32 %v1946, %v164
    %v1996 = vmul.f32 %v1951, %v164
    %v1997 = vmul.f32 %v1956, %v164
    %v1998 = vmul.f32 %v1961, %v164
    %v1999 = vmul.f32 %v1966, %v164
    %v2000 = vmul.f32 %v1971, %v164
    %v2001 = vmul.f32 %v1976, %v164
    %v2002 = vmul.f32 %v1981, %v164
    %v2003 = vmul.f32 %v1986, %v164
    %2004 = vset.pattern.permute.xlu0 1
    %2005 = vperm.xlu0 %2004, %v1892
    %v2006 = vpop.permute.xlu0 %2005
    %2008 = vset.pattern.permute.xlu0 1
    %2009 = vperm.xlu0 %2008, %v1893
    %v2010 = vpop.permute.xlu0 %2009
    %2012 = vset.pattern.permute.xlu0 1
    %2013 = vperm.xlu0 %2012, %v1894
    %v2014 = vpop.permute.xlu0 %2013
    %2016 = vset.pattern.permute.xlu0 1
    %2017 = vperm.xlu0 %2016, %v1895
    %v2018 = vpop.permute.xlu0 %2017
    %2020 = vset.pattern.permute.xlu0 1
    %2021 = vperm.xlu0 %2020, %v1896
    %v2022 = vpop.permute.xlu0 %2021
    %2024 = vset.pattern.permute.xlu0 1
    %2025 = vperm.xlu0 %2024, %v1897
    %v2026 = vpop.permute.xlu0 %2025
    %2028 = vset.pattern.permute.xlu0 1
    %2029 = vperm.xlu0 %2028, %v1898
    %v2030 = vpop.permute.xlu0 %2029
    %2032 = vset.pattern.permute.xlu0 1
    %2033 = vperm.xlu0 %2032, %v1899
    %v2034 = vpop.permute.xlu0 %2033
    %2036 = vset.pattern.permute.xlu0 1
    %2037 = vperm.xlu0 %2036, %v1900
    %v2038 = vpop.permute.xlu0 %2037
    %2040 = vset.pattern.permute.xlu0 1
    %2041 = vperm.xlu0 %2040, %v1901
    %v2042 = vpop.permute.xlu0 %2041
    %2044 = vset.pattern.permute.xlu0 1
    %2045 = vperm.xlu0 %2044, %v1902
    %v2046 = vpop.permute.xlu0 %2045
    %2048 = vset.pattern.permute.xlu0 1
    %2049 = vperm.xlu0 %2048, %v1903
    %v2050 = vpop.permute.xlu0 %2049
    %2052 = vset.pattern.permute.xlu0 1
    %2053 = vperm.xlu0 %2052, %v1904
    %v2054 = vpop.permute.xlu0 %2053
    %2056 = vset.pattern.permute.xlu0 1
    %2057 = vperm.xlu0 %2056, %v1905
    %v2058 = vpop.permute.xlu0 %2057
    %2060 = vset.pattern.permute.xlu0 1
    %2061 = vperm.xlu0 %2060, %v1906
    %v2062 = vpop.permute.xlu0 %2061
    %2064 = vset.pattern.permute.xlu0 1
    %2065 = vperm.xlu0 %2064, %v1907
    %v2066 = vpop.permute.xlu0 %2065
    %v2068 = vmul.f32 %v2006, %v245
    %v2069 = vmul.f32 %v2010, %v245
    %v2070 = vmul.f32 %v2014, %v245
    %v2071 = vmul.f32 %v2018, %v245
    %v2072 = vmul.f32 %v2022, %v245
    %v2073 = vmul.f32 %v2026, %v245
    %v2074 = vmul.f32 %v2030, %v245
    %v2075 = vmul.f32 %v2034, %v245
    %v2076 = vmul.f32 %v2038, %v245
    %v2077 = vmul.f32 %v2042, %v245
    %v2078 = vmul.f32 %v2046, %v245
    %v2079 = vmul.f32 %v2050, %v245
    %v2080 = vmul.f32 %v2054, %v245
    %v2081 = vmul.f32 %v2058, %v245
    %v2082 = vmul.f32 %v2062, %v245
    %v2083 = vmul.f32 %v2066, %v245
    %v2084 = vadd.f32 %v1988, %v2068
    %v2085 = vadd.f32 %v1989, %v2069
    %v2086 = vadd.f32 %v1990, %v2070
    %v2087 = vadd.f32 %v1991, %v2071
    %v2088 = vadd.f32 %v1992, %v2072
    %v2089 = vadd.f32 %v1993, %v2073
    %v2090 = vadd.f32 %v1994, %v2074
    %v2091 = vadd.f32 %v1995, %v2075
    %v2092 = vadd.f32 %v1996, %v2076
    %v2093 = vadd.f32 %v1997, %v2077
    %v2094 = vadd.f32 %v1998, %v2078
    %v2095 = vadd.f32 %v1999, %v2079
    %v2096 = vadd.f32 %v2000, %v2080
    %v2097 = vadd.f32 %v2001, %v2081
    %v2098 = vadd.f32 %v2002, %v2082
    %v2099 = vadd.f32 %v2003, %v2083
    %2100 = vset.pattern.permute.xlu0 2
    %2101 = vperm.xlu0 %2100, %v1892
    %v2102 = vpop.permute.xlu0 %2101
    %2104 = vset.pattern.permute.xlu0 2
    %2105 = vperm.xlu0 %2104, %v1893
    %v2106 = vpop.permute.xlu0 %2105
    %2108 = vset.pattern.permute.xlu0 2
    %2109 = vperm.xlu0 %2108, %v1894
    %v2110 = vpop.permute.xlu0 %2109
    %2112 = vset.pattern.permute.xlu0 2
    %2113 = vperm.xlu0 %2112, %v1895
    %v2114 = vpop.permute.xlu0 %2113
    %2116 = vset.pattern.permute.xlu0 2
    %2117 = vperm.xlu0 %2116, %v1896
    %v2118 = vpop.permute.xlu0 %2117
    %2120 = vset.pattern.permute.xlu0 2
    %2121 = vperm.xlu0 %2120, %v1897
    %v2122 = vpop.permute.xlu0 %2121
    %2124 = vset.pattern.permute.xlu0 2
    %2125 = vperm.xlu0 %2124, %v1898
    %v2126 = vpop.permute.xlu0 %2125
    %2128 = vset.pattern.permute.xlu0 2
    %2129 = vperm.xlu0 %2128, %v1899
    %v2130 = vpop.permute.xlu0 %2129
    %2132 = vset.pattern.permute.xlu0 2
    %2133 = vperm.xlu0 %2132, %v1900
    %v2134 = vpop.permute.xlu0 %2133
    %2136 = vset.pattern.permute.xlu0 2
    %2137 = vperm.xlu0 %2136, %v1901
    %v2138 = vpop.permute.xlu0 %2137
    %2140 = vset.pattern.permute.xlu0 2
    %2141 = vperm.xlu0 %2140, %v1902
    %v2142 = vpop.permute.xlu0 %2141
    %2144 = vset.pattern.permute.xlu0 2
    %2145 = vperm.xlu0 %2144, %v1903
    %v2146 = vpop.permute.xlu0 %2145
    %2148 = vset.pattern.permute.xlu0 2
    %2149 = vperm.xlu0 %2148, %v1904
    %v2150 = vpop.permute.xlu0 %2149
    %2152 = vset.pattern.permute.xlu0 2
    %2153 = vperm.xlu0 %2152, %v1905
    %v2154 = vpop.permute.xlu0 %2153
    %2156 = vset.pattern.permute.xlu0 2
    %2157 = vperm.xlu0 %2156, %v1906
    %v2158 = vpop.permute.xlu0 %2157
    %2160 = vset.pattern.permute.xlu0 2
    %2161 = vperm.xlu0 %2160, %v1907
    %v2162 = vpop.permute.xlu0 %2161
    %v2164 = vmul.f32 %v2102, %v342
    %v2165 = vmul.f32 %v2106, %v342
    %v2166 = vmul.f32 %v2110, %v342
    %v2167 = vmul.f32 %v2114, %v342
    %v2168 = vmul.f32 %v2118, %v342
    %v2169 = vmul.f32 %v2122, %v342
    %v2170 = vmul.f32 %v2126, %v342
    %v2171 = vmul.f32 %v2130, %v342
    %v2172 = vmul.f32 %v2134, %v342
    %v2173 = vmul.f32 %v2138, %v342
    %v2174 = vmul.f32 %v2142, %v342
    %v2175 = vmul.f32 %v2146, %v342
    %v2176 = vmul.f32 %v2150, %v342
    %v2177 = vmul.f32 %v2154, %v342
    %v2178 = vmul.f32 %v2158, %v342
    %v2179 = vmul.f32 %v2162, %v342
    %v2180 = vadd.f32 %v2084, %v2164
    %v2181 = vadd.f32 %v2085, %v2165
    %v2182 = vadd.f32 %v2086, %v2166
    %v2183 = vadd.f32 %v2087, %v2167
    %v2184 = vadd.f32 %v2088, %v2168
    %v2185 = vadd.f32 %v2089, %v2169
    %v2186 = vadd.f32 %v2090, %v2170
    %v2187 = vadd.f32 %v2091, %v2171
    %v2188 = vadd.f32 %v2092, %v2172
    %v2189 = vadd.f32 %v2093, %v2173
    %v2190 = vadd.f32 %v2094, %v2174
    %v2191 = vadd.f32 %v2095, %v2175
    %v2192 = vadd.f32 %v2096, %v2176
    %v2193 = vadd.f32 %v2097, %v2177
    %v2194 = vadd.f32 %v2098, %v2178
    %v2195 = vadd.f32 %v2099, %v2179
    %2196 = vset.pattern.permute.xlu0 3
    %2197 = vperm.xlu0 %2196, %v1892
    %v2198 = vpop.permute.xlu0 %2197
    %2200 = vset.pattern.permute.xlu0 3
    %2201 = vperm.xlu0 %2200, %v1893
    %v2202 = vpop.permute.xlu0 %2201
    %2204 = vset.pattern.permute.xlu0 3
    %2205 = vperm.xlu0 %2204, %v1894
    %v2206 = vpop.permute.xlu0 %2205
    %2208 = vset.pattern.permute.xlu0 3
    %2209 = vperm.xlu0 %2208, %v1895
    %v2210 = vpop.permute.xlu0 %2209
    %2212 = vset.pattern.permute.xlu0 3
    %2213 = vperm.xlu0 %2212, %v1896
    %v2214 = vpop.permute.xlu0 %2213
    %2216 = vset.pattern.permute.xlu0 3
    %2217 = vperm.xlu0 %2216, %v1897
    %v2218 = vpop.permute.xlu0 %2217
    %2220 = vset.pattern.permute.xlu0 3
    %2221 = vperm.xlu0 %2220, %v1898
    %v2222 = vpop.permute.xlu0 %2221
    %2224 = vset.pattern.permute.xlu0 3
    %2225 = vperm.xlu0 %2224, %v1899
    %v2226 = vpop.permute.xlu0 %2225
    %2228 = vset.pattern.permute.xlu0 3
    %2229 = vperm.xlu0 %2228, %v1900
    %v2230 = vpop.permute.xlu0 %2229
    %2232 = vset.pattern.permute.xlu0 3
    %2233 = vperm.xlu0 %2232, %v1901
    %v2234 = vpop.permute.xlu0 %2233
    %2236 = vset.pattern.permute.xlu0 3
    %2237 = vperm.xlu0 %2236, %v1902
    %v2238 = vpop.permute.xlu0 %2237
    %2240 = vset.pattern.permute.xlu0 3
    %2241 = vperm.xlu0 %2240, %v1903
    %v2242 = vpop.permute.xlu0 %2241
    %2244 = vset.pattern.permute.xlu0 3
    %2245 = vperm.xlu0 %2244, %v1904
    %v2246 = vpop.permute.xlu0 %2245
    %2248 = vset.pattern.permute.xlu0 3
    %2249 = vperm.xlu0 %2248, %v1905
    %v2250 = vpop.permute.xlu0 %2249
    %2252 = vset.pattern.permute.xlu0 3
    %2253 = vperm.xlu0 %2252, %v1906
    %v2254 = vpop.permute.xlu0 %2253
    %2256 = vset.pattern.permute.xlu0 3
    %2257 = vperm.xlu0 %2256, %v1907
    %v2258 = vpop.permute.xlu0 %2257
    %v2260 = vmul.f32 %v2198, %v439
    %v2261 = vmul.f32 %v2202, %v439
    %v2262 = vmul.f32 %v2206, %v439
    %v2263 = vmul.f32 %v2210, %v439
    %v2264 = vmul.f32 %v2214, %v439
    %v2265 = vmul.f32 %v2218, %v439
    %v2266 = vmul.f32 %v2222, %v439
    %v2267 = vmul.f32 %v2226, %v439
    %v2268 = vmul.f32 %v2230, %v439
    %v2269 = vmul.f32 %v2234, %v439
    %v2270 = vmul.f32 %v2238, %v439
    %v2271 = vmul.f32 %v2242, %v439
    %v2272 = vmul.f32 %v2246, %v439
    %v2273 = vmul.f32 %v2250, %v439
    %v2274 = vmul.f32 %v2254, %v439
    %v2275 = vmul.f32 %v2258, %v439
    %v2276 = vadd.f32 %v2180, %v2260
    %v2277 = vadd.f32 %v2181, %v2261
    %v2278 = vadd.f32 %v2182, %v2262
    %v2279 = vadd.f32 %v2183, %v2263
    %v2280 = vadd.f32 %v2184, %v2264
    %v2281 = vadd.f32 %v2185, %v2265
    %v2282 = vadd.f32 %v2186, %v2266
    %v2283 = vadd.f32 %v2187, %v2267
    %v2284 = vadd.f32 %v2188, %v2268
    %v2285 = vadd.f32 %v2189, %v2269
    %v2286 = vadd.f32 %v2190, %v2270
    %v2287 = vadd.f32 %v2191, %v2271
    %v2288 = vadd.f32 %v2192, %v2272
    %v2289 = vadd.f32 %v2193, %v2273
    %v2290 = vadd.f32 %v2194, %v2274
    %v2291 = vadd.f32 %v2195, %v2275
    %2292 = vset.pattern.permute.xlu0 4
    %2293 = vperm.xlu0 %2292, %v1892
    %v2294 = vpop.permute.xlu0 %2293
    %2296 = vset.pattern.permute.xlu0 4
    %2297 = vperm.xlu0 %2296, %v1893
    %v2298 = vpop.permute.xlu0 %2297
    %2300 = vset.pattern.permute.xlu0 4
    %2301 = vperm.xlu0 %2300, %v1894
    %v2302 = vpop.permute.xlu0 %2301
    %2304 = vset.pattern.permute.xlu0 4
    %2305 = vperm.xlu0 %2304, %v1895
    %v2306 = vpop.permute.xlu0 %2305
    %2308 = vset.pattern.permute.xlu0 4
    %2309 = vperm.xlu0 %2308, %v1896
    %v2310 = vpop.permute.xlu0 %2309
    %2312 = vset.pattern.permute.xlu0 4
    %2313 = vperm.xlu0 %2312, %v1897
    %v2314 = vpop.permute.xlu0 %2313
    %2316 = vset.pattern.permute.xlu0 4
    %2317 = vperm.xlu0 %2316, %v1898
    %v2318 = vpop.permute.xlu0 %2317
    %2320 = vset.pattern.permute.xlu0 4
    %2321 = vperm.xlu0 %2320, %v1899
    %v2322 = vpop.permute.xlu0 %2321
    %2324 = vset.pattern.permute.xlu0 4
    %2325 = vperm.xlu0 %2324, %v1900
    %v2326 = vpop.permute.xlu0 %2325
    %2328 = vset.pattern.permute.xlu0 4
    %2329 = vperm.xlu0 %2328, %v1901
    %v2330 = vpop.permute.xlu0 %2329
    %2332 = vset.pattern.permute.xlu0 4
    %2333 = vperm.xlu0 %2332, %v1902
    %v2334 = vpop.permute.xlu0 %2333
    %2336 = vset.pattern.permute.xlu0 4
    %2337 = vperm.xlu0 %2336, %v1903
    %v2338 = vpop.permute.xlu0 %2337
    %2340 = vset.pattern.permute.xlu0 4
    %2341 = vperm.xlu0 %2340, %v1904
    %v2342 = vpop.permute.xlu0 %2341
    %2344 = vset.pattern.permute.xlu0 4
    %2345 = vperm.xlu0 %2344, %v1905
    %v2346 = vpop.permute.xlu0 %2345
    %2348 = vset.pattern.permute.xlu0 4
    %2349 = vperm.xlu0 %2348, %v1906
    %v2350 = vpop.permute.xlu0 %2349
    %2352 = vset.pattern.permute.xlu0 4
    %2353 = vperm.xlu0 %2352, %v1907
    %v2354 = vpop.permute.xlu0 %2353
    %v2356 = vmul.f32 %v2294, %v536
    %v2357 = vmul.f32 %v2298, %v536
    %v2358 = vmul.f32 %v2302, %v536
    %v2359 = vmul.f32 %v2306, %v536
    %v2360 = vmul.f32 %v2310, %v536
    %v2361 = vmul.f32 %v2314, %v536
    %v2362 = vmul.f32 %v2318, %v536
    %v2363 = vmul.f32 %v2322, %v536
    %v2364 = vmul.f32 %v2326, %v536
    %v2365 = vmul.f32 %v2330, %v536
    %v2366 = vmul.f32 %v2334, %v536
    %v2367 = vmul.f32 %v2338, %v536
    %v2368 = vmul.f32 %v2342, %v536
    %v2369 = vmul.f32 %v2346, %v536
    %v2370 = vmul.f32 %v2350, %v536
    %v2371 = vmul.f32 %v2354, %v536
    %v2372 = vadd.f32 %v2276, %v2356
    %v2373 = vadd.f32 %v2277, %v2357
    %v2374 = vadd.f32 %v2278, %v2358
    %v2375 = vadd.f32 %v2279, %v2359
    %v2376 = vadd.f32 %v2280, %v2360
    %v2377 = vadd.f32 %v2281, %v2361
    %v2378 = vadd.f32 %v2282, %v2362
    %v2379 = vadd.f32 %v2283, %v2363
    %v2380 = vadd.f32 %v2284, %v2364
    %v2381 = vadd.f32 %v2285, %v2365
    %v2382 = vadd.f32 %v2286, %v2366
    %v2383 = vadd.f32 %v2287, %v2367
    %v2384 = vadd.f32 %v2288, %v2368
    %v2385 = vadd.f32 %v2289, %v2369
    %v2386 = vadd.f32 %v2290, %v2370
    %v2387 = vadd.f32 %v2291, %v2371
    %2388 = vset.pattern.permute.xlu0 5
    %2389 = vperm.xlu0 %2388, %v1892
    %v2390 = vpop.permute.xlu0 %2389
    %2392 = vset.pattern.permute.xlu0 5
    %2393 = vperm.xlu0 %2392, %v1893
    %v2394 = vpop.permute.xlu0 %2393
    %2396 = vset.pattern.permute.xlu0 5
    %2397 = vperm.xlu0 %2396, %v1894
    %v2398 = vpop.permute.xlu0 %2397
    %2400 = vset.pattern.permute.xlu0 5
    %2401 = vperm.xlu0 %2400, %v1895
    %v2402 = vpop.permute.xlu0 %2401
    %2404 = vset.pattern.permute.xlu0 5
    %2405 = vperm.xlu0 %2404, %v1896
    %v2406 = vpop.permute.xlu0 %2405
    %2408 = vset.pattern.permute.xlu0 5
    %2409 = vperm.xlu0 %2408, %v1897
    %v2410 = vpop.permute.xlu0 %2409
    %2412 = vset.pattern.permute.xlu0 5
    %2413 = vperm.xlu0 %2412, %v1898
    %v2414 = vpop.permute.xlu0 %2413
    %2416 = vset.pattern.permute.xlu0 5
    %2417 = vperm.xlu0 %2416, %v1899
    %v2418 = vpop.permute.xlu0 %2417
    %2420 = vset.pattern.permute.xlu0 5
    %2421 = vperm.xlu0 %2420, %v1900
    %v2422 = vpop.permute.xlu0 %2421
    %2424 = vset.pattern.permute.xlu0 5
    %2425 = vperm.xlu0 %2424, %v1901
    %v2426 = vpop.permute.xlu0 %2425
    %2428 = vset.pattern.permute.xlu0 5
    %2429 = vperm.xlu0 %2428, %v1902
    %v2430 = vpop.permute.xlu0 %2429
    %2432 = vset.pattern.permute.xlu0 5
    %2433 = vperm.xlu0 %2432, %v1903
    %v2434 = vpop.permute.xlu0 %2433
    %2436 = vset.pattern.permute.xlu0 5
    %2437 = vperm.xlu0 %2436, %v1904
    %v2438 = vpop.permute.xlu0 %2437
    %2440 = vset.pattern.permute.xlu0 5
    %2441 = vperm.xlu0 %2440, %v1905
    %v2442 = vpop.permute.xlu0 %2441
    %2444 = vset.pattern.permute.xlu0 5
    %2445 = vperm.xlu0 %2444, %v1906
    %v2446 = vpop.permute.xlu0 %2445
    %2448 = vset.pattern.permute.xlu0 5
    %2449 = vperm.xlu0 %2448, %v1907
    %v2450 = vpop.permute.xlu0 %2449
    %v2452 = vmul.f32 %v2390, %v633
    %v2453 = vmul.f32 %v2394, %v633
    %v2454 = vmul.f32 %v2398, %v633
    %v2455 = vmul.f32 %v2402, %v633
    %v2456 = vmul.f32 %v2406, %v633
    %v2457 = vmul.f32 %v2410, %v633
    %v2458 = vmul.f32 %v2414, %v633
    %v2459 = vmul.f32 %v2418, %v633
    %v2460 = vmul.f32 %v2422, %v633
    %v2461 = vmul.f32 %v2426, %v633
    %v2462 = vmul.f32 %v2430, %v633
    %v2463 = vmul.f32 %v2434, %v633
    %v2464 = vmul.f32 %v2438, %v633
    %v2465 = vmul.f32 %v2442, %v633
    %v2466 = vmul.f32 %v2446, %v633
    %v2467 = vmul.f32 %v2450, %v633
    %v2468 = vadd.f32 %v2372, %v2452
    %v2469 = vadd.f32 %v2373, %v2453
    %v2470 = vadd.f32 %v2374, %v2454
    %v2471 = vadd.f32 %v2375, %v2455
    %v2472 = vadd.f32 %v2376, %v2456
    %v2473 = vadd.f32 %v2377, %v2457
    %v2474 = vadd.f32 %v2378, %v2458
    %v2475 = vadd.f32 %v2379, %v2459
    %v2476 = vadd.f32 %v2380, %v2460
    %v2477 = vadd.f32 %v2381, %v2461
    %v2478 = vadd.f32 %v2382, %v2462
    %v2479 = vadd.f32 %v2383, %v2463
    %v2480 = vadd.f32 %v2384, %v2464
    %v2481 = vadd.f32 %v2385, %v2465
    %v2482 = vadd.f32 %v2386, %v2466
    %v2483 = vadd.f32 %v2387, %v2467
    %2484 = vset.pattern.permute.xlu0 6
    %2485 = vperm.xlu0 %2484, %v1892
    %v2486 = vpop.permute.xlu0 %2485
    %2488 = vset.pattern.permute.xlu0 6
    %2489 = vperm.xlu0 %2488, %v1893
    %v2490 = vpop.permute.xlu0 %2489
    %2492 = vset.pattern.permute.xlu0 6
    %2493 = vperm.xlu0 %2492, %v1894
    %v2494 = vpop.permute.xlu0 %2493
    %2496 = vset.pattern.permute.xlu0 6
    %2497 = vperm.xlu0 %2496, %v1895
    %v2498 = vpop.permute.xlu0 %2497
    %2500 = vset.pattern.permute.xlu0 6
    %2501 = vperm.xlu0 %2500, %v1896
    %v2502 = vpop.permute.xlu0 %2501
    %2504 = vset.pattern.permute.xlu0 6
    %2505 = vperm.xlu0 %2504, %v1897
    %v2506 = vpop.permute.xlu0 %2505
    %2508 = vset.pattern.permute.xlu0 6
    %2509 = vperm.xlu0 %2508, %v1898
    %v2510 = vpop.permute.xlu0 %2509
    %2512 = vset.pattern.permute.xlu0 6
    %2513 = vperm.xlu0 %2512, %v1899
    %v2514 = vpop.permute.xlu0 %2513
    %2516 = vset.pattern.permute.xlu0 6
    %2517 = vperm.xlu0 %2516, %v1900
    %v2518 = vpop.permute.xlu0 %2517
    %2520 = vset.pattern.permute.xlu0 6
    %2521 = vperm.xlu0 %2520, %v1901
    %v2522 = vpop.permute.xlu0 %2521
    %2524 = vset.pattern.permute.xlu0 6
    %2525 = vperm.xlu0 %2524, %v1902
    %v2526 = vpop.permute.xlu0 %2525
    %2528 = vset.pattern.permute.xlu0 6
    %2529 = vperm.xlu0 %2528, %v1903
    %v2530 = vpop.permute.xlu0 %2529
    %2532 = vset.pattern.permute.xlu0 6
    %2533 = vperm.xlu0 %2532, %v1904
    %v2534 = vpop.permute.xlu0 %2533
    %2536 = vset.pattern.permute.xlu0 6
    %2537 = vperm.xlu0 %2536, %v1905
    %v2538 = vpop.permute.xlu0 %2537
    %2540 = vset.pattern.permute.xlu0 6
    %2541 = vperm.xlu0 %2540, %v1906
    %v2542 = vpop.permute.xlu0 %2541
    %2544 = vset.pattern.permute.xlu0 6
    %2545 = vperm.xlu0 %2544, %v1907
    %v2546 = vpop.permute.xlu0 %2545
    %v2548 = vmul.f32 %v2486, %v730
    %v2549 = vmul.f32 %v2490, %v730
    %v2550 = vmul.f32 %v2494, %v730
    %v2551 = vmul.f32 %v2498, %v730
    %v2552 = vmul.f32 %v2502, %v730
    %v2553 = vmul.f32 %v2506, %v730
    %v2554 = vmul.f32 %v2510, %v730
    %v2555 = vmul.f32 %v2514, %v730
    %v2556 = vmul.f32 %v2518, %v730
    %v2557 = vmul.f32 %v2522, %v730
    %v2558 = vmul.f32 %v2526, %v730
    %v2559 = vmul.f32 %v2530, %v730
    %v2560 = vmul.f32 %v2534, %v730
    %v2561 = vmul.f32 %v2538, %v730
    %v2562 = vmul.f32 %v2542, %v730
    %v2563 = vmul.f32 %v2546, %v730
    %v2564 = vadd.f32 %v2468, %v2548
    %v2565 = vadd.f32 %v2469, %v2549
    %v2566 = vadd.f32 %v2470, %v2550
    %v2567 = vadd.f32 %v2471, %v2551
    %v2568 = vadd.f32 %v2472, %v2552
    %v2569 = vadd.f32 %v2473, %v2553
    %v2570 = vadd.f32 %v2474, %v2554
    %v2571 = vadd.f32 %v2475, %v2555
    %v2572 = vadd.f32 %v2476, %v2556
    %v2573 = vadd.f32 %v2477, %v2557
    %v2574 = vadd.f32 %v2478, %v2558
    %v2575 = vadd.f32 %v2479, %v2559
    %v2576 = vadd.f32 %v2480, %v2560
    %v2577 = vadd.f32 %v2481, %v2561
    %v2578 = vadd.f32 %v2482, %v2562
    %v2579 = vadd.f32 %v2483, %v2563
    %2580 = vset.pattern.permute.xlu0 7
    %2581 = vperm.xlu0 %2580, %v1892
    %v2582 = vpop.permute.xlu0 %2581
    %2584 = vset.pattern.permute.xlu0 7
    %2585 = vperm.xlu0 %2584, %v1893
    %v2586 = vpop.permute.xlu0 %2585
    %2588 = vset.pattern.permute.xlu0 7
    %2589 = vperm.xlu0 %2588, %v1894
    %v2590 = vpop.permute.xlu0 %2589
    %2592 = vset.pattern.permute.xlu0 7
    %2593 = vperm.xlu0 %2592, %v1895
    %v2594 = vpop.permute.xlu0 %2593
    %2596 = vset.pattern.permute.xlu0 7
    %2597 = vperm.xlu0 %2596, %v1896
    %v2598 = vpop.permute.xlu0 %2597
    %2600 = vset.pattern.permute.xlu0 7
    %2601 = vperm.xlu0 %2600, %v1897
    %v2602 = vpop.permute.xlu0 %2601
    %2604 = vset.pattern.permute.xlu0 7
    %2605 = vperm.xlu0 %2604, %v1898
    %v2606 = vpop.permute.xlu0 %2605
    %2608 = vset.pattern.permute.xlu0 7
    %2609 = vperm.xlu0 %2608, %v1899
    %v2610 = vpop.permute.xlu0 %2609
    %2612 = vset.pattern.permute.xlu0 7
    %2613 = vperm.xlu0 %2612, %v1900
    %v2614 = vpop.permute.xlu0 %2613
    %2616 = vset.pattern.permute.xlu0 7
    %2617 = vperm.xlu0 %2616, %v1901
    %v2618 = vpop.permute.xlu0 %2617
    %2620 = vset.pattern.permute.xlu0 7
    %2621 = vperm.xlu0 %2620, %v1902
    %v2622 = vpop.permute.xlu0 %2621
    %2624 = vset.pattern.permute.xlu0 7
    %2625 = vperm.xlu0 %2624, %v1903
    %v2626 = vpop.permute.xlu0 %2625
    %2628 = vset.pattern.permute.xlu0 7
    %2629 = vperm.xlu0 %2628, %v1904
    %v2630 = vpop.permute.xlu0 %2629
    %2632 = vset.pattern.permute.xlu0 7
    %2633 = vperm.xlu0 %2632, %v1905
    %v2634 = vpop.permute.xlu0 %2633
    %2636 = vset.pattern.permute.xlu0 7
    %2637 = vperm.xlu0 %2636, %v1906
    %v2638 = vpop.permute.xlu0 %2637
    %2640 = vset.pattern.permute.xlu0 7
    %2641 = vperm.xlu0 %2640, %v1907
    %v2642 = vpop.permute.xlu0 %2641
    %v2644 = vmul.f32 %v2582, %v827
    %v2645 = vmul.f32 %v2586, %v827
    %v2646 = vmul.f32 %v2590, %v827
    %v2647 = vmul.f32 %v2594, %v827
    %v2648 = vmul.f32 %v2598, %v827
    %v2649 = vmul.f32 %v2602, %v827
    %v2650 = vmul.f32 %v2606, %v827
    %v2651 = vmul.f32 %v2610, %v827
    %v2652 = vmul.f32 %v2614, %v827
    %v2653 = vmul.f32 %v2618, %v827
    %v2654 = vmul.f32 %v2622, %v827
    %v2655 = vmul.f32 %v2626, %v827
    %v2656 = vmul.f32 %v2630, %v827
    %v2657 = vmul.f32 %v2634, %v827
    %v2658 = vmul.f32 %v2638, %v827
    %v2659 = vmul.f32 %v2642, %v827
    %v2660 = vadd.f32 %v2564, %v2644
    %v2661 = vadd.f32 %v2565, %v2645
    %v2662 = vadd.f32 %v2566, %v2646
    %v2663 = vadd.f32 %v2567, %v2647
    %v2664 = vadd.f32 %v2568, %v2648
    %v2665 = vadd.f32 %v2569, %v2649
    %v2666 = vadd.f32 %v2570, %v2650
    %v2667 = vadd.f32 %v2571, %v2651
    %v2668 = vadd.f32 %v2572, %v2652
    %v2669 = vadd.f32 %v2573, %v2653
    %v2670 = vadd.f32 %v2574, %v2654
    %v2671 = vadd.f32 %v2575, %v2655
    %v2672 = vadd.f32 %v2576, %v2656
    %v2673 = vadd.f32 %v2577, %v2657
    %v2674 = vadd.f32 %v2578, %v2658
    %v2675 = vadd.f32 %v2579, %v2659
    %2676 = vset.pattern.permute.xlu0 8
    %2677 = vperm.xlu0 %2676, %v1892
    %v2678 = vpop.permute.xlu0 %2677
    %2680 = vset.pattern.permute.xlu0 8
    %2681 = vperm.xlu0 %2680, %v1893
    %v2682 = vpop.permute.xlu0 %2681
    %2684 = vset.pattern.permute.xlu0 8
    %2685 = vperm.xlu0 %2684, %v1894
    %v2686 = vpop.permute.xlu0 %2685
    %2688 = vset.pattern.permute.xlu0 8
    %2689 = vperm.xlu0 %2688, %v1895
    %v2690 = vpop.permute.xlu0 %2689
    %2692 = vset.pattern.permute.xlu0 8
    %2693 = vperm.xlu0 %2692, %v1896
    %v2694 = vpop.permute.xlu0 %2693
    %2696 = vset.pattern.permute.xlu0 8
    %2697 = vperm.xlu0 %2696, %v1897
    %v2698 = vpop.permute.xlu0 %2697
    %2700 = vset.pattern.permute.xlu0 8
    %2701 = vperm.xlu0 %2700, %v1898
    %v2702 = vpop.permute.xlu0 %2701
    %2704 = vset.pattern.permute.xlu0 8
    %2705 = vperm.xlu0 %2704, %v1899
    %v2706 = vpop.permute.xlu0 %2705
    %2708 = vset.pattern.permute.xlu0 8
    %2709 = vperm.xlu0 %2708, %v1900
    %v2710 = vpop.permute.xlu0 %2709
    %2712 = vset.pattern.permute.xlu0 8
    %2713 = vperm.xlu0 %2712, %v1901
    %v2714 = vpop.permute.xlu0 %2713
    %2716 = vset.pattern.permute.xlu0 8
    %2717 = vperm.xlu0 %2716, %v1902
    %v2718 = vpop.permute.xlu0 %2717
    %2720 = vset.pattern.permute.xlu0 8
    %2721 = vperm.xlu0 %2720, %v1903
    %v2722 = vpop.permute.xlu0 %2721
    %2724 = vset.pattern.permute.xlu0 8
    %2725 = vperm.xlu0 %2724, %v1904
    %v2726 = vpop.permute.xlu0 %2725
    %2728 = vset.pattern.permute.xlu0 8
    %2729 = vperm.xlu0 %2728, %v1905
    %v2730 = vpop.permute.xlu0 %2729
    %2732 = vset.pattern.permute.xlu0 8
    %2733 = vperm.xlu0 %2732, %v1906
    %v2734 = vpop.permute.xlu0 %2733
    %2736 = vset.pattern.permute.xlu0 8
    %2737 = vperm.xlu0 %2736, %v1907
    %v2738 = vpop.permute.xlu0 %2737
    %v2740 = vmul.f32 %v2678, %v924
    %v2741 = vmul.f32 %v2682, %v924
    %v2742 = vmul.f32 %v2686, %v924
    %v2743 = vmul.f32 %v2690, %v924
    %v2744 = vmul.f32 %v2694, %v924
    %v2745 = vmul.f32 %v2698, %v924
    %v2746 = vmul.f32 %v2702, %v924
    %v2747 = vmul.f32 %v2706, %v924
    %v2748 = vmul.f32 %v2710, %v924
    %v2749 = vmul.f32 %v2714, %v924
    %v2750 = vmul.f32 %v2718, %v924
    %v2751 = vmul.f32 %v2722, %v924
    %v2752 = vmul.f32 %v2726, %v924
    %v2753 = vmul.f32 %v2730, %v924
    %v2754 = vmul.f32 %v2734, %v924
    %v2755 = vmul.f32 %v2738, %v924
    %v2756 = vadd.f32 %v2660, %v2740
    %v2757 = vadd.f32 %v2661, %v2741
    %v2758 = vadd.f32 %v2662, %v2742
    %v2759 = vadd.f32 %v2663, %v2743
    %v2760 = vadd.f32 %v2664, %v2744
    %v2761 = vadd.f32 %v2665, %v2745
    %v2762 = vadd.f32 %v2666, %v2746
    %v2763 = vadd.f32 %v2667, %v2747
    %v2764 = vadd.f32 %v2668, %v2748
    %v2765 = vadd.f32 %v2669, %v2749
    %v2766 = vadd.f32 %v2670, %v2750
    %v2767 = vadd.f32 %v2671, %v2751
    %v2768 = vadd.f32 %v2672, %v2752
    %v2769 = vadd.f32 %v2673, %v2753
    %v2770 = vadd.f32 %v2674, %v2754
    %v2771 = vadd.f32 %v2675, %v2755
    %v2772 = vmax.f32 %v2756, %v2760
    %v2773 = vmax.f32 %v2757, %v2761
    %v2774 = vmax.f32 %v2758, %v2762
    %v2775 = vmax.f32 %v2759, %v2763
    %v2776 = vmax.f32 %v2772, %v2764
    %v2777 = vmax.f32 %v2773, %v2765
    %v2778 = vmax.f32 %v2774, %v2766
    %v2779 = vmax.f32 %v2775, %v2767
    %v2780 = vmax.f32 %v2776, %v2768
    %v2781 = vmax.f32 %v2777, %v2769
    %v2782 = vmax.f32 %v2778, %v2770
    %v2783 = vmax.f32 %v2779, %v2771
    %v2784 = vadd.f32 %v2780, %v970
    %v2785 = vadd.f32 %v2781, %v970
    %v2786 = vadd.f32 %v2782, %v970
    %v2787 = vadd.f32 %v2783, %v970
    %v2788 = vmax.f32 %v2784, 0.0
    %v2789 = vmax.f32 %v2785, 0.0
    %v2790 = vmax.f32 %v2786, 0.0
    %v2791 = vmax.f32 %v2787, 0.0
    %s2792 = scalar_lea.vmem [#allocation2], 104
    %2793 = vst.msk [vmem:[%s2792] sm:$0xf] %vm980, %v2788
    %2794 = vst.msk [vmem:[%s2792 + $0x8] sm:$0xf] %vm980, %v2789
    %2795 = vst.msk [vmem:[%s2792 + $0x18] sm:$0xf] %vm980, %v2790
    %2796 = vst.msk [vmem:[%s2792 + $0x20] sm:$0xf] %vm980, %v2791
    %s2797 = scalar_lea.vmem %s0, 192
    %v2798 = vld [vmem:[%s2797] sm:$0xf]
    %v2799 = vld [vmem:[%s2797 + $0x4] sm:$0xf]
    %v2800 = vld [vmem:[%s2797 + $0x8] sm:$0xf]
    %v2801 = vld [vmem:[%s2797 + $0xc] sm:$0xf]
    %v2802 = vld [vmem:[%s2797 + $0x10] sm:$0xf]
    %v2803 = vld [vmem:[%s2797 + $0x14] sm:$0xf]
    %v2804 = vld [vmem:[%s2797 + $0x18] sm:$0xf]
    %v2805 = vld [vmem:[%s2797 + $0x1c] sm:$0xf]
    %v2806 = vld [vmem:[%s2797 + $0x20] sm:$0xf]
    %v2807 = vld [vmem:[%s2797 + $0x24] sm:$0xf]
    %v2808 = vld [vmem:[%s2797 + $0x28] sm:$0xf]
    %v2809 = vld [vmem:[%s2797 + $0x2c] sm:$0xf]
    %v2810 = vld [vmem:[%s2797 + $0x30] sm:$0xf]
    %v2811 = vld [vmem:[%s2797 + $0x34] sm:$0xf]
    %v2812 = vld [vmem:[%s2797 + $0x38] sm:$0xf]
    %v2813 = vld [vmem:[%s2797 + $0x3c] sm:$0xf]
    %2815 = vset.pattern.permute.xlu0 0
    %2816 = vperm.xlu0 %2815, %v2798
    %v2817 = vpop.permute.xlu0 %2816
    %2820 = vset.pattern.permute.xlu0 0
    %2821 = vperm.xlu0 %2820, %v2799
    %v2822 = vpop.permute.xlu0 %2821
    %2825 = vset.pattern.permute.xlu0 0
    %2826 = vperm.xlu0 %2825, %v2800
    %v2827 = vpop.permute.xlu0 %2826
    %2830 = vset.pattern.permute.xlu0 0
    %2831 = vperm.xlu0 %2830, %v2801
    %v2832 = vpop.permute.xlu0 %2831
    %2835 = vset.pattern.permute.xlu0 0
    %2836 = vperm.xlu0 %2835, %v2802
    %v2837 = vpop.permute.xlu0 %2836
    %2840 = vset.pattern.permute.xlu0 0
    %2841 = vperm.xlu0 %2840, %v2803
    %v2842 = vpop.permute.xlu0 %2841
    %2845 = vset.pattern.permute.xlu0 0
    %2846 = vperm.xlu0 %2845, %v2804
    %v2847 = vpop.permute.xlu0 %2846
    %2850 = vset.pattern.permute.xlu0 0
    %2851 = vperm.xlu0 %2850, %v2805
    %v2852 = vpop.permute.xlu0 %2851
    %2855 = vset.pattern.permute.xlu0 0
    %2856 = vperm.xlu0 %2855, %v2806
    %v2857 = vpop.permute.xlu0 %2856
    %2860 = vset.pattern.permute.xlu0 0
    %2861 = vperm.xlu0 %2860, %v2807
    %v2862 = vpop.permute.xlu0 %2861
    %2865 = vset.pattern.permute.xlu0 0
    %2866 = vperm.xlu0 %2865, %v2808
    %v2867 = vpop.permute.xlu0 %2866
    %2870 = vset.pattern.permute.xlu0 0
    %2871 = vperm.xlu0 %2870, %v2809
    %v2872 = vpop.permute.xlu0 %2871
    %2875 = vset.pattern.permute.xlu0 0
    %2876 = vperm.xlu0 %2875, %v2810
    %v2877 = vpop.permute.xlu0 %2876
    %2880 = vset.pattern.permute.xlu0 0
    %2881 = vperm.xlu0 %2880, %v2811
    %v2882 = vpop.permute.xlu0 %2881
    %2885 = vset.pattern.permute.xlu0 0
    %2886 = vperm.xlu0 %2885, %v2812
    %v2887 = vpop.permute.xlu0 %2886
    %2890 = vset.pattern.permute.xlu0 0
    %2891 = vperm.xlu0 %2890, %v2813
    %v2892 = vpop.permute.xlu0 %2891
    %v2894 = vmul.f32 %v2817, %v164
    %v2895 = vmul.f32 %v2822, %v164
    %v2896 = vmul.f32 %v2827, %v164
    %v2897 = vmul.f32 %v2832, %v164
    %v2898 = vmul.f32 %v2837, %v164
    %v2899 = vmul.f32 %v2842, %v164
    %v2900 = vmul.f32 %v2847, %v164
    %v2901 = vmul.f32 %v2852, %v164
    %v2902 = vmul.f32 %v2857, %v164
    %v2903 = vmul.f32 %v2862, %v164
    %v2904 = vmul.f32 %v2867, %v164
    %v2905 = vmul.f32 %v2872, %v164
    %v2906 = vmul.f32 %v2877, %v164
    %v2907 = vmul.f32 %v2882, %v164
    %v2908 = vmul.f32 %v2887, %v164
    %v2909 = vmul.f32 %v2892, %v164
    %2910 = vset.pattern.permute.xlu0 1
    %2911 = vperm.xlu0 %2910, %v2798
    %v2912 = vpop.permute.xlu0 %2911
    %2914 = vset.pattern.permute.xlu0 1
    %2915 = vperm.xlu0 %2914, %v2799
    %v2916 = vpop.permute.xlu0 %2915
    %2918 = vset.pattern.permute.xlu0 1
    %2919 = vperm.xlu0 %2918, %v2800
    %v2920 = vpop.permute.xlu0 %2919
    %2922 = vset.pattern.permute.xlu0 1
    %2923 = vperm.xlu0 %2922, %v2801
    %v2924 = vpop.permute.xlu0 %2923
    %2926 = vset.pattern.permute.xlu0 1
    %2927 = vperm.xlu0 %2926, %v2802
    %v2928 = vpop.permute.xlu0 %2927
    %2930 = vset.pattern.permute.xlu0 1
    %2931 = vperm.xlu0 %2930, %v2803
    %v2932 = vpop.permute.xlu0 %2931
    %2934 = vset.pattern.permute.xlu0 1
    %2935 = vperm.xlu0 %2934, %v2804
    %v2936 = vpop.permute.xlu0 %2935
    %2938 = vset.pattern.permute.xlu0 1
    %2939 = vperm.xlu0 %2938, %v2805
    %v2940 = vpop.permute.xlu0 %2939
    %2942 = vset.pattern.permute.xlu0 1
    %2943 = vperm.xlu0 %2942, %v2806
    %v2944 = vpop.permute.xlu0 %2943
    %2946 = vset.pattern.permute.xlu0 1
    %2947 = vperm.xlu0 %2946, %v2807
    %v2948 = vpop.permute.xlu0 %2947
    %2950 = vset.pattern.permute.xlu0 1
    %2951 = vperm.xlu0 %2950, %v2808
    %v2952 = vpop.permute.xlu0 %2951
    %2954 = vset.pattern.permute.xlu0 1
    %2955 = vperm.xlu0 %2954, %v2809
    %v2956 = vpop.permute.xlu0 %2955
    %2958 = vset.pattern.permute.xlu0 1
    %2959 = vperm.xlu0 %2958, %v2810
    %v2960 = vpop.permute.xlu0 %2959
    %2962 = vset.pattern.permute.xlu0 1
    %2963 = vperm.xlu0 %2962, %v2811
    %v2964 = vpop.permute.xlu0 %2963
    %2966 = vset.pattern.permute.xlu0 1
    %2967 = vperm.xlu0 %2966, %v2812
    %v2968 = vpop.permute.xlu0 %2967
    %2970 = vset.pattern.permute.xlu0 1
    %2971 = vperm.xlu0 %2970, %v2813
    %v2972 = vpop.permute.xlu0 %2971
    %v2974 = vmul.f32 %v2912, %v245
    %v2975 = vmul.f32 %v2916, %v245
    %v2976 = vmul.f32 %v2920, %v245
    %v2977 = vmul.f32 %v2924, %v245
    %v2978 = vmul.f32 %v2928, %v245
    %v2979 = vmul.f32 %v2932, %v245
    %v2980 = vmul.f32 %v2936, %v245
    %v2981 = vmul.f32 %v2940, %v245
    %v2982 = vmul.f32 %v2944, %v245
    %v2983 = vmul.f32 %v2948, %v245
    %v2984 = vmul.f32 %v2952, %v245
    %v2985 = vmul.f32 %v2956, %v245
    %v2986 = vmul.f32 %v2960, %v245
    %v2987 = vmul.f32 %v2964, %v245
    %v2988 = vmul.f32 %v2968, %v245
    %v2989 = vmul.f32 %v2972, %v245
    %v2990 = vadd.f32 %v2894, %v2974
    %v2991 = vadd.f32 %v2895, %v2975
    %v2992 = vadd.f32 %v2896, %v2976
    %v2993 = vadd.f32 %v2897, %v2977
    %v2994 = vadd.f32 %v2898, %v2978
    %v2995 = vadd.f32 %v2899, %v2979
    %v2996 = vadd.f32 %v2900, %v2980
    %v2997 = vadd.f32 %v2901, %v2981
    %v2998 = vadd.f32 %v2902, %v2982
    %v2999 = vadd.f32 %v2903, %v2983
    %v3000 = vadd.f32 %v2904, %v2984
    %v3001 = vadd.f32 %v2905, %v2985
    %v3002 = vadd.f32 %v2906, %v2986
    %v3003 = vadd.f32 %v2907, %v2987
    %v3004 = vadd.f32 %v2908, %v2988
    %v3005 = vadd.f32 %v2909, %v2989
    %3006 = vset.pattern.permute.xlu0 2
    %3007 = vperm.xlu0 %3006, %v2798
    %v3008 = vpop.permute.xlu0 %3007
    %3010 = vset.pattern.permute.xlu0 2
    %3011 = vperm.xlu0 %3010, %v2799
    %v3012 = vpop.permute.xlu0 %3011
    %3014 = vset.pattern.permute.xlu0 2
    %3015 = vperm.xlu0 %3014, %v2800
    %v3016 = vpop.permute.xlu0 %3015
    %3018 = vset.pattern.permute.xlu0 2
    %3019 = vperm.xlu0 %3018, %v2801
    %v3020 = vpop.permute.xlu0 %3019
    %3022 = vset.pattern.permute.xlu0 2
    %3023 = vperm.xlu0 %3022, %v2802
    %v3024 = vpop.permute.xlu0 %3023
    %3026 = vset.pattern.permute.xlu0 2
    %3027 = vperm.xlu0 %3026, %v2803
    %v3028 = vpop.permute.xlu0 %3027
    %3030 = vset.pattern.permute.xlu0 2
    %3031 = vperm.xlu0 %3030, %v2804
    %v3032 = vpop.permute.xlu0 %3031
    %3034 = vset.pattern.permute.xlu0 2
    %3035 = vperm.xlu0 %3034, %v2805
    %v3036 = vpop.permute.xlu0 %3035
    %3038 = vset.pattern.permute.xlu0 2
    %3039 = vperm.xlu0 %3038, %v2806
    %v3040 = vpop.permute.xlu0 %3039
    %3042 = vset.pattern.permute.xlu0 2
    %3043 = vperm.xlu0 %3042, %v2807
    %v3044 = vpop.permute.xlu0 %3043
    %3046 = vset.pattern.permute.xlu0 2
    %3047 = vperm.xlu0 %3046, %v2808
    %v3048 = vpop.permute.xlu0 %3047
    %3050 = vset.pattern.permute.xlu0 2
    %3051 = vperm.xlu0 %3050, %v2809
    %v3052 = vpop.permute.xlu0 %3051
    %3054 = vset.pattern.permute.xlu0 2
    %3055 = vperm.xlu0 %3054, %v2810
    %v3056 = vpop.permute.xlu0 %3055
    %3058 = vset.pattern.permute.xlu0 2
    %3059 = vperm.xlu0 %3058, %v2811
    %v3060 = vpop.permute.xlu0 %3059
    %3062 = vset.pattern.permute.xlu0 2
    %3063 = vperm.xlu0 %3062, %v2812
    %v3064 = vpop.permute.xlu0 %3063
    %3066 = vset.pattern.permute.xlu0 2
    %3067 = vperm.xlu0 %3066, %v2813
    %v3068 = vpop.permute.xlu0 %3067
    %v3070 = vmul.f32 %v3008, %v342
    %v3071 = vmul.f32 %v3012, %v342
    %v3072 = vmul.f32 %v3016, %v342
    %v3073 = vmul.f32 %v3020, %v342
    %v3074 = vmul.f32 %v3024, %v342
    %v3075 = vmul.f32 %v3028, %v342
    %v3076 = vmul.f32 %v3032, %v342
    %v3077 = vmul.f32 %v3036, %v342
    %v3078 = vmul.f32 %v3040, %v342
    %v3079 = vmul.f32 %v3044, %v342
    %v3080 = vmul.f32 %v3048, %v342
    %v3081 = vmul.f32 %v3052, %v342
    %v3082 = vmul.f32 %v3056, %v342
    %v3083 = vmul.f32 %v3060, %v342
    %v3084 = vmul.f32 %v3064, %v342
    %v3085 = vmul.f32 %v3068, %v342
    %v3086 = vadd.f32 %v2990, %v3070
    %v3087 = vadd.f32 %v2991, %v3071
    %v3088 = vadd.f32 %v2992, %v3072
    %v3089 = vadd.f32 %v2993, %v3073
    %v3090 = vadd.f32 %v2994, %v3074
    %v3091 = vadd.f32 %v2995, %v3075
    %v3092 = vadd.f32 %v2996, %v3076
    %v3093 = vadd.f32 %v2997, %v3077
    %v3094 = vadd.f32 %v2998, %v3078
    %v3095 = vadd.f32 %v2999, %v3079
    %v3096 = vadd.f32 %v3000, %v3080
    %v3097 = vadd.f32 %v3001, %v3081
    %v3098 = vadd.f32 %v3002, %v3082
    %v3099 = vadd.f32 %v3003, %v3083
    %v3100 = vadd.f32 %v3004, %v3084
    %v3101 = vadd.f32 %v3005, %v3085
    %3102 = vset.pattern.permute.xlu0 3
    %3103 = vperm.xlu0 %3102, %v2798
    %v3104 = vpop.permute.xlu0 %3103
    %3106 = vset.pattern.permute.xlu0 3
    %3107 = vperm.xlu0 %3106, %v2799
    %v3108 = vpop.permute.xlu0 %3107
    %3110 = vset.pattern.permute.xlu0 3
    %3111 = vperm.xlu0 %3110, %v2800
    %v3112 = vpop.permute.xlu0 %3111
    %3114 = vset.pattern.permute.xlu0 3
    %3115 = vperm.xlu0 %3114, %v2801
    %v3116 = vpop.permute.xlu0 %3115
    %3118 = vset.pattern.permute.xlu0 3
    %3119 = vperm.xlu0 %3118, %v2802
    %v3120 = vpop.permute.xlu0 %3119
    %3122 = vset.pattern.permute.xlu0 3
    %3123 = vperm.xlu0 %3122, %v2803
    %v3124 = vpop.permute.xlu0 %3123
    %3126 = vset.pattern.permute.xlu0 3
    %3127 = vperm.xlu0 %3126, %v2804
    %v3128 = vpop.permute.xlu0 %3127
    %3130 = vset.pattern.permute.xlu0 3
    %3131 = vperm.xlu0 %3130, %v2805
    %v3132 = vpop.permute.xlu0 %3131
    %3134 = vset.pattern.permute.xlu0 3
    %3135 = vperm.xlu0 %3134, %v2806
    %v3136 = vpop.permute.xlu0 %3135
    %3138 = vset.pattern.permute.xlu0 3
    %3139 = vperm.xlu0 %3138, %v2807
    %v3140 = vpop.permute.xlu0 %3139
    %3142 = vset.pattern.permute.xlu0 3
    %3143 = vperm.xlu0 %3142, %v2808
    %v3144 = vpop.permute.xlu0 %3143
    %3146 = vset.pattern.permute.xlu0 3
    %3147 = vperm.xlu0 %3146, %v2809
    %v3148 = vpop.permute.xlu0 %3147
    %3150 = vset.pattern.permute.xlu0 3
    %3151 = vperm.xlu0 %3150, %v2810
    %v3152 = vpop.permute.xlu0 %3151
    %3154 = vset.pattern.permute.xlu0 3
    %3155 = vperm.xlu0 %3154, %v2811
    %v3156 = vpop.permute.xlu0 %3155
    %3158 = vset.pattern.permute.xlu0 3
    %3159 = vperm.xlu0 %3158, %v2812
    %v3160 = vpop.permute.xlu0 %3159
    %3162 = vset.pattern.permute.xlu0 3
    %3163 = vperm.xlu0 %3162, %v2813
    %v3164 = vpop.permute.xlu0 %3163
    %v3166 = vmul.f32 %v3104, %v439
    %v3167 = vmul.f32 %v3108, %v439
    %v3168 = vmul.f32 %v3112, %v439
    %v3169 = vmul.f32 %v3116, %v439
    %v3170 = vmul.f32 %v3120, %v439
    %v3171 = vmul.f32 %v3124, %v439
    %v3172 = vmul.f32 %v3128, %v439
    %v3173 = vmul.f32 %v3132, %v439
    %v3174 = vmul.f32 %v3136, %v439
    %v3175 = vmul.f32 %v3140, %v439
    %v3176 = vmul.f32 %v3144, %v439
    %v3177 = vmul.f32 %v3148, %v439
    %v3178 = vmul.f32 %v3152, %v439
    %v3179 = vmul.f32 %v3156, %v439
    %v3180 = vmul.f32 %v3160, %v439
    %v3181 = vmul.f32 %v3164, %v439
    %v3182 = vadd.f32 %v3086, %v3166
    %v3183 = vadd.f32 %v3087, %v3167
    %v3184 = vadd.f32 %v3088, %v3168
    %v3185 = vadd.f32 %v3089, %v3169
    %v3186 = vadd.f32 %v3090, %v3170
    %v3187 = vadd.f32 %v3091, %v3171
    %v3188 = vadd.f32 %v3092, %v3172
    %v3189 = vadd.f32 %v3093, %v3173
    %v3190 = vadd.f32 %v3094, %v3174
    %v3191 = vadd.f32 %v3095, %v3175
    %v3192 = vadd.f32 %v3096, %v3176
    %v3193 = vadd.f32 %v3097, %v3177
    %v3194 = vadd.f32 %v3098, %v3178
    %v3195 = vadd.f32 %v3099, %v3179
    %v3196 = vadd.f32 %v3100, %v3180
    %v3197 = vadd.f32 %v3101, %v3181
    %3198 = vset.pattern.permute.xlu0 4
    %3199 = vperm.xlu0 %3198, %v2798
    %v3200 = vpop.permute.xlu0 %3199
    %3202 = vset.pattern.permute.xlu0 4
    %3203 = vperm.xlu0 %3202, %v2799
    %v3204 = vpop.permute.xlu0 %3203
    %3206 = vset.pattern.permute.xlu0 4
    %3207 = vperm.xlu0 %3206, %v2800
    %v3208 = vpop.permute.xlu0 %3207
    %3210 = vset.pattern.permute.xlu0 4
    %3211 = vperm.xlu0 %3210, %v2801
    %v3212 = vpop.permute.xlu0 %3211
    %3214 = vset.pattern.permute.xlu0 4
    %3215 = vperm.xlu0 %3214, %v2802
    %v3216 = vpop.permute.xlu0 %3215
    %3218 = vset.pattern.permute.xlu0 4
    %3219 = vperm.xlu0 %3218, %v2803
    %v3220 = vpop.permute.xlu0 %3219
    %3222 = vset.pattern.permute.xlu0 4
    %3223 = vperm.xlu0 %3222, %v2804
    %v3224 = vpop.permute.xlu0 %3223
    %3226 = vset.pattern.permute.xlu0 4
    %3227 = vperm.xlu0 %3226, %v2805
    %v3228 = vpop.permute.xlu0 %3227
    %3230 = vset.pattern.permute.xlu0 4
    %3231 = vperm.xlu0 %3230, %v2806
    %v3232 = vpop.permute.xlu0 %3231
    %3234 = vset.pattern.permute.xlu0 4
    %3235 = vperm.xlu0 %3234, %v2807
    %v3236 = vpop.permute.xlu0 %3235
    %3238 = vset.pattern.permute.xlu0 4
    %3239 = vperm.xlu0 %3238, %v2808
    %v3240 = vpop.permute.xlu0 %3239
    %3242 = vset.pattern.permute.xlu0 4
    %3243 = vperm.xlu0 %3242, %v2809
    %v3244 = vpop.permute.xlu0 %3243
    %3246 = vset.pattern.permute.xlu0 4
    %3247 = vperm.xlu0 %3246, %v2810
    %v3248 = vpop.permute.xlu0 %3247
    %3250 = vset.pattern.permute.xlu0 4
    %3251 = vperm.xlu0 %3250, %v2811
    %v3252 = vpop.permute.xlu0 %3251
    %3254 = vset.pattern.permute.xlu0 4
    %3255 = vperm.xlu0 %3254, %v2812
    %v3256 = vpop.permute.xlu0 %3255
    %3258 = vset.pattern.permute.xlu0 4
    %3259 = vperm.xlu0 %3258, %v2813
    %v3260 = vpop.permute.xlu0 %3259
    %v3262 = vmul.f32 %v3200, %v536
    %v3263 = vmul.f32 %v3204, %v536
    %v3264 = vmul.f32 %v3208, %v536
    %v3265 = vmul.f32 %v3212, %v536
    %v3266 = vmul.f32 %v3216, %v536
    %v3267 = vmul.f32 %v3220, %v536
    %v3268 = vmul.f32 %v3224, %v536
    %v3269 = vmul.f32 %v3228, %v536
    %v3270 = vmul.f32 %v3232, %v536
    %v3271 = vmul.f32 %v3236, %v536
    %v3272 = vmul.f32 %v3240, %v536
    %v3273 = vmul.f32 %v3244, %v536
    %v3274 = vmul.f32 %v3248, %v536
    %v3275 = vmul.f32 %v3252, %v536
    %v3276 = vmul.f32 %v3256, %v536
    %v3277 = vmul.f32 %v3260, %v536
    %v3278 = vadd.f32 %v3182, %v3262
    %v3279 = vadd.f32 %v3183, %v3263
    %v3280 = vadd.f32 %v3184, %v3264
    %v3281 = vadd.f32 %v3185, %v3265
    %v3282 = vadd.f32 %v3186, %v3266
    %v3283 = vadd.f32 %v3187, %v3267
    %v3284 = vadd.f32 %v3188, %v3268
    %v3285 = vadd.f32 %v3189, %v3269
    %v3286 = vadd.f32 %v3190, %v3270
    %v3287 = vadd.f32 %v3191, %v3271
    %v3288 = vadd.f32 %v3192, %v3272
    %v3289 = vadd.f32 %v3193, %v3273
    %v3290 = vadd.f32 %v3194, %v3274
    %v3291 = vadd.f32 %v3195, %v3275
    %v3292 = vadd.f32 %v3196, %v3276
    %v3293 = vadd.f32 %v3197, %v3277
    %3294 = vset.pattern.permute.xlu0 5
    %3295 = vperm.xlu0 %3294, %v2798
    %v3296 = vpop.permute.xlu0 %3295
    %3298 = vset.pattern.permute.xlu0 5
    %3299 = vperm.xlu0 %3298, %v2799
    %v3300 = vpop.permute.xlu0 %3299
    %3302 = vset.pattern.permute.xlu0 5
    %3303 = vperm.xlu0 %3302, %v2800
    %v3304 = vpop.permute.xlu0 %3303
    %3306 = vset.pattern.permute.xlu0 5
    %3307 = vperm.xlu0 %3306, %v2801
    %v3308 = vpop.permute.xlu0 %3307
    %3310 = vset.pattern.permute.xlu0 5
    %3311 = vperm.xlu0 %3310, %v2802
    %v3312 = vpop.permute.xlu0 %3311
    %3314 = vset.pattern.permute.xlu0 5
    %3315 = vperm.xlu0 %3314, %v2803
    %v3316 = vpop.permute.xlu0 %3315
    %3318 = vset.pattern.permute.xlu0 5
    %3319 = vperm.xlu0 %3318, %v2804
    %v3320 = vpop.permute.xlu0 %3319
    %3322 = vset.pattern.permute.xlu0 5
    %3323 = vperm.xlu0 %3322, %v2805
    %v3324 = vpop.permute.xlu0 %3323
    %3326 = vset.pattern.permute.xlu0 5
    %3327 = vperm.xlu0 %3326, %v2806
    %v3328 = vpop.permute.xlu0 %3327
    %3330 = vset.pattern.permute.xlu0 5
    %3331 = vperm.xlu0 %3330, %v2807
    %v3332 = vpop.permute.xlu0 %3331
    %3334 = vset.pattern.permute.xlu0 5
    %3335 = vperm.xlu0 %3334, %v2808
    %v3336 = vpop.permute.xlu0 %3335
    %3338 = vset.pattern.permute.xlu0 5
    %3339 = vperm.xlu0 %3338, %v2809
    %v3340 = vpop.permute.xlu0 %3339
    %3342 = vset.pattern.permute.xlu0 5
    %3343 = vperm.xlu0 %3342, %v2810
    %v3344 = vpop.permute.xlu0 %3343
    %3346 = vset.pattern.permute.xlu0 5
    %3347 = vperm.xlu0 %3346, %v2811
    %v3348 = vpop.permute.xlu0 %3347
    %3350 = vset.pattern.permute.xlu0 5
    %3351 = vperm.xlu0 %3350, %v2812
    %v3352 = vpop.permute.xlu0 %3351
    %3354 = vset.pattern.permute.xlu0 5
    %3355 = vperm.xlu0 %3354, %v2813
    %v3356 = vpop.permute.xlu0 %3355
    %v3358 = vmul.f32 %v3296, %v633
    %v3359 = vmul.f32 %v3300, %v633
    %v3360 = vmul.f32 %v3304, %v633
    %v3361 = vmul.f32 %v3308, %v633
    %v3362 = vmul.f32 %v3312, %v633
    %v3363 = vmul.f32 %v3316, %v633
    %v3364 = vmul.f32 %v3320, %v633
    %v3365 = vmul.f32 %v3324, %v633
    %v3366 = vmul.f32 %v3328, %v633
    %v3367 = vmul.f32 %v3332, %v633
    %v3368 = vmul.f32 %v3336, %v633
    %v3369 = vmul.f32 %v3340, %v633
    %v3370 = vmul.f32 %v3344, %v633
    %v3371 = vmul.f32 %v3348, %v633
    %v3372 = vmul.f32 %v3352, %v633
    %v3373 = vmul.f32 %v3356, %v633
    %v3374 = vadd.f32 %v3278, %v3358
    %v3375 = vadd.f32 %v3279, %v3359
    %v3376 = vadd.f32 %v3280, %v3360
    %v3377 = vadd.f32 %v3281, %v3361
    %v3378 = vadd.f32 %v3282, %v3362
    %v3379 = vadd.f32 %v3283, %v3363
    %v3380 = vadd.f32 %v3284, %v3364
    %v3381 = vadd.f32 %v3285, %v3365
    %v3382 = vadd.f32 %v3286, %v3366
    %v3383 = vadd.f32 %v3287, %v3367
    %v3384 = vadd.f32 %v3288, %v3368
    %v3385 = vadd.f32 %v3289, %v3369
    %v3386 = vadd.f32 %v3290, %v3370
    %v3387 = vadd.f32 %v3291, %v3371
    %v3388 = vadd.f32 %v3292, %v3372
    %v3389 = vadd.f32 %v3293, %v3373
    %3390 = vset.pattern.permute.xlu0 6
    %3391 = vperm.xlu0 %3390, %v2798
    %v3392 = vpop.permute.xlu0 %3391
    %3394 = vset.pattern.permute.xlu0 6
    %3395 = vperm.xlu0 %3394, %v2799
    %v3396 = vpop.permute.xlu0 %3395
    %3398 = vset.pattern.permute.xlu0 6
    %3399 = vperm.xlu0 %3398, %v2800
    %v3400 = vpop.permute.xlu0 %3399
    %3402 = vset.pattern.permute.xlu0 6
    %3403 = vperm.xlu0 %3402, %v2801
    %v3404 = vpop.permute.xlu0 %3403
    %3406 = vset.pattern.permute.xlu0 6
    %3407 = vperm.xlu0 %3406, %v2802
    %v3408 = vpop.permute.xlu0 %3407
    %3410 = vset.pattern.permute.xlu0 6
    %3411 = vperm.xlu0 %3410, %v2803
    %v3412 = vpop.permute.xlu0 %3411
    %3414 = vset.pattern.permute.xlu0 6
    %3415 = vperm.xlu0 %3414, %v2804
    %v3416 = vpop.permute.xlu0 %3415
    %3418 = vset.pattern.permute.xlu0 6
    %3419 = vperm.xlu0 %3418, %v2805
    %v3420 = vpop.permute.xlu0 %3419
    %3422 = vset.pattern.permute.xlu0 6
    %3423 = vperm.xlu0 %3422, %v2806
    %v3424 = vpop.permute.xlu0 %3423
    %3426 = vset.pattern.permute.xlu0 6
    %3427 = vperm.xlu0 %3426, %v2807
    %v3428 = vpop.permute.xlu0 %3427
    %3430 = vset.pattern.permute.xlu0 6
    %3431 = vperm.xlu0 %3430, %v2808
    %v3432 = vpop.permute.xlu0 %3431
    %3434 = vset.pattern.permute.xlu0 6
    %3435 = vperm.xlu0 %3434, %v2809
    %v3436 = vpop.permute.xlu0 %3435
    %3438 = vset.pattern.permute.xlu0 6
    %3439 = vperm.xlu0 %3438, %v2810
    %v3440 = vpop.permute.xlu0 %3439
    %3442 = vset.pattern.permute.xlu0 6
    %3443 = vperm.xlu0 %3442, %v2811
    %v3444 = vpop.permute.xlu0 %3443
    %3446 = vset.pattern.permute.xlu0 6
    %3447 = vperm.xlu0 %3446, %v2812
    %v3448 = vpop.permute.xlu0 %3447
    %3450 = vset.pattern.permute.xlu0 6
    %3451 = vperm.xlu0 %3450, %v2813
    %v3452 = vpop.permute.xlu0 %3451
    %v3454 = vmul.f32 %v3392, %v730
    %v3455 = vmul.f32 %v3396, %v730
    %v3456 = vmul.f32 %v3400, %v730
    %v3457 = vmul.f32 %v3404, %v730
    %v3458 = vmul.f32 %v3408, %v730
    %v3459 = vmul.f32 %v3412, %v730
    %v3460 = vmul.f32 %v3416, %v730
    %v3461 = vmul.f32 %v3420, %v730
    %v3462 = vmul.f32 %v3424, %v730
    %v3463 = vmul.f32 %v3428, %v730
    %v3464 = vmul.f32 %v3432, %v730
    %v3465 = vmul.f32 %v3436, %v730
    %v3466 = vmul.f32 %v3440, %v730
    %v3467 = vmul.f32 %v3444, %v730
    %v3468 = vmul.f32 %v3448, %v730
    %v3469 = vmul.f32 %v3452, %v730
    %v3470 = vadd.f32 %v3374, %v3454
    %v3471 = vadd.f32 %v3375, %v3455
    %v3472 = vadd.f32 %v3376, %v3456
    %v3473 = vadd.f32 %v3377, %v3457
    %v3474 = vadd.f32 %v3378, %v3458
    %v3475 = vadd.f32 %v3379, %v3459
    %v3476 = vadd.f32 %v3380, %v3460
    %v3477 = vadd.f32 %v3381, %v3461
    %v3478 = vadd.f32 %v3382, %v3462
    %v3479 = vadd.f32 %v3383, %v3463
    %v3480 = vadd.f32 %v3384, %v3464
    %v3481 = vadd.f32 %v3385, %v3465
    %v3482 = vadd.f32 %v3386, %v3466
    %v3483 = vadd.f32 %v3387, %v3467
    %v3484 = vadd.f32 %v3388, %v3468
    %v3485 = vadd.f32 %v3389, %v3469
    %3486 = vset.pattern.permute.xlu0 7
    %3487 = vperm.xlu0 %3486, %v2798
    %v3488 = vpop.permute.xlu0 %3487
    %3490 = vset.pattern.permute.xlu0 7
    %3491 = vperm.xlu0 %3490, %v2799
    %v3492 = vpop.permute.xlu0 %3491
    %3494 = vset.pattern.permute.xlu0 7
    %3495 = vperm.xlu0 %3494, %v2800
    %v3496 = vpop.permute.xlu0 %3495
    %3498 = vset.pattern.permute.xlu0 7
    %3499 = vperm.xlu0 %3498, %v2801
    %v3500 = vpop.permute.xlu0 %3499
    %3502 = vset.pattern.permute.xlu0 7
    %3503 = vperm.xlu0 %3502, %v2802
    %v3504 = vpop.permute.xlu0 %3503
    %3506 = vset.pattern.permute.xlu0 7
    %3507 = vperm.xlu0 %3506, %v2803
    %v3508 = vpop.permute.xlu0 %3507
    %3510 = vset.pattern.permute.xlu0 7
    %3511 = vperm.xlu0 %3510, %v2804
    %v3512 = vpop.permute.xlu0 %3511
    %3514 = vset.pattern.permute.xlu0 7
    %3515 = vperm.xlu0 %3514, %v2805
    %v3516 = vpop.permute.xlu0 %3515
    %3518 = vset.pattern.permute.xlu0 7
    %3519 = vperm.xlu0 %3518, %v2806
    %v3520 = vpop.permute.xlu0 %3519
    %3522 = vset.pattern.permute.xlu0 7
    %3523 = vperm.xlu0 %3522, %v2807
    %v3524 = vpop.permute.xlu0 %3523
    %3526 = vset.pattern.permute.xlu0 7
    %3527 = vperm.xlu0 %3526, %v2808
    %v3528 = vpop.permute.xlu0 %3527
    %3530 = vset.pattern.permute.xlu0 7
    %3531 = vperm.xlu0 %3530, %v2809
    %v3532 = vpop.permute.xlu0 %3531
    %3534 = vset.pattern.permute.xlu0 7
    %3535 = vperm.xlu0 %3534, %v2810
    %v3536 = vpop.permute.xlu0 %3535
    %3538 = vset.pattern.permute.xlu0 7
    %3539 = vperm.xlu0 %3538, %v2811
    %v3540 = vpop.permute.xlu0 %3539
    %3542 = vset.pattern.permute.xlu0 7
    %3543 = vperm.xlu0 %3542, %v2812
    %v3544 = vpop.permute.xlu0 %3543
    %3546 = vset.pattern.permute.xlu0 7
    %3547 = vperm.xlu0 %3546, %v2813
    %v3548 = vpop.permute.xlu0 %3547
    %v3550 = vmul.f32 %v3488, %v827
    %v3551 = vmul.f32 %v3492, %v827
    %v3552 = vmul.f32 %v3496, %v827
    %v3553 = vmul.f32 %v3500, %v827
    %v3554 = vmul.f32 %v3504, %v827
    %v3555 = vmul.f32 %v3508, %v827
    %v3556 = vmul.f32 %v3512, %v827
    %v3557 = vmul.f32 %v3516, %v827
    %v3558 = vmul.f32 %v3520, %v827
    %v3559 = vmul.f32 %v3524, %v827
    %v3560 = vmul.f32 %v3528, %v827
    %v3561 = vmul.f32 %v3532, %v827
    %v3562 = vmul.f32 %v3536, %v827
    %v3563 = vmul.f32 %v3540, %v827
    %v3564 = vmul.f32 %v3544, %v827
    %v3565 = vmul.f32 %v3548, %v827
    %v3566 = vadd.f32 %v3470, %v3550
    %v3567 = vadd.f32 %v3471, %v3551
    %v3568 = vadd.f32 %v3472, %v3552
    %v3569 = vadd.f32 %v3473, %v3553
    %v3570 = vadd.f32 %v3474, %v3554
    %v3571 = vadd.f32 %v3475, %v3555
    %v3572 = vadd.f32 %v3476, %v3556
    %v3573 = vadd.f32 %v3477, %v3557
    %v3574 = vadd.f32 %v3478, %v3558
    %v3575 = vadd.f32 %v3479, %v3559
    %v3576 = vadd.f32 %v3480, %v3560
    %v3577 = vadd.f32 %v3481, %v3561
    %v3578 = vadd.f32 %v3482, %v3562
    %v3579 = vadd.f32 %v3483, %v3563
    %v3580 = vadd.f32 %v3484, %v3564
    %v3581 = vadd.f32 %v3485, %v3565
    %3582 = vset.pattern.permute.xlu0 8
    %3583 = vperm.xlu0 %3582, %v2798
    %v3584 = vpop.permute.xlu0 %3583
    %3586 = vset.pattern.permute.xlu0 8
    %3587 = vperm.xlu0 %3586, %v2799
    %v3588 = vpop.permute.xlu0 %3587
    %3590 = vset.pattern.permute.xlu0 8
    %3591 = vperm.xlu0 %3590, %v2800
    %v3592 = vpop.permute.xlu0 %3591
    %3594 = vset.pattern.permute.xlu0 8
    %3595 = vperm.xlu0 %3594, %v2801
    %v3596 = vpop.permute.xlu0 %3595
    %3598 = vset.pattern.permute.xlu0 8
    %3599 = vperm.xlu0 %3598, %v2802
    %v3600 = vpop.permute.xlu0 %3599
    %3602 = vset.pattern.permute.xlu0 8
    %3603 = vperm.xlu0 %3602, %v2803
    %v3604 = vpop.permute.xlu0 %3603
    %3606 = vset.pattern.permute.xlu0 8
    %3607 = vperm.xlu0 %3606, %v2804
    %v3608 = vpop.permute.xlu0 %3607
    %3610 = vset.pattern.permute.xlu0 8
    %3611 = vperm.xlu0 %3610, %v2805
    %v3612 = vpop.permute.xlu0 %3611
    %3614 = vset.pattern.permute.xlu0 8
    %3615 = vperm.xlu0 %3614, %v2806
    %v3616 = vpop.permute.xlu0 %3615
    %3618 = vset.pattern.permute.xlu0 8
    %3619 = vperm.xlu0 %3618, %v2807
    %v3620 = vpop.permute.xlu0 %3619
    %3622 = vset.pattern.permute.xlu0 8
    %3623 = vperm.xlu0 %3622, %v2808
    %v3624 = vpop.permute.xlu0 %3623
    %3626 = vset.pattern.permute.xlu0 8
    %3627 = vperm.xlu0 %3626, %v2809
    %v3628 = vpop.permute.xlu0 %3627
    %3630 = vset.pattern.permute.xlu0 8
    %3631 = vperm.xlu0 %3630, %v2810
    %v3632 = vpop.permute.xlu0 %3631
    %3634 = vset.pattern.permute.xlu0 8
    %3635 = vperm.xlu0 %3634, %v2811
    %v3636 = vpop.permute.xlu0 %3635
    %3638 = vset.pattern.permute.xlu0 8
    %3639 = vperm.xlu0 %3638, %v2812
    %v3640 = vpop.permute.xlu0 %3639
    %3642 = vset.pattern.permute.xlu0 8
    %3643 = vperm.xlu0 %3642, %v2813
    %v3644 = vpop.permute.xlu0 %3643
    %v3646 = vmul.f32 %v3584, %v924
    %v3647 = vmul.f32 %v3588, %v924
    %v3648 = vmul.f32 %v3592, %v924
    %v3649 = vmul.f32 %v3596, %v924
    %v3650 = vmul.f32 %v3600, %v924
    %v3651 = vmul.f32 %v3604, %v924
    %v3652 = vmul.f32 %v3608, %v924
    %v3653 = vmul.f32 %v3612, %v924
    %v3654 = vmul.f32 %v3616, %v924
    %v3655 = vmul.f32 %v3620, %v924
    %v3656 = vmul.f32 %v3624, %v924
    %v3657 = vmul.f32 %v3628, %v924
    %v3658 = vmul.f32 %v3632, %v924
    %v3659 = vmul.f32 %v3636, %v924
    %v3660 = vmul.f32 %v3640, %v924
    %v3661 = vmul.f32 %v3644, %v924
    %v3662 = vadd.f32 %v3566, %v3646
    %v3663 = vadd.f32 %v3567, %v3647
    %v3664 = vadd.f32 %v3568, %v3648
    %v3665 = vadd.f32 %v3569, %v3649
    %v3666 = vadd.f32 %v3570, %v3650
    %v3667 = vadd.f32 %v3571, %v3651
    %v3668 = vadd.f32 %v3572, %v3652
    %v3669 = vadd.f32 %v3573, %v3653
    %v3670 = vadd.f32 %v3574, %v3654
    %v3671 = vadd.f32 %v3575, %v3655
    %v3672 = vadd.f32 %v3576, %v3656
    %v3673 = vadd.f32 %v3577, %v3657
    %v3674 = vadd.f32 %v3578, %v3658
    %v3675 = vadd.f32 %v3579, %v3659
    %v3676 = vadd.f32 %v3580, %v3660
    %v3677 = vadd.f32 %v3581, %v3661
    %v3678 = vmax.f32 %v3662, %v3666
    %v3679 = vmax.f32 %v3663, %v3667
    %v3680 = vmax.f32 %v3664, %v3668
    %v3681 = vmax.f32 %v3665, %v3669
    %v3682 = vmax.f32 %v3678, %v3670
    %v3683 = vmax.f32 %v3679, %v3671
    %v3684 = vmax.f32 %v3680, %v3672
    %v3685 = vmax.f32 %v3681, %v3673
    %v3686 = vmax.f32 %v3682, %v3674
    %v3687 = vmax.f32 %v3683, %v3675
    %v3688 = vmax.f32 %v3684, %v3676
    %v3689 = vmax.f32 %v3685, %v3677
    %v3690 = vadd.f32 %v3686, %v970
    %v3691 = vadd.f32 %v3687, %v970
    %v3692 = vadd.f32 %v3688, %v970
    %v3693 = vadd.f32 %v3689, %v970
    %v3694 = vmax.f32 %v3690, 0.0
    %v3695 = vmax.f32 %v3691, 0.0
    %v3696 = vmax.f32 %v3692, 0.0
    %v3697 = vmax.f32 %v3693, 0.0
    %s3698 = scalar_lea.vmem [#allocation2], 152
    %3699 = vst.msk [vmem:[%s3698 + $0x1] sm:$0xf] %vm980, %v3694
    %3700 = vst.msk [vmem:[%s3698 + $0x9] sm:$0xf] %vm980, %v3695
    %3701 = vst.msk [vmem:[%s3698 + $0x19] sm:$0xf] %vm980, %v3696
    %3702 = vst.msk [vmem:[%s3698 + $0x21] sm:$0xf] %vm980, %v3697
    %s3703 = scalar_lea.vmem [#allocation2], 144
    %v3704 = vld [vmem:[%s3703] sm:$0xf]
    %v3705 = vld [vmem:[%s3703 + $0x8] sm:$0xf]
    %v3706 = vld [vmem:[%s3703 + $0x18] sm:$0xf]
    %v3707 = vld [vmem:[%s3703 + $0x20] sm:$0xf]
    %3708 = vst.msk [vmem:[#allocation3] sm:$0xf] %vm980, %v3704
    %v3710 = vrot.slane %v3705, 4
    %vm3712 = vcmask 261124
    %3713 = vst.msk [vmem:[#allocation3] sm:$0xf0] %vm3712, %v3710
    %3714 = vst.msk [vmem:[#allocation3 + $0x18] sm:$0xf] %vm980, %v3706
    %v3716 = vrot.slane %v3707, 4
    %3718 = vst.msk [vmem:[#allocation3 + $0x18] sm:$0xf0] %vm3712, %v3716
    %s3719 = scalar_lea.vmem [#allocation2], 96
    %v3720 = vld [vmem:[%s3719] sm:$0xf]
    %v3721 = vld [vmem:[%s3719 + $0x8] sm:$0xf]
    %v3722 = vld [vmem:[%s3719 + $0x18] sm:$0xf]
    %v3723 = vld [vmem:[%s3719 + $0x20] sm:$0xf]
    %3725 = vrot.lane.b32.xlu0 %v3720, 32
    %v3726 = vpop.permute.xlu0 %3725
    %vm3728 = vcmask 519424
    %3729 = vst.msk [vmem:[#allocation3] sm:$0xf] %vm3728, %v3726
    %v3731 = vrot.slane %v3721, 4
    %3732 = vrot.lane.b32.xlu0 %v3731, 32
    %v3733 = vpop.permute.xlu0 %3732
    %vm3735 = vcmask 523524
    %3736 = vst.msk [vmem:[#allocation3] sm:$0xf0] %vm3735, %v3733
    %3738 = vrot.lane.b32.xlu0 %v3722, 32
    %v3739 = vpop.permute.xlu0 %3738
    %3741 = vst.msk [vmem:[#allocation3 + $0x18] sm:$0xf] %vm3728, %v3739
    %v3743 = vrot.slane %v3723, 4
    %3744 = vrot.lane.b32.xlu0 %v3743, 32
    %v3745 = vpop.permute.xlu0 %3744
    %3747 = vst.msk [vmem:[#allocation3 + $0x18] sm:$0xf0] %vm3735, %v3745
    %v3748 = vld [vmem:[%s3703 + $0x1] sm:$0xf]
    %v3749 = vld [vmem:[%s3703 + $0x9] sm:$0xf]
    %v3750 = vld [vmem:[%s3703 + $0x19] sm:$0xf]
    %v3751 = vld [vmem:[%s3703 + $0x21] sm:$0xf]
    %3753 = vrot.lane.b32.xlu0 %v3748, 64
    %v3754 = vpop.permute.xlu0 %3753
    %vm3756 = vcmask 781824
    %3757 = vst.msk [vmem:[#allocation3] sm:$0xf] %vm3756, %v3754
    %v3759 = vrot.slane %v3749, 4
    %3760 = vrot.lane.b32.xlu0 %v3759, 64
    %v3761 = vpop.permute.xlu0 %3760
    %vm3763 = vcmask 785924
    %3764 = vst.msk [vmem:[#allocation3] sm:$0xf0] %vm3763, %v3761
    %3766 = vrot.lane.b32.xlu0 %v3750, 64
    %v3767 = vpop.permute.xlu0 %3766
    %3769 = vst.msk [vmem:[#allocation3 + $0x18] sm:$0xf] %vm3756, %v3767
    %v3771 = vrot.slane %v3751, 4
    %3772 = vrot.lane.b32.xlu0 %v3771, 64
    %v3773 = vpop.permute.xlu0 %3772
    %3775 = vst.msk [vmem:[#allocation3 + $0x18] sm:$0xf0] %vm3763, %v3773
    %v3776 = vld [vmem:[%s1886] sm:$0xf]
    %v3777 = vld [vmem:[%s1886 + $0x8] sm:$0xf]
    %v3778 = vld [vmem:[%s1886 + $0x18] sm:$0xf]
    %v3779 = vld [vmem:[%s1886 + $0x20] sm:$0xf]
    %3781 = vrot.lane.b32.xlu0 %v3776, 96
    %v3782 = vpop.permute.xlu0 %3781
    %vm3784 = vcmask 1044224
    %3785 = vst.msk [vmem:[#allocation3] sm:$0xf] %vm3784, %v3782
    %v3787 = vrot.slane %v3777, 4
    %3788 = vrot.lane.b32.xlu0 %v3787, 96
    %v3789 = vpop.permute.xlu0 %3788
    %vm3791 = vcmask 1048324
    %3792 = vst.msk [vmem:[#allocation3] sm:$0xf0] %vm3791, %v3789
    %3794 = vrot.lane.b32.xlu0 %v3778, 96
    %v3795 = vpop.permute.xlu0 %3794
    %3797 = vst.msk [vmem:[#allocation3 + $0x18] sm:$0xf] %vm3784, %v3795
    %v3799 = vrot.slane %v3779, 4
    %3800 = vrot.lane.b32.xlu0 %v3799, 96
    %v3801 = vpop.permute.xlu0 %3800
    %3803 = vst.msk [vmem:[#allocation3 + $0x18] sm:$0xf0] %vm3791, %v3801
    %v3804 = vld [vmem:[#allocation2] sm:$0xf]
    %v3805 = vld [vmem:[#allocation2 + $0x8] sm:$0xf]
    %v3806 = vld [vmem:[#allocation2 + $0x18] sm:$0xf]
    %v3807 = vld [vmem:[#allocation2 + $0x20] sm:$0xf]
    %3808 = vst.msk [vmem:[#allocation3 + $0x8] sm:$0xf] %vm980, %v3804
    %v3810 = vrot.slane %v3805, 4
    %3812 = vst.msk [vmem:[#allocation3 + $0x8] sm:$0xf0] %vm3712, %v3810
    %3813 = vst.msk [vmem:[#allocation3 + $0x20] sm:$0xf] %vm980, %v3806
    %v3815 = vrot.slane %v3807, 4
    %3817 = vst.msk [vmem:[#allocation3 + $0x20] sm:$0xf0] %vm3712, %v3815
    %v3818 = vld [vmem:[%s1886 + $0x1] sm:$0xf]
    %v3819 = vld [vmem:[%s1886 + $0x9] sm:$0xf]
    %v3820 = vld [vmem:[%s1886 + $0x19] sm:$0xf]
    %v3821 = vld [vmem:[%s1886 + $0x21] sm:$0xf]
    %3823 = vrot.lane.b32.xlu0 %v3818, 32
    %v3824 = vpop.permute.xlu0 %3823
    %3826 = vst.msk [vmem:[#allocation3 + $0x8] sm:$0xf] %vm3728, %v3824
    %v3828 = vrot.slane %v3819, 4
    %3829 = vrot.lane.b32.xlu0 %v3828, 32
    %v3830 = vpop.permute.xlu0 %3829
    %3832 = vst.msk [vmem:[#allocation3 + $0x8] sm:$0xf0] %vm3735, %v3830
    %3834 = vrot.lane.b32.xlu0 %v3820, 32
    %v3835 = vpop.permute.xlu0 %3834
    %3837 = vst.msk [vmem:[#allocation3 + $0x20] sm:$0xf] %vm3728, %v3835
    %v3839 = vrot.slane %v3821, 4
    %3840 = vrot.lane.b32.xlu0 %v3839, 32
    %v3841 = vpop.permute.xlu0 %3840
    %3843 = vst.msk [vmem:[#allocation3 + $0x20] sm:$0xf0] %vm3735, %v3841
    %v3844 = vld [vmem:[%s3698] sm:$0xf]
    %v3845 = vld [vmem:[%s3698 + $0x8] sm:$0xf]
    %v3846 = vld [vmem:[%s3698 + $0x18] sm:$0xf]
    %v3847 = vld [vmem:[%s3698 + $0x20] sm:$0xf]
    %3849 = vrot.lane.b32.xlu0 %v3844, 64
    %v3850 = vpop.permute.xlu0 %3849
    %3852 = vst.msk [vmem:[#allocation3 + $0x8] sm:$0xf] %vm3756, %v3850
    %v3854 = vrot.slane %v3845, 4
    %3855 = vrot.lane.b32.xlu0 %v3854, 64
    %v3856 = vpop.permute.xlu0 %3855
    %3858 = vst.msk [vmem:[#allocation3 + $0x8] sm:$0xf0] %vm3763, %v3856
    %3860 = vrot.lane.b32.xlu0 %v3846, 64
    %v3861 = vpop.permute.xlu0 %3860
    %3863 = vst.msk [vmem:[#allocation3 + $0x20] sm:$0xf] %vm3756, %v3861
    %v3865 = vrot.slane %v3847, 4
    %3866 = vrot.lane.b32.xlu0 %v3865, 64
    %v3867 = vpop.permute.xlu0 %3866
    %3869 = vst.msk [vmem:[#allocation3 + $0x20] sm:$0xf0] %vm3763, %v3867
    %v3870 = vld [vmem:[%s2792] sm:$0xf]
    %v3871 = vld [vmem:[%s2792 + $0x8] sm:$0xf]
    %v3872 = vld [vmem:[%s2792 + $0x18] sm:$0xf]
    %v3873 = vld [vmem:[%s2792 + $0x20] sm:$0xf]
    %3875 = vrot.lane.b32.xlu0 %v3870, 96
    %v3876 = vpop.permute.xlu0 %3875
    %3878 = vst.msk [vmem:[#allocation3 + $0x8] sm:$0xf] %vm3784, %v3876
    %v3880 = vrot.slane %v3871, 4
    %3881 = vrot.lane.b32.xlu0 %v3880, 96
    %v3882 = vpop.permute.xlu0 %3881
    %3884 = vst.msk [vmem:[#allocation3 + $0x8] sm:$0xf0] %vm3791, %v3882
    %3886 = vrot.lane.b32.xlu0 %v3872, 96
    %v3887 = vpop.permute.xlu0 %3886
    %3889 = vst.msk [vmem:[#allocation3 + $0x20] sm:$0xf] %vm3784, %v3887
    %v3891 = vrot.slane %v3873, 4
    %3892 = vrot.lane.b32.xlu0 %v3891, 96
    %v3893 = vpop.permute.xlu0 %3892
    %3895 = vst.msk [vmem:[#allocation3 + $0x20] sm:$0xf0] %vm3791, %v3893
    %v3896 = vld [vmem:[%s3698 + $0x1] sm:$0xf]
    %v3897 = vld [vmem:[%s3698 + $0x9] sm:$0xf]
    %v3898 = vld [vmem:[%s3698 + $0x19] sm:$0xf]
    %v3899 = vld [vmem:[%s3698 + $0x21] sm:$0xf]
    %3900 = vst.msk [vmem:[#allocation3 + $0x10] sm:$0xf] %vm980, %v3896
    %v3902 = vrot.slane %v3897, 4
    %3904 = vst.msk [vmem:[#allocation3 + $0x10] sm:$0xf0] %vm3712, %v3902
    %3905 = vst.msk [vmem:[#allocation3 + $0x28] sm:$0xf] %vm980, %v3898
    %v3907 = vrot.slane %v3899, 4
    %3909 = vst.msk [vmem:[#allocation3 + $0x28] sm:$0xf0] %vm3712, %v3907
    %v3910 = vld [vmem:[%s3719] sm:$0xf]
    %v3911 = vld [vmem:[%s3719 + $0x8] sm:$0xf]
    %v3912 = vld [vmem:[%s3719 + $0x18] sm:$0xf]
    %v3913 = vld [vmem:[%s3719 + $0x20] sm:$0xf]
    %3914 = vst.msk [vmem:[#allocation3 + $0x30] sm:$0xf] %vm980, %v3910
    %v3916 = vrot.slane %v3911, 4
    %3918 = vst.msk [vmem:[#allocation3 + $0x30] sm:$0xf0] %vm3712, %v3916
    %3919 = vst.msk [vmem:[#allocation3 + $0x48] sm:$0xf] %vm980, %v3912
    %v3921 = vrot.slane %v3913, 4
    %3923 = vst.msk [vmem:[#allocation3 + $0x48] sm:$0xf0] %vm3712, %v3921
    %v3924 = vld [vmem:[%s3703 + $0x1] sm:$0xf]
    %v3925 = vld [vmem:[%s3703 + $0x9] sm:$0xf]
    %v3926 = vld [vmem:[%s3703 + $0x19] sm:$0xf]
    %v3927 = vld [vmem:[%s3703 + $0x21] sm:$0xf]
    %3929 = vrot.lane.b32.xlu0 %v3924, 32
    %v3930 = vpop.permute.xlu0 %3929
    %3932 = vst.msk [vmem:[#allocation3 + $0x30] sm:$0xf] %vm3728, %v3930
    %v3934 = vrot.slane %v3925, 4
    %3935 = vrot.lane.b32.xlu0 %v3934, 32
    %v3936 = vpop.permute.xlu0 %3935
    %3938 = vst.msk [vmem:[#allocation3 + $0x30] sm:$0xf0] %vm3735, %v3936
    %3940 = vrot.lane.b32.xlu0 %v3926, 32
    %v3941 = vpop.permute.xlu0 %3940
    %3943 = vst.msk [vmem:[#allocation3 + $0x48] sm:$0xf] %vm3728, %v3941
    %v3945 = vrot.slane %v3927, 4
    %3946 = vrot.lane.b32.xlu0 %v3945, 32
    %v3947 = vpop.permute.xlu0 %3946
    %3949 = vst.msk [vmem:[#allocation3 + $0x48] sm:$0xf0] %vm3735, %v3947
    %v3950 = vld [vmem:[%s3719 + $0x1] sm:$0xf]
    %v3951 = vld [vmem:[%s3719 + $0x9] sm:$0xf]
    %v3952 = vld [vmem:[%s3719 + $0x19] sm:$0xf]
    %v3953 = vld [vmem:[%s3719 + $0x21] sm:$0xf]
    %3955 = vrot.lane.b32.xlu0 %v3950, 64
    %v3956 = vpop.permute.xlu0 %3955
    %3958 = vst.msk [vmem:[#allocation3 + $0x30] sm:$0xf] %vm3756, %v3956
    %v3960 = vrot.slane %v3951, 4
    %3961 = vrot.lane.b32.xlu0 %v3960, 64
    %v3962 = vpop.permute.xlu0 %3961
    %3964 = vst.msk [vmem:[#allocation3 + $0x30] sm:$0xf0] %vm3763, %v3962
    %3966 = vrot.lane.b32.xlu0 %v3952, 64
    %v3967 = vpop.permute.xlu0 %3966
    %3969 = vst.msk [vmem:[#allocation3 + $0x48] sm:$0xf] %vm3756, %v3967
    %v3971 = vrot.slane %v3953, 4
    %3972 = vrot.lane.b32.xlu0 %v3971, 64
    %v3973 = vpop.permute.xlu0 %3972
    %3975 = vst.msk [vmem:[#allocation3 + $0x48] sm:$0xf0] %vm3763, %v3973
    %v3976 = vld [vmem:[#allocation2] sm:$0xf]
    %v3977 = vld [vmem:[#allocation2 + $0x8] sm:$0xf]
    %v3978 = vld [vmem:[#allocation2 + $0x18] sm:$0xf]
    %v3979 = vld [vmem:[#allocation2 + $0x20] sm:$0xf]
    %3981 = vrot.lane.b32.xlu0 %v3976, 96
    %v3982 = vpop.permute.xlu0 %3981
    %3984 = vst.msk [vmem:[#allocation3 + $0x30] sm:$0xf] %vm3784, %v3982
    %v3986 = vrot.slane %v3977, 4
    %3987 = vrot.lane.b32.xlu0 %v3986, 96
    %v3988 = vpop.permute.xlu0 %3987
    %3990 = vst.msk [vmem:[#allocation3 + $0x30] sm:$0xf0] %vm3791, %v3988
    %3992 = vrot.lane.b32.xlu0 %v3978, 96
    %v3993 = vpop.permute.xlu0 %3992
    %3995 = vst.msk [vmem:[#allocation3 + $0x48] sm:$0xf] %vm3784, %v3993
    %v3997 = vrot.slane %v3979, 4
    %3998 = vrot.lane.b32.xlu0 %v3997, 96
    %v3999 = vpop.permute.xlu0 %3998
    %4001 = vst.msk [vmem:[#allocation3 + $0x48] sm:$0xf0] %vm3791, %v3999
    %v4002 = vld [vmem:[%s1886 + $0x1] sm:$0xf]
    %v4003 = vld [vmem:[%s1886 + $0x9] sm:$0xf]
    %v4004 = vld [vmem:[%s1886 + $0x19] sm:$0xf]
    %v4005 = vld [vmem:[%s1886 + $0x21] sm:$0xf]
    %4006 = vst.msk [vmem:[#allocation3 + $0x38] sm:$0xf] %vm980, %v4002
    %v4008 = vrot.slane %v4003, 4
    %4010 = vst.msk [vmem:[#allocation3 + $0x38] sm:$0xf0] %vm3712, %v4008
    %4011 = vst.msk [vmem:[#allocation3 + $0x50] sm:$0xf] %vm980, %v4004
    %v4013 = vrot.slane %v4005, 4
    %4015 = vst.msk [vmem:[#allocation3 + $0x50] sm:$0xf0] %vm3712, %v4013
    %v4016 = vld [vmem:[#allocation2 + $0x1] sm:$0xf]
    %v4017 = vld [vmem:[#allocation2 + $0x9] sm:$0xf]
    %v4018 = vld [vmem:[#allocation2 + $0x19] sm:$0xf]
    %v4019 = vld [vmem:[#allocation2 + $0x21] sm:$0xf]
    %4021 = vrot.lane.b32.xlu0 %v4016, 32
    %v4022 = vpop.permute.xlu0 %4021
    %4024 = vst.msk [vmem:[#allocation3 + $0x38] sm:$0xf] %vm3728, %v4022
    %v4026 = vrot.slane %v4017, 4
    %4027 = vrot.lane.b32.xlu0 %v4026, 32
    %v4028 = vpop.permute.xlu0 %4027
    %4030 = vst.msk [vmem:[#allocation3 + $0x38] sm:$0xf0] %vm3735, %v4028
    %4032 = vrot.lane.b32.xlu0 %v4018, 32
    %v4033 = vpop.permute.xlu0 %4032
    %4035 = vst.msk [vmem:[#allocation3 + $0x50] sm:$0xf] %vm3728, %v4033
    %v4037 = vrot.slane %v4019, 4
    %4038 = vrot.lane.b32.xlu0 %v4037, 32
    %v4039 = vpop.permute.xlu0 %4038
    %4041 = vst.msk [vmem:[#allocation3 + $0x50] sm:$0xf0] %vm3735, %v4039
    %v4042 = vld [vmem:[%s2792] sm:$0xf]
    %v4043 = vld [vmem:[%s2792 + $0x8] sm:$0xf]
    %v4044 = vld [vmem:[%s2792 + $0x18] sm:$0xf]
    %v4045 = vld [vmem:[%s2792 + $0x20] sm:$0xf]
    %4047 = vrot.lane.b32.xlu0 %v4042, 64
    %v4048 = vpop.permute.xlu0 %4047
    %4050 = vst.msk [vmem:[#allocation3 + $0x38] sm:$0xf] %vm3756, %v4048
    %v4052 = vrot.slane %v4043, 4
    %4053 = vrot.lane.b32.xlu0 %v4052, 64
    %v4054 = vpop.permute.xlu0 %4053
    %4056 = vst.msk [vmem:[#allocation3 + $0x38] sm:$0xf0] %vm3763, %v4054
    %4058 = vrot.lane.b32.xlu0 %v4044, 64
    %v4059 = vpop.permute.xlu0 %4058
    %4061 = vst.msk [vmem:[#allocation3 + $0x50] sm:$0xf] %vm3756, %v4059
    %v4063 = vrot.slane %v4045, 4
    %4064 = vrot.lane.b32.xlu0 %v4063, 64
    %v4065 = vpop.permute.xlu0 %4064
    %4067 = vst.msk [vmem:[#allocation3 + $0x50] sm:$0xf0] %vm3763, %v4065
    %v4068 = vld [vmem:[%s3698 + $0x1] sm:$0xf]
    %v4069 = vld [vmem:[%s3698 + $0x9] sm:$0xf]
    %v4070 = vld [vmem:[%s3698 + $0x19] sm:$0xf]
    %v4071 = vld [vmem:[%s3698 + $0x21] sm:$0xf]
    %4073 = vrot.lane.b32.xlu0 %v4068, 96
    %v4074 = vpop.permute.xlu0 %4073
    %4076 = vst.msk [vmem:[#allocation3 + $0x38] sm:$0xf] %vm3784, %v4074
    %v4078 = vrot.slane %v4069, 4
    %4079 = vrot.lane.b32.xlu0 %v4078, 96
    %v4080 = vpop.permute.xlu0 %4079
    %4082 = vst.msk [vmem:[#allocation3 + $0x38] sm:$0xf0] %vm3791, %v4080
    %4084 = vrot.lane.b32.xlu0 %v4070, 96
    %v4085 = vpop.permute.xlu0 %4084
    %4087 = vst.msk [vmem:[#allocation3 + $0x50] sm:$0xf] %vm3784, %v4085
    %v4089 = vrot.slane %v4071, 4
    %4090 = vrot.lane.b32.xlu0 %v4089, 96
    %v4091 = vpop.permute.xlu0 %4090
    %4093 = vst.msk [vmem:[#allocation3 + $0x50] sm:$0xf0] %vm3791, %v4091
    %v4094 = vld [vmem:[%s2792 + $0x1] sm:$0xf]
    %v4095 = vld [vmem:[%s2792 + $0x9] sm:$0xf]
    %v4096 = vld [vmem:[%s2792 + $0x19] sm:$0xf]
    %v4097 = vld [vmem:[%s2792 + $0x21] sm:$0xf]
    %4098 = vst.msk [vmem:[#allocation3 + $0x40] sm:$0xf] %vm980, %v4094
    %v4100 = vrot.slane %v4095, 4
    %4102 = vst.msk [vmem:[#allocation3 + $0x40] sm:$0xf0] %vm3712, %v4100
    %4103 = vst.msk [vmem:[#allocation3 + $0x58] sm:$0xf] %vm980, %v4096
    %v4105 = vrot.slane %v4097, 4
    %4107 = vst.msk [vmem:[#allocation3 + $0x58] sm:$0xf0] %vm3712, %v4105
    %v4108 = vld [vmem:[%s1886] sm:$0xf]
    %v4109 = vld [vmem:[%s1886 + $0x8] sm:$0xf]
    %v4110 = vld [vmem:[%s1886 + $0x18] sm:$0xf]
    %v4111 = vld [vmem:[%s1886 + $0x20] sm:$0xf]
    %4112 = vst.msk [vmem:[#allocation3 + $0x60] sm:$0xf] %vm980, %v4108
    %v4114 = vrot.slane %v4109, 4
    %4116 = vst.msk [vmem:[#allocation3 + $0x60] sm:$0xf0] %vm3712, %v4114
    %4117 = vst.msk [vmem:[#allocation3 + $0x78] sm:$0xf] %vm980, %v4110
    %v4119 = vrot.slane %v4111, 4
    %4121 = vst.msk [vmem:[#allocation3 + $0x78] sm:$0xf0] %vm3712, %v4119
    %v4122 = vld [vmem:[#allocation2] sm:$0xf]
    %v4123 = vld [vmem:[#allocation2 + $0x8] sm:$0xf]
    %v4124 = vld [vmem:[#allocation2 + $0x18] sm:$0xf]
    %v4125 = vld [vmem:[#allocation2 + $0x20] sm:$0xf]
    %4127 = vrot.lane.b32.xlu0 %v4122, 32
    %v4128 = vpop.permute.xlu0 %4127
    %4130 = vst.msk [vmem:[#allocation3 + $0x60] sm:$0xf] %vm3728, %v4128
    %v4132 = vrot.slane %v4123, 4
    %4133 = vrot.lane.b32.xlu0 %v4132, 32
    %v4134 = vpop.permute.xlu0 %4133
    %4136 = vst.msk [vmem:[#allocation3 + $0x60] sm:$0xf0] %vm3735, %v4134
    %4138 = vrot.lane.b32.xlu0 %v4124, 32
    %v4139 = vpop.permute.xlu0 %4138
    %4141 = vst.msk [vmem:[#allocation3 + $0x78] sm:$0xf] %vm3728, %v4139
    %v4143 = vrot.slane %v4125, 4
    %4144 = vrot.lane.b32.xlu0 %v4143, 32
    %v4145 = vpop.permute.xlu0 %4144
    %4147 = vst.msk [vmem:[#allocation3 + $0x78] sm:$0xf0] %vm3735, %v4145
    %v4148 = vld [vmem:[%s1886 + $0x1] sm:$0xf]
    %v4149 = vld [vmem:[%s1886 + $0x9] sm:$0xf]
    %v4150 = vld [vmem:[%s1886 + $0x19] sm:$0xf]
    %v4151 = vld [vmem:[%s1886 + $0x21] sm:$0xf]
    %4153 = vrot.lane.b32.xlu0 %v4148, 64
    %v4154 = vpop.permute.xlu0 %4153
    %4156 = vst.msk [vmem:[#allocation3 + $0x60] sm:$0xf] %vm3756, %v4154
    %v4158 = vrot.slane %v4149, 4
    %4159 = vrot.lane.b32.xlu0 %v4158, 64
    %v4160 = vpop.permute.xlu0 %4159
    %4162 = vst.msk [vmem:[#allocation3 + $0x60] sm:$0xf0] %vm3763, %v4160
    %4164 = vrot.lane.b32.xlu0 %v4150, 64
    %v4165 = vpop.permute.xlu0 %4164
    %4167 = vst.msk [vmem:[#allocation3 + $0x78] sm:$0xf] %vm3756, %v4165
    %v4169 = vrot.slane %v4151, 4
    %4170 = vrot.lane.b32.xlu0 %v4169, 64
    %v4171 = vpop.permute.xlu0 %4170
    %4173 = vst.msk [vmem:[#allocation3 + $0x78] sm:$0xf0] %vm3763, %v4171
    %v4174 = vld [vmem:[%s3698] sm:$0xf]
    %v4175 = vld [vmem:[%s3698 + $0x8] sm:$0xf]
    %v4176 = vld [vmem:[%s3698 + $0x18] sm:$0xf]
    %v4177 = vld [vmem:[%s3698 + $0x20] sm:$0xf]
    %4179 = vrot.lane.b32.xlu0 %v4174, 96
    %v4180 = vpop.permute.xlu0 %4179
    %4182 = vst.msk [vmem:[#allocation3 + $0x60] sm:$0xf] %vm3784, %v4180
    %v4184 = vrot.slane %v4175, 4
    %4185 = vrot.lane.b32.xlu0 %v4184, 96
    %v4186 = vpop.permute.xlu0 %4185
    %4188 = vst.msk [vmem:[#allocation3 + $0x60] sm:$0xf0] %vm3791, %v4186
    %4190 = vrot.lane.b32.xlu0 %v4176, 96
    %v4191 = vpop.permute.xlu0 %4190
    %4193 = vst.msk [vmem:[#allocation3 + $0x78] sm:$0xf] %vm3784, %v4191
    %v4195 = vrot.slane %v4177, 4
    %4196 = vrot.lane.b32.xlu0 %v4195, 96
    %v4197 = vpop.permute.xlu0 %4196
    %4199 = vst.msk [vmem:[#allocation3 + $0x78] sm:$0xf0] %vm3791, %v4197
    %v4200 = vld [vmem:[%s2792] sm:$0xf]
    %v4201 = vld [vmem:[%s2792 + $0x8] sm:$0xf]
    %v4202 = vld [vmem:[%s2792 + $0x18] sm:$0xf]
    %v4203 = vld [vmem:[%s2792 + $0x20] sm:$0xf]
    %4204 = vst.msk [vmem:[#allocation3 + $0x68] sm:$0xf] %vm980, %v4200
    %v4206 = vrot.slane %v4201, 4
    %4208 = vst.msk [vmem:[#allocation3 + $0x68] sm:$0xf0] %vm3712, %v4206
    %4209 = vst.msk [vmem:[#allocation3 + $0x80] sm:$0xf] %vm980, %v4202
    %v4211 = vrot.slane %v4203, 4
    %4213 = vst.msk [vmem:[#allocation3 + $0x80] sm:$0xf0] %vm3712, %v4211
    %v4214 = vld [vmem:[%s3698 + $0x1] sm:$0xf]
    %v4215 = vld [vmem:[%s3698 + $0x9] sm:$0xf]
    %v4216 = vld [vmem:[%s3698 + $0x19] sm:$0xf]
    %v4217 = vld [vmem:[%s3698 + $0x21] sm:$0xf]
    %4219 = vrot.lane.b32.xlu0 %v4214, 32
    %v4220 = vpop.permute.xlu0 %4219
    %4222 = vst.msk [vmem:[#allocation3 + $0x68] sm:$0xf] %vm3728, %v4220
    %v4224 = vrot.slane %v4215, 4
    %4225 = vrot.lane.b32.xlu0 %v4224, 32
    %v4226 = vpop.permute.xlu0 %4225
    %4228 = vst.msk [vmem:[#allocation3 + $0x68] sm:$0xf0] %vm3735, %v4226
    %4230 = vrot.lane.b32.xlu0 %v4216, 32
    %v4231 = vpop.permute.xlu0 %4230
    %4233 = vst.msk [vmem:[#allocation3 + $0x80] sm:$0xf] %vm3728, %v4231
    %v4235 = vrot.slane %v4217, 4
    %4236 = vrot.lane.b32.xlu0 %v4235, 32
    %v4237 = vpop.permute.xlu0 %4236
    %4239 = vst.msk [vmem:[#allocation3 + $0x80] sm:$0xf0] %vm3735, %v4237
    %s4240 = scalar_lea.vmem [#allocation2], 56
    %v4241 = vld [vmem:[%s4240] sm:$0xf]
    %v4242 = vld [vmem:[%s4240 + $0x8] sm:$0xf]
    %v4243 = vld [vmem:[%s4240 + $0x18] sm:$0xf]
    %v4244 = vld [vmem:[%s4240 + $0x20] sm:$0xf]
    %4246 = vrot.lane.b32.xlu0 %v4241, 64
    %v4247 = vpop.permute.xlu0 %4246
    %4249 = vst.msk [vmem:[#allocation3 + $0x68] sm:$0xf] %vm3756, %v4247
    %v4251 = vrot.slane %v4242, 4
    %4252 = vrot.lane.b32.xlu0 %v4251, 64
    %v4253 = vpop.permute.xlu0 %4252
    %4255 = vst.msk [vmem:[#allocation3 + $0x68] sm:$0xf0] %vm3763, %v4253
    %4257 = vrot.lane.b32.xlu0 %v4243, 64
    %v4258 = vpop.permute.xlu0 %4257
    %4260 = vst.msk [vmem:[#allocation3 + $0x80] sm:$0xf] %vm3756, %v4258
    %v4262 = vrot.slane %v4244, 4
    %4263 = vrot.lane.b32.xlu0 %v4262, 64
    %v4264 = vpop.permute.xlu0 %4263
    %4266 = vst.msk [vmem:[#allocation3 + $0x80] sm:$0xf0] %vm3763, %v4264
    %s4267 = scalar_lea.vmem [#allocation2], 8
    %v4268 = vld [vmem:[%s4267] sm:$0xf]
    %v4269 = vld [vmem:[%s4267 + $0x8] sm:$0xf]
    %v4270 = vld [vmem:[%s4267 + $0x18] sm:$0xf]
    %v4271 = vld [vmem:[%s4267 + $0x20] sm:$0xf]
    %4273 = vrot.lane.b32.xlu0 %v4268, 96
    %v4274 = vpop.permute.xlu0 %4273
    %4276 = vst.msk [vmem:[#allocation3 + $0x68] sm:$0xf] %vm3784, %v4274
    %v4278 = vrot.slane %v4269, 4
    %4279 = vrot.lane.b32.xlu0 %v4278, 96
    %v4280 = vpop.permute.xlu0 %4279
    %4282 = vst.msk [vmem:[#allocation3 + $0x68] sm:$0xf0] %vm3791, %v4280
    %4284 = vrot.lane.b32.xlu0 %v4270, 96
    %v4285 = vpop.permute.xlu0 %4284
    %4287 = vst.msk [vmem:[#allocation3 + $0x80] sm:$0xf] %vm3784, %v4285
    %v4289 = vrot.slane %v4271, 4
    %4290 = vrot.lane.b32.xlu0 %v4289, 96
    %v4291 = vpop.permute.xlu0 %4290
    %4293 = vst.msk [vmem:[#allocation3 + $0x80] sm:$0xf0] %vm3791, %v4291
    %v4294 = vld [vmem:[%s4240 + $0x1] sm:$0xf]
    %v4295 = vld [vmem:[%s4240 + $0x9] sm:$0xf]
    %v4296 = vld [vmem:[%s4240 + $0x19] sm:$0xf]
    %v4297 = vld [vmem:[%s4240 + $0x21] sm:$0xf]
    %4298 = vst.msk [vmem:[#allocation3 + $0x70] sm:$0xf] %vm980, %v4294
    %v4300 = vrot.slane %v4295, 4
    %4302 = vst.msk [vmem:[#allocation3 + $0x70] sm:$0xf0] %vm3712, %v4300
    %4303 = vst.msk [vmem:[#allocation3 + $0x88] sm:$0xf] %vm980, %v4296
    %v4305 = vrot.slane %v4297, 4
    %4307 = vst.msk [vmem:[#allocation3 + $0x88] sm:$0xf0] %vm3712, %v4305
    %v4308 = vld [vmem:[#allocation2] sm:$0xf]
    %v4309 = vld [vmem:[#allocation2 + $0x8] sm:$0xf]
    %v4310 = vld [vmem:[#allocation2 + $0x18] sm:$0xf]
    %v4311 = vld [vmem:[#allocation2 + $0x20] sm:$0xf]
    %4312 = vst.msk [vmem:[#allocation3 + $0x90] sm:$0xf] %vm980, %v4308
    %v4314 = vrot.slane %v4309, 4
    %4316 = vst.msk [vmem:[#allocation3 + $0x90] sm:$0xf0] %vm3712, %v4314
    %4317 = vst.msk [vmem:[#allocation3 + $0xa8] sm:$0xf] %vm980, %v4310
    %v4319 = vrot.slane %v4311, 4
    %4321 = vst.msk [vmem:[#allocation3 + $0xa8] sm:$0xf0] %vm3712, %v4319
    %v4322 = vld [vmem:[%s1886 + $0x1] sm:$0xf]
    %v4323 = vld [vmem:[%s1886 + $0x9] sm:$0xf]
    %v4324 = vld [vmem:[%s1886 + $0x19] sm:$0xf]
    %v4325 = vld [vmem:[%s1886 + $0x21] sm:$0xf]
    %4327 = vrot.lane.b32.xlu0 %v4322, 32
    %v4328 = vpop.permute.xlu0 %4327
    %4330 = vst.msk [vmem:[#allocation3 + $0x90] sm:$0xf] %vm3728, %v4328
    %v4332 = vrot.slane %v4323, 4
    %4333 = vrot.lane.b32.xlu0 %v4332, 32
    %v4334 = vpop.permute.xlu0 %4333
    %4336 = vst.msk [vmem:[#allocation3 + $0x90] sm:$0xf0] %vm3735, %v4334
    %4338 = vrot.lane.b32.xlu0 %v4324, 32
    %v4339 = vpop.permute.xlu0 %4338
    %4341 = vst.msk [vmem:[#allocation3 + $0xa8] sm:$0xf] %vm3728, %v4339
    %v4343 = vrot.slane %v4325, 4
    %4344 = vrot.lane.b32.xlu0 %v4343, 32
    %v4345 = vpop.permute.xlu0 %4344
    %4347 = vst.msk [vmem:[#allocation3 + $0xa8] sm:$0xf0] %vm3735, %v4345
    %v4348 = vld [vmem:[#allocation2 + $0x1] sm:$0xf]
    %v4349 = vld [vmem:[#allocation2 + $0x9] sm:$0xf]
    %v4350 = vld [vmem:[#allocation2 + $0x19] sm:$0xf]
    %v4351 = vld [vmem:[#allocation2 + $0x21] sm:$0xf]
    %4353 = vrot.lane.b32.xlu0 %v4348, 64
    %v4354 = vpop.permute.xlu0 %4353
    %4356 = vst.msk [vmem:[#allocation3 + $0x90] sm:$0xf] %vm3756, %v4354
    %v4358 = vrot.slane %v4349, 4
    %4359 = vrot.lane.b32.xlu0 %v4358, 64
    %v4360 = vpop.permute.xlu0 %4359
    %4362 = vst.msk [vmem:[#allocation3 + $0x90] sm:$0xf0] %vm3763, %v4360
    %4364 = vrot.lane.b32.xlu0 %v4350, 64
    %v4365 = vpop.permute.xlu0 %4364
    %4367 = vst.msk [vmem:[#allocation3 + $0xa8] sm:$0xf] %vm3756, %v4365
    %v4369 = vrot.slane %v4351, 4
    %4370 = vrot.lane.b32.xlu0 %v4369, 64
    %v4371 = vpop.permute.xlu0 %4370
    %4373 = vst.msk [vmem:[#allocation3 + $0xa8] sm:$0xf0] %vm3763, %v4371
    %v4374 = vld [vmem:[%s2792] sm:$0xf]
    %v4375 = vld [vmem:[%s2792 + $0x8] sm:$0xf]
    %v4376 = vld [vmem:[%s2792 + $0x18] sm:$0xf]
    %v4377 = vld [vmem:[%s2792 + $0x20] sm:$0xf]
    %4379 = vrot.lane.b32.xlu0 %v4374, 96
    %v4380 = vpop.permute.xlu0 %4379
    %4382 = vst.msk [vmem:[#allocation3 + $0x90] sm:$0xf] %vm3784, %v4380
    %v4384 = vrot.slane %v4375, 4
    %4385 = vrot.lane.b32.xlu0 %v4384, 96
    %v4386 = vpop.permute.xlu0 %4385
    %4388 = vst.msk [vmem:[#allocation3 + $0x90] sm:$0xf0] %vm3791, %v4386
    %4390 = vrot.lane.b32.xlu0 %v4376, 96
    %v4391 = vpop.permute.xlu0 %4390
    %4393 = vst.msk [vmem:[#allocation3 + $0xa8] sm:$0xf] %vm3784, %v4391
    %v4395 = vrot.slane %v4377, 4
    %4396 = vrot.lane.b32.xlu0 %v4395, 96
    %v4397 = vpop.permute.xlu0 %4396
    %4399 = vst.msk [vmem:[#allocation3 + $0xa8] sm:$0xf0] %vm3791, %v4397
    %v4400 = vld [vmem:[%s3698 + $0x1] sm:$0xf]
    %v4401 = vld [vmem:[%s3698 + $0x9] sm:$0xf]
    %v4402 = vld [vmem:[%s3698 + $0x19] sm:$0xf]
    %v4403 = vld [vmem:[%s3698 + $0x21] sm:$0xf]
    %4404 = vst.msk [vmem:[#allocation3 + $0x98] sm:$0xf] %vm980, %v4400
    %v4406 = vrot.slane %v4401, 4
    %4408 = vst.msk [vmem:[#allocation3 + $0x98] sm:$0xf0] %vm3712, %v4406
    %4409 = vst.msk [vmem:[#allocation3 + $0xb0] sm:$0xf] %vm980, %v4402
    %v4411 = vrot.slane %v4403, 4
    %4413 = vst.msk [vmem:[#allocation3 + $0xb0] sm:$0xf0] %vm3712, %v4411
    %v4414 = vld [vmem:[%s2792 + $0x1] sm:$0xf]
    %v4415 = vld [vmem:[%s2792 + $0x9] sm:$0xf]
    %v4416 = vld [vmem:[%s2792 + $0x19] sm:$0xf]
    %v4417 = vld [vmem:[%s2792 + $0x21] sm:$0xf]
    %4419 = vrot.lane.b32.xlu0 %v4414, 32
    %v4420 = vpop.permute.xlu0 %4419
    %4422 = vst.msk [vmem:[#allocation3 + $0x98] sm:$0xf] %vm3728, %v4420
    %v4424 = vrot.slane %v4415, 4
    %4425 = vrot.lane.b32.xlu0 %v4424, 32
    %v4426 = vpop.permute.xlu0 %4425
    %4428 = vst.msk [vmem:[#allocation3 + $0x98] sm:$0xf0] %vm3735, %v4426
    %4430 = vrot.lane.b32.xlu0 %v4416, 32
    %v4431 = vpop.permute.xlu0 %4430
    %4433 = vst.msk [vmem:[#allocation3 + $0xb0] sm:$0xf] %vm3728, %v4431
    %v4435 = vrot.slane %v4417, 4
    %4436 = vrot.lane.b32.xlu0 %v4435, 32
    %v4437 = vpop.permute.xlu0 %4436
    %4439 = vst.msk [vmem:[#allocation3 + $0xb0] sm:$0xf0] %vm3735, %v4437
    %v4440 = vld [vmem:[%s4267] sm:$0xf]
    %v4441 = vld [vmem:[%s4267 + $0x8] sm:$0xf]
    %v4442 = vld [vmem:[%s4267 + $0x18] sm:$0xf]
    %v4443 = vld [vmem:[%s4267 + $0x20] sm:$0xf]
    %4445 = vrot.lane.b32.xlu0 %v4440, 64
    %v4446 = vpop.permute.xlu0 %4445
    %4448 = vst.msk [vmem:[#allocation3 + $0x98] sm:$0xf] %vm3756, %v4446
    %v4450 = vrot.slane %v4441, 4
    %4451 = vrot.lane.b32.xlu0 %v4450, 64
    %v4452 = vpop.permute.xlu0 %4451
    %4454 = vst.msk [vmem:[#allocation3 + $0x98] sm:$0xf0] %vm3763, %v4452
    %4456 = vrot.lane.b32.xlu0 %v4442, 64
    %v4457 = vpop.permute.xlu0 %4456
    %4459 = vst.msk [vmem:[#allocation3 + $0xb0] sm:$0xf] %vm3756, %v4457
    %v4461 = vrot.slane %v4443, 4
    %4462 = vrot.lane.b32.xlu0 %v4461, 64
    %v4463 = vpop.permute.xlu0 %4462
    %4465 = vst.msk [vmem:[#allocation3 + $0xb0] sm:$0xf0] %vm3763, %v4463
    %v4466 = vld [vmem:[%s4240 + $0x1] sm:$0xf]
    %v4467 = vld [vmem:[%s4240 + $0x9] sm:$0xf]
    %v4468 = vld [vmem:[%s4240 + $0x19] sm:$0xf]
    %v4469 = vld [vmem:[%s4240 + $0x21] sm:$0xf]
    %4471 = vrot.lane.b32.xlu0 %v4466, 96
    %v4472 = vpop.permute.xlu0 %4471
    %4474 = vst.msk [vmem:[#allocation3 + $0x98] sm:$0xf] %vm3784, %v4472
    %v4476 = vrot.slane %v4467, 4
    %4477 = vrot.lane.b32.xlu0 %v4476, 96
    %v4478 = vpop.permute.xlu0 %4477
    %4480 = vst.msk [vmem:[#allocation3 + $0x98] sm:$0xf0] %vm3791, %v4478
    %4482 = vrot.lane.b32.xlu0 %v4468, 96
    %v4483 = vpop.permute.xlu0 %4482
    %4485 = vst.msk [vmem:[#allocation3 + $0xb0] sm:$0xf] %vm3784, %v4483
    %v4487 = vrot.slane %v4469, 4
    %4488 = vrot.lane.b32.xlu0 %v4487, 96
    %v4489 = vpop.permute.xlu0 %4488
    %4491 = vst.msk [vmem:[#allocation3 + $0xb0] sm:$0xf0] %vm3791, %v4489
    %v4492 = vld [vmem:[%s4267 + $0x1] sm:$0xf]
    %v4493 = vld [vmem:[%s4267 + $0x9] sm:$0xf]
    %v4494 = vld [vmem:[%s4267 + $0x19] sm:$0xf]
    %v4495 = vld [vmem:[%s4267 + $0x21] sm:$0xf]
    %4496 = vst.msk [vmem:[#allocation3 + $0xa0] sm:$0xf] %vm980, %v4492
    %v4498 = vrot.slane %v4493, 4
    %4500 = vst.msk [vmem:[#allocation3 + $0xa0] sm:$0xf0] %vm3712, %v4498
    %4501 = vst.msk [vmem:[#allocation3 + $0xb8] sm:$0xf] %vm980, %v4494
    %v4503 = vrot.slane %v4495, 4
    %4505 = vst.msk [vmem:[#allocation3 + $0xb8] sm:$0xf0] %vm3712, %v4503
    %v4506 = vld [vmem:[#allocation3] sm:$0xff]
    %v4507 = vld [vmem:[#allocation3 + $0x8] sm:$0xff]
    %v4508 = vld [vmem:[#allocation3 + $0x10] sm:$0xff]
    %v4509 = vld [vmem:[#allocation3 + $0x18] sm:$0xff]
    %v4510 = vld [vmem:[#allocation3 + $0x20] sm:$0xff]
    %v4511 = vld [vmem:[#allocation3 + $0x28] sm:$0xff]
    %v4512 = vld [vmem:[#allocation3 + $0x30] sm:$0xff]
    %v4513 = vld [vmem:[#allocation3 + $0x38] sm:$0xff]
    %v4514 = vld [vmem:[#allocation3 + $0x40] sm:$0xff]
    %v4515 = vld [vmem:[#allocation3 + $0x48] sm:$0xff]
    %v4516 = vld [vmem:[#allocation3 + $0x50] sm:$0xff]
    %v4517 = vld [vmem:[#allocation3 + $0x58] sm:$0xff]
    %v4518 = vld [vmem:[#allocation3 + $0x60] sm:$0xff]
    %v4519 = vld [vmem:[#allocation3 + $0x68] sm:$0xff]
    %v4520 = vld [vmem:[#allocation3 + $0x70] sm:$0xff]
    %v4521 = vld [vmem:[#allocation3 + $0x78] sm:$0xff]
    %v4522 = vld [vmem:[#allocation3 + $0x80] sm:$0xff]
    %v4523 = vld [vmem:[#allocation3 + $0x88] sm:$0xff]
    %v4524 = vld [vmem:[#allocation3 + $0x90] sm:$0xff]
    %v4525 = vld [vmem:[#allocation3 + $0x98] sm:$0xff]
    %v4526 = vld [vmem:[#allocation3 + $0xa0] sm:$0xff]
    %v4527 = vld [vmem:[#allocation3 + $0xa8] sm:$0xff]
    %v4528 = vld [vmem:[#allocation3 + $0xb0] sm:$0xff]
    %v4529 = vld [vmem:[#allocation3 + $0xb8] sm:$0xff]
    %v4530 = vpack.c.bf16 %v4509, %v4506
    %v4531 = vpack.c.bf16 %v4510, %v4507
    %v4532 = vpack.c.bf16 %v4511, %v4508
    %v4533 = vpack.c.bf16 %v4515, %v4512
    %v4534 = vpack.c.bf16 %v4516, %v4513
    %v4535 = vpack.c.bf16 %v4517, %v4514
    %v4536 = vpack.c.bf16 %v4521, %v4518
    %v4537 = vpack.c.bf16 %v4522, %v4519
    %v4538 = vpack.c.bf16 %v4523, %v4520
    %v4539 = vpack.c.bf16 %v4527, %v4524
    %v4540 = vpack.c.bf16 %v4528, %v4525
    %v4541 = vpack.c.bf16 %v4529, %v4526
    %v4542 = vld [vmem:[%s3] sm:$0xf]
    %v4543 = vld [vmem:[%s3 + $0x4] sm:$0xf]
    %v4544 = vld [vmem:[%s3 + $0x8] sm:$0xf]
    %v4545 = vld [vmem:[%s3 + $0xc] sm:$0xf]
    %v4546 = vld [vmem:[%s3 + $0x10] sm:$0xf]
    %v4547 = vld [vmem:[%s3 + $0x14] sm:$0xf]
    %v4548 = vld [vmem:[%s3 + $0x18] sm:$0xf]
    %v4549 = vld [vmem:[%s3 + $0x1c] sm:$0xf]
    %v4550 = vld [vmem:[%s3 + $0x20] sm:$0xf]
    %v4551 = vld [vmem:[%s3 + $0x24] sm:$0xf]
    %v4552 = vld [vmem:[%s3 + $0x28] sm:$0xf]
    %v4553 = vld [vmem:[%s3 + $0x2c] sm:$0xf]
    %v4554 = vld [vmem:[%s3 + $0x30] sm:$0xf]
    %v4555 = vld [vmem:[%s3 + $0x34] sm:$0xf]
    %v4556 = vld [vmem:[%s3 + $0x38] sm:$0xf]
    %v4557 = vld [vmem:[%s3 + $0x3c] sm:$0xf]
    %v4558 = vld [vmem:[%s3 + $0x40] sm:$0xf]
    %v4559 = vld [vmem:[%s3 + $0x44] sm:$0xf]
    %v4560 = vld [vmem:[%s3 + $0x48] sm:$0xf]
    %v4561 = vld [vmem:[%s3 + $0x4c] sm:$0xf]
    %v4562 = vld [vmem:[%s3 + $0x50] sm:$0xf]
    %v4563 = vld [vmem:[%s3 + $0x54] sm:$0xf]
    %v4564 = vld [vmem:[%s3 + $0x58] sm:$0xf]
    %v4565 = vld [vmem:[%s3 + $0x5c] sm:$0xf]
    %v4566 = vld [vmem:[%s3 + $0x60] sm:$0xf]
    %v4567 = vld [vmem:[%s3 + $0x64] sm:$0xf]
    %v4568 = vld [vmem:[%s3 + $0x68] sm:$0xf]
    %v4569 = vld [vmem:[%s3 + $0x6c] sm:$0xf]
    %v4570 = vld [vmem:[%s3 + $0x70] sm:$0xf]
    %v4571 = vld [vmem:[%s3 + $0x74] sm:$0xf]
    %v4572 = vld [vmem:[%s3 + $0x78] sm:$0xf]
    %v4573 = vld [vmem:[%s3 + $0x7c] sm:$0xf]
    %v4574 = vld [vmem:[%s3 + $0x80] sm:$0xf]
    %v4575 = vld [vmem:[%s3 + $0x84] sm:$0xf]
    %v4576 = vld [vmem:[%s3 + $0x88] sm:$0xf]
    %v4577 = vld [vmem:[%s3 + $0x8c] sm:$0xf]
    %v4614 = vunpack.c.l.b16 %v4542
    %v4615 = vunpack.c.l.b16 %v4543
    %v4616 = vunpack.c.l.b16 %v4544
    %v4617 = vunpack.c.l.b16 %v4545
    %v4618 = vunpack.c.l.b16 %v4546
    %v4619 = vunpack.c.l.b16 %v4547
    %v4620 = vunpack.c.l.b16 %v4548
    %v4621 = vunpack.c.l.b16 %v4549
    %v4622 = vunpack.c.l.b16 %v4550
    %v4623 = vunpack.c.l.b16 %v4551
    %v4624 = vunpack.c.l.b16 %v4552
    %v4625 = vunpack.c.l.b16 %v4553
    %v4626 = vunpack.c.l.b16 %v4554
    %v4627 = vunpack.c.l.b16 %v4555
    %v4628 = vunpack.c.l.b16 %v4556
    %v4629 = vunpack.c.l.b16 %v4557
    %v4630 = vunpack.c.l.b16 %v4558
    %v4631 = vunpack.c.l.b16 %v4559
    %v4632 = vunpack.c.l.b16 %v4560
    %v4633 = vunpack.c.l.b16 %v4561
    %v4634 = vunpack.c.l.b16 %v4562
    %v4635 = vunpack.c.l.b16 %v4563
    %v4636 = vunpack.c.l.b16 %v4564
    %v4637 = vunpack.c.l.b16 %v4565
    %v4638 = vunpack.c.l.b16 %v4566
    %v4639 = vunpack.c.l.b16 %v4567
    %v4640 = vunpack.c.l.b16 %v4568
    %v4641 = vunpack.c.l.b16 %v4569
    %v4642 = vunpack.c.l.b16 %v4570
    %v4643 = vunpack.c.l.b16 %v4571
    %v4644 = vunpack.c.l.b16 %v4572
    %v4645 = vunpack.c.l.b16 %v4573
    %v4646 = vunpack.c.l.b16 %v4574
    %v4647 = vunpack.c.l.b16 %v4575
    %v4648 = vunpack.c.l.b16 %v4576
    %v4649 = vunpack.c.l.b16 %v4577
    %v4650 = vpack.c.b16 %v4615, %v4614
    %v4651 = vpack.c.b16 %v4617, %v4616
    %v4652 = vpack.c.b16 %v4619, %v4618
    %v4653 = vpack.c.b16 %v4621, %v4620
    %v4654 = vpack.c.b16 %v4623, %v4622
    %v4655 = vpack.c.b16 %v4625, %v4624
    %v4656 = vpack.c.b16 %v4627, %v4626
    %v4657 = vpack.c.b16 %v4629, %v4628
    %v4658 = vpack.c.b16 %v4631, %v4630
    %v4659 = vpack.c.b16 %v4633, %v4632
    %v4660 = vpack.c.b16 %v4635, %v4634
    %v4661 = vpack.c.b16 %v4637, %v4636
    %v4662 = vpack.c.b16 %v4639, %v4638
    %v4663 = vpack.c.b16 %v4641, %v4640
    %v4664 = vpack.c.b16 %v4643, %v4642
    %v4665 = vpack.c.b16 %v4645, %v4644
    %v4666 = vpack.c.b16 %v4647, %v4646
    %v4667 = vpack.c.b16 %v4649, %v4648
    %vm4686 = vcmask 261120
    %v4688 = vsel %vm4686, %v4532, 0
    %v4691 = vsel %vm4686, %v4535, 0
    %v4694 = vsel %vm4686, %v4538, 0
    %v4697 = vsel %vm4686, %v4541, 0
    %4699 = vmatpush.bf16.msra.mxu0 %v4657
    %4700 = vmatpush.bf16.msra.mxu0 %v4656
    %4701 = vmatpush.bf16.msra.mxu0 %v4655
    %4702 = vmatpush.bf16.msra.mxu0 %v4654
    %4703 = vmatpush.bf16.msra.mxu0 %v4653
    %4704 = vmatpush.bf16.msra.mxu0 %v4652
    %4705 = vmatpush.bf16.msra.mxu0 %v4651
    %4706 = vmatpush.bf16.msra.mxu0 %v4650
    %4707 = vmatmul.bf16.gmra.mxu0 %v4530
    %v4708 = vpop.f32.mrf.mxu0
    %v4709 = vadd.f32 0.0, %v4708
    %v4710 = vpop.f32.mrf.mxu0
    %v4711 = vadd.f32 0.0, %v4710
    %4712 = vmatmul.bf16.gmra.mxu0 %v4533
    %v4713 = vpop.f32.mrf.mxu0
    %v4714 = vadd.f32 0.0, %v4713
    %v4715 = vpop.f32.mrf.mxu0
    %v4716 = vadd.f32 0.0, %v4715
    %4717 = vmatmul.bf16.gmra.mxu0 %v4536
    %v4718 = vpop.f32.mrf.mxu0
    %v4719 = vadd.f32 0.0, %v4718
    %v4720 = vpop.f32.mrf.mxu0
    %v4721 = vadd.f32 0.0, %v4720
    %4722 = vmatmul.bf16.gmra.mxu0 %v4539
    %v4723 = vpop.f32.mrf.mxu0
    %v4724 = vadd.f32 0.0, %v4723
    %v4725 = vpop.f32.mrf.mxu0
    %v4726 = vadd.f32 0.0, %v4725
    %4727 = vdwg.mxu0
    %4728 = vmatpush.bf16.msra.mxu0 %v4665
    %4729 = vmatpush.bf16.msra.mxu0 %v4664
    %4730 = vmatpush.bf16.msra.mxu0 %v4663
    %4731 = vmatpush.bf16.msra.mxu0 %v4662
    %4732 = vmatpush.bf16.msra.mxu0 %v4661
    %4733 = vmatpush.bf16.msra.mxu0 %v4660
    %4734 = vmatpush.bf16.msra.mxu0 %v4659
    %4735 = vmatpush.bf16.msra.mxu0 %v4658
    %4736 = vmatmul.bf16.gmra.mxu0 %v4531
    %v4737 = vpop.f32.mrf.mxu0
    %v4738 = vadd.f32 %v4709, %v4737
    %v4739 = vpop.f32.mrf.mxu0
    %v4740 = vadd.f32 %v4711, %v4739
    %4741 = vmatmul.bf16.gmra.mxu0 %v4534
    %v4742 = vpop.f32.mrf.mxu0
    %v4743 = vadd.f32 %v4714, %v4742
    %v4744 = vpop.f32.mrf.mxu0
    %v4745 = vadd.f32 %v4716, %v4744
    %4746 = vmatmul.bf16.gmra.mxu0 %v4537
    %v4747 = vpop.f32.mrf.mxu0
    %v4748 = vadd.f32 %v4719, %v4747
    %v4749 = vpop.f32.mrf.mxu0
    %v4750 = vadd.f32 %v4721, %v4749
    %4751 = vmatmul.bf16.gmra.mxu0 %v4540
    %v4752 = vpop.f32.mrf.mxu0
    %v4753 = vadd.f32 %v4724, %v4752
    %v4754 = vpop.f32.mrf.mxu0
    %v4755 = vadd.f32 %v4726, %v4754
    %4756 = vdwg.mxu0
    %4757 = vmatpush.bf16.msra.mxu0 0
    %4758 = vmatpush.bf16.msra.mxu0 0
    %4759 = vmatpush.bf16.msra.mxu0 0
    %4760 = vmatpush.bf16.msra.mxu0 0
    %4761 = vmatpush.bf16.msra.mxu0 0
    %4762 = vmatpush.bf16.msra.mxu0 0
    %4763 = vmatpush.bf16.msra.mxu0 %v4667
    %4764 = vmatpush.bf16.msra.mxu0 %v4666
    %4765 = vmatmul.bf16.gmra.mxu0 %v4688
    %v4766 = vpop.f32.mrf.mxu0
    %v4767 = vadd.f32 %v4738, %v4766
    %v4768 = vpop.f32.mrf.mxu0
    %v4769 = vadd.f32 %v4740, %v4768
    %4770 = vmatmul.bf16.gmra.mxu0 %v4691
    %v4771 = vpop.f32.mrf.mxu0
    %v4772 = vadd.f32 %v4743, %v4771
    %v4773 = vpop.f32.mrf.mxu0
    %v4774 = vadd.f32 %v4745, %v4773
    %4775 = vmatmul.bf16.gmra.mxu0 %v4694
    %v4776 = vpop.f32.mrf.mxu0
    %v4777 = vadd.f32 %v4748, %v4776
    %v4778 = vpop.f32.mrf.mxu0
    %v4779 = vadd.f32 %v4750, %v4778
    %4780 = vmatmul.bf16.gmra.mxu0 %v4697
    %v4781 = vpop.f32.mrf.mxu0
    %v4782 = vadd.f32 %v4753, %v4781
    %v4783 = vpop.f32.mrf.mxu0
    %v4784 = vadd.f32 %v4755, %v4783
    %4785 = vdwg.mxu0
    %v4786 = vmax.f32 %v4767, %v4772
    %v4787 = vmax.f32 %v4769, %v4774
    %v4788 = vmax.f32 %v4786, %v4777
    %v4789 = vmax.f32 %v4787, %v4779
    %v4790 = vmax.f32 %v4788, %v4782
    %v4791 = vmax.f32 %v4789, %v4784
    %v4792 = vld [vmem:[%s4] sm:$0x1]
    %v4794 = vperm.slane %v4792, 0
    %v4796 = vadd.f32 %v4790, %v4794
    %v4797 = vadd.f32 %v4791, %v4794
    %v4798 = vmax.f32 %v4796, 0.0
    %v4799 = vmax.f32 %v4797, 0.0
    %vm4800 = vcmask 516096
    %4801 = vst.msk [vmem:[#allocation4] sm:$0x1] %vm4800, %v4798
    %v4803 = vrot.slane %v4798, 7
    %v4804 = vrot.slane %v4803, 2
    %4805 = vrot.lane.b32.xlu0 %v4804, 64
    %v4806 = vpop.permute.xlu0 %4805
    %vm4808 = vcmask 1040896
    %4809 = vst.msk [vmem:[#allocation4] sm:$0x1] %vm4808, %v4806
    %4810 = vst.sshfl [vmem:[#allocation1] sm:$0xff pattern:$0x73625140] %v4798
    %s4811 = scalar_lea.vmem [#allocation1], 1
    %v4812 = vld [vmem:[%s4811] ss:$4 sm:$0xff]
    %4814 = vst.msk [vmem:[#allocation4 + $0x2] sm:$0x1] %vm4800, %v4812
    %4815 = vst.sshfl [vmem:[#allocation1] sm:$0xff pattern:$0x73625140] %v4798
    %s4816 = scalar_lea.vmem [#allocation1], 1
    %v4817 = vld [vmem:[%s4816] ss:$4 sm:$0xff]
    %v4818 = vrot.slane %v4817, 7
    %v4819 = vrot.slane %v4818, 2
    %4820 = vrot.lane.b32.xlu0 %v4819, 64
    %v4821 = vpop.permute.xlu0 %4820
    %4823 = vst.msk [vmem:[#allocation4 + $0x2] sm:$0x1] %vm4808, %v4821
    %4824 = vst.sshfl [vmem:[#allocation1] sm:$0xff pattern:$0x73625140] %v4798
    %s4825 = scalar_lea.vmem [#allocation1], 2
    %v4826 = vld [vmem:[%s4825] ss:$4 sm:$0xff]
    %4828 = vst.msk [vmem:[#allocation4 + $0x4] sm:$0x1] %vm4800, %v4826
    %4829 = vst.sshfl [vmem:[#allocation1] sm:$0xff pattern:$0x73625140] %v4798
    %s4830 = scalar_lea.vmem [#allocation1], 2
    %v4831 = vld [vmem:[%s4830] ss:$4 sm:$0xff]
    %v4832 = vrot.slane %v4831, 7
    %v4833 = vrot.slane %v4832, 2
    %4834 = vrot.lane.b32.xlu0 %v4833, 64
    %v4835 = vpop.permute.xlu0 %4834
    %4837 = vst.msk [vmem:[#allocation4 + $0x4] sm:$0x1] %vm4808, %v4835
    %4838 = vst.sshfl [vmem:[#allocation1] sm:$0xff pattern:$0x73625140] %v4798
    %s4839 = scalar_lea.vmem [#allocation1], 3
    %v4840 = vld [vmem:[%s4839] ss:$4 sm:$0xff]
    %4842 = vst.msk [vmem:[#allocation4 + $0x6] sm:$0x1] %vm4800, %v4840
    %4843 = vst.sshfl [vmem:[#allocation1] sm:$0xff pattern:$0x73625140] %v4798
    %s4844 = scalar_lea.vmem [#allocation1], 3
    %v4845 = vld [vmem:[%s4844] ss:$4 sm:$0xff]
    %v4846 = vrot.slane %v4845, 7
    %v4847 = vrot.slane %v4846, 2
    %4848 = vrot.lane.b32.xlu0 %v4847, 64
    %v4849 = vpop.permute.xlu0 %4848
    %4851 = vst.msk [vmem:[#allocation4 + $0x6] sm:$0x1] %vm4808, %v4849
    %4852 = vst.msk [vmem:[#allocation4 + $0x1] sm:$0x1] %vm4800, %v4799
    %v4854 = vrot.slane %v4799, 7
    %v4855 = vrot.slane %v4854, 2
    %4856 = vrot.lane.b32.xlu0 %v4855, 64
    %v4857 = vpop.permute.xlu0 %4856
    %4859 = vst.msk [vmem:[#allocation4 + $0x1] sm:$0x1] %vm4808, %v4857
    %4860 = vst.sshfl [vmem:[#allocation1] sm:$0xff pattern:$0x73625140] %v4799
    %s4861 = scalar_lea.vmem [#allocation1], 1
    %v4862 = vld [vmem:[%s4861] ss:$4 sm:$0xff]
    %4864 = vst.msk [vmem:[#allocation4 + $0x3] sm:$0x1] %vm4800, %v4862
    %4865 = vst.sshfl [vmem:[#allocation1] sm:$0xff pattern:$0x73625140] %v4799
    %s4866 = scalar_lea.vmem [#allocation1], 1
    %v4867 = vld [vmem:[%s4866] ss:$4 sm:$0xff]
    %v4868 = vrot.slane %v4867, 7
    %v4869 = vrot.slane %v4868, 2
    %4870 = vrot.lane.b32.xlu0 %v4869, 64
    %v4871 = vpop.permute.xlu0 %4870
    %4873 = vst.msk [vmem:[#allocation4 + $0x3] sm:$0x1] %vm4808, %v4871
    %4874 = vst.sshfl [vmem:[#allocation1] sm:$0xff pattern:$0x73625140] %v4799
    %s4875 = scalar_lea.vmem [#allocation1], 2
    %v4876 = vld [vmem:[%s4875] ss:$4 sm:$0xff]
    %4878 = vst.msk [vmem:[#allocation4 + $0x5] sm:$0x1] %vm4800, %v4876
    %4879 = vst.sshfl [vmem:[#allocation1] sm:$0xff pattern:$0x73625140] %v4799
    %s4880 = scalar_lea.vmem [#allocation1], 2
    %v4881 = vld [vmem:[%s4880] ss:$4 sm:$0xff]
    %v4882 = vrot.slane %v4881, 7
    %v4883 = vrot.slane %v4882, 2
    %4884 = vrot.lane.b32.xlu0 %v4883, 64
    %v4885 = vpop.permute.xlu0 %4884
    %4887 = vst.msk [vmem:[#allocation4 + $0x5] sm:$0x1] %vm4808, %v4885
    %4888 = vst.sshfl [vmem:[#allocation1] sm:$0xff pattern:$0x73625140] %v4799
    %s4889 = scalar_lea.vmem [#allocation1], 3
    %v4890 = vld [vmem:[%s4889] ss:$4 sm:$0xff]
    %4892 = vst.msk [vmem:[#allocation4 + $0x7] sm:$0x1] %vm4800, %v4890
    %4893 = vst.sshfl [vmem:[#allocation1] sm:$0xff pattern:$0x73625140] %v4799
    %s4894 = scalar_lea.vmem [#allocation1], 3
    %v4895 = vld [vmem:[%s4894] ss:$4 sm:$0xff]
    %v4896 = vrot.slane %v4895, 7
    %v4897 = vrot.slane %v4896, 2
    %4898 = vrot.lane.b32.xlu0 %v4897, 64
    %v4899 = vpop.permute.xlu0 %4898
    %4901 = vst.msk [vmem:[#allocation4 + $0x7] sm:$0x1] %vm4808, %v4899
    %v4902 = vld [vmem:[#allocation4] sm:$0xff]
    %4904 = vst [vmem:[#allocation1] ss:$4 sm:$0xff] %v4902
    %v4905 = vld.sshfl [vmem:[#allocation1] sm:$0xff pattern:$0x73625140]
    %v4906 = vld.sshfl [vmem:[#allocation1 + $0x8] sm:$0xff pattern:$0x73625140]
    %v4907 = vld.sshfl [vmem:[#allocation1 + $0x10] sm:$0xff pattern:$0x73625140]
    %v4908 = vld.sshfl [vmem:[#allocation1 + $0x18] sm:$0xff pattern:$0x73625140]
    %v4913 = vpack.c.bf16 %v4905, %v4905
    %v4914 = vpack.c.bf16 %v4906, %v4906
    %v4915 = vpack.c.bf16 %v4907, %v4907
    %v4916 = vpack.c.bf16 %v4908, %v4908
    %v4917 = vld [vmem:[%s5] sm:$0xff]
    %v4918 = vld [vmem:[%s5 + $0x8] sm:$0xff]
    %v4919 = vld [vmem:[%s5 + $0x10] sm:$0xff]
    %v4920 = vld [vmem:[%s5 + $0x18] sm:$0xff]
    %v4921 = vld [vmem:[%s5 + $0x20] sm:$0xff]
    %v4922 = vld [vmem:[%s5 + $0x28] sm:$0xff]
    %v4923 = vld [vmem:[%s5 + $0x30] sm:$0xff]
    %v4924 = vld [vmem:[%s5 + $0x38] sm:$0xff]
    %v4925 = vld [vmem:[%s5 + $0x40] sm:$0xff]
    %v4926 = vld [vmem:[%s5 + $0x48] sm:$0xff]
    %v4927 = vld [vmem:[%s5 + $0x50] sm:$0xff]
    %v4928 = vld [vmem:[%s5 + $0x58] sm:$0xff]
    %v4929 = vld [vmem:[%s5 + $0x60] sm:$0xff]
    %v4930 = vld [vmem:[%s5 + $0x68] sm:$0xff]
    %v4931 = vld [vmem:[%s5 + $0x70] sm:$0xff]
    %v4932 = vld [vmem:[%s5 + $0x78] sm:$0xff]
    %v4933 = vld [vmem:[%s5 + $0x80] sm:$0xff]
    %v4934 = vld [vmem:[%s5 + $0x88] sm:$0xff]
    %v4935 = vld [vmem:[%s5 + $0x90] sm:$0xff]
    %v4936 = vld [vmem:[%s5 + $0x98] sm:$0xff]
    %v4937 = vld [vmem:[%s5 + $0xa0] sm:$0xff]
    %v4938 = vld [vmem:[%s5 + $0xa8] sm:$0xff]
    %v4939 = vld [vmem:[%s5 + $0xb0] sm:$0xff]
    %v4940 = vld [vmem:[%s5 + $0xb8] sm:$0xff]
    %v4941 = vld [vmem:[%s5 + $0xc0] sm:$0xff]
    %v4942 = vld [vmem:[%s5 + $0xc8] sm:$0xff]
    %v4943 = vld [vmem:[%s5 + $0xd0] sm:$0xff]
    %v4944 = vld [vmem:[%s5 + $0xd8] sm:$0xff]
    %v4945 = vld [vmem:[%s5 + $0xe0] sm:$0xff]
    %v4946 = vld [vmem:[%s5 + $0xe8] sm:$0xff]
    %v4947 = vld [vmem:[%s5 + $0xf0] sm:$0xff]
    %v4948 = vld [vmem:[%s5 + $0xf8] sm:$0xff]
    %v4949 = vld [vmem:[%s5 + $0x100] sm:$0xff]
    %v4950 = vld [vmem:[%s5 + $0x108] sm:$0xff]
    %v4951 = vld [vmem:[%s5 + $0x110] sm:$0xff]
    %v4952 = vld [vmem:[%s5 + $0x118] sm:$0xff]
    %v4953 = vld [vmem:[%s5 + $0x120] sm:$0xff]
    %v4954 = vld [vmem:[%s5 + $0x128] sm:$0xff]
    %v4955 = vld [vmem:[%s5 + $0x130] sm:$0xff]
    %v4956 = vld [vmem:[%s5 + $0x138] sm:$0xff]
    %v4957 = vld [vmem:[%s5 + $0x140] sm:$0xff]
    %v4958 = vld [vmem:[%s5 + $0x148] sm:$0xff]
    %v4959 = vld [vmem:[%s5 + $0x150] sm:$0xff]
    %v4960 = vld [vmem:[%s5 + $0x158] sm:$0xff]
    %v4961 = vld [vmem:[%s5 + $0x160] sm:$0xff]
    %v4962 = vld [vmem:[%s5 + $0x168] sm:$0xff]
    %v4963 = vld [vmem:[%s5 + $0x170] sm:$0xff]
    %v4964 = vld [vmem:[%s5 + $0x178] sm:$0xff]
    %v4965 = vld [vmem:[%s5 + $0x180] sm:$0xff]
    %v4966 = vld [vmem:[%s5 + $0x188] sm:$0xff]
    %v4967 = vld [vmem:[%s5 + $0x190] sm:$0xff]
    %v4968 = vld [vmem:[%s5 + $0x198] sm:$0xff]
    %v4969 = vld [vmem:[%s5 + $0x1a0] sm:$0xff]
    %v4970 = vld [vmem:[%s5 + $0x1a8] sm:$0xff]
    %v4971 = vld [vmem:[%s5 + $0x1b0] sm:$0xff]
    %v4972 = vld [vmem:[%s5 + $0x1b8] sm:$0xff]
    %v4973 = vld [vmem:[%s5 + $0x1c0] sm:$0xff]
    %v4974 = vld [vmem:[%s5 + $0x1c8] sm:$0xff]
    %v4975 = vld [vmem:[%s5 + $0x1d0] sm:$0xff]
    %v4976 = vld [vmem:[%s5 + $0x1d8] sm:$0xff]
    %v4977 = vld [vmem:[%s5 + $0x1e0] sm:$0xff]
    %v4978 = vld [vmem:[%s5 + $0x1e8] sm:$0xff]
    %v4979 = vld [vmem:[%s5 + $0x1f0] sm:$0xff]
    %v4980 = vld [vmem:[%s5 + $0x1f8] sm:$0xff]
    %v4981 = vld [vmem:[%s6] sm:$0x3]
    %v4983 = vperm.slane %v4981, 0
    %v4984 = vperm.slane %v4981, 1
    %v5051 = vunpack.c.l.b16 %v4917
    %v5052 = vunpack.c.h.b16 %v4917
    %v5053 = vunpack.c.l.b16 %v4918
    %v5054 = vunpack.c.h.b16 %v4918
    %v5055 = vunpack.c.l.b16 %v4919
    %v5056 = vunpack.c.h.b16 %v4919
    %v5057 = vunpack.c.l.b16 %v4920
    %v5058 = vunpack.c.h.b16 %v4920
    %v5059 = vunpack.c.l.b16 %v4921
    %v5060 = vunpack.c.h.b16 %v4921
    %v5061 = vunpack.c.l.b16 %v4922
    %v5062 = vunpack.c.h.b16 %v4922
    %v5063 = vunpack.c.l.b16 %v4923
    %v5064 = vunpack.c.h.b16 %v4923
    %v5065 = vunpack.c.l.b16 %v4924
    %v5066 = vunpack.c.h.b16 %v4924
    %v5067 = vunpack.c.l.b16 %v4925
    %v5068 = vunpack.c.h.b16 %v4925
    %v5069 = vunpack.c.l.b16 %v4926
    %v5070 = vunpack.c.h.b16 %v4926
    %v5071 = vunpack.c.l.b16 %v4927
    %v5072 = vunpack.c.h.b16 %v4927
    %v5073 = vunpack.c.l.b16 %v4928
    %v5074 = vunpack.c.h.b16 %v4928
    %v5075 = vunpack.c.l.b16 %v4929
    %v5076 = vunpack.c.h.b16 %v4929
    %v5077 = vunpack.c.l.b16 %v4930
    %v5078 = vunpack.c.h.b16 %v4930
    %v5079 = vunpack.c.l.b16 %v4931
    %v5080 = vunpack.c.h.b16 %v4931
    %v5081 = vunpack.c.l.b16 %v4932
    %v5082 = vunpack.c.h.b16 %v4932
    %v5083 = vunpack.c.l.b16 %v4933
    %v5084 = vunpack.c.h.b16 %v4933
    %v5085 = vunpack.c.l.b16 %v4934
    %v5086 = vunpack.c.h.b16 %v4934
    %v5087 = vunpack.c.l.b16 %v4935
    %v5088 = vunpack.c.h.b16 %v4935
    %v5089 = vunpack.c.l.b16 %v4936
    %v5090 = vunpack.c.h.b16 %v4936
    %v5091 = vunpack.c.l.b16 %v4937
    %v5092 = vunpack.c.h.b16 %v4937
    %v5093 = vunpack.c.l.b16 %v4938
    %v5094 = vunpack.c.h.b16 %v4938
    %v5095 = vunpack.c.l.b16 %v4939
    %v5096 = vunpack.c.h.b16 %v4939
    %v5097 = vunpack.c.l.b16 %v4940
    %v5098 = vunpack.c.h.b16 %v4940
    %v5099 = vunpack.c.l.b16 %v4941
    %v5100 = vunpack.c.h.b16 %v4941
    %v5101 = vunpack.c.l.b16 %v4942
    %v5102 = vunpack.c.h.b16 %v4942
    %v5103 = vunpack.c.l.b16 %v4943
    %v5104 = vunpack.c.h.b16 %v4943
    %v5105 = vunpack.c.l.b16 %v4944
    %v5106 = vunpack.c.h.b16 %v4944
    %v5107 = vunpack.c.l.b16 %v4945
    %v5108 = vunpack.c.h.b16 %v4945
    %v5109 = vunpack.c.l.b16 %v4946
    %v5110 = vunpack.c.h.b16 %v4946
    %v5111 = vunpack.c.l.b16 %v4947
    %v5112 = vunpack.c.h.b16 %v4947
    %v5113 = vunpack.c.l.b16 %v4948
    %v5114 = vunpack.c.h.b16 %v4948
    %v5115 = vunpack.c.l.b16 %v4949
    %v5116 = vunpack.c.h.b16 %v4949
    %v5117 = vunpack.c.l.b16 %v4950
    %v5118 = vunpack.c.h.b16 %v4950
    %v5119 = vunpack.c.l.b16 %v4951
    %v5120 = vunpack.c.h.b16 %v4951
    %v5121 = vunpack.c.l.b16 %v4952
    %v5122 = vunpack.c.h.b16 %v4952
    %v5123 = vunpack.c.l.b16 %v4953
    %v5124 = vunpack.c.h.b16 %v4953
    %v5125 = vunpack.c.l.b16 %v4954
    %v5126 = vunpack.c.h.b16 %v4954
    %v5127 = vunpack.c.l.b16 %v4955
    %v5128 = vunpack.c.h.b16 %v4955
    %v5129 = vunpack.c.l.b16 %v4956
    %v5130 = vunpack.c.h.b16 %v4956
    %v5131 = vunpack.c.l.b16 %v4957
    %v5132 = vunpack.c.h.b16 %v4957
    %v5133 = vunpack.c.l.b16 %v4958
    %v5134 = vunpack.c.h.b16 %v4958
    %v5135 = vunpack.c.l.b16 %v4959
    %v5136 = vunpack.c.h.b16 %v4959
    %v5137 = vunpack.c.l.b16 %v4960
    %v5138 = vunpack.c.h.b16 %v4960
    %v5139 = vunpack.c.l.b16 %v4961
    %v5140 = vunpack.c.h.b16 %v4961
    %v5141 = vunpack.c.l.b16 %v4962
    %v5142 = vunpack.c.h.b16 %v4962
    %v5143 = vunpack.c.l.b16 %v4963
    %v5144 = vunpack.c.h.b16 %v4963
    %v5145 = vunpack.c.l.b16 %v4964
    %v5146 = vunpack.c.h.b16 %v4964
    %v5147 = vunpack.c.l.b16 %v4965
    %v5148 = vunpack.c.h.b16 %v4965
    %v5149 = vunpack.c.l.b16 %v4966
    %v5150 = vunpack.c.h.b16 %v4966
    %v5151 = vunpack.c.l.b16 %v4967
    %v5152 = vunpack.c.h.b16 %v4967
    %v5153 = vunpack.c.l.b16 %v4968
    %v5154 = vunpack.c.h.b16 %v4968
    %v5155 = vunpack.c.l.b16 %v4969
    %v5156 = vunpack.c.h.b16 %v4969
    %v5157 = vunpack.c.l.b16 %v4970
    %v5158 = vunpack.c.h.b16 %v4970
    %v5159 = vunpack.c.l.b16 %v4971
    %v5160 = vunpack.c.h.b16 %v4971
    %v5161 = vunpack.c.l.b16 %v4972
    %v5162 = vunpack.c.h.b16 %v4972
    %v5163 = vunpack.c.l.b16 %v4973
    %v5164 = vunpack.c.h.b16 %v4973
    %v5165 = vunpack.c.l.b16 %v4974
    %v5166 = vunpack.c.h.b16 %v4974
    %v5167 = vunpack.c.l.b16 %v4975
    %v5168 = vunpack.c.h.b16 %v4975
    %v5169 = vunpack.c.l.b16 %v4976
    %v5170 = vunpack.c.h.b16 %v4976
    %v5171 = vunpack.c.l.b16 %v4977
    %v5172 = vunpack.c.h.b16 %v4977
    %v5173 = vunpack.c.l.b16 %v4978
    %v5174 = vunpack.c.h.b16 %v4978
    %v5175 = vunpack.c.l.b16 %v4979
    %v5176 = vunpack.c.h.b16 %v4979
    %v5177 = vunpack.c.l.b16 %v4980
    %v5178 = vunpack.c.h.b16 %v4980
    %v5179 = vpack.c.b16 %v5053, %v5051
    %v5180 = vpack.c.b16 %v5054, %v5052
    %v5181 = vpack.c.b16 %v5057, %v5055
    %v5182 = vpack.c.b16 %v5058, %v5056
    %v5183 = vpack.c.b16 %v5061, %v5059
    %v5184 = vpack.c.b16 %v5062, %v5060
    %v5185 = vpack.c.b16 %v5065, %v5063
    %v5186 = vpack.c.b16 %v5066, %v5064
    %v5187 = vpack.c.b16 %v5069, %v5067
    %v5188 = vpack.c.b16 %v5070, %v5068
    %v5189 = vpack.c.b16 %v5073, %v5071
    %v5190 = vpack.c.b16 %v5074, %v5072
    %v5191 = vpack.c.b16 %v5077, %v5075
    %v5192 = vpack.c.b16 %v5078, %v5076
    %v5193 = vpack.c.b16 %v5081, %v5079
    %v5194 = vpack.c.b16 %v5082, %v5080
    %v5195 = vpack.c.b16 %v5085, %v5083
    %v5196 = vpack.c.b16 %v5086, %v5084
    %v5197 = vpack.c.b16 %v5089, %v5087
    %v5198 = vpack.c.b16 %v5090, %v5088
    %v5199 = vpack.c.b16 %v5093, %v5091
    %v5200 = vpack.c.b16 %v5094, %v5092
    %v5201 = vpack.c.b16 %v5097, %v5095
    %v5202 = vpack.c.b16 %v5098, %v5096
    %v5203 = vpack.c.b16 %v5101, %v5099
    %v5204 = vpack.c.b16 %v5102, %v5100
    %v5205 = vpack.c.b16 %v5105, %v5103
    %v5206 = vpack.c.b16 %v5106, %v5104
    %v5207 = vpack.c.b16 %v5109, %v5107
    %v5208 = vpack.c.b16 %v5110, %v5108
    %v5209 = vpack.c.b16 %v5113, %v5111
    %v5210 = vpack.c.b16 %v5114, %v5112
    %v5211 = vpack.c.b16 %v5117, %v5115
    %v5212 = vpack.c.b16 %v5118, %v5116
    %v5213 = vpack.c.b16 %v5121, %v5119
    %v5214 = vpack.c.b16 %v5122, %v5120
    %v5215 = vpack.c.b16 %v5125, %v5123
    %v5216 = vpack.c.b16 %v5126, %v5124
    %v5217 = vpack.c.b16 %v5129, %v5127
    %v5218 = vpack.c.b16 %v5130, %v5128
    %v5219 = vpack.c.b16 %v5133, %v5131
    %v5220 = vpack.c.b16 %v5134, %v5132
    %v5221 = vpack.c.b16 %v5137, %v5135
    %v5222 = vpack.c.b16 %v5138, %v5136
    %v5223 = vpack.c.b16 %v5141, %v5139
    %v5224 = vpack.c.b16 %v5142, %v5140
    %v5225 = vpack.c.b16 %v5145, %v5143
    %v5226 = vpack.c.b16 %v5146, %v5144
    %v5227 = vpack.c.b16 %v5149, %v5147
    %v5228 = vpack.c.b16 %v5150, %v5148
    %v5229 = vpack.c.b16 %v5153, %v5151
    %v5230 = vpack.c.b16 %v5154, %v5152
    %v5231 = vpack.c.b16 %v5157, %v5155
    %v5232 = vpack.c.b16 %v5158, %v5156
    %v5233 = vpack.c.b16 %v5161, %v5159
    %v5234 = vpack.c.b16 %v5162, %v5160
    %v5235 = vpack.c.b16 %v5165, %v5163
    %v5236 = vpack.c.b16 %v5166, %v5164
    %v5237 = vpack.c.b16 %v5169, %v5167
    %v5238 = vpack.c.b16 %v5170, %v5168
    %v5239 = vpack.c.b16 %v5173, %v5171
    %v5240 = vpack.c.b16 %v5174, %v5172
    %v5241 = vpack.c.b16 %v5177, %v5175
    %v5242 = vpack.c.b16 %v5178, %v5176
    %5307 = vmatpush.bf16.msra.mxu0 %v5193
    %5308 = vmatpush.bf16.msra.mxu0 %v5191
    %5309 = vmatpush.bf16.msra.mxu0 %v5189
    %5310 = vmatpush.bf16.msra.mxu0 %v5187
    %5311 = vmatpush.bf16.msra.mxu0 %v5185
    %5312 = vmatpush.bf16.msra.mxu0 %v5183
    %5313 = vmatpush.bf16.msra.mxu0 %v5181
    %5314 = vmatpush.bf16.msra.mxu0 %v5179
    %5315 = vmatmul.bf16.gmra.mxu0 %v4913
    %v5316 = vpop.f32.mrf.mxu0
    %v5317 = vadd.f32 %v4983, %v5316
    %v5318 = vpop.f32.mrf.mxu0
    %5319 = vdwg.mxu0
    %5320 = vmatpush.bf16.msra.mxu0 %v5209
    %5321 = vmatpush.bf16.msra.mxu0 %v5207
    %5322 = vmatpush.bf16.msra.mxu0 %v5205
    %5323 = vmatpush.bf16.msra.mxu0 %v5203
    %5324 = vmatpush.bf16.msra.mxu0 %v5201
    %5325 = vmatpush.bf16.msra.mxu0 %v5199
    %5326 = vmatpush.bf16.msra.mxu0 %v5197
    %5327 = vmatpush.bf16.msra.mxu0 %v5195
    %5328 = vmatmul.bf16.gmra.mxu0 %v4914
    %v5329 = vpop.f32.mrf.mxu0
    %v5330 = vadd.f32 %v5317, %v5329
    %v5331 = vpop.f32.mrf.mxu0
    %5332 = vdwg.mxu0
    %5333 = vmatpush.bf16.msra.mxu0 %v5225
    %5334 = vmatpush.bf16.msra.mxu0 %v5223
    %5335 = vmatpush.bf16.msra.mxu0 %v5221
    %5336 = vmatpush.bf16.msra.mxu0 %v5219
    %5337 = vmatpush.bf16.msra.mxu0 %v5217
    %5338 = vmatpush.bf16.msra.mxu0 %v5215
    %5339 = vmatpush.bf16.msra.mxu0 %v5213
    %5340 = vmatpush.bf16.msra.mxu0 %v5211
    %5341 = vmatmul.bf16.gmra.mxu0 %v4915
    %v5342 = vpop.f32.mrf.mxu0
    %v5343 = vadd.f32 %v5330, %v5342
    %v5344 = vpop.f32.mrf.mxu0
    %5345 = vdwg.mxu0
    %5346 = vmatpush.bf16.msra.mxu0 %v5241
    %5347 = vmatpush.bf16.msra.mxu0 %v5239
    %5348 = vmatpush.bf16.msra.mxu0 %v5237
    %5349 = vmatpush.bf16.msra.mxu0 %v5235
    %5350 = vmatpush.bf16.msra.mxu0 %v5233
    %5351 = vmatpush.bf16.msra.mxu0 %v5231
    %5352 = vmatpush.bf16.msra.mxu0 %v5229
    %5353 = vmatpush.bf16.msra.mxu0 %v5227
    %5354 = vmatmul.bf16.gmra.mxu0 %v4916
    %v5355 = vpop.f32.mrf.mxu0
    %v5356 = vadd.f32 %v5343, %v5355
    %v5357 = vpop.f32.mrf.mxu0
    %5358 = vdwg.mxu0
    %5359 = vmatpush.bf16.msra.mxu0 %v5194
    %5360 = vmatpush.bf16.msra.mxu0 %v5192
    %5361 = vmatpush.bf16.msra.mxu0 %v5190
    %5362 = vmatpush.bf16.msra.mxu0 %v5188
    %5363 = vmatpush.bf16.msra.mxu0 %v5186
    %5364 = vmatpush.bf16.msra.mxu0 %v5184
    %5365 = vmatpush.bf16.msra.mxu0 %v5182
    %5366 = vmatpush.bf16.msra.mxu0 %v5180
    %5367 = vmatmul.bf16.gmra.mxu0 %v4913
    %v5368 = vpop.f32.mrf.mxu0
    %v5369 = vadd.f32 %v4984, %v5368
    %v5370 = vpop.f32.mrf.mxu0
    %5371 = vdwg.mxu0
    %5372 = vmatpush.bf16.msra.mxu0 %v5210
    %5373 = vmatpush.bf16.msra.mxu0 %v5208
    %5374 = vmatpush.bf16.msra.mxu0 %v5206
    %5375 = vmatpush.bf16.msra.mxu0 %v5204
    %5376 = vmatpush.bf16.msra.mxu0 %v5202
    %5377 = vmatpush.bf16.msra.mxu0 %v5200
    %5378 = vmatpush.bf16.msra.mxu0 %v5198
    %5379 = vmatpush.bf16.msra.mxu0 %v5196
    %5380 = vmatmul.bf16.gmra.mxu0 %v4914
    %v5381 = vpop.f32.mrf.mxu0
    %v5382 = vadd.f32 %v5369, %v5381
    %v5383 = vpop.f32.mrf.mxu0
    %5384 = vdwg.mxu0
    %5385 = vmatpush.bf16.msra.mxu0 %v5226
    %5386 = vmatpush.bf16.msra.mxu0 %v5224
    %5387 = vmatpush.bf16.msra.mxu0 %v5222
    %5388 = vmatpush.bf16.msra.mxu0 %v5220
    %5389 = vmatpush.bf16.msra.mxu0 %v5218
    %5390 = vmatpush.bf16.msra.mxu0 %v5216
    %5391 = vmatpush.bf16.msra.mxu0 %v5214
    %5392 = vmatpush.bf16.msra.mxu0 %v5212
    %5393 = vmatmul.bf16.gmra.mxu0 %v4915
    %v5394 = vpop.f32.mrf.mxu0
    %v5395 = vadd.f32 %v5382, %v5394
    %v5396 = vpop.f32.mrf.mxu0
    %5397 = vdwg.mxu0
    %5398 = vmatpush.bf16.msra.mxu0 %v5242
    %5399 = vmatpush.bf16.msra.mxu0 %v5240
    %5400 = vmatpush.bf16.msra.mxu0 %v5238
    %5401 = vmatpush.bf16.msra.mxu0 %v5236
    %5402 = vmatpush.bf16.msra.mxu0 %v5234
    %5403 = vmatpush.bf16.msra.mxu0 %v5232
    %5404 = vmatpush.bf16.msra.mxu0 %v5230
    %5405 = vmatpush.bf16.msra.mxu0 %v5228
    %5406 = vmatmul.bf16.gmra.mxu0 %v4916
    %v5407 = vpop.f32.mrf.mxu0
    %v5408 = vadd.f32 %v5395, %v5407
    %v5409 = vpop.f32.mrf.mxu0
    %5410 = vdwg.mxu0
    %v5411 = vmax.f32 %v5356, 0.0
    %v5412 = vmax.f32 %v5408, 0.0
    %v5413 = vpack.c.bf16 %v5411, %v5411
    %v5414 = vpack.c.bf16 %v5412, %v5412
    %v5415 = vld [vmem:[%s7] sm:$0xf]
    %v5416 = vld [vmem:[%s7 + $0x4] sm:$0xf]
    %v5417 = vld [vmem:[%s7 + $0x8] sm:$0xf]
    %v5418 = vld [vmem:[%s7 + $0xc] sm:$0xf]
    %v5419 = vld [vmem:[%s7 + $0x10] sm:$0xf]
    %v5420 = vld [vmem:[%s7 + $0x14] sm:$0xf]
    %v5421 = vld [vmem:[%s7 + $0x18] sm:$0xf]
    %v5422 = vld [vmem:[%s7 + $0x1c] sm:$0xf]
    %v5423 = vld [vmem:[%s7 + $0x20] sm:$0xf]
    %v5424 = vld [vmem:[%s7 + $0x24] sm:$0xf]
    %v5425 = vld [vmem:[%s7 + $0x28] sm:$0xf]
    %v5426 = vld [vmem:[%s7 + $0x2c] sm:$0xf]
    %v5427 = vld [vmem:[%s7 + $0x30] sm:$0xf]
    %v5428 = vld [vmem:[%s7 + $0x34] sm:$0xf]
    %v5429 = vld [vmem:[%s7 + $0x38] sm:$0xf]
    %v5430 = vld [vmem:[%s7 + $0x3c] sm:$0xf]
    %v5431 = vld [vmem:[%s7 + $0x40] sm:$0xf]
    %v5432 = vld [vmem:[%s7 + $0x44] sm:$0xf]
    %v5433 = vld [vmem:[%s7 + $0x48] sm:$0xf]
    %v5434 = vld [vmem:[%s7 + $0x4c] sm:$0xf]
    %v5435 = vld [vmem:[%s7 + $0x50] sm:$0xf]
    %v5436 = vld [vmem:[%s7 + $0x54] sm:$0xf]
    %v5437 = vld [vmem:[%s7 + $0x58] sm:$0xf]
    %v5438 = vld [vmem:[%s7 + $0x5c] sm:$0xf]
    %v5439 = vld [vmem:[%s7 + $0x60] sm:$0xf]
    %v5440 = vld [vmem:[%s7 + $0x64] sm:$0xf]
    %v5441 = vld [vmem:[%s7 + $0x68] sm:$0xf]
    %v5442 = vld [vmem:[%s7 + $0x6c] sm:$0xf]
    %v5443 = vld [vmem:[%s7 + $0x70] sm:$0xf]
    %v5444 = vld [vmem:[%s7 + $0x74] sm:$0xf]
    %v5445 = vld [vmem:[%s7 + $0x78] sm:$0xf]
    %v5446 = vld [vmem:[%s7 + $0x7c] sm:$0xf]
    %v5447 = vld [vmem:[%s8] sm:$0x1]
    %v5449 = vperm.slane %v5447, 0
    %v5483 = vunpack.c.l.b16 %v5415
    %v5484 = vunpack.c.l.b16 %v5416
    %v5485 = vunpack.c.l.b16 %v5417
    %v5486 = vunpack.c.l.b16 %v5418
    %v5487 = vunpack.c.l.b16 %v5419
    %v5488 = vunpack.c.l.b16 %v5420
    %v5489 = vunpack.c.l.b16 %v5421
    %v5490 = vunpack.c.l.b16 %v5422
    %v5491 = vunpack.c.l.b16 %v5423
    %v5492 = vunpack.c.l.b16 %v5424
    %v5493 = vunpack.c.l.b16 %v5425
    %v5494 = vunpack.c.l.b16 %v5426
    %v5495 = vunpack.c.l.b16 %v5427
    %v5496 = vunpack.c.l.b16 %v5428
    %v5497 = vunpack.c.l.b16 %v5429
    %v5498 = vunpack.c.l.b16 %v5430
    %v5499 = vunpack.c.l.b16 %v5431
    %v5500 = vunpack.c.l.b16 %v5432
    %v5501 = vunpack.c.l.b16 %v5433
    %v5502 = vunpack.c.l.b16 %v5434
    %v5503 = vunpack.c.l.b16 %v5435
    %v5504 = vunpack.c.l.b16 %v5436
    %v5505 = vunpack.c.l.b16 %v5437
    %v5506 = vunpack.c.l.b16 %v5438
    %v5507 = vunpack.c.l.b16 %v5439
    %v5508 = vunpack.c.l.b16 %v5440
    %v5509 = vunpack.c.l.b16 %v5441
    %v5510 = vunpack.c.l.b16 %v5442
    %v5511 = vunpack.c.l.b16 %v5443
    %v5512 = vunpack.c.l.b16 %v5444
    %v5513 = vunpack.c.l.b16 %v5445
    %v5514 = vunpack.c.l.b16 %v5446
    %v5515 = vpack.c.b16 %v5484, %v5483
    %v5516 = vpack.c.b16 %v5486, %v5485
    %v5517 = vpack.c.b16 %v5488, %v5487
    %v5518 = vpack.c.b16 %v5490, %v5489
    %v5519 = vpack.c.b16 %v5492, %v5491
    %v5520 = vpack.c.b16 %v5494, %v5493
    %v5521 = vpack.c.b16 %v5496, %v5495
    %v5522 = vpack.c.b16 %v5498, %v5497
    %v5523 = vpack.c.b16 %v5500, %v5499
    %v5524 = vpack.c.b16 %v5502, %v5501
    %v5525 = vpack.c.b16 %v5504, %v5503
    %v5526 = vpack.c.b16 %v5506, %v5505
    %v5527 = vpack.c.b16 %v5508, %v5507
    %v5528 = vpack.c.b16 %v5510, %v5509
    %v5529 = vpack.c.b16 %v5512, %v5511
    %v5530 = vpack.c.b16 %v5514, %v5513
    %5547 = vmatpush.bf16.msra.mxu0 %v5522
    %5548 = vmatpush.bf16.msra.mxu0 %v5521
    %5549 = vmatpush.bf16.msra.mxu0 %v5520
    %5550 = vmatpush.bf16.msra.mxu0 %v5519
    %5551 = vmatpush.bf16.msra.mxu0 %v5518
    %5552 = vmatpush.bf16.msra.mxu0 %v5517
    %5553 = vmatpush.bf16.msra.mxu0 %v5516
    %5554 = vmatpush.bf16.msra.mxu0 %v5515
    %5555 = vmatmul.bf16.gmra.mxu0 %v5413
    %v5556 = vpop.f32.mrf.mxu0
    %v5557 = vadd.f32 %v5449, %v5556
    %v5558 = vpop.f32.mrf.mxu0
    %5559 = vdwg.mxu0
    %5560 = vmatpush.bf16.msra.mxu0 %v5530
    %5561 = vmatpush.bf16.msra.mxu0 %v5529
    %5562 = vmatpush.bf16.msra.mxu0 %v5528
    %5563 = vmatpush.bf16.msra.mxu0 %v5527
    %5564 = vmatpush.bf16.msra.mxu0 %v5526
    %5565 = vmatpush.bf16.msra.mxu0 %v5525
    %5566 = vmatpush.bf16.msra.mxu0 %v5524
    %5567 = vmatpush.bf16.msra.mxu0 %v5523
    %5568 = vmatmul.bf16.gmra.mxu0 %v5414
    %v5569 = vpop.f32.mrf.mxu0
    %v5570 = vadd.f32 %v5557, %v5569
    %v5571 = vpop.f32.mrf.mxu0
    %5572 = vdwg.mxu0
    %v5573 = vmax.f32 %v5570, 0.0
    %v5574 = vld [vmem:[%s9] sm:$0xff]
    %v5575 = vld [vmem:[%s9 + $0x8] sm:$0xff]
    %v5576 = vld [vmem:[%s9 + $0x10] sm:$0xff]
    %v5577 = vld [vmem:[%s9 + $0x18] sm:$0xff]
    %v5578 = vld [vmem:[%s9 + $0x20] sm:$0xff]
    %v5579 = vld [vmem:[%s9 + $0x28] sm:$0xff]
    %v5580 = vld [vmem:[%s9 + $0x30] sm:$0xff]
    %v5581 = vld [vmem:[%s9 + $0x38] sm:$0xff]
    %v5582 = vld [vmem:[%s10] sm:$0x1]
    %v5584 = vperm.slane %v5582, 0
    %vm5586 = vcmask 523264
    %v5588 = vsel %vm5586, %v5573, 0
    %5590 = vmatpush.msra.mxu0 0.0
    %5591 = vmatpush.msra.mxu0 0.0
    %5592 = vmatpush.msra.mxu0 0.0
    %5593 = vmatpush.msra.mxu0 0.0
    %5594 = vmatpush.msra.mxu0 0.0
    %5595 = vmatpush.msra.mxu0 0.0
    %5596 = vmatpush.msra.mxu0 0.0
    %5597 = vmatpush.msra.mxu0 0.0
    %5598 = vmatpush.msra.mxu0 %v5581
    %5599 = vmatpush.msra.mxu0 %v5580
    %5600 = vmatpush.msra.mxu0 %v5579
    %5601 = vmatpush.msra.mxu0 %v5578
    %5602 = vmatpush.msra.mxu0 %v5577
    %5603 = vmatpush.msra.mxu0 %v5576
    %5604 = vmatpush.msra.mxu0 %v5575
    %5605 = vmatpush.msra.mxu0 %v5574
    %5606 = vmatmul.f32.gmra.mxu0 %v5588
    %v5607 = vpop.f32.mrf.mxu0
    %v5608 = vadd.f32 %v5584, %v5607
    %5609 = vdwg.mxu0
    %vm5610 = vcmask 17408
    %5611 = vst.msk [vmem:[#allocation5] sm:$0x3] %vm5610, %v5608
    // Predicated region
    $region46: #{_lambda_.1} parent=1 // pred_check
      _
    $region47: #{_lambda_.1} parent=1 // pred_check_branch
      %5613 = sbr.rel (0) target = $region49
    $region48: #{_lambda_.1} parent=1 // pred_region
      %5615 = vsyncadd [#allocation6], 0
      %s5617 = sshll.u32 [#allocation5], 4
      %s5618 = int_to_ptr.vmem [resolvable:$true] %s5617
      %s5619 = sshll.u32 %s11, 4
      %s5620 = int_to_ptr.hbm [resolvable:$true] %s5619
      %5622 = dma.vmem_to_hbm [thread:$0]  %s5618, 32, %s5620, [#allocation6]
    $region49: #{_lambda_.1} parent=1 // pred_fallthru
      _
    // Predicated region
    $region50: #{_lambda_.1} parent=1 // pred_check
      _
    $region51: #{_lambda_.1} parent=1 // pred_check_branch
      %5624 = sbr.rel (0) target = $region53
    $region52: #{_lambda_.1} parent=1 // pred_region
      %5626 = dma.done [#allocation6], 32
    $region53: #{_lambda_.1} parent=1 // pred_fallthru
      _
    %5627 = vsyncpa [#allocation6], 1

</llo_original>
